<compile_context>
chip_gen: v5e
topology: v5e:2x2
jax: 0.10.0
libtpu: 0.0.40
codegen_flags: <defaults>
</compile_context>

<pallas_src>
import functools

import jax
import jax.numpy as jnp
from jax.experimental import pallas as pl
from jax.experimental.pallas import tpu as pltpu


D = 8            # number of pts_linears
W = 64           # hidden width
W_HALF = W // 2  # views_linears width
D_IN = 3         # input_ch (multires == 0 -> raw xyz)
D_IN_VIEW = 3    # input_ch_view
SKIPS = (4,)     # exactly one skip is supported by the packed layout below


# ----------------------------------------------------------------------------
# Parameter construction (deterministic, PyTorch-Linear-style uniform init).
# Each linear is a pair (w, b) with w: (in, out), b: (1, out).
# ----------------------------------------------------------------------------
def _init_linear(key, fan_in, fan_out):
    kw, kb = jax.random.split(key)
    bound = 1.0 / jnp.sqrt(float(fan_in))
    w = jax.random.uniform(kw, (fan_in, fan_out), jnp.float32, -bound, bound)
    b = jax.random.uniform(kb, (1, fan_out), jnp.float32, -bound, bound)
    return w, b


def init_nerf_params(key):
    params = []
    keys = jax.random.split(key, D + 4)
    # pts_linears: [Linear(d_in, W)] + [Linear(W, W) or Linear(W + d_in, W)]
    fan_in = D_IN
    for i in range(D):
        params.extend(_init_linear(keys[i], fan_in, W))
        fan_in = W + D_IN if i in SKIPS else W
    params.extend(_init_linear(keys[D + 0], W, W))                   # feature_linear
    params.extend(_init_linear(keys[D + 1], W, 1))                   # alpha_linear
    params.extend(_init_linear(keys[D + 2], W + D_IN_VIEW, W_HALF))  # views_linears[0]
    params.extend(_init_linear(keys[D + 3], W_HALF, 3))              # rgb_linear
    return params  # 12 (w, b) pairs flattened -> 24 arrays


# ----------------------------------------------------------------------------
# Wrapper-side parameter packing into a few lane-dense slabs.
#   w_in  : (6, 2W + W/2)  rows 0:3 = pts -> [layer0 | skip-add for layer 5 | 0]
#                          rows 3:6 = views -> [0 | 0 | views part of views_linears[0]]
#   w_hid : (D-1, W, W)    layers 1..7 (layer 5 keeps only its h-columns)
#   w_fa  : (W, W+1)       [feature_linear | alpha_linear]
#   wv_f  : (W, W/2)       feature part of views_linears[0]
#   w_rgb : (W/2, 3)
#   b_pts : (D, W), b_fa : (1, W+1), b_v : (1, W/2), b_rgb : (1, 3)
# ----------------------------------------------------------------------------
def pack_params(params, dtype=jnp.float32):
    assert len(SKIPS) == 1

    def get(k):
        return params[2 * k], params[2 * k + 1]

    w0, b0 = get(0)
    w_layers, b_layers = [], [b0]
    w_skip_pts = None
    for i in range(1, D):
        w, b = get(i)
        if (i - 1) in SKIPS:             # layer consuming cat([pts, h]) (67-wide)
            w_skip_pts = w[:D_IN, :]     # rows multiplying input_pts
            w_layers.append(w[D_IN:, :])  # rows multiplying h
        else:
            w_layers.append(w)
        b_layers.append(b)

    w_feat, b_feat = get(D + 0)
    w_alpha, b_alpha = get(D + 1)
    w_view, b_view = get(D + 2)
    w_rgb, b_rgb = get(D + 3)

    wv_f = w_view[:W, :]     # feature part of views_linears[0]
    wv_v = w_view[W:, :]     # view-dir part

    tot = 2 * W + W_HALF
    w_in = jnp.zeros((D_IN + D_IN_VIEW, tot), jnp.float32)
    w_in = w_in.at[:D_IN, 0:W].set(w0)
    w_in = w_in.at[:D_IN, W:2 * W].set(w_skip_pts)
    w_in = w_in.at[D_IN:, 2 * W:].set(wv_v)

    w_hid = jnp.stack(w_layers, axis=0)            # (D-1, W, W)
    b_pts = jnp.concatenate(b_layers, axis=0)      # (D, W)
    w_fa = jnp.concatenate([w_feat, w_alpha], axis=1)   # (W, W+1)
    b_fa = jnp.concatenate([b_feat, b_alpha], axis=1)   # (1, W+1)

    cast = lambda a: a.astype(dtype)
    weights = tuple(cast(a) for a in (w_in, w_hid, w_fa, wv_f, w_rgb))
    biases = (b_pts, b_fa, b_view, b_rgb)          # biases stay f32 (VPU adds)
    return weights + biases                         # 9 arrays


# ----------------------------------------------------------------------------
# Pallas kernel: whole MLP for one tile of rays, entirely in VMEM.
# ----------------------------------------------------------------------------
def nerf_kernel(pv_ref, w_in_ref, w_hid_ref, w_fa_ref, wv_f_ref, w_rgb_ref,
                b_pts_ref, b_fa_ref, b_v_ref, b_rgb_ref, out_ref):
    f32 = jnp.float32
    wdt = w_in_ref.dtype

    def mm(x, w):
        return jnp.dot(x.astype(wdt), w, preferred_element_type=f32)

    pv = pv_ref[...]                                    # (tile_n, 6)

    # One matmul projects the raw 6-wide input onto:
    #   cols [0:W)        layer-0 pre-activation (bias added below)
    #   cols [W:2W)       pts contribution to the post-skip layer
    #   cols [2W:2W+W/2)  view-dir contribution to views_linears[0]
    in_proj = mm(pv, w_in_ref[...])                     # (tile_n, 2W + W/2)

    b_pts = b_pts_ref[...].astype(f32)                  # (D, W)

    h = jnp.maximum(in_proj[:, 0:W] + b_pts[0:1, :], 0.0)      # layer 0
    skip_add = in_proj[:, W:2 * W]
    for i in range(1, D):                               # layers 1..D-1
        pre = mm(h, w_hid_ref[i - 1]) + b_pts[i:i + 1, :]
        if (i - 1) in SKIPS:                            # concat replaced by add
            pre = pre + skip_add
        h = jnp.maximum(pre, 0.0)

    # fused feature_linear (cols 0:W) + alpha_linear (col W)
    fa = mm(h, w_fa_ref[...]) + b_fa_ref[...].astype(f32)       # (tile_n, W+1)
    feature = fa[:, 0:W]
    alpha = fa[:, W:W + 1]

    # views_linears[0] with the lane concat removed
    hv = mm(feature, wv_f_ref[...]) + in_proj[:, 2 * W:] + b_v_ref[...].astype(f32)
    hv = jnp.maximum(hv, 0.0)                                   # (tile_n, W/2)

    rgb = mm(hv, w_rgb_ref[...]) + b_rgb_ref[...].astype(f32)   # (tile_n, 3)

    # single lane-dense fused output: [alpha | rgb]
    out_ref[:, 0:1] = alpha.astype(out_ref.dtype)
    out_ref[:, 1:4] = rgb.astype(out_ref.dtype)


# ----------------------------------------------------------------------------
# Wrapper: tiles over rays (N); packed weights/biases passed as full blocks.
# ----------------------------------------------------------------------------
@functools.partial(jax.jit, static_argnames=("tile_n",))
def nerf_forward(input_pts, input_views, packed_params, *, tile_n=1024):
    n = input_pts.shape[0]
    assert n % tile_n == 0 and tile_n % 8 == 0

    pv = jnp.concatenate([input_pts, input_views], axis=-1)     # (N, 6)

    in_specs = [pl.BlockSpec((tile_n, D_IN + D_IN_VIEW), lambda i: (i, 0))]
    for prm in packed_params:
        in_specs.append(
            pl.BlockSpec(prm.shape, lambda i, _nd=prm.ndim: (0,) * _nd)
        )

    out = pl.pallas_call(
        nerf_kernel,
        out_shape=jax.ShapeDtypeStruct((n, 4), jnp.float32),
        grid_spec=pltpu.PrefetchScalarGridSpec(
            num_scalar_prefetch=0,
            grid=(n // tile_n,),
            in_specs=in_specs,
            out_specs=pl.BlockSpec((tile_n, 4), lambda i: (i, 0)),
        ),
        compiler_params=pltpu.CompilerParams(
            dimension_semantics=("parallel",),
        ),
    )(pv, *packed_params)

    return out[:, 0:1], out[:, 1:4]                             # alpha, rgb


# ----------------------------------------------------------------------------
# Pure-JAX reference (mirrors the PyTorch forward) for the correctness check.
# ----------------------------------------------------------------------------
def nerf_reference(input_pts, input_views, params):
    hp = jax.lax.Precision.HIGHEST

    def linear(x, k):
        return jnp.dot(x, params[2 * k], precision=hp) + params[2 * k + 1]

    pts = input_pts
    h = pts
    for i in range(D):
        h = jnp.maximum(linear(h, i), 0.0)
        if i in SKIPS:
            h = jnp.concatenate([pts, h], axis=-1)
    alpha = linear(h, D + 1)
    feature = linear(h, D + 0)
    hv = jnp.concatenate([feature, input_views], axis=-1)
    hv = jnp.maximum(linear(hv, D + 2), 0.0)
    rgb = linear(hv, D + 3)
    return alpha, rgb


if __name__ == "__main__":
    key = jax.random.PRNGKey(0)
    k_pts, k_views, k_params = jax.random.split(key, 3)

    N = 2048                      # samples; grid of 2 steps at tile_n=1024
    TILE_N = 1024
    input_pts = jax.random.normal(k_pts, (N, D_IN), jnp.float32)
    input_views = jax.random.normal(k_views, (N, D_IN_VIEW), jnp.float32)
    params = init_nerf_params(k_params)

    alpha_ref, rgb_ref = nerf_reference(input_pts, input_views, params)

    # f32 weights: tight tolerance
    packed_f32 = pack_params(params, jnp.float32)
    alpha, rgb = nerf_forward(input_pts, input_views, packed_f32, tile_n=TILE_N)
    jax.block_until_ready((alpha, rgb))
    assert alpha.shape == (N, 1) and rgb.shape == (N, 3)
    assert jnp.allclose(alpha, alpha_ref, rtol=1e-4, atol=1e-4)
    assert jnp.allclose(rgb, rgb_ref, rtol=1e-4, atol=1e-4)

    # bf16 weights / dot operands (v6e & v7x MXU-friendly), f32 accumulation
    packed_bf16 = pack_params(params, jnp.bfloat16)
    alpha_b, rgb_b = nerf_forward(input_pts, input_views, packed_bf16, tile_n=TILE_N)
    jax.block_until_ready((alpha_b, rgb_b))
    assert jnp.allclose(alpha_b, alpha_ref, rtol=5e-2, atol=5e-2)
    assert jnp.allclose(rgb_b, rgb_ref, rtol=5e-2, atol=5e-2)

    print("KERNEL_OK")
</pallas_src>

<mosaic_0001>
module attributes {stable_mosaic.version = 11 : i64} {
  func.func @nerf_kernel(%arg0: i32, %arg1: memref<1024x6xf32, #tpu.memory_space<vmem>>, %arg2: memref<6x160xf32, #tpu.memory_space<vmem>>, %arg3: memref<7x64x64xf32, #tpu.memory_space<vmem>>, %arg4: memref<64x65xf32, #tpu.memory_space<vmem>>, %arg5: memref<64x32xf32, #tpu.memory_space<vmem>>, %arg6: memref<32x3xf32, #tpu.memory_space<vmem>>, %arg7: memref<8x64xf32, #tpu.memory_space<vmem>>, %arg8: memref<1x65xf32, #tpu.memory_space<vmem>>, %arg9: memref<1x32xf32, #tpu.memory_space<vmem>>, %arg10: memref<1x3xf32, #tpu.memory_space<vmem>>, %arg11: memref<1024x4xf32, #tpu.memory_space<vmem>>) attributes {dimension_semantics = [#tpu.dimension_semantics<parallel>], iteration_bounds = array<i64: 2>, scalar_prefetch = 0 : i64, scratch_operands = 0 : i64, tpu.core_type = #tpu.core_type<tc>, window_params = [{transform_indices = @transform_0, window_bounds = array<i64: 1024, 6>}, {pipeline_mode = #tpu.pipeline_mode<synchronous>, transform_indices = @transform_1, window_bounds = array<i64: 6, 160>}, {pipeline_mode = #tpu.pipeline_mode<synchronous>, transform_indices = @transform_2, window_bounds = array<i64: 7, 64, 64>}, {pipeline_mode = #tpu.pipeline_mode<synchronous>, transform_indices = @transform_3, window_bounds = array<i64: 64, 65>}, {pipeline_mode = #tpu.pipeline_mode<synchronous>, transform_indices = @transform_4, window_bounds = array<i64: 64, 32>}, {pipeline_mode = #tpu.pipeline_mode<synchronous>, transform_indices = @transform_5, window_bounds = array<i64: 32, 3>}, {pipeline_mode = #tpu.pipeline_mode<synchronous>, transform_indices = @transform_6, window_bounds = array<i64: 8, 64>}, {pipeline_mode = #tpu.pipeline_mode<synchronous>, transform_indices = @transform_7, window_bounds = array<i64: 1, 65>}, {pipeline_mode = #tpu.pipeline_mode<synchronous>, transform_indices = @transform_8, window_bounds = array<i64: 1, 32>}, {pipeline_mode = #tpu.pipeline_mode<synchronous>, transform_indices = @transform_9, window_bounds = array<i64: 1, 3>}, {transform_indices = @transform_10, window_bounds = array<i64: 1024, 4>}]} {
    %c0 = arith.constant 0 : index
    %c0_0 = arith.constant 0 : index
    %0 = vector.load %arg1[%c0, %c0_0] : memref<1024x6xf32, #tpu.memory_space<vmem>>, vector<1024x6xf32>
    %c0_1 = arith.constant 0 : index
    %c0_2 = arith.constant 0 : index
    %1 = vector.load %arg2[%c0_1, %c0_2] : memref<6x160xf32, #tpu.memory_space<vmem>>, vector<6x160xf32>
    %cst = arith.constant dense<0.000000e+00> : vector<1024x160xf32>
    %2 = tpu.matmul %0, %1, %cst {dimension_numbers = #tpu.dot_dimension_numbers<[1], [0], [0], [1], [0, 0, 1, 1], [], []>} : vector<1024x6xf32>, vector<6x160xf32>, vector<1024x160xf32> -> vector<1024x160xf32>
    %c0_3 = arith.constant 0 : index
    %c0_4 = arith.constant 0 : index
    %3 = vector.load %arg7[%c0_3, %c0_4] : memref<8x64xf32, #tpu.memory_space<vmem>>, vector<8x64xf32>
    %4 = vector.extract_strided_slice %2 {offsets = [0, 0], sizes = [1024, 64], strides = [1, 1]} : vector<1024x160xf32> to vector<1024x64xf32>
    %5 = vector.extract_strided_slice %3 {offsets = [0, 0], sizes = [1, 64], strides = [1, 1]} : vector<8x64xf32> to vector<1x64xf32>
    %6 = vector.broadcast %5 : vector<1x64xf32> to vector<1024x64xf32>
    %7 = arith.addf %4, %6 : vector<1024x64xf32>
    %cst_5 = arith.constant 0.000000e+00 : f32
    %8 = vector.broadcast %cst_5 : f32 to vector<1024x64xf32>
    %9 = arith.maximumf %7, %8 : vector<1024x64xf32>
    %10 = vector.extract_strided_slice %2 {offsets = [0, 64], sizes = [1024, 64], strides = [1, 1]} : vector<1024x160xf32> to vector<1024x64xf32>
    %c0_6 = arith.constant 0 : index
    %c0_7 = arith.constant 0 : index
    %c0_8 = arith.constant 0 : index
    %11 = vector.load %arg3[%c0_6, %c0_7, %c0_8] : memref<7x64x64xf32, #tpu.memory_space<vmem>>, vector<1x64x64xf32>
    %12 = vector.shape_cast %11 : vector<1x64x64xf32> to vector<64x64xf32>
    %cst_9 = arith.constant dense<0.000000e+00> : vector<1024x64xf32>
    %13 = tpu.matmul %9, %12, %cst_9 {dimension_numbers = #tpu.dot_dimension_numbers<[1], [0], [0], [1], [0, 0, 1, 1], [], []>} : vector<1024x64xf32>, vector<64x64xf32>, vector<1024x64xf32> -> vector<1024x64xf32>
    %14 = vector.extract_strided_slice %3 {offsets = [1, 0], sizes = [1, 64], strides = [1, 1]} : vector<8x64xf32> to vector<1x64xf32>
    %15 = vector.broadcast %14 : vector<1x64xf32> to vector<1024x64xf32>
    %16 = arith.addf %13, %15 : vector<1024x64xf32>
    %cst_10 = arith.constant 0.000000e+00 : f32
    %17 = vector.broadcast %cst_10 : f32 to vector<1024x64xf32>
    %18 = arith.maximumf %16, %17 : vector<1024x64xf32>
    %c1 = arith.constant 1 : index
    %c0_11 = arith.constant 0 : index
    %c0_12 = arith.constant 0 : index
    %19 = vector.load %arg3[%c1, %c0_11, %c0_12] : memref<7x64x64xf32, #tpu.memory_space<vmem>>, vector<1x64x64xf32>
    %20 = vector.shape_cast %19 : vector<1x64x64xf32> to vector<64x64xf32>
    %cst_13 = arith.constant dense<0.000000e+00> : vector<1024x64xf32>
    %21 = tpu.matmul %18, %20, %cst_13 {dimension_numbers = #tpu.dot_dimension_numbers<[1], [0], [0], [1], [0, 0, 1, 1], [], []>} : vector<1024x64xf32>, vector<64x64xf32>, vector<1024x64xf32> -> vector<1024x64xf32>
    %22 = vector.extract_strided_slice %3 {offsets = [2, 0], sizes = [1, 64], strides = [1, 1]} : vector<8x64xf32> to vector<1x64xf32>
    %23 = vector.broadcast %22 : vector<1x64xf32> to vector<1024x64xf32>
    %24 = arith.addf %21, %23 : vector<1024x64xf32>
    %cst_14 = arith.constant 0.000000e+00 : f32
    %25 = vector.broadcast %cst_14 : f32 to vector<1024x64xf32>
    %26 = arith.maximumf %24, %25 : vector<1024x64xf32>
    %c2 = arith.constant 2 : index
    %c0_15 = arith.constant 0 : index
    %c0_16 = arith.constant 0 : index
    %27 = vector.load %arg3[%c2, %c0_15, %c0_16] : memref<7x64x64xf32, #tpu.memory_space<vmem>>, vector<1x64x64xf32>
    %28 = vector.shape_cast %27 : vector<1x64x64xf32> to vector<64x64xf32>
    %cst_17 = arith.constant dense<0.000000e+00> : vector<1024x64xf32>
    %29 = tpu.matmul %26, %28, %cst_17 {dimension_numbers = #tpu.dot_dimension_numbers<[1], [0], [0], [1], [0, 0, 1, 1], [], []>} : vector<1024x64xf32>, vector<64x64xf32>, vector<1024x64xf32> -> vector<1024x64xf32>
    %30 = vector.extract_strided_slice %3 {offsets = [3, 0], sizes = [1, 64], strides = [1, 1]} : vector<8x64xf32> to vector<1x64xf32>
    %31 = vector.broadcast %30 : vector<1x64xf32> to vector<1024x64xf32>
    %32 = arith.addf %29, %31 : vector<1024x64xf32>
    %cst_18 = arith.constant 0.000000e+00 : f32
    %33 = vector.broadcast %cst_18 : f32 to vector<1024x64xf32>
    %34 = arith.maximumf %32, %33 : vector<1024x64xf32>
    %c3 = arith.constant 3 : index
    %c0_19 = arith.constant 0 : index
    %c0_20 = arith.constant 0 : index
    %35 = vector.load %arg3[%c3, %c0_19, %c0_20] : memref<7x64x64xf32, #tpu.memory_space<vmem>>, vector<1x64x64xf32>
    %36 = vector.shape_cast %35 : vector<1x64x64xf32> to vector<64x64xf32>
    %cst_21 = arith.constant dense<0.000000e+00> : vector<1024x64xf32>
    %37 = tpu.matmul %34, %36, %cst_21 {dimension_numbers = #tpu.dot_dimension_numbers<[1], [0], [0], [1], [0, 0, 1, 1], [], []>} : vector<1024x64xf32>, vector<64x64xf32>, vector<1024x64xf32> -> vector<1024x64xf32>
    %38 = vector.extract_strided_slice %3 {offsets = [4, 0], sizes = [1, 64], strides = [1, 1]} : vector<8x64xf32> to vector<1x64xf32>
    %39 = vector.broadcast %38 : vector<1x64xf32> to vector<1024x64xf32>
    %40 = arith.addf %37, %39 : vector<1024x64xf32>
    %cst_22 = arith.constant 0.000000e+00 : f32
    %41 = vector.broadcast %cst_22 : f32 to vector<1024x64xf32>
    %42 = arith.maximumf %40, %41 : vector<1024x64xf32>
    %c4 = arith.constant 4 : index
    %c0_23 = arith.constant 0 : index
    %c0_24 = arith.constant 0 : index
    %43 = vector.load %arg3[%c4, %c0_23, %c0_24] : memref<7x64x64xf32, #tpu.memory_space<vmem>>, vector<1x64x64xf32>
    %44 = vector.shape_cast %43 : vector<1x64x64xf32> to vector<64x64xf32>
    %cst_25 = arith.constant dense<0.000000e+00> : vector<1024x64xf32>
    %45 = tpu.matmul %42, %44, %cst_25 {dimension_numbers = #tpu.dot_dimension_numbers<[1], [0], [0], [1], [0, 0, 1, 1], [], []>} : vector<1024x64xf32>, vector<64x64xf32>, vector<1024x64xf32> -> vector<1024x64xf32>
    %46 = vector.extract_strided_slice %3 {offsets = [5, 0], sizes = [1, 64], strides = [1, 1]} : vector<8x64xf32> to vector<1x64xf32>
    %47 = vector.broadcast %46 : vector<1x64xf32> to vector<1024x64xf32>
    %48 = arith.addf %45, %47 : vector<1024x64xf32>
    %49 = arith.addf %48, %10 : vector<1024x64xf32>
    %cst_26 = arith.constant 0.000000e+00 : f32
    %50 = vector.broadcast %cst_26 : f32 to vector<1024x64xf32>
    %51 = arith.maximumf %49, %50 : vector<1024x64xf32>
    %c5 = arith.constant 5 : index
    %c0_27 = arith.constant 0 : index
    %c0_28 = arith.constant 0 : index
    %52 = vector.load %arg3[%c5, %c0_27, %c0_28] : memref<7x64x64xf32, #tpu.memory_space<vmem>>, vector<1x64x64xf32>
    %53 = vector.shape_cast %52 : vector<1x64x64xf32> to vector<64x64xf32>
    %cst_29 = arith.constant dense<0.000000e+00> : vector<1024x64xf32>
    %54 = tpu.matmul %51, %53, %cst_29 {dimension_numbers = #tpu.dot_dimension_numbers<[1], [0], [0], [1], [0, 0, 1, 1], [], []>} : vector<1024x64xf32>, vector<64x64xf32>, vector<1024x64xf32> -> vector<1024x64xf32>
    %55 = vector.extract_strided_slice %3 {offsets = [6, 0], sizes = [1, 64], strides = [1, 1]} : vector<8x64xf32> to vector<1x64xf32>
    %56 = vector.broadcast %55 : vector<1x64xf32> to vector<1024x64xf32>
    %57 = arith.addf %54, %56 : vector<1024x64xf32>
    %cst_30 = arith.constant 0.000000e+00 : f32
    %58 = vector.broadcast %cst_30 : f32 to vector<1024x64xf32>
    %59 = arith.maximumf %57, %58 : vector<1024x64xf32>
    %c6 = arith.constant 6 : index
    %c0_31 = arith.constant 0 : index
    %c0_32 = arith.constant 0 : index
    %60 = vector.load %arg3[%c6, %c0_31, %c0_32] : memref<7x64x64xf32, #tpu.memory_space<vmem>>, vector<1x64x64xf32>
    %61 = vector.shape_cast %60 : vector<1x64x64xf32> to vector<64x64xf32>
    %cst_33 = arith.constant dense<0.000000e+00> : vector<1024x64xf32>
    %62 = tpu.matmul %59, %61, %cst_33 {dimension_numbers = #tpu.dot_dimension_numbers<[1], [0], [0], [1], [0, 0, 1, 1], [], []>} : vector<1024x64xf32>, vector<64x64xf32>, vector<1024x64xf32> -> vector<1024x64xf32>
    %63 = vector.extract_strided_slice %3 {offsets = [7, 0], sizes = [1, 64], strides = [1, 1]} : vector<8x64xf32> to vector<1x64xf32>
    %64 = vector.broadcast %63 : vector<1x64xf32> to vector<1024x64xf32>
    %65 = arith.addf %62, %64 : vector<1024x64xf32>
    %cst_34 = arith.constant 0.000000e+00 : f32
    %66 = vector.broadcast %cst_34 : f32 to vector<1024x64xf32>
    %67 = arith.maximumf %65, %66 : vector<1024x64xf32>
    %c0_35 = arith.constant 0 : index
    %c0_36 = arith.constant 0 : index
    %68 = vector.load %arg4[%c0_35, %c0_36] : memref<64x65xf32, #tpu.memory_space<vmem>>, vector<64x65xf32>
    %cst_37 = arith.constant dense<0.000000e+00> : vector<1024x65xf32>
    %69 = tpu.matmul %67, %68, %cst_37 {dimension_numbers = #tpu.dot_dimension_numbers<[1], [0], [0], [1], [0, 0, 1, 1], [], []>} : vector<1024x64xf32>, vector<64x65xf32>, vector<1024x65xf32> -> vector<1024x65xf32>
    %c0_38 = arith.constant 0 : index
    %c0_39 = arith.constant 0 : index
    %70 = vector.load %arg8[%c0_38, %c0_39] : memref<1x65xf32, #tpu.memory_space<vmem>>, vector<1x65xf32>
    %71 = vector.broadcast %70 : vector<1x65xf32> to vector<1024x65xf32>
    %72 = arith.addf %69, %71 : vector<1024x65xf32>
    %73 = vector.extract_strided_slice %72 {offsets = [0, 0], sizes = [1024, 64], strides = [1, 1]} : vector<1024x65xf32> to vector<1024x64xf32>
    %74 = vector.extract_strided_slice %72 {offsets = [0, 64], sizes = [1024, 1], strides = [1, 1]} : vector<1024x65xf32> to vector<1024x1xf32>
    %c0_40 = arith.constant 0 : index
    %c0_41 = arith.constant 0 : index
    %75 = vector.load %arg5[%c0_40, %c0_41] : memref<64x32xf32, #tpu.memory_space<vmem>>, vector<64x32xf32>
    %cst_42 = arith.constant dense<0.000000e+00> : vector<1024x32xf32>
    %76 = tpu.matmul %73, %75, %cst_42 {dimension_numbers = #tpu.dot_dimension_numbers<[1], [0], [0], [1], [0, 0, 1, 1], [], []>} : vector<1024x64xf32>, vector<64x32xf32>, vector<1024x32xf32> -> vector<1024x32xf32>
    %77 = vector.extract_strided_slice %2 {offsets = [0, 128], sizes = [1024, 32], strides = [1, 1]} : vector<1024x160xf32> to vector<1024x32xf32>
    %78 = arith.addf %76, %77 : vector<1024x32xf32>
    %c0_43 = arith.constant 0 : index
    %c0_44 = arith.constant 0 : index
    %79 = vector.load %arg9[%c0_43, %c0_44] : memref<1x32xf32, #tpu.memory_space<vmem>>, vector<1x32xf32>
    %80 = vector.broadcast %79 : vector<1x32xf32> to vector<1024x32xf32>
    %81 = arith.addf %78, %80 : vector<1024x32xf32>
    %cst_45 = arith.constant 0.000000e+00 : f32
    %82 = vector.broadcast %cst_45 : f32 to vector<1024x32xf32>
    %83 = arith.maximumf %81, %82 : vector<1024x32xf32>
    %c0_46 = arith.constant 0 : index
    %c0_47 = arith.constant 0 : index
    %84 = vector.load %arg6[%c0_46, %c0_47] : memref<32x3xf32, #tpu.memory_space<vmem>>, vector<32x3xf32>
    %cst_48 = arith.constant dense<0.000000e+00> : vector<1024x3xf32>
    %85 = tpu.matmul %83, %84, %cst_48 {dimension_numbers = #tpu.dot_dimension_numbers<[1], [0], [0], [1], [0, 0, 1, 1], [], []>} : vector<1024x32xf32>, vector<32x3xf32>, vector<1024x3xf32> -> vector<1024x3xf32>
    %c0_49 = arith.constant 0 : index
    %c0_50 = arith.constant 0 : index
    %86 = vector.load %arg10[%c0_49, %c0_50] : memref<1x3xf32, #tpu.memory_space<vmem>>, vector<1x3xf32>
    %87 = vector.broadcast %86 : vector<1x3xf32> to vector<1024x3xf32>
    %88 = arith.addf %85, %87 : vector<1024x3xf32>
    %c0_51 = arith.constant 0 : index
    %c0_52 = arith.constant 0 : index
    %89 = vector.load %arg11[%c0_51, %c0_52] : memref<1024x4xf32, #tpu.memory_space<vmem>>, vector<1024x1xf32>
    tpu.vector_store %arg11[%c0_51, %c0_52], %74 {strides = array<i32>} : memref<1024x4xf32, #tpu.memory_space<vmem>>, vector<1024x1xf32>,
    %c0_53 = arith.constant 0 : index
    %c1_54 = arith.constant 1 : index
    %90 = vector.load %arg11[%c0_53, %c1_54] : memref<1024x4xf32, #tpu.memory_space<vmem>>, vector<1024x3xf32>
    tpu.vector_store %arg11[%c0_53, %c1_54], %88 {strides = array<i32>} : memref<1024x4xf32, #tpu.memory_space<vmem>>, vector<1024x3xf32>,
    return
  }
  func.func @transform_0(%arg0: i32) -> (i32, i32) {
    %c0_i32 = arith.constant 0 : i32
    %c0_i32_0 = arith.constant 0 : i32
    return %arg0, %c0_i32 : i32, i32
  }
  func.func @transform_1(%arg0: i32) -> (i32, i32) {
    %c0_i32 = arith.constant 0 : i32
    %c0_i32_0 = arith.constant 0 : i32
    %c0_i32_1 = arith.constant 0 : i32
    return %c0_i32, %c0_i32_0 : i32, i32
  }
  func.func @transform_2(%arg0: i32) -> (i32, i32, i32) {
    %c0_i32 = arith.constant 0 : i32
    %c0_i32_0 = arith.constant 0 : i32
    %c0_i32_1 = arith.constant 0 : i32
    %c0_i32_2 = arith.constant 0 : i32
    return %c0_i32, %c0_i32_0, %c0_i32_1 : i32, i32, i32
  }
  func.func @transform_3(%arg0: i32) -> (i32, i32) {
    %c0_i32 = arith.constant 0 : i32
    %c0_i32_0 = arith.constant 0 : i32
    %c0_i32_1 = arith.constant 0 : i32
    return %c0_i32, %c0_i32_0 : i32, i32
  }
  func.func @transform_4(%arg0: i32) -> (i32, i32) {
    %c0_i32 = arith.constant 0 : i32
    %c0_i32_0 = arith.constant 0 : i32
    %c0_i32_1 = arith.constant 0 : i32
    return %c0_i32, %c0_i32_0 : i32, i32
  }
  func.func @transform_5(%arg0: i32) -> (i32, i32) {
    %c0_i32 = arith.constant 0 : i32
    %c0_i32_0 = arith.constant 0 : i32
    %c0_i32_1 = arith.constant 0 : i32
    return %c0_i32, %c0_i32_0 : i32, i32
  }
  func.func @transform_6(%arg0: i32) -> (i32, i32) {
    %c0_i32 = arith.constant 0 : i32
    %c0_i32_0 = arith.constant 0 : i32
    %c0_i32_1 = arith.constant 0 : i32
    return %c0_i32, %c0_i32_0 : i32, i32
  }
  func.func @transform_7(%arg0: i32) -> (i32, i32) {
    %c0_i32 = arith.constant 0 : i32
    %c0_i32_0 = arith.constant 0 : i32
    %c0_i32_1 = arith.constant 0 : i32
    return %c0_i32, %c0_i32_0 : i32, i32
  }
  func.func @transform_8(%arg0: i32) -> (i32, i32) {
    %c0_i32 = arith.constant 0 : i32
    %c0_i32_0 = arith.constant 0 : i32
    %c0_i32_1 = arith.constant 0 : i32
    return %c0_i32, %c0_i32_0 : i32, i32
  }
  func.func @transform_9(%arg0: i32) -> (i32, i32) {
    %c0_i32 = arith.constant 0 : i32
    %c0_i32_0 = arith.constant 0 : i32
    %c0_i32_1 = arith.constant 0 : i32
    return %c0_i32, %c0_i32_0 : i32, i32
  }
  func.func @transform_10(%arg0: i32) -> (i32, i32) {
    %c0_i32 = arith.constant 0 : i32
    %c0_i32_0 = arith.constant 0 : i32
    return %arg0, %c0_i32 : i32, i32
  }
}

</mosaic_0001>

<llo_original>
// kernel: nerf_forward.1
$region0: #{nerf_forward.1}
  #allocation0 [shape = 'u32[]', space=smem, size = 0x4, offset = 0x4, fixed_abs, tag = 'smem constant byte address 0x4 - core index']
  #allocation1 [shape = 'u32[72,128]{1,0:T(1,128)}', space=vmem, size = 0x9000, scoped, tag = 'internal scratch']
  %s0 = inlined_call_operand.vmem [shape: f32[2048,6], index: 0, kind: input, shape index: {}]
  %s1 = inlined_call_operand.vmem [shape: f32[6,160], index: 1, kind: input, shape index: {}]
  %s2 = inlined_call_operand.vmem [shape: f32[7,64,64], index: 2, kind: input, shape index: {}]
  %s3 = inlined_call_operand.vmem [shape: f32[64,65], index: 3, kind: input, shape index: {}]
  %s4 = inlined_call_operand.vmem [shape: f32[64,32], index: 4, kind: input, shape index: {}]
  %s5 = inlined_call_operand.vmem [shape: f32[32,3], index: 5, kind: input, shape index: {}]
  %s6 = inlined_call_operand.vmem [shape: f32[8,64], index: 6, kind: input, shape index: {}]
  %s7 = inlined_call_operand.vmem [shape: f32[1,65], index: 7, kind: input, shape index: {}]
  %s8 = inlined_call_operand.vmem [shape: f32[1,32], index: 8, kind: input, shape index: {}]
  %s9 = inlined_call_operand.vmem [shape: f32[1,3], index: 9, kind: input, shape index: {}]
  %s10 = inlined_call_operand.vmem [shape: f32[2048,4], index: 10, kind: output, shape index: {}]
  %s11 = sld [smem:[#allocation0]]
  $region73: #{nerf_forward.1} parent=0
    _
  %s13 = ssub.s32 1, %s11
  %s14 = scalar_select 0, %s13, %s11
  loop: start=0, step=1, limit=4
  $region2: #{nerf_forward.1} parent=0 // loop_pre_header
    _
  $region3: #{nerf_forward.1} parent=0 // loop_header
    %s16 = sphi 0, %s20
    %p17 = scmp.ge.s32.totalorder %s16, 4
    %s26 = sphi 0, %s28
    %s29 = sphi 0, %s26
    %s30 = sphi 0, %s29
    %s46 = sphi 0, %s30
    %s50 = sphi 0, %s50
    %s52 = sphi 0, %s50
    %s53 = sphi 0, %s52
    %s67 = sphi 0, %s53
    %s71 = sphi 0, %s71
    %s73 = sphi 0, %s71
    %s74 = sphi 0, %s73
    %s88 = sphi 0, %s74
    %s92 = sphi 0, %s92
    %s94 = sphi 0, %s92
    %s95 = sphi 0, %s94
    %s109 = sphi 0, %s95
    %s113 = sphi 0, %s113
    %s115 = sphi 0, %s113
    %s116 = sphi 0, %s115
    %s130 = sphi 0, %s116
    %s134 = sphi 0, %s134
    %s136 = sphi 0, %s134
    %s137 = sphi 0, %s136
    %s151 = sphi 0, %s137
    %s155 = sphi 0, %s155
    %s157 = sphi 0, %s155
    %s158 = sphi 0, %s157
    %s172 = sphi 0, %s158
    %s176 = sphi 0, %s176
    %s178 = sphi 0, %s176
    %s179 = sphi 0, %s178
    %s193 = sphi 0, %s179
    %s197 = sphi 0, %s197
    %s199 = sphi 0, %s197
    %s200 = sphi 0, %s199
    %s214 = sphi 0, %s200
    %s218 = sphi 0, %s218
    %s220 = sphi 0, %s218
    %s221 = sphi 0, %s220
    %s235 = sphi 0, %s221
    %s241 = sphi 0, %s243
    %s244 = sphi 0, %s241
    %s245 = sphi 0, %s244
    %s261 = sphi 0, %s245
  $region4: #{nerf_forward.1} parent=0 // loop_header_branch
    %19 = sbr.rel (%p17) target = $region8
  $region5: #{nerf_forward.1} parent=0 // loop_body
    %s21 = ssub.s32 %s16, 1
    %s22 = ssub.s32 %s16, 2
    %s23 = sadd.s32 %s16, 1
    %s24 = ssub.s32 %s16, %s23
    %p25 = scmp.eq.s32.totalorder %s24, 0
    %s27 = sadd.s32 %s26, 1
    %s28 = scalar_select %p25, %s26, %s27
    %p31 = pneg %p25
    %p32 = scmp.eq.s32.totalorder %s16, 1
    %p33 = por %p31, %p32
    %p34 = scmp.ne.s32.totalorder %s26, %s29
    %p35 = scmp.eq.s32.totalorder %s16, 0
    %p36 = por %p34, %p35
    %p37 = scmp.ne.s32.totalorder %s26, %s29
    %p38 = scmp.eq.s32.totalorder %s21, 1
    %p39 = por %p37, %p38
    %p40 = scmp.ne.s32.totalorder %s29, %s30
    %p41 = scmp.eq.s32.totalorder %s21, 0
    %p42 = por %p40, %p41
    %p43 = scmp.ne.s32.totalorder %s29, %s30
    %p44 = scmp.eq.s32.totalorder %s22, 1
    %p45 = por %p43, %p44
    %p47 = scmp.ne.s32.totalorder %s30, %s46
    %p48 = scmp.eq.s32.totalorder %s22, 0
    %p49 = por %p47, %p48
    %s51 = sadd.s32 %s50, 1
    %p54 = scmp.eq.s32.totalorder %s16, 1
    %p55 = scmp.ne.s32.totalorder %s50, %s52
    %p56 = scmp.eq.s32.totalorder %s16, 0
    %p57 = por %p55, %p56
    %p58 = scmp.ne.s32.totalorder %s50, %s52
    %p59 = scmp.eq.s32.totalorder %s21, 1
    %p60 = por %p58, %p59
    %p61 = scmp.ne.s32.totalorder %s52, %s53
    %p62 = scmp.eq.s32.totalorder %s21, 0
    %p63 = por %p61, %p62
    %p64 = scmp.ne.s32.totalorder %s52, %s53
    %p65 = scmp.eq.s32.totalorder %s22, 1
    %p66 = por %p64, %p65
    %p68 = scmp.ne.s32.totalorder %s53, %s67
    %p69 = scmp.eq.s32.totalorder %s22, 0
    %p70 = por %p68, %p69
    %s72 = sadd.s32 %s71, 1
    %p75 = scmp.eq.s32.totalorder %s16, 1
    %p76 = scmp.ne.s32.totalorder %s71, %s73
    %p77 = scmp.eq.s32.totalorder %s16, 0
    %p78 = por %p76, %p77
    %p79 = scmp.ne.s32.totalorder %s71, %s73
    %p80 = scmp.eq.s32.totalorder %s21, 1
    %p81 = por %p79, %p80
    %p82 = scmp.ne.s32.totalorder %s73, %s74
    %p83 = scmp.eq.s32.totalorder %s21, 0
    %p84 = por %p82, %p83
    %p85 = scmp.ne.s32.totalorder %s73, %s74
    %p86 = scmp.eq.s32.totalorder %s22, 1
    %p87 = por %p85, %p86
    %p89 = scmp.ne.s32.totalorder %s74, %s88
    %p90 = scmp.eq.s32.totalorder %s22, 0
    %p91 = por %p89, %p90
    %s93 = sadd.s32 %s92, 1
    %p96 = scmp.eq.s32.totalorder %s16, 1
    %p97 = scmp.ne.s32.totalorder %s92, %s94
    %p98 = scmp.eq.s32.totalorder %s16, 0
    %p99 = por %p97, %p98
    %p100 = scmp.ne.s32.totalorder %s92, %s94
    %p101 = scmp.eq.s32.totalorder %s21, 1
    %p102 = por %p100, %p101
    %p103 = scmp.ne.s32.totalorder %s94, %s95
    %p104 = scmp.eq.s32.totalorder %s21, 0
    %p105 = por %p103, %p104
    %p106 = scmp.ne.s32.totalorder %s94, %s95
    %p107 = scmp.eq.s32.totalorder %s22, 1
    %p108 = por %p106, %p107
    %p110 = scmp.ne.s32.totalorder %s95, %s109
    %p111 = scmp.eq.s32.totalorder %s22, 0
    %p112 = por %p110, %p111
    %s114 = sadd.s32 %s113, 1
    %p117 = scmp.eq.s32.totalorder %s16, 1
    %p118 = scmp.ne.s32.totalorder %s113, %s115
    %p119 = scmp.eq.s32.totalorder %s16, 0
    %p120 = por %p118, %p119
    %p121 = scmp.ne.s32.totalorder %s113, %s115
    %p122 = scmp.eq.s32.totalorder %s21, 1
    %p123 = por %p121, %p122
    %p124 = scmp.ne.s32.totalorder %s115, %s116
    %p125 = scmp.eq.s32.totalorder %s21, 0
    %p126 = por %p124, %p125
    %p127 = scmp.ne.s32.totalorder %s115, %s116
    %p128 = scmp.eq.s32.totalorder %s22, 1
    %p129 = por %p127, %p128
    %p131 = scmp.ne.s32.totalorder %s116, %s130
    %p132 = scmp.eq.s32.totalorder %s22, 0
    %p133 = por %p131, %p132
    %s135 = sadd.s32 %s134, 1
    %p138 = scmp.eq.s32.totalorder %s16, 1
    %p139 = scmp.ne.s32.totalorder %s134, %s136
    %p140 = scmp.eq.s32.totalorder %s16, 0
    %p141 = por %p139, %p140
    %p142 = scmp.ne.s32.totalorder %s134, %s136
    %p143 = scmp.eq.s32.totalorder %s21, 1
    %p144 = por %p142, %p143
    %p145 = scmp.ne.s32.totalorder %s136, %s137
    %p146 = scmp.eq.s32.totalorder %s21, 0
    %p147 = por %p145, %p146
    %p148 = scmp.ne.s32.totalorder %s136, %s137
    %p149 = scmp.eq.s32.totalorder %s22, 1
    %p150 = por %p148, %p149
    %p152 = scmp.ne.s32.totalorder %s137, %s151
    %p153 = scmp.eq.s32.totalorder %s22, 0
    %p154 = por %p152, %p153
    %s156 = sadd.s32 %s155, 1
    %p159 = scmp.eq.s32.totalorder %s16, 1
    %p160 = scmp.ne.s32.totalorder %s155, %s157
    %p161 = scmp.eq.s32.totalorder %s16, 0
    %p162 = por %p160, %p161
    %p163 = scmp.ne.s32.totalorder %s155, %s157
    %p164 = scmp.eq.s32.totalorder %s21, 1
    %p165 = por %p163, %p164
    %p166 = scmp.ne.s32.totalorder %s157, %s158
    %p167 = scmp.eq.s32.totalorder %s21, 0
    %p168 = por %p166, %p167
    %p169 = scmp.ne.s32.totalorder %s157, %s158
    %p170 = scmp.eq.s32.totalorder %s22, 1
    %p171 = por %p169, %p170
    %p173 = scmp.ne.s32.totalorder %s158, %s172
    %p174 = scmp.eq.s32.totalorder %s22, 0
    %p175 = por %p173, %p174
    %s177 = sadd.s32 %s176, 1
    %p180 = scmp.eq.s32.totalorder %s16, 1
    %p181 = scmp.ne.s32.totalorder %s176, %s178
    %p182 = scmp.eq.s32.totalorder %s16, 0
    %p183 = por %p181, %p182
    %p184 = scmp.ne.s32.totalorder %s176, %s178
    %p185 = scmp.eq.s32.totalorder %s21, 1
    %p186 = por %p184, %p185
    %p187 = scmp.ne.s32.totalorder %s178, %s179
    %p188 = scmp.eq.s32.totalorder %s21, 0
    %p189 = por %p187, %p188
    %p190 = scmp.ne.s32.totalorder %s178, %s179
    %p191 = scmp.eq.s32.totalorder %s22, 1
    %p192 = por %p190, %p191
    %p194 = scmp.ne.s32.totalorder %s179, %s193
    %p195 = scmp.eq.s32.totalorder %s22, 0
    %p196 = por %p194, %p195
    %s198 = sadd.s32 %s197, 1
    %p201 = scmp.eq.s32.totalorder %s16, 1
    %p202 = scmp.ne.s32.totalorder %s197, %s199
    %p203 = scmp.eq.s32.totalorder %s16, 0
    %p204 = por %p202, %p203
    %p205 = scmp.ne.s32.totalorder %s197, %s199
    %p206 = scmp.eq.s32.totalorder %s21, 1
    %p207 = por %p205, %p206
    %p208 = scmp.ne.s32.totalorder %s199, %s200
    %p209 = scmp.eq.s32.totalorder %s21, 0
    %p210 = por %p208, %p209
    %p211 = scmp.ne.s32.totalorder %s199, %s200
    %p212 = scmp.eq.s32.totalorder %s22, 1
    %p213 = por %p211, %p212
    %p215 = scmp.ne.s32.totalorder %s200, %s214
    %p216 = scmp.eq.s32.totalorder %s22, 0
    %p217 = por %p215, %p216
    %s219 = sadd.s32 %s218, 1
    %p222 = scmp.eq.s32.totalorder %s16, 1
    %p223 = scmp.ne.s32.totalorder %s218, %s220
    %p224 = scmp.eq.s32.totalorder %s16, 0
    %p225 = por %p223, %p224
    %p226 = scmp.ne.s32.totalorder %s218, %s220
    %p227 = scmp.eq.s32.totalorder %s21, 1
    %p228 = por %p226, %p227
    %p229 = scmp.ne.s32.totalorder %s220, %s221
    %p230 = scmp.eq.s32.totalorder %s21, 0
    %p231 = por %p229, %p230
    %p232 = scmp.ne.s32.totalorder %s220, %s221
    %p233 = scmp.eq.s32.totalorder %s22, 1
    %p234 = por %p232, %p233
    %p236 = scmp.ne.s32.totalorder %s221, %s235
    %p237 = scmp.eq.s32.totalorder %s22, 0
    %p238 = por %p236, %p237
    %s239 = ssub.s32 %s16, %s23
    %p240 = scmp.eq.s32.totalorder %s239, 0
    %s242 = sadd.s32 %s241, 1
    %s243 = scalar_select %p240, %s241, %s242
    %p246 = pneg %p240
    %p247 = scmp.eq.s32.totalorder %s16, 1
    %p248 = por %p246, %p247
    %p249 = scmp.ne.s32.totalorder %s241, %s244
    %p250 = scmp.eq.s32.totalorder %s16, 0
    %p251 = por %p249, %p250
    %p252 = scmp.ne.s32.totalorder %s241, %s244
    %p253 = scmp.eq.s32.totalorder %s21, 1
    %p254 = por %p252, %p253
    %p255 = scmp.ne.s32.totalorder %s244, %s245
    %p256 = scmp.eq.s32.totalorder %s21, 0
    %p257 = por %p255, %p256
    %p258 = scmp.ne.s32.totalorder %s244, %s245
    %p259 = scmp.eq.s32.totalorder %s22, 1
    %p260 = por %p258, %p259
    %p262 = scmp.ne.s32.totalorder %s245, %s261
    %p263 = scmp.eq.s32.totalorder %s22, 0
    %p264 = por %p262, %p263
    %p265 = scmp.le.s32.totalorder 1, %s16
    %p266 = scmp.lt.s32.totalorder %s16, 3
    %p267 = pnand %p265, %p266
    %p268 = pneg %p267
    // Predicated region
    $region9: #{nerf_forward.1} parent=5 // pred_check
      _
    $region10: #{nerf_forward.1} parent=5 // pred_check_branch
      %270 = sbr.rel (%p267) target = $region12
    $region11: #{nerf_forward.1} parent=5 // pred_region
      %s271 = ssub.s32 %s16, 1
      // Predicated region
      $region13: #{nerf_forward.1} parent=11 // pred_check
        %p272 = pneg %p63
      $region14: #{nerf_forward.1} parent=11 // pred_check_branch
        %274 = sbr.rel (%p272) target = $region16
      $region15: #{nerf_forward.1} parent=11 // pred_region
        _
      $region16: #{nerf_forward.1} parent=11 // pred_fallthru
        _
      // Predicated region
      $region17: #{nerf_forward.1} parent=11 // pred_check
        %p275 = pneg %p84
      $region18: #{nerf_forward.1} parent=11 // pred_check_branch
        %277 = sbr.rel (%p275) target = $region20
      $region19: #{nerf_forward.1} parent=11 // pred_region
        _
      $region20: #{nerf_forward.1} parent=11 // pred_fallthru
        _
      // Predicated region
      $region21: #{nerf_forward.1} parent=11 // pred_check
        %p278 = pneg %p105
      $region22: #{nerf_forward.1} parent=11 // pred_check_branch
        %280 = sbr.rel (%p278) target = $region24
      $region23: #{nerf_forward.1} parent=11 // pred_region
        _
      $region24: #{nerf_forward.1} parent=11 // pred_fallthru
        _
      // Predicated region
      $region25: #{nerf_forward.1} parent=11 // pred_check
        %p281 = pneg %p126
      $region26: #{nerf_forward.1} parent=11 // pred_check_branch
        %283 = sbr.rel (%p281) target = $region28
      $region27: #{nerf_forward.1} parent=11 // pred_region
        _
      $region28: #{nerf_forward.1} parent=11 // pred_fallthru
        _
      // Predicated region
      $region29: #{nerf_forward.1} parent=11 // pred_check
        %p284 = pneg %p147
      $region30: #{nerf_forward.1} parent=11 // pred_check_branch
        %286 = sbr.rel (%p284) target = $region32
      $region31: #{nerf_forward.1} parent=11 // pred_region
        _
      $region32: #{nerf_forward.1} parent=11 // pred_fallthru
        _
      // Predicated region
      $region33: #{nerf_forward.1} parent=11 // pred_check
        %p287 = pneg %p168
      $region34: #{nerf_forward.1} parent=11 // pred_check_branch
        %289 = sbr.rel (%p287) target = $region36
      $region35: #{nerf_forward.1} parent=11 // pred_region
        _
      $region36: #{nerf_forward.1} parent=11 // pred_fallthru
        _
      // Predicated region
      $region37: #{nerf_forward.1} parent=11 // pred_check
        %p290 = pneg %p189
      $region38: #{nerf_forward.1} parent=11 // pred_check_branch
        %292 = sbr.rel (%p290) target = $region40
      $region39: #{nerf_forward.1} parent=11 // pred_region
        _
      $region40: #{nerf_forward.1} parent=11 // pred_fallthru
        _
      // Predicated region
      $region41: #{nerf_forward.1} parent=11 // pred_check
        %p293 = pneg %p210
      $region42: #{nerf_forward.1} parent=11 // pred_check_branch
        %295 = sbr.rel (%p293) target = $region44
      $region43: #{nerf_forward.1} parent=11 // pred_region
        _
      $region44: #{nerf_forward.1} parent=11 // pred_fallthru
        _
      // Predicated region
      $region45: #{nerf_forward.1} parent=11 // pred_check
        %p296 = pneg %p231
      $region46: #{nerf_forward.1} parent=11 // pred_check_branch
        %298 = sbr.rel (%p296) target = $region48
      $region47: #{nerf_forward.1} parent=11 // pred_region
        _
      $region48: #{nerf_forward.1} parent=11 // pred_fallthru
        _
    $region12: #{nerf_forward.1} parent=5 // pred_fallthru
      _
    %p299 = scmp.lt.s32.totalorder %s16, 2
    // Predicated region
    $region49: #{nerf_forward.1} parent=5 // pred_check
      %p300 = pneg %p299
    $region50: #{nerf_forward.1} parent=5 // pred_check_branch
      %302 = sbr.rel (%p300) target = $region52
    $region51: #{nerf_forward.1} parent=5 // pred_region
      // Predicated region
      $region53: #{nerf_forward.1} parent=51 // pred_check
        %p303 = pneg %p36
      $region54: #{nerf_forward.1} parent=51 // pred_check_branch
        %305 = sbr.rel (%p303) target = $region56
      $region55: #{nerf_forward.1} parent=51 // pred_region
        %s306 = smul.u32 128, %s16
        %p307 = scmp.lt.s32.totalorder %s306, 255
        %s308 = scalar_select %p307, %s306, 255
        %s309 = smul.addr %s308, 8
        %s310 = scalar_lea.vmem %s0, %s309
        %s311 = smul.u32 128, %s16
      $region56: #{nerf_forward.1} parent=51 // pred_fallthru
        _
    $region52: #{nerf_forward.1} parent=5 // pred_fallthru
      _
    %p312 = scmp.le.s32.totalorder 1, %s16
    %p313 = scmp.lt.s32.totalorder %s16, 3
    %p314 = pnand %p312, %p313
    %p315 = pneg %p314
    // Predicated region
    $region57: #{nerf_forward.1} parent=5 // pred_check
      _
    $region58: #{nerf_forward.1} parent=5 // pred_check_branch
      %317 = sbr.rel (%p314) target = $region60
    $region59: #{nerf_forward.1} parent=5 // pred_region
      %s318 = ssub.s32 %s16, 1
      %s319 = smul.u32 128, %s21
      %p320 = scmp.lt.s32.totalorder %s319, 255
      %s321 = scalar_select %p320, %s319, 255
      %s322 = smul.addr %s321, 8
      %s323 = scalar_lea.vmem %s0, %s322
      %p324 = pneg %p42
      %p325 = pneg %p39
      %p326 = pneg %p63
      %p327 = pneg %p60
      %p328 = pneg %p84
      %p329 = pneg %p81
      %p330 = pneg %p105
      %p331 = pneg %p102
      %p332 = pneg %p126
      %p333 = pneg %p123
      %p334 = pneg %p147
      %p335 = pneg %p144
      %p336 = pneg %p168
      %p337 = pneg %p165
      %p338 = pneg %p189
      %p339 = pneg %p186
      %p340 = pneg %p210
      %p341 = pneg %p207
      %p342 = pneg %p231
      %p343 = pneg %p228
      %p344 = pneg %p257
      %p345 = pneg %p254
      %s346 = smul.u32 128, %s21
      %p347 = scmp.lt.s32.totalorder %s346, 255
      %s348 = scalar_select %p347, %s346, 255
      %s349 = smul.addr %s348, 8
      %s350 = scalar_lea.vmem %s10, %s349
      %s351 = smul.u32 128, %s21
      %p352 = scmp.lt.s32.totalorder %s351, 255
      %s353 = scalar_select %p352, %s351, 255
      %s354 = smul.addr %s353, 8
      %s355 = scalar_lea.vmem %s0, %s354
      %s356 = smul.u32 128, %s21
      %s357 = smul.u32 128, %s21
      %p358 = scmp.lt.s32.totalorder %s357, 255
      %s359 = scalar_select %p358, %s357, 255
      %s360 = smul.addr %s359, 8
      %s361 = scalar_lea.vmem %s10, %s360
      %s362 = smul.u32 128, %s21
      %v363 = vld [vmem:[%s355] sm:$0xff]
      %v364 = vld [vmem:[%s355 + $0x8] sm:$0xff]
      %v365 = vld [vmem:[%s355 + $0x10] sm:$0xff]
      %v366 = vld [vmem:[%s355 + $0x18] sm:$0xff]
      %v367 = vld [vmem:[%s355 + $0x20] sm:$0xff]
      %v368 = vld [vmem:[%s355 + $0x28] sm:$0xff]
      %v369 = vld [vmem:[%s355 + $0x30] sm:$0xff]
      %v370 = vld [vmem:[%s355 + $0x38] sm:$0xff]
      %v371 = vld [vmem:[%s355 + $0x40] sm:$0xff]
      %v372 = vld [vmem:[%s355 + $0x48] sm:$0xff]
      %v373 = vld [vmem:[%s355 + $0x50] sm:$0xff]
      %v374 = vld [vmem:[%s355 + $0x58] sm:$0xff]
      %v375 = vld [vmem:[%s355 + $0x60] sm:$0xff]
      %v376 = vld [vmem:[%s355 + $0x68] sm:$0xff]
      %v377 = vld [vmem:[%s355 + $0x70] sm:$0xff]
      %v378 = vld [vmem:[%s355 + $0x78] sm:$0xff]
      %v379 = vld [vmem:[%s355 + $0x80] sm:$0xff]
      %v380 = vld [vmem:[%s355 + $0x88] sm:$0xff]
      %v381 = vld [vmem:[%s355 + $0x90] sm:$0xff]
      %v382 = vld [vmem:[%s355 + $0x98] sm:$0xff]
      %v383 = vld [vmem:[%s355 + $0xa0] sm:$0xff]
      %v384 = vld [vmem:[%s355 + $0xa8] sm:$0xff]
      %v385 = vld [vmem:[%s355 + $0xb0] sm:$0xff]
      %v386 = vld [vmem:[%s355 + $0xb8] sm:$0xff]
      %v387 = vld [vmem:[%s355 + $0xc0] sm:$0xff]
      %v388 = vld [vmem:[%s355 + $0xc8] sm:$0xff]
      %v389 = vld [vmem:[%s355 + $0xd0] sm:$0xff]
      %v390 = vld [vmem:[%s355 + $0xd8] sm:$0xff]
      %v391 = vld [vmem:[%s355 + $0xe0] sm:$0xff]
      %v392 = vld [vmem:[%s355 + $0xe8] sm:$0xff]
      %v393 = vld [vmem:[%s355 + $0xf0] sm:$0xff]
      %v394 = vld [vmem:[%s355 + $0xf8] sm:$0xff]
      %v395 = vld [vmem:[%s355 + $0x100] sm:$0xff]
      %v396 = vld [vmem:[%s355 + $0x108] sm:$0xff]
      %v397 = vld [vmem:[%s355 + $0x110] sm:$0xff]
      %v398 = vld [vmem:[%s355 + $0x118] sm:$0xff]
      %v399 = vld [vmem:[%s355 + $0x120] sm:$0xff]
      %v400 = vld [vmem:[%s355 + $0x128] sm:$0xff]
      %v401 = vld [vmem:[%s355 + $0x130] sm:$0xff]
      %v402 = vld [vmem:[%s355 + $0x138] sm:$0xff]
      %v403 = vld [vmem:[%s355 + $0x140] sm:$0xff]
      %v404 = vld [vmem:[%s355 + $0x148] sm:$0xff]
      %v405 = vld [vmem:[%s355 + $0x150] sm:$0xff]
      %v406 = vld [vmem:[%s355 + $0x158] sm:$0xff]
      %v407 = vld [vmem:[%s355 + $0x160] sm:$0xff]
      %v408 = vld [vmem:[%s355 + $0x168] sm:$0xff]
      %v409 = vld [vmem:[%s355 + $0x170] sm:$0xff]
      %v410 = vld [vmem:[%s355 + $0x178] sm:$0xff]
      %v411 = vld [vmem:[%s355 + $0x180] sm:$0xff]
      %v412 = vld [vmem:[%s355 + $0x188] sm:$0xff]
      %v413 = vld [vmem:[%s355 + $0x190] sm:$0xff]
      %v414 = vld [vmem:[%s355 + $0x198] sm:$0xff]
      %v415 = vld [vmem:[%s355 + $0x1a0] sm:$0xff]
      %v416 = vld [vmem:[%s355 + $0x1a8] sm:$0xff]
      %v417 = vld [vmem:[%s355 + $0x1b0] sm:$0xff]
      %v418 = vld [vmem:[%s355 + $0x1b8] sm:$0xff]
      %v419 = vld [vmem:[%s355 + $0x1c0] sm:$0xff]
      %v420 = vld [vmem:[%s355 + $0x1c8] sm:$0xff]
      %v421 = vld [vmem:[%s355 + $0x1d0] sm:$0xff]
      %v422 = vld [vmem:[%s355 + $0x1d8] sm:$0xff]
      %v423 = vld [vmem:[%s355 + $0x1e0] sm:$0xff]
      %v424 = vld [vmem:[%s355 + $0x1e8] sm:$0xff]
      %v425 = vld [vmem:[%s355 + $0x1f0] sm:$0xff]
      %v426 = vld [vmem:[%s355 + $0x1f8] sm:$0xff]
      %v427 = vld [vmem:[%s355 + $0x200] sm:$0xff]
      %v428 = vld [vmem:[%s355 + $0x208] sm:$0xff]
      %v429 = vld [vmem:[%s355 + $0x210] sm:$0xff]
      %v430 = vld [vmem:[%s355 + $0x218] sm:$0xff]
      %v431 = vld [vmem:[%s355 + $0x220] sm:$0xff]
      %v432 = vld [vmem:[%s355 + $0x228] sm:$0xff]
      %v433 = vld [vmem:[%s355 + $0x230] sm:$0xff]
      %v434 = vld [vmem:[%s355 + $0x238] sm:$0xff]
      %v435 = vld [vmem:[%s355 + $0x240] sm:$0xff]
      %v436 = vld [vmem:[%s355 + $0x248] sm:$0xff]
      %v437 = vld [vmem:[%s355 + $0x250] sm:$0xff]
      %v438 = vld [vmem:[%s355 + $0x258] sm:$0xff]
      %v439 = vld [vmem:[%s355 + $0x260] sm:$0xff]
      %v440 = vld [vmem:[%s355 + $0x268] sm:$0xff]
      %v441 = vld [vmem:[%s355 + $0x270] sm:$0xff]
      %v442 = vld [vmem:[%s355 + $0x278] sm:$0xff]
      %v443 = vld [vmem:[%s355 + $0x280] sm:$0xff]
      %v444 = vld [vmem:[%s355 + $0x288] sm:$0xff]
      %v445 = vld [vmem:[%s355 + $0x290] sm:$0xff]
      %v446 = vld [vmem:[%s355 + $0x298] sm:$0xff]
      %v447 = vld [vmem:[%s355 + $0x2a0] sm:$0xff]
      %v448 = vld [vmem:[%s355 + $0x2a8] sm:$0xff]
      %v449 = vld [vmem:[%s355 + $0x2b0] sm:$0xff]
      %v450 = vld [vmem:[%s355 + $0x2b8] sm:$0xff]
      %v451 = vld [vmem:[%s355 + $0x2c0] sm:$0xff]
      %v452 = vld [vmem:[%s355 + $0x2c8] sm:$0xff]
      %v453 = vld [vmem:[%s355 + $0x2d0] sm:$0xff]
      %v454 = vld [vmem:[%s355 + $0x2d8] sm:$0xff]
      %v455 = vld [vmem:[%s355 + $0x2e0] sm:$0xff]
      %v456 = vld [vmem:[%s355 + $0x2e8] sm:$0xff]
      %v457 = vld [vmem:[%s355 + $0x2f0] sm:$0xff]
      %v458 = vld [vmem:[%s355 + $0x2f8] sm:$0xff]
      %v459 = vld [vmem:[%s355 + $0x300] sm:$0xff]
      %v460 = vld [vmem:[%s355 + $0x308] sm:$0xff]
      %v461 = vld [vmem:[%s355 + $0x310] sm:$0xff]
      %v462 = vld [vmem:[%s355 + $0x318] sm:$0xff]
      %v463 = vld [vmem:[%s355 + $0x320] sm:$0xff]
      %v464 = vld [vmem:[%s355 + $0x328] sm:$0xff]
      %v465 = vld [vmem:[%s355 + $0x330] sm:$0xff]
      %v466 = vld [vmem:[%s355 + $0x338] sm:$0xff]
      %v467 = vld [vmem:[%s355 + $0x340] sm:$0xff]
      %v468 = vld [vmem:[%s355 + $0x348] sm:$0xff]
      %v469 = vld [vmem:[%s355 + $0x350] sm:$0xff]
      %v470 = vld [vmem:[%s355 + $0x358] sm:$0xff]
      %v471 = vld [vmem:[%s355 + $0x360] sm:$0xff]
      %v472 = vld [vmem:[%s355 + $0x368] sm:$0xff]
      %v473 = vld [vmem:[%s355 + $0x370] sm:$0xff]
      %v474 = vld [vmem:[%s355 + $0x378] sm:$0xff]
      %v475 = vld [vmem:[%s355 + $0x380] sm:$0xff]
      %v476 = vld [vmem:[%s355 + $0x388] sm:$0xff]
      %v477 = vld [vmem:[%s355 + $0x390] sm:$0xff]
      %v478 = vld [vmem:[%s355 + $0x398] sm:$0xff]
      %v479 = vld [vmem:[%s355 + $0x3a0] sm:$0xff]
      %v480 = vld [vmem:[%s355 + $0x3a8] sm:$0xff]
      %v481 = vld [vmem:[%s355 + $0x3b0] sm:$0xff]
      %v482 = vld [vmem:[%s355 + $0x3b8] sm:$0xff]
      %v483 = vld [vmem:[%s355 + $0x3c0] sm:$0xff]
      %v484 = vld [vmem:[%s355 + $0x3c8] sm:$0xff]
      %v485 = vld [vmem:[%s355 + $0x3d0] sm:$0xff]
      %v486 = vld [vmem:[%s355 + $0x3d8] sm:$0xff]
      %v487 = vld [vmem:[%s355 + $0x3e0] sm:$0xff]
      %v488 = vld [vmem:[%s355 + $0x3e8] sm:$0xff]
      %v489 = vld [vmem:[%s355 + $0x3f0] sm:$0xff]
      %v490 = vld [vmem:[%s355 + $0x3f8] sm:$0xff]
      %v491 = vld [vmem:[%s1] sm:$0x3f]
      %v492 = vld [vmem:[%s1 + $0x8] sm:$0x3f]
      %vm493 = vcmask 48128
      %v495 = vsel %vm493, %v363, 0
      %v498 = vsel %vm493, %v364, 0
      %v501 = vsel %vm493, %v365, 0
      %v504 = vsel %vm493, %v366, 0
      %v507 = vsel %vm493, %v367, 0
      %v510 = vsel %vm493, %v368, 0
      %v513 = vsel %vm493, %v369, 0
      %v516 = vsel %vm493, %v370, 0
      %v519 = vsel %vm493, %v371, 0
      %v522 = vsel %vm493, %v372, 0
      %v525 = vsel %vm493, %v373, 0
      %v528 = vsel %vm493, %v374, 0
      %v531 = vsel %vm493, %v375, 0
      %v534 = vsel %vm493, %v376, 0
      %v537 = vsel %vm493, %v377, 0
      %v540 = vsel %vm493, %v378, 0
      %v543 = vsel %vm493, %v379, 0
      %v546 = vsel %vm493, %v380, 0
      %v549 = vsel %vm493, %v381, 0
      %v552 = vsel %vm493, %v382, 0
      %v555 = vsel %vm493, %v383, 0
      %v558 = vsel %vm493, %v384, 0
      %v561 = vsel %vm493, %v385, 0
      %v564 = vsel %vm493, %v386, 0
      %v567 = vsel %vm493, %v387, 0
      %v570 = vsel %vm493, %v388, 0
      %v573 = vsel %vm493, %v389, 0
      %v576 = vsel %vm493, %v390, 0
      %v579 = vsel %vm493, %v391, 0
      %v582 = vsel %vm493, %v392, 0
      %v585 = vsel %vm493, %v393, 0
      %v588 = vsel %vm493, %v394, 0
      %v591 = vsel %vm493, %v395, 0
      %v594 = vsel %vm493, %v396, 0
      %v597 = vsel %vm493, %v397, 0
      %v600 = vsel %vm493, %v398, 0
      %v603 = vsel %vm493, %v399, 0
      %v606 = vsel %vm493, %v400, 0
      %v609 = vsel %vm493, %v401, 0
      %v612 = vsel %vm493, %v402, 0
      %v615 = vsel %vm493, %v403, 0
      %v618 = vsel %vm493, %v404, 0
      %v621 = vsel %vm493, %v405, 0
      %v624 = vsel %vm493, %v406, 0
      %v627 = vsel %vm493, %v407, 0
      %v630 = vsel %vm493, %v408, 0
      %v633 = vsel %vm493, %v409, 0
      %v636 = vsel %vm493, %v410, 0
      %v639 = vsel %vm493, %v411, 0
      %v642 = vsel %vm493, %v412, 0
      %v645 = vsel %vm493, %v413, 0
      %v648 = vsel %vm493, %v414, 0
      %v651 = vsel %vm493, %v415, 0
      %v654 = vsel %vm493, %v416, 0
      %v657 = vsel %vm493, %v417, 0
      %v660 = vsel %vm493, %v418, 0
      %v663 = vsel %vm493, %v419, 0
      %v666 = vsel %vm493, %v420, 0
      %v669 = vsel %vm493, %v421, 0
      %v672 = vsel %vm493, %v422, 0
      %v675 = vsel %vm493, %v423, 0
      %v678 = vsel %vm493, %v424, 0
      %v681 = vsel %vm493, %v425, 0
      %v684 = vsel %vm493, %v426, 0
      %v687 = vsel %vm493, %v427, 0
      %v690 = vsel %vm493, %v428, 0
      %v693 = vsel %vm493, %v429, 0
      %v696 = vsel %vm493, %v430, 0
      %v699 = vsel %vm493, %v431, 0
      %v702 = vsel %vm493, %v432, 0
      %v705 = vsel %vm493, %v433, 0
      %v708 = vsel %vm493, %v434, 0
      %v711 = vsel %vm493, %v435, 0
      %v714 = vsel %vm493, %v436, 0
      %v717 = vsel %vm493, %v437, 0
      %v720 = vsel %vm493, %v438, 0
      %v723 = vsel %vm493, %v439, 0
      %v726 = vsel %vm493, %v440, 0
      %v729 = vsel %vm493, %v441, 0
      %v732 = vsel %vm493, %v442, 0
      %v735 = vsel %vm493, %v443, 0
      %v738 = vsel %vm493, %v444, 0
      %v741 = vsel %vm493, %v445, 0
      %v744 = vsel %vm493, %v446, 0
      %v747 = vsel %vm493, %v447, 0
      %v750 = vsel %vm493, %v448, 0
      %v753 = vsel %vm493, %v449, 0
      %v756 = vsel %vm493, %v450, 0
      %v759 = vsel %vm493, %v451, 0
      %v762 = vsel %vm493, %v452, 0
      %v765 = vsel %vm493, %v453, 0
      %v768 = vsel %vm493, %v454, 0
      %v771 = vsel %vm493, %v455, 0
      %v774 = vsel %vm493, %v456, 0
      %v777 = vsel %vm493, %v457, 0
      %v780 = vsel %vm493, %v458, 0
      %v783 = vsel %vm493, %v459, 0
      %v786 = vsel %vm493, %v460, 0
      %v789 = vsel %vm493, %v461, 0
      %v792 = vsel %vm493, %v462, 0
      %v795 = vsel %vm493, %v463, 0
      %v798 = vsel %vm493, %v464, 0
      %v801 = vsel %vm493, %v465, 0
      %v804 = vsel %vm493, %v466, 0
      %v807 = vsel %vm493, %v467, 0
      %v810 = vsel %vm493, %v468, 0
      %v813 = vsel %vm493, %v469, 0
      %v816 = vsel %vm493, %v470, 0
      %v819 = vsel %vm493, %v471, 0
      %v822 = vsel %vm493, %v472, 0
      %v825 = vsel %vm493, %v473, 0
      %v828 = vsel %vm493, %v474, 0
      %v831 = vsel %vm493, %v475, 0
      %v834 = vsel %vm493, %v476, 0
      %v837 = vsel %vm493, %v477, 0
      %v840 = vsel %vm493, %v478, 0
      %v843 = vsel %vm493, %v479, 0
      %v846 = vsel %vm493, %v480, 0
      %v849 = vsel %vm493, %v481, 0
      %v852 = vsel %vm493, %v482, 0
      %v855 = vsel %vm493, %v483, 0
      %v858 = vsel %vm493, %v484, 0
      %v861 = vsel %vm493, %v485, 0
      %v864 = vsel %vm493, %v486, 0
      %v867 = vsel %vm493, %v487, 0
      %v870 = vsel %vm493, %v488, 0
      %v873 = vsel %vm493, %v489, 0
      %v876 = vsel %vm493, %v490, 0
      %vm878 = vcmask 1045504
      %v880 = vsel %vm878, %v491, 0
      %v883 = vsel %vm878, %v492, 0
      %885 = vmatpush.msra.mxu0 0.0
      %886 = vmatpush.msra.mxu0 0.0
      %887 = vmatpush.msra.mxu0 0.0
      %888 = vmatpush.msra.mxu0 0.0
      %889 = vmatpush.msra.mxu0 0.0
      %890 = vmatpush.msra.mxu0 0.0
      %891 = vmatpush.msra.mxu0 0.0
      %892 = vmatpush.msra.mxu0 0.0
      %893 = vmatpush.msra.mxu0 0.0
      %894 = vmatpush.msra.mxu0 0.0
      %895 = vmatpush.msra.mxu0 0.0
      %896 = vmatpush.msra.mxu0 0.0
      %897 = vmatpush.msra.mxu0 0.0
      %898 = vmatpush.msra.mxu0 0.0
      %899 = vmatpush.msra.mxu0 0.0
      %900 = vmatpush.msra.mxu0 %v880
      %901 = vmatmul.f32.gmra.mxu0 %v495
      %v902 = vpop.f32.mrf.mxu0
      %v903 = vadd.f32 0.0, %v902
      %904 = vmatmul.f32.gmra.mxu0 %v498
      %v905 = vpop.f32.mrf.mxu0
      %v906 = vadd.f32 0.0, %v905
      %907 = vmatmul.f32.gmra.mxu0 %v501
      %v908 = vpop.f32.mrf.mxu0
      %v909 = vadd.f32 0.0, %v908
      %910 = vmatmul.f32.gmra.mxu0 %v504
      %v911 = vpop.f32.mrf.mxu0
      %v912 = vadd.f32 0.0, %v911
      %913 = vmatmul.f32.gmra.mxu0 %v507
      %v914 = vpop.f32.mrf.mxu0
      %v915 = vadd.f32 0.0, %v914
      %916 = vmatmul.f32.gmra.mxu0 %v510
      %v917 = vpop.f32.mrf.mxu0
      %v918 = vadd.f32 0.0, %v917
      %919 = vmatmul.f32.gmra.mxu0 %v513
      %v920 = vpop.f32.mrf.mxu0
      %v921 = vadd.f32 0.0, %v920
      %922 = vmatmul.f32.gmra.mxu0 %v516
      %v923 = vpop.f32.mrf.mxu0
      %v924 = vadd.f32 0.0, %v923
      %925 = vmatmul.f32.gmra.mxu0 %v519
      %v926 = vpop.f32.mrf.mxu0
      %v927 = vadd.f32 0.0, %v926
      %928 = vmatmul.f32.gmra.mxu0 %v522
      %v929 = vpop.f32.mrf.mxu0
      %v930 = vadd.f32 0.0, %v929
      %931 = vmatmul.f32.gmra.mxu0 %v525
      %v932 = vpop.f32.mrf.mxu0
      %v933 = vadd.f32 0.0, %v932
      %934 = vmatmul.f32.gmra.mxu0 %v528
      %v935 = vpop.f32.mrf.mxu0
      %v936 = vadd.f32 0.0, %v935
      %937 = vmatmul.f32.gmra.mxu0 %v531
      %v938 = vpop.f32.mrf.mxu0
      %v939 = vadd.f32 0.0, %v938
      %940 = vmatmul.f32.gmra.mxu0 %v534
      %v941 = vpop.f32.mrf.mxu0
      %v942 = vadd.f32 0.0, %v941
      %943 = vmatmul.f32.gmra.mxu0 %v537
      %v944 = vpop.f32.mrf.mxu0
      %v945 = vadd.f32 0.0, %v944
      %946 = vmatmul.f32.gmra.mxu0 %v540
      %v947 = vpop.f32.mrf.mxu0
      %v948 = vadd.f32 0.0, %v947
      %949 = vmatmul.f32.gmra.mxu0 %v543
      %v950 = vpop.f32.mrf.mxu0
      %v951 = vadd.f32 0.0, %v950
      %952 = vmatmul.f32.gmra.mxu0 %v546
      %v953 = vpop.f32.mrf.mxu0
      %v954 = vadd.f32 0.0, %v953
      %955 = vmatmul.f32.gmra.mxu0 %v549
      %v956 = vpop.f32.mrf.mxu0
      %v957 = vadd.f32 0.0, %v956
      %958 = vmatmul.f32.gmra.mxu0 %v552
      %v959 = vpop.f32.mrf.mxu0
      %v960 = vadd.f32 0.0, %v959
      %961 = vmatmul.f32.gmra.mxu0 %v555
      %v962 = vpop.f32.mrf.mxu0
      %v963 = vadd.f32 0.0, %v962
      %964 = vmatmul.f32.gmra.mxu0 %v558
      %v965 = vpop.f32.mrf.mxu0
      %v966 = vadd.f32 0.0, %v965
      %967 = vmatmul.f32.gmra.mxu0 %v561
      %v968 = vpop.f32.mrf.mxu0
      %v969 = vadd.f32 0.0, %v968
      %970 = vmatmul.f32.gmra.mxu0 %v564
      %v971 = vpop.f32.mrf.mxu0
      %v972 = vadd.f32 0.0, %v971
      %973 = vmatmul.f32.gmra.mxu0 %v567
      %v974 = vpop.f32.mrf.mxu0
      %v975 = vadd.f32 0.0, %v974
      %976 = vmatmul.f32.gmra.mxu0 %v570
      %v977 = vpop.f32.mrf.mxu0
      %v978 = vadd.f32 0.0, %v977
      %979 = vmatmul.f32.gmra.mxu0 %v573
      %v980 = vpop.f32.mrf.mxu0
      %v981 = vadd.f32 0.0, %v980
      %982 = vmatmul.f32.gmra.mxu0 %v576
      %v983 = vpop.f32.mrf.mxu0
      %v984 = vadd.f32 0.0, %v983
      %985 = vmatmul.f32.gmra.mxu0 %v579
      %v986 = vpop.f32.mrf.mxu0
      %v987 = vadd.f32 0.0, %v986
      %988 = vmatmul.f32.gmra.mxu0 %v582
      %v989 = vpop.f32.mrf.mxu0
      %v990 = vadd.f32 0.0, %v989
      %991 = vmatmul.f32.gmra.mxu0 %v585
      %v992 = vpop.f32.mrf.mxu0
      %v993 = vadd.f32 0.0, %v992
      %994 = vmatmul.f32.gmra.mxu0 %v588
      %v995 = vpop.f32.mrf.mxu0
      %v996 = vadd.f32 0.0, %v995
      %997 = vmatmul.f32.gmra.mxu0 %v591
      %v998 = vpop.f32.mrf.mxu0
      %v999 = vadd.f32 0.0, %v998
      %1000 = vmatmul.f32.gmra.mxu0 %v594
      %v1001 = vpop.f32.mrf.mxu0
      %v1002 = vadd.f32 0.0, %v1001
      %1003 = vmatmul.f32.gmra.mxu0 %v597
      %v1004 = vpop.f32.mrf.mxu0
      %v1005 = vadd.f32 0.0, %v1004
      %1006 = vmatmul.f32.gmra.mxu0 %v600
      %v1007 = vpop.f32.mrf.mxu0
      %v1008 = vadd.f32 0.0, %v1007
      %1009 = vmatmul.f32.gmra.mxu0 %v603
      %v1010 = vpop.f32.mrf.mxu0
      %v1011 = vadd.f32 0.0, %v1010
      %1012 = vmatmul.f32.gmra.mxu0 %v606
      %v1013 = vpop.f32.mrf.mxu0
      %v1014 = vadd.f32 0.0, %v1013
      %1015 = vmatmul.f32.gmra.mxu0 %v609
      %v1016 = vpop.f32.mrf.mxu0
      %v1017 = vadd.f32 0.0, %v1016
      %1018 = vmatmul.f32.gmra.mxu0 %v612
      %v1019 = vpop.f32.mrf.mxu0
      %v1020 = vadd.f32 0.0, %v1019
      %1021 = vmatmul.f32.gmra.mxu0 %v615
      %v1022 = vpop.f32.mrf.mxu0
      %v1023 = vadd.f32 0.0, %v1022
      %1024 = vmatmul.f32.gmra.mxu0 %v618
      %v1025 = vpop.f32.mrf.mxu0
      %v1026 = vadd.f32 0.0, %v1025
      %1027 = vmatmul.f32.gmra.mxu0 %v621
      %v1028 = vpop.f32.mrf.mxu0
      %v1029 = vadd.f32 0.0, %v1028
      %1030 = vmatmul.f32.gmra.mxu0 %v624
      %v1031 = vpop.f32.mrf.mxu0
      %v1032 = vadd.f32 0.0, %v1031
      %1033 = vmatmul.f32.gmra.mxu0 %v627
      %v1034 = vpop.f32.mrf.mxu0
      %v1035 = vadd.f32 0.0, %v1034
      %1036 = vmatmul.f32.gmra.mxu0 %v630
      %v1037 = vpop.f32.mrf.mxu0
      %v1038 = vadd.f32 0.0, %v1037
      %1039 = vmatmul.f32.gmra.mxu0 %v633
      %v1040 = vpop.f32.mrf.mxu0
      %v1041 = vadd.f32 0.0, %v1040
      %1042 = vmatmul.f32.gmra.mxu0 %v636
      %v1043 = vpop.f32.mrf.mxu0
      %v1044 = vadd.f32 0.0, %v1043
      %1045 = vmatmul.f32.gmra.mxu0 %v639
      %v1046 = vpop.f32.mrf.mxu0
      %v1047 = vadd.f32 0.0, %v1046
      %1048 = vmatmul.f32.gmra.mxu0 %v642
      %v1049 = vpop.f32.mrf.mxu0
      %v1050 = vadd.f32 0.0, %v1049
      %1051 = vmatmul.f32.gmra.mxu0 %v645
      %v1052 = vpop.f32.mrf.mxu0
      %v1053 = vadd.f32 0.0, %v1052
      %1054 = vmatmul.f32.gmra.mxu0 %v648
      %v1055 = vpop.f32.mrf.mxu0
      %v1056 = vadd.f32 0.0, %v1055
      %1057 = vmatmul.f32.gmra.mxu0 %v651
      %v1058 = vpop.f32.mrf.mxu0
      %v1059 = vadd.f32 0.0, %v1058
      %1060 = vmatmul.f32.gmra.mxu0 %v654
      %v1061 = vpop.f32.mrf.mxu0
      %v1062 = vadd.f32 0.0, %v1061
      %1063 = vmatmul.f32.gmra.mxu0 %v657
      %v1064 = vpop.f32.mrf.mxu0
      %v1065 = vadd.f32 0.0, %v1064
      %1066 = vmatmul.f32.gmra.mxu0 %v660
      %v1067 = vpop.f32.mrf.mxu0
      %v1068 = vadd.f32 0.0, %v1067
      %1069 = vmatmul.f32.gmra.mxu0 %v663
      %v1070 = vpop.f32.mrf.mxu0
      %v1071 = vadd.f32 0.0, %v1070
      %1072 = vmatmul.f32.gmra.mxu0 %v666
      %v1073 = vpop.f32.mrf.mxu0
      %v1074 = vadd.f32 0.0, %v1073
      %1075 = vmatmul.f32.gmra.mxu0 %v669
      %v1076 = vpop.f32.mrf.mxu0
      %v1077 = vadd.f32 0.0, %v1076
      %1078 = vmatmul.f32.gmra.mxu0 %v672
      %v1079 = vpop.f32.mrf.mxu0
      %v1080 = vadd.f32 0.0, %v1079
      %1081 = vmatmul.f32.gmra.mxu0 %v675
      %v1082 = vpop.f32.mrf.mxu0
      %v1083 = vadd.f32 0.0, %v1082
      %1084 = vmatmul.f32.gmra.mxu0 %v678
      %v1085 = vpop.f32.mrf.mxu0
      %v1086 = vadd.f32 0.0, %v1085
      %1087 = vmatmul.f32.gmra.mxu0 %v681
      %v1088 = vpop.f32.mrf.mxu0
      %v1089 = vadd.f32 0.0, %v1088
      %1090 = vmatmul.f32.gmra.mxu0 %v684
      %v1091 = vpop.f32.mrf.mxu0
      %v1092 = vadd.f32 0.0, %v1091
      %1093 = vmatmul.f32.gmra.mxu0 %v687
      %v1094 = vpop.f32.mrf.mxu0
      %v1095 = vadd.f32 0.0, %v1094
      %1096 = vmatmul.f32.gmra.mxu0 %v690
      %v1097 = vpop.f32.mrf.mxu0
      %v1098 = vadd.f32 0.0, %v1097
      %1099 = vmatmul.f32.gmra.mxu0 %v693
      %v1100 = vpop.f32.mrf.mxu0
      %v1101 = vadd.f32 0.0, %v1100
      %1102 = vmatmul.f32.gmra.mxu0 %v696
      %v1103 = vpop.f32.mrf.mxu0
      %v1104 = vadd.f32 0.0, %v1103
      %1105 = vmatmul.f32.gmra.mxu0 %v699
      %v1106 = vpop.f32.mrf.mxu0
      %v1107 = vadd.f32 0.0, %v1106
      %1108 = vmatmul.f32.gmra.mxu0 %v702
      %v1109 = vpop.f32.mrf.mxu0
      %v1110 = vadd.f32 0.0, %v1109
      %1111 = vmatmul.f32.gmra.mxu0 %v705
      %v1112 = vpop.f32.mrf.mxu0
      %v1113 = vadd.f32 0.0, %v1112
      %1114 = vmatmul.f32.gmra.mxu0 %v708
      %v1115 = vpop.f32.mrf.mxu0
      %v1116 = vadd.f32 0.0, %v1115
      %1117 = vmatmul.f32.gmra.mxu0 %v711
      %v1118 = vpop.f32.mrf.mxu0
      %v1119 = vadd.f32 0.0, %v1118
      %1120 = vmatmul.f32.gmra.mxu0 %v714
      %v1121 = vpop.f32.mrf.mxu0
      %v1122 = vadd.f32 0.0, %v1121
      %1123 = vmatmul.f32.gmra.mxu0 %v717
      %v1124 = vpop.f32.mrf.mxu0
      %v1125 = vadd.f32 0.0, %v1124
      %1126 = vmatmul.f32.gmra.mxu0 %v720
      %v1127 = vpop.f32.mrf.mxu0
      %v1128 = vadd.f32 0.0, %v1127
      %1129 = vmatmul.f32.gmra.mxu0 %v723
      %v1130 = vpop.f32.mrf.mxu0
      %v1131 = vadd.f32 0.0, %v1130
      %1132 = vmatmul.f32.gmra.mxu0 %v726
      %v1133 = vpop.f32.mrf.mxu0
      %v1134 = vadd.f32 0.0, %v1133
      %1135 = vmatmul.f32.gmra.mxu0 %v729
      %v1136 = vpop.f32.mrf.mxu0
      %v1137 = vadd.f32 0.0, %v1136
      %1138 = vmatmul.f32.gmra.mxu0 %v732
      %v1139 = vpop.f32.mrf.mxu0
      %v1140 = vadd.f32 0.0, %v1139
      %1141 = vmatmul.f32.gmra.mxu0 %v735
      %v1142 = vpop.f32.mrf.mxu0
      %v1143 = vadd.f32 0.0, %v1142
      %1144 = vmatmul.f32.gmra.mxu0 %v738
      %v1145 = vpop.f32.mrf.mxu0
      %v1146 = vadd.f32 0.0, %v1145
      %1147 = vmatmul.f32.gmra.mxu0 %v741
      %v1148 = vpop.f32.mrf.mxu0
      %v1149 = vadd.f32 0.0, %v1148
      %1150 = vmatmul.f32.gmra.mxu0 %v744
      %v1151 = vpop.f32.mrf.mxu0
      %v1152 = vadd.f32 0.0, %v1151
      %1153 = vmatmul.f32.gmra.mxu0 %v747
      %v1154 = vpop.f32.mrf.mxu0
      %v1155 = vadd.f32 0.0, %v1154
      %1156 = vmatmul.f32.gmra.mxu0 %v750
      %v1157 = vpop.f32.mrf.mxu0
      %v1158 = vadd.f32 0.0, %v1157
      %1159 = vmatmul.f32.gmra.mxu0 %v753
      %v1160 = vpop.f32.mrf.mxu0
      %v1161 = vadd.f32 0.0, %v1160
      %1162 = vmatmul.f32.gmra.mxu0 %v756
      %v1163 = vpop.f32.mrf.mxu0
      %v1164 = vadd.f32 0.0, %v1163
      %1165 = vmatmul.f32.gmra.mxu0 %v759
      %v1166 = vpop.f32.mrf.mxu0
      %v1167 = vadd.f32 0.0, %v1166
      %1168 = vmatmul.f32.gmra.mxu0 %v762
      %v1169 = vpop.f32.mrf.mxu0
      %v1170 = vadd.f32 0.0, %v1169
      %1171 = vmatmul.f32.gmra.mxu0 %v765
      %v1172 = vpop.f32.mrf.mxu0
      %v1173 = vadd.f32 0.0, %v1172
      %1174 = vmatmul.f32.gmra.mxu0 %v768
      %v1175 = vpop.f32.mrf.mxu0
      %v1176 = vadd.f32 0.0, %v1175
      %1177 = vmatmul.f32.gmra.mxu0 %v771
      %v1178 = vpop.f32.mrf.mxu0
      %v1179 = vadd.f32 0.0, %v1178
      %1180 = vmatmul.f32.gmra.mxu0 %v774
      %v1181 = vpop.f32.mrf.mxu0
      %v1182 = vadd.f32 0.0, %v1181
      %1183 = vmatmul.f32.gmra.mxu0 %v777
      %v1184 = vpop.f32.mrf.mxu0
      %v1185 = vadd.f32 0.0, %v1184
      %1186 = vmatmul.f32.gmra.mxu0 %v780
      %v1187 = vpop.f32.mrf.mxu0
      %v1188 = vadd.f32 0.0, %v1187
      %1189 = vmatmul.f32.gmra.mxu0 %v783
      %v1190 = vpop.f32.mrf.mxu0
      %v1191 = vadd.f32 0.0, %v1190
      %1192 = vmatmul.f32.gmra.mxu0 %v786
      %v1193 = vpop.f32.mrf.mxu0
      %v1194 = vadd.f32 0.0, %v1193
      %1195 = vmatmul.f32.gmra.mxu0 %v789
      %v1196 = vpop.f32.mrf.mxu0
      %v1197 = vadd.f32 0.0, %v1196
      %1198 = vmatmul.f32.gmra.mxu0 %v792
      %v1199 = vpop.f32.mrf.mxu0
      %v1200 = vadd.f32 0.0, %v1199
      %1201 = vmatmul.f32.gmra.mxu0 %v795
      %v1202 = vpop.f32.mrf.mxu0
      %v1203 = vadd.f32 0.0, %v1202
      %1204 = vmatmul.f32.gmra.mxu0 %v798
      %v1205 = vpop.f32.mrf.mxu0
      %v1206 = vadd.f32 0.0, %v1205
      %1207 = vmatmul.f32.gmra.mxu0 %v801
      %v1208 = vpop.f32.mrf.mxu0
      %v1209 = vadd.f32 0.0, %v1208
      %1210 = vmatmul.f32.gmra.mxu0 %v804
      %v1211 = vpop.f32.mrf.mxu0
      %v1212 = vadd.f32 0.0, %v1211
      %1213 = vmatmul.f32.gmra.mxu0 %v807
      %v1214 = vpop.f32.mrf.mxu0
      %v1215 = vadd.f32 0.0, %v1214
      %1216 = vmatmul.f32.gmra.mxu0 %v810
      %v1217 = vpop.f32.mrf.mxu0
      %v1218 = vadd.f32 0.0, %v1217
      %1219 = vmatmul.f32.gmra.mxu0 %v813
      %v1220 = vpop.f32.mrf.mxu0
      %v1221 = vadd.f32 0.0, %v1220
      %1222 = vmatmul.f32.gmra.mxu0 %v816
      %v1223 = vpop.f32.mrf.mxu0
      %v1224 = vadd.f32 0.0, %v1223
      %1225 = vmatmul.f32.gmra.mxu0 %v819
      %v1226 = vpop.f32.mrf.mxu0
      %v1227 = vadd.f32 0.0, %v1226
      %1228 = vmatmul.f32.gmra.mxu0 %v822
      %v1229 = vpop.f32.mrf.mxu0
      %v1230 = vadd.f32 0.0, %v1229
      %1231 = vmatmul.f32.gmra.mxu0 %v825
      %v1232 = vpop.f32.mrf.mxu0
      %v1233 = vadd.f32 0.0, %v1232
      %1234 = vmatmul.f32.gmra.mxu0 %v828
      %v1235 = vpop.f32.mrf.mxu0
      %v1236 = vadd.f32 0.0, %v1235
      %1237 = vmatmul.f32.gmra.mxu0 %v831
      %v1238 = vpop.f32.mrf.mxu0
      %v1239 = vadd.f32 0.0, %v1238
      %1240 = vmatmul.f32.gmra.mxu0 %v834
      %v1241 = vpop.f32.mrf.mxu0
      %v1242 = vadd.f32 0.0, %v1241
      %1243 = vmatmul.f32.gmra.mxu0 %v837
      %v1244 = vpop.f32.mrf.mxu0
      %v1245 = vadd.f32 0.0, %v1244
      %1246 = vmatmul.f32.gmra.mxu0 %v840
      %v1247 = vpop.f32.mrf.mxu0
      %v1248 = vadd.f32 0.0, %v1247
      %1249 = vmatmul.f32.gmra.mxu0 %v843
      %v1250 = vpop.f32.mrf.mxu0
      %v1251 = vadd.f32 0.0, %v1250
      %1252 = vmatmul.f32.gmra.mxu0 %v846
      %v1253 = vpop.f32.mrf.mxu0
      %v1254 = vadd.f32 0.0, %v1253
      %1255 = vmatmul.f32.gmra.mxu0 %v849
      %v1256 = vpop.f32.mrf.mxu0
      %v1257 = vadd.f32 0.0, %v1256
      %1258 = vmatmul.f32.gmra.mxu0 %v852
      %v1259 = vpop.f32.mrf.mxu0
      %v1260 = vadd.f32 0.0, %v1259
      %1261 = vmatmul.f32.gmra.mxu0 %v855
      %v1262 = vpop.f32.mrf.mxu0
      %v1263 = vadd.f32 0.0, %v1262
      %1264 = vmatmul.f32.gmra.mxu0 %v858
      %v1265 = vpop.f32.mrf.mxu0
      %v1266 = vadd.f32 0.0, %v1265
      %1267 = vmatmul.f32.gmra.mxu0 %v861
      %v1268 = vpop.f32.mrf.mxu0
      %v1269 = vadd.f32 0.0, %v1268
      %1270 = vmatmul.f32.gmra.mxu0 %v864
      %v1271 = vpop.f32.mrf.mxu0
      %v1272 = vadd.f32 0.0, %v1271
      %1273 = vmatmul.f32.gmra.mxu0 %v867
      %v1274 = vpop.f32.mrf.mxu0
      %v1275 = vadd.f32 0.0, %v1274
      %1276 = vmatmul.f32.gmra.mxu0 %v870
      %v1277 = vpop.f32.mrf.mxu0
      %v1278 = vadd.f32 0.0, %v1277
      %1279 = vmatmul.f32.gmra.mxu0 %v873
      %v1280 = vpop.f32.mrf.mxu0
      %v1281 = vadd.f32 0.0, %v1280
      %1282 = vmatmul.f32.gmra.mxu0 %v876
      %v1283 = vpop.f32.mrf.mxu0
      %v1284 = vadd.f32 0.0, %v1283
      %1285 = vdwg.mxu0
      %1286 = vmatpush.msra.mxu0 0.0
      %1287 = vmatpush.msra.mxu0 0.0
      %1288 = vmatpush.msra.mxu0 0.0
      %1289 = vmatpush.msra.mxu0 0.0
      %1290 = vmatpush.msra.mxu0 0.0
      %1291 = vmatpush.msra.mxu0 0.0
      %1292 = vmatpush.msra.mxu0 0.0
      %1293 = vmatpush.msra.mxu0 0.0
      %1294 = vmatpush.msra.mxu0 0.0
      %1295 = vmatpush.msra.mxu0 0.0
      %1296 = vmatpush.msra.mxu0 0.0
      %1297 = vmatpush.msra.mxu0 0.0
      %1298 = vmatpush.msra.mxu0 0.0
      %1299 = vmatpush.msra.mxu0 0.0
      %1300 = vmatpush.msra.mxu0 0.0
      %1301 = vmatpush.msra.mxu0 %v883
      %1302 = vmatmul.f32.gmra.mxu0 %v495
      %v1303 = vpop.f32.mrf.mxu0
      %v1304 = vadd.f32 0.0, %v1303
      %1305 = vmatmul.f32.gmra.mxu0 %v498
      %v1306 = vpop.f32.mrf.mxu0
      %v1307 = vadd.f32 0.0, %v1306
      %1308 = vmatmul.f32.gmra.mxu0 %v501
      %v1309 = vpop.f32.mrf.mxu0
      %v1310 = vadd.f32 0.0, %v1309
      %1311 = vmatmul.f32.gmra.mxu0 %v504
      %v1312 = vpop.f32.mrf.mxu0
      %v1313 = vadd.f32 0.0, %v1312
      %1314 = vmatmul.f32.gmra.mxu0 %v507
      %v1315 = vpop.f32.mrf.mxu0
      %v1316 = vadd.f32 0.0, %v1315
      %1317 = vmatmul.f32.gmra.mxu0 %v510
      %v1318 = vpop.f32.mrf.mxu0
      %v1319 = vadd.f32 0.0, %v1318
      %1320 = vmatmul.f32.gmra.mxu0 %v513
      %v1321 = vpop.f32.mrf.mxu0
      %v1322 = vadd.f32 0.0, %v1321
      %1323 = vmatmul.f32.gmra.mxu0 %v516
      %v1324 = vpop.f32.mrf.mxu0
      %v1325 = vadd.f32 0.0, %v1324
      %1326 = vmatmul.f32.gmra.mxu0 %v519
      %v1327 = vpop.f32.mrf.mxu0
      %v1328 = vadd.f32 0.0, %v1327
      %1329 = vmatmul.f32.gmra.mxu0 %v522
      %v1330 = vpop.f32.mrf.mxu0
      %v1331 = vadd.f32 0.0, %v1330
      %1332 = vmatmul.f32.gmra.mxu0 %v525
      %v1333 = vpop.f32.mrf.mxu0
      %v1334 = vadd.f32 0.0, %v1333
      %1335 = vmatmul.f32.gmra.mxu0 %v528
      %v1336 = vpop.f32.mrf.mxu0
      %v1337 = vadd.f32 0.0, %v1336
      %1338 = vmatmul.f32.gmra.mxu0 %v531
      %v1339 = vpop.f32.mrf.mxu0
      %v1340 = vadd.f32 0.0, %v1339
      %1341 = vmatmul.f32.gmra.mxu0 %v534
      %v1342 = vpop.f32.mrf.mxu0
      %v1343 = vadd.f32 0.0, %v1342
      %1344 = vmatmul.f32.gmra.mxu0 %v537
      %v1345 = vpop.f32.mrf.mxu0
      %v1346 = vadd.f32 0.0, %v1345
      %1347 = vmatmul.f32.gmra.mxu0 %v540
      %v1348 = vpop.f32.mrf.mxu0
      %v1349 = vadd.f32 0.0, %v1348
      %1350 = vmatmul.f32.gmra.mxu0 %v543
      %v1351 = vpop.f32.mrf.mxu0
      %v1352 = vadd.f32 0.0, %v1351
      %1353 = vmatmul.f32.gmra.mxu0 %v546
      %v1354 = vpop.f32.mrf.mxu0
      %v1355 = vadd.f32 0.0, %v1354
      %1356 = vmatmul.f32.gmra.mxu0 %v549
      %v1357 = vpop.f32.mrf.mxu0
      %v1358 = vadd.f32 0.0, %v1357
      %1359 = vmatmul.f32.gmra.mxu0 %v552
      %v1360 = vpop.f32.mrf.mxu0
      %v1361 = vadd.f32 0.0, %v1360
      %1362 = vmatmul.f32.gmra.mxu0 %v555
      %v1363 = vpop.f32.mrf.mxu0
      %v1364 = vadd.f32 0.0, %v1363
      %1365 = vmatmul.f32.gmra.mxu0 %v558
      %v1366 = vpop.f32.mrf.mxu0
      %v1367 = vadd.f32 0.0, %v1366
      %1368 = vmatmul.f32.gmra.mxu0 %v561
      %v1369 = vpop.f32.mrf.mxu0
      %v1370 = vadd.f32 0.0, %v1369
      %1371 = vmatmul.f32.gmra.mxu0 %v564
      %v1372 = vpop.f32.mrf.mxu0
      %v1373 = vadd.f32 0.0, %v1372
      %1374 = vmatmul.f32.gmra.mxu0 %v567
      %v1375 = vpop.f32.mrf.mxu0
      %v1376 = vadd.f32 0.0, %v1375
      %1377 = vmatmul.f32.gmra.mxu0 %v570
      %v1378 = vpop.f32.mrf.mxu0
      %v1379 = vadd.f32 0.0, %v1378
      %1380 = vmatmul.f32.gmra.mxu0 %v573
      %v1381 = vpop.f32.mrf.mxu0
      %v1382 = vadd.f32 0.0, %v1381
      %1383 = vmatmul.f32.gmra.mxu0 %v576
      %v1384 = vpop.f32.mrf.mxu0
      %v1385 = vadd.f32 0.0, %v1384
      %1386 = vmatmul.f32.gmra.mxu0 %v579
      %v1387 = vpop.f32.mrf.mxu0
      %v1388 = vadd.f32 0.0, %v1387
      %1389 = vmatmul.f32.gmra.mxu0 %v582
      %v1390 = vpop.f32.mrf.mxu0
      %v1391 = vadd.f32 0.0, %v1390
      %1392 = vmatmul.f32.gmra.mxu0 %v585
      %v1393 = vpop.f32.mrf.mxu0
      %v1394 = vadd.f32 0.0, %v1393
      %1395 = vmatmul.f32.gmra.mxu0 %v588
      %v1396 = vpop.f32.mrf.mxu0
      %v1397 = vadd.f32 0.0, %v1396
      %1398 = vmatmul.f32.gmra.mxu0 %v591
      %v1399 = vpop.f32.mrf.mxu0
      %v1400 = vadd.f32 0.0, %v1399
      %1401 = vmatmul.f32.gmra.mxu0 %v594
      %v1402 = vpop.f32.mrf.mxu0
      %v1403 = vadd.f32 0.0, %v1402
      %1404 = vmatmul.f32.gmra.mxu0 %v597
      %v1405 = vpop.f32.mrf.mxu0
      %v1406 = vadd.f32 0.0, %v1405
      %1407 = vmatmul.f32.gmra.mxu0 %v600
      %v1408 = vpop.f32.mrf.mxu0
      %v1409 = vadd.f32 0.0, %v1408
      %1410 = vmatmul.f32.gmra.mxu0 %v603
      %v1411 = vpop.f32.mrf.mxu0
      %v1412 = vadd.f32 0.0, %v1411
      %1413 = vmatmul.f32.gmra.mxu0 %v606
      %v1414 = vpop.f32.mrf.mxu0
      %v1415 = vadd.f32 0.0, %v1414
      %1416 = vmatmul.f32.gmra.mxu0 %v609
      %v1417 = vpop.f32.mrf.mxu0
      %v1418 = vadd.f32 0.0, %v1417
      %1419 = vmatmul.f32.gmra.mxu0 %v612
      %v1420 = vpop.f32.mrf.mxu0
      %v1421 = vadd.f32 0.0, %v1420
      %1422 = vmatmul.f32.gmra.mxu0 %v615
      %v1423 = vpop.f32.mrf.mxu0
      %v1424 = vadd.f32 0.0, %v1423
      %1425 = vmatmul.f32.gmra.mxu0 %v618
      %v1426 = vpop.f32.mrf.mxu0
      %v1427 = vadd.f32 0.0, %v1426
      %1428 = vmatmul.f32.gmra.mxu0 %v621
      %v1429 = vpop.f32.mrf.mxu0
      %v1430 = vadd.f32 0.0, %v1429
      %1431 = vmatmul.f32.gmra.mxu0 %v624
      %v1432 = vpop.f32.mrf.mxu0
      %v1433 = vadd.f32 0.0, %v1432
      %1434 = vmatmul.f32.gmra.mxu0 %v627
      %v1435 = vpop.f32.mrf.mxu0
      %v1436 = vadd.f32 0.0, %v1435
      %1437 = vmatmul.f32.gmra.mxu0 %v630
      %v1438 = vpop.f32.mrf.mxu0
      %v1439 = vadd.f32 0.0, %v1438
      %1440 = vmatmul.f32.gmra.mxu0 %v633
      %v1441 = vpop.f32.mrf.mxu0
      %v1442 = vadd.f32 0.0, %v1441
      %1443 = vmatmul.f32.gmra.mxu0 %v636
      %v1444 = vpop.f32.mrf.mxu0
      %v1445 = vadd.f32 0.0, %v1444
      %1446 = vmatmul.f32.gmra.mxu0 %v639
      %v1447 = vpop.f32.mrf.mxu0
      %v1448 = vadd.f32 0.0, %v1447
      %1449 = vmatmul.f32.gmra.mxu0 %v642
      %v1450 = vpop.f32.mrf.mxu0
      %v1451 = vadd.f32 0.0, %v1450
      %1452 = vmatmul.f32.gmra.mxu0 %v645
      %v1453 = vpop.f32.mrf.mxu0
      %v1454 = vadd.f32 0.0, %v1453
      %1455 = vmatmul.f32.gmra.mxu0 %v648
      %v1456 = vpop.f32.mrf.mxu0
      %v1457 = vadd.f32 0.0, %v1456
      %1458 = vmatmul.f32.gmra.mxu0 %v651
      %v1459 = vpop.f32.mrf.mxu0
      %v1460 = vadd.f32 0.0, %v1459
      %1461 = vmatmul.f32.gmra.mxu0 %v654
      %v1462 = vpop.f32.mrf.mxu0
      %v1463 = vadd.f32 0.0, %v1462
      %1464 = vmatmul.f32.gmra.mxu0 %v657
      %v1465 = vpop.f32.mrf.mxu0
      %v1466 = vadd.f32 0.0, %v1465
      %1467 = vmatmul.f32.gmra.mxu0 %v660
      %v1468 = vpop.f32.mrf.mxu0
      %v1469 = vadd.f32 0.0, %v1468
      %1470 = vmatmul.f32.gmra.mxu0 %v663
      %v1471 = vpop.f32.mrf.mxu0
      %v1472 = vadd.f32 0.0, %v1471
      %1473 = vmatmul.f32.gmra.mxu0 %v666
      %v1474 = vpop.f32.mrf.mxu0
      %v1475 = vadd.f32 0.0, %v1474
      %1476 = vmatmul.f32.gmra.mxu0 %v669
      %v1477 = vpop.f32.mrf.mxu0
      %v1478 = vadd.f32 0.0, %v1477
      %1479 = vmatmul.f32.gmra.mxu0 %v672
      %v1480 = vpop.f32.mrf.mxu0
      %v1481 = vadd.f32 0.0, %v1480
      %1482 = vmatmul.f32.gmra.mxu0 %v675
      %v1483 = vpop.f32.mrf.mxu0
      %v1484 = vadd.f32 0.0, %v1483
      %1485 = vmatmul.f32.gmra.mxu0 %v678
      %v1486 = vpop.f32.mrf.mxu0
      %v1487 = vadd.f32 0.0, %v1486
      %1488 = vmatmul.f32.gmra.mxu0 %v681
      %v1489 = vpop.f32.mrf.mxu0
      %v1490 = vadd.f32 0.0, %v1489
      %1491 = vmatmul.f32.gmra.mxu0 %v684
      %v1492 = vpop.f32.mrf.mxu0
      %v1493 = vadd.f32 0.0, %v1492
      %1494 = vmatmul.f32.gmra.mxu0 %v687
      %v1495 = vpop.f32.mrf.mxu0
      %v1496 = vadd.f32 0.0, %v1495
      %1497 = vmatmul.f32.gmra.mxu0 %v690
      %v1498 = vpop.f32.mrf.mxu0
      %v1499 = vadd.f32 0.0, %v1498
      %1500 = vmatmul.f32.gmra.mxu0 %v693
      %v1501 = vpop.f32.mrf.mxu0
      %v1502 = vadd.f32 0.0, %v1501
      %1503 = vmatmul.f32.gmra.mxu0 %v696
      %v1504 = vpop.f32.mrf.mxu0
      %v1505 = vadd.f32 0.0, %v1504
      %1506 = vmatmul.f32.gmra.mxu0 %v699
      %v1507 = vpop.f32.mrf.mxu0
      %v1508 = vadd.f32 0.0, %v1507
      %1509 = vmatmul.f32.gmra.mxu0 %v702
      %v1510 = vpop.f32.mrf.mxu0
      %v1511 = vadd.f32 0.0, %v1510
      %1512 = vmatmul.f32.gmra.mxu0 %v705
      %v1513 = vpop.f32.mrf.mxu0
      %v1514 = vadd.f32 0.0, %v1513
      %1515 = vmatmul.f32.gmra.mxu0 %v708
      %v1516 = vpop.f32.mrf.mxu0
      %v1517 = vadd.f32 0.0, %v1516
      %1518 = vmatmul.f32.gmra.mxu0 %v711
      %v1519 = vpop.f32.mrf.mxu0
      %v1520 = vadd.f32 0.0, %v1519
      %1521 = vmatmul.f32.gmra.mxu0 %v714
      %v1522 = vpop.f32.mrf.mxu0
      %v1523 = vadd.f32 0.0, %v1522
      %1524 = vmatmul.f32.gmra.mxu0 %v717
      %v1525 = vpop.f32.mrf.mxu0
      %v1526 = vadd.f32 0.0, %v1525
      %1527 = vmatmul.f32.gmra.mxu0 %v720
      %v1528 = vpop.f32.mrf.mxu0
      %v1529 = vadd.f32 0.0, %v1528
      %1530 = vmatmul.f32.gmra.mxu0 %v723
      %v1531 = vpop.f32.mrf.mxu0
      %v1532 = vadd.f32 0.0, %v1531
      %1533 = vmatmul.f32.gmra.mxu0 %v726
      %v1534 = vpop.f32.mrf.mxu0
      %v1535 = vadd.f32 0.0, %v1534
      %1536 = vmatmul.f32.gmra.mxu0 %v729
      %v1537 = vpop.f32.mrf.mxu0
      %v1538 = vadd.f32 0.0, %v1537
      %1539 = vmatmul.f32.gmra.mxu0 %v732
      %v1540 = vpop.f32.mrf.mxu0
      %v1541 = vadd.f32 0.0, %v1540
      %1542 = vmatmul.f32.gmra.mxu0 %v735
      %v1543 = vpop.f32.mrf.mxu0
      %v1544 = vadd.f32 0.0, %v1543
      %1545 = vmatmul.f32.gmra.mxu0 %v738
      %v1546 = vpop.f32.mrf.mxu0
      %v1547 = vadd.f32 0.0, %v1546
      %1548 = vmatmul.f32.gmra.mxu0 %v741
      %v1549 = vpop.f32.mrf.mxu0
      %v1550 = vadd.f32 0.0, %v1549
      %1551 = vmatmul.f32.gmra.mxu0 %v744
      %v1552 = vpop.f32.mrf.mxu0
      %v1553 = vadd.f32 0.0, %v1552
      %1554 = vmatmul.f32.gmra.mxu0 %v747
      %v1555 = vpop.f32.mrf.mxu0
      %v1556 = vadd.f32 0.0, %v1555
      %1557 = vmatmul.f32.gmra.mxu0 %v750
      %v1558 = vpop.f32.mrf.mxu0
      %v1559 = vadd.f32 0.0, %v1558
      %1560 = vmatmul.f32.gmra.mxu0 %v753
      %v1561 = vpop.f32.mrf.mxu0
      %v1562 = vadd.f32 0.0, %v1561
      %1563 = vmatmul.f32.gmra.mxu0 %v756
      %v1564 = vpop.f32.mrf.mxu0
      %v1565 = vadd.f32 0.0, %v1564
      %1566 = vmatmul.f32.gmra.mxu0 %v759
      %v1567 = vpop.f32.mrf.mxu0
      %v1568 = vadd.f32 0.0, %v1567
      %1569 = vmatmul.f32.gmra.mxu0 %v762
      %v1570 = vpop.f32.mrf.mxu0
      %v1571 = vadd.f32 0.0, %v1570
      %1572 = vmatmul.f32.gmra.mxu0 %v765
      %v1573 = vpop.f32.mrf.mxu0
      %v1574 = vadd.f32 0.0, %v1573
      %1575 = vmatmul.f32.gmra.mxu0 %v768
      %v1576 = vpop.f32.mrf.mxu0
      %v1577 = vadd.f32 0.0, %v1576
      %1578 = vmatmul.f32.gmra.mxu0 %v771
      %v1579 = vpop.f32.mrf.mxu0
      %v1580 = vadd.f32 0.0, %v1579
      %1581 = vmatmul.f32.gmra.mxu0 %v774
      %v1582 = vpop.f32.mrf.mxu0
      %v1583 = vadd.f32 0.0, %v1582
      %1584 = vmatmul.f32.gmra.mxu0 %v777
      %v1585 = vpop.f32.mrf.mxu0
      %v1586 = vadd.f32 0.0, %v1585
      %1587 = vmatmul.f32.gmra.mxu0 %v780
      %v1588 = vpop.f32.mrf.mxu0
      %v1589 = vadd.f32 0.0, %v1588
      %1590 = vmatmul.f32.gmra.mxu0 %v783
      %v1591 = vpop.f32.mrf.mxu0
      %v1592 = vadd.f32 0.0, %v1591
      %1593 = vmatmul.f32.gmra.mxu0 %v786
      %v1594 = vpop.f32.mrf.mxu0
      %v1595 = vadd.f32 0.0, %v1594
      %1596 = vmatmul.f32.gmra.mxu0 %v789
      %v1597 = vpop.f32.mrf.mxu0
      %v1598 = vadd.f32 0.0, %v1597
      %1599 = vmatmul.f32.gmra.mxu0 %v792
      %v1600 = vpop.f32.mrf.mxu0
      %v1601 = vadd.f32 0.0, %v1600
      %1602 = vmatmul.f32.gmra.mxu0 %v795
      %v1603 = vpop.f32.mrf.mxu0
      %v1604 = vadd.f32 0.0, %v1603
      %1605 = vmatmul.f32.gmra.mxu0 %v798
      %v1606 = vpop.f32.mrf.mxu0
      %v1607 = vadd.f32 0.0, %v1606
      %1608 = vmatmul.f32.gmra.mxu0 %v801
      %v1609 = vpop.f32.mrf.mxu0
      %v1610 = vadd.f32 0.0, %v1609
      %1611 = vmatmul.f32.gmra.mxu0 %v804
      %v1612 = vpop.f32.mrf.mxu0
      %v1613 = vadd.f32 0.0, %v1612
      %1614 = vmatmul.f32.gmra.mxu0 %v807
      %v1615 = vpop.f32.mrf.mxu0
      %v1616 = vadd.f32 0.0, %v1615
      %1617 = vmatmul.f32.gmra.mxu0 %v810
      %v1618 = vpop.f32.mrf.mxu0
      %v1619 = vadd.f32 0.0, %v1618
      %1620 = vmatmul.f32.gmra.mxu0 %v813
      %v1621 = vpop.f32.mrf.mxu0
      %v1622 = vadd.f32 0.0, %v1621
      %1623 = vmatmul.f32.gmra.mxu0 %v816
      %v1624 = vpop.f32.mrf.mxu0
      %v1625 = vadd.f32 0.0, %v1624
      %1626 = vmatmul.f32.gmra.mxu0 %v819
      %v1627 = vpop.f32.mrf.mxu0
      %v1628 = vadd.f32 0.0, %v1627
      %1629 = vmatmul.f32.gmra.mxu0 %v822
      %v1630 = vpop.f32.mrf.mxu0
      %v1631 = vadd.f32 0.0, %v1630
      %1632 = vmatmul.f32.gmra.mxu0 %v825
      %v1633 = vpop.f32.mrf.mxu0
      %v1634 = vadd.f32 0.0, %v1633
      %1635 = vmatmul.f32.gmra.mxu0 %v828
      %v1636 = vpop.f32.mrf.mxu0
      %v1637 = vadd.f32 0.0, %v1636
      %1638 = vmatmul.f32.gmra.mxu0 %v831
      %v1639 = vpop.f32.mrf.mxu0
      %v1640 = vadd.f32 0.0, %v1639
      %1641 = vmatmul.f32.gmra.mxu0 %v834
      %v1642 = vpop.f32.mrf.mxu0
      %v1643 = vadd.f32 0.0, %v1642
      %1644 = vmatmul.f32.gmra.mxu0 %v837
      %v1645 = vpop.f32.mrf.mxu0
      %v1646 = vadd.f32 0.0, %v1645
      %1647 = vmatmul.f32.gmra.mxu0 %v840
      %v1648 = vpop.f32.mrf.mxu0
      %v1649 = vadd.f32 0.0, %v1648
      %1650 = vmatmul.f32.gmra.mxu0 %v843
      %v1651 = vpop.f32.mrf.mxu0
      %v1652 = vadd.f32 0.0, %v1651
      %1653 = vmatmul.f32.gmra.mxu0 %v846
      %v1654 = vpop.f32.mrf.mxu0
      %v1655 = vadd.f32 0.0, %v1654
      %1656 = vmatmul.f32.gmra.mxu0 %v849
      %v1657 = vpop.f32.mrf.mxu0
      %v1658 = vadd.f32 0.0, %v1657
      %1659 = vmatmul.f32.gmra.mxu0 %v852
      %v1660 = vpop.f32.mrf.mxu0
      %v1661 = vadd.f32 0.0, %v1660
      %1662 = vmatmul.f32.gmra.mxu0 %v855
      %v1663 = vpop.f32.mrf.mxu0
      %v1664 = vadd.f32 0.0, %v1663
      %1665 = vmatmul.f32.gmra.mxu0 %v858
      %v1666 = vpop.f32.mrf.mxu0
      %v1667 = vadd.f32 0.0, %v1666
      %1668 = vmatmul.f32.gmra.mxu0 %v861
      %v1669 = vpop.f32.mrf.mxu0
      %v1670 = vadd.f32 0.0, %v1669
      %1671 = vmatmul.f32.gmra.mxu0 %v864
      %v1672 = vpop.f32.mrf.mxu0
      %v1673 = vadd.f32 0.0, %v1672
      %1674 = vmatmul.f32.gmra.mxu0 %v867
      %v1675 = vpop.f32.mrf.mxu0
      %v1676 = vadd.f32 0.0, %v1675
      %1677 = vmatmul.f32.gmra.mxu0 %v870
      %v1678 = vpop.f32.mrf.mxu0
      %v1679 = vadd.f32 0.0, %v1678
      %1680 = vmatmul.f32.gmra.mxu0 %v873
      %v1681 = vpop.f32.mrf.mxu0
      %v1682 = vadd.f32 0.0, %v1681
      %1683 = vmatmul.f32.gmra.mxu0 %v876
      %v1684 = vpop.f32.mrf.mxu0
      %v1685 = vadd.f32 0.0, %v1684
      %1686 = vdwg.mxu0
      %v1687 = vld [vmem:[%s6] sm:$0xff]
      %v1688 = vperm.slane %v1687, 0
      %v1689 = vadd.f32 %v903, %v1688
      %v1690 = vadd.f32 %v906, %v1688
      %v1691 = vadd.f32 %v909, %v1688
      %v1692 = vadd.f32 %v912, %v1688
      %v1693 = vadd.f32 %v915, %v1688
      %v1694 = vadd.f32 %v918, %v1688
      %v1695 = vadd.f32 %v921, %v1688
      %v1696 = vadd.f32 %v924, %v1688
      %v1697 = vadd.f32 %v927, %v1688
      %v1698 = vadd.f32 %v930, %v1688
      %v1699 = vadd.f32 %v933, %v1688
      %v1700 = vadd.f32 %v936, %v1688
      %v1701 = vadd.f32 %v939, %v1688
      %v1702 = vadd.f32 %v942, %v1688
      %v1703 = vadd.f32 %v945, %v1688
      %v1704 = vadd.f32 %v948, %v1688
      %v1705 = vadd.f32 %v951, %v1688
      %v1706 = vadd.f32 %v954, %v1688
      %v1707 = vadd.f32 %v957, %v1688
      %v1708 = vadd.f32 %v960, %v1688
      %v1709 = vadd.f32 %v963, %v1688
      %v1710 = vadd.f32 %v966, %v1688
      %v1711 = vadd.f32 %v969, %v1688
      %v1712 = vadd.f32 %v972, %v1688
      %v1713 = vadd.f32 %v975, %v1688
      %v1714 = vadd.f32 %v978, %v1688
      %v1715 = vadd.f32 %v981, %v1688
      %v1716 = vadd.f32 %v984, %v1688
      %v1717 = vadd.f32 %v987, %v1688
      %v1718 = vadd.f32 %v990, %v1688
      %v1719 = vadd.f32 %v993, %v1688
      %v1720 = vadd.f32 %v996, %v1688
      %v1721 = vadd.f32 %v999, %v1688
      %v1722 = vadd.f32 %v1002, %v1688
      %v1723 = vadd.f32 %v1005, %v1688
      %v1724 = vadd.f32 %v1008, %v1688
      %v1725 = vadd.f32 %v1011, %v1688
      %v1726 = vadd.f32 %v1014, %v1688
      %v1727 = vadd.f32 %v1017, %v1688
      %v1728 = vadd.f32 %v1020, %v1688
      %v1729 = vadd.f32 %v1023, %v1688
      %v1730 = vadd.f32 %v1026, %v1688
      %v1731 = vadd.f32 %v1029, %v1688
      %v1732 = vadd.f32 %v1032, %v1688
      %v1733 = vadd.f32 %v1035, %v1688
      %v1734 = vadd.f32 %v1038, %v1688
      %v1735 = vadd.f32 %v1041, %v1688
      %v1736 = vadd.f32 %v1044, %v1688
      %v1737 = vadd.f32 %v1047, %v1688
      %v1738 = vadd.f32 %v1050, %v1688
      %v1739 = vadd.f32 %v1053, %v1688
      %v1740 = vadd.f32 %v1056, %v1688
      %v1741 = vadd.f32 %v1059, %v1688
      %v1742 = vadd.f32 %v1062, %v1688
      %v1743 = vadd.f32 %v1065, %v1688
      %v1744 = vadd.f32 %v1068, %v1688
      %v1745 = vadd.f32 %v1071, %v1688
      %v1746 = vadd.f32 %v1074, %v1688
      %v1747 = vadd.f32 %v1077, %v1688
      %v1748 = vadd.f32 %v1080, %v1688
      %v1749 = vadd.f32 %v1083, %v1688
      %v1750 = vadd.f32 %v1086, %v1688
      %v1751 = vadd.f32 %v1089, %v1688
      %v1752 = vadd.f32 %v1092, %v1688
      %v1753 = vadd.f32 %v1095, %v1688
      %v1754 = vadd.f32 %v1098, %v1688
      %v1755 = vadd.f32 %v1101, %v1688
      %v1756 = vadd.f32 %v1104, %v1688
      %v1757 = vadd.f32 %v1107, %v1688
      %v1758 = vadd.f32 %v1110, %v1688
      %v1759 = vadd.f32 %v1113, %v1688
      %v1760 = vadd.f32 %v1116, %v1688
      %v1761 = vadd.f32 %v1119, %v1688
      %v1762 = vadd.f32 %v1122, %v1688
      %v1763 = vadd.f32 %v1125, %v1688
      %v1764 = vadd.f32 %v1128, %v1688
      %v1765 = vadd.f32 %v1131, %v1688
      %v1766 = vadd.f32 %v1134, %v1688
      %v1767 = vadd.f32 %v1137, %v1688
      %v1768 = vadd.f32 %v1140, %v1688
      %v1769 = vadd.f32 %v1143, %v1688
      %v1770 = vadd.f32 %v1146, %v1688
      %v1771 = vadd.f32 %v1149, %v1688
      %v1772 = vadd.f32 %v1152, %v1688
      %v1773 = vadd.f32 %v1155, %v1688
      %v1774 = vadd.f32 %v1158, %v1688
      %v1775 = vadd.f32 %v1161, %v1688
      %v1776 = vadd.f32 %v1164, %v1688
      %v1777 = vadd.f32 %v1167, %v1688
      %v1778 = vadd.f32 %v1170, %v1688
      %v1779 = vadd.f32 %v1173, %v1688
      %v1780 = vadd.f32 %v1176, %v1688
      %v1781 = vadd.f32 %v1179, %v1688
      %v1782 = vadd.f32 %v1182, %v1688
      %v1783 = vadd.f32 %v1185, %v1688
      %v1784 = vadd.f32 %v1188, %v1688
      %v1785 = vadd.f32 %v1191, %v1688
      %v1786 = vadd.f32 %v1194, %v1688
      %v1787 = vadd.f32 %v1197, %v1688
      %v1788 = vadd.f32 %v1200, %v1688
      %v1789 = vadd.f32 %v1203, %v1688
      %v1790 = vadd.f32 %v1206, %v1688
      %v1791 = vadd.f32 %v1209, %v1688
      %v1792 = vadd.f32 %v1212, %v1688
      %v1793 = vadd.f32 %v1215, %v1688
      %v1794 = vadd.f32 %v1218, %v1688
      %v1795 = vadd.f32 %v1221, %v1688
      %v1796 = vadd.f32 %v1224, %v1688
      %v1797 = vadd.f32 %v1227, %v1688
      %v1798 = vadd.f32 %v1230, %v1688
      %v1799 = vadd.f32 %v1233, %v1688
      %v1800 = vadd.f32 %v1236, %v1688
      %v1801 = vadd.f32 %v1239, %v1688
      %v1802 = vadd.f32 %v1242, %v1688
      %v1803 = vadd.f32 %v1245, %v1688
      %v1804 = vadd.f32 %v1248, %v1688
      %v1805 = vadd.f32 %v1251, %v1688
      %v1806 = vadd.f32 %v1254, %v1688
      %v1807 = vadd.f32 %v1257, %v1688
      %v1808 = vadd.f32 %v1260, %v1688
      %v1809 = vadd.f32 %v1263, %v1688
      %v1810 = vadd.f32 %v1266, %v1688
      %v1811 = vadd.f32 %v1269, %v1688
      %v1812 = vadd.f32 %v1272, %v1688
      %v1813 = vadd.f32 %v1275, %v1688
      %v1814 = vadd.f32 %v1278, %v1688
      %v1815 = vadd.f32 %v1281, %v1688
      %v1816 = vadd.f32 %v1284, %v1688
      %v1817 = vmax.f32 %v1689, 0.0
      %v1818 = vmax.f32 %v1690, 0.0
      %v1819 = vmax.f32 %v1691, 0.0
      %v1820 = vmax.f32 %v1692, 0.0
      %v1821 = vmax.f32 %v1693, 0.0
      %v1822 = vmax.f32 %v1694, 0.0
      %v1823 = vmax.f32 %v1695, 0.0
      %v1824 = vmax.f32 %v1696, 0.0
      %v1825 = vmax.f32 %v1697, 0.0
      %v1826 = vmax.f32 %v1698, 0.0
      %v1827 = vmax.f32 %v1699, 0.0
      %v1828 = vmax.f32 %v1700, 0.0
      %v1829 = vmax.f32 %v1701, 0.0
      %v1830 = vmax.f32 %v1702, 0.0
      %v1831 = vmax.f32 %v1703, 0.0
      %v1832 = vmax.f32 %v1704, 0.0
      %v1833 = vmax.f32 %v1705, 0.0
      %v1834 = vmax.f32 %v1706, 0.0
      %v1835 = vmax.f32 %v1707, 0.0
      %v1836 = vmax.f32 %v1708, 0.0
      %v1837 = vmax.f32 %v1709, 0.0
      %v1838 = vmax.f32 %v1710, 0.0
      %v1839 = vmax.f32 %v1711, 0.0
      %v1840 = vmax.f32 %v1712, 0.0
      %v1841 = vmax.f32 %v1713, 0.0
      %v1842 = vmax.f32 %v1714, 0.0
      %v1843 = vmax.f32 %v1715, 0.0
      %v1844 = vmax.f32 %v1716, 0.0
      %v1845 = vmax.f32 %v1717, 0.0
      %v1846 = vmax.f32 %v1718, 0.0
      %v1847 = vmax.f32 %v1719, 0.0
      %v1848 = vmax.f32 %v1720, 0.0
      %v1849 = vmax.f32 %v1721, 0.0
      %v1850 = vmax.f32 %v1722, 0.0
      %v1851 = vmax.f32 %v1723, 0.0
      %v1852 = vmax.f32 %v1724, 0.0
      %v1853 = vmax.f32 %v1725, 0.0
      %v1854 = vmax.f32 %v1726, 0.0
      %v1855 = vmax.f32 %v1727, 0.0
      %v1856 = vmax.f32 %v1728, 0.0
      %v1857 = vmax.f32 %v1729, 0.0
      %v1858 = vmax.f32 %v1730, 0.0
      %v1859 = vmax.f32 %v1731, 0.0
      %v1860 = vmax.f32 %v1732, 0.0
      %v1861 = vmax.f32 %v1733, 0.0
      %v1862 = vmax.f32 %v1734, 0.0
      %v1863 = vmax.f32 %v1735, 0.0
      %v1864 = vmax.f32 %v1736, 0.0
      %v1865 = vmax.f32 %v1737, 0.0
      %v1866 = vmax.f32 %v1738, 0.0
      %v1867 = vmax.f32 %v1739, 0.0
      %v1868 = vmax.f32 %v1740, 0.0
      %v1869 = vmax.f32 %v1741, 0.0
      %v1870 = vmax.f32 %v1742, 0.0
      %v1871 = vmax.f32 %v1743, 0.0
      %v1872 = vmax.f32 %v1744, 0.0
      %v1873 = vmax.f32 %v1745, 0.0
      %v1874 = vmax.f32 %v1746, 0.0
      %v1875 = vmax.f32 %v1747, 0.0
      %v1876 = vmax.f32 %v1748, 0.0
      %v1877 = vmax.f32 %v1749, 0.0
      %v1878 = vmax.f32 %v1750, 0.0
      %v1879 = vmax.f32 %v1751, 0.0
      %v1880 = vmax.f32 %v1752, 0.0
      %v1881 = vmax.f32 %v1753, 0.0
      %v1882 = vmax.f32 %v1754, 0.0
      %v1883 = vmax.f32 %v1755, 0.0
      %v1884 = vmax.f32 %v1756, 0.0
      %v1885 = vmax.f32 %v1757, 0.0
      %v1886 = vmax.f32 %v1758, 0.0
      %v1887 = vmax.f32 %v1759, 0.0
      %v1888 = vmax.f32 %v1760, 0.0
      %v1889 = vmax.f32 %v1761, 0.0
      %v1890 = vmax.f32 %v1762, 0.0
      %v1891 = vmax.f32 %v1763, 0.0
      %v1892 = vmax.f32 %v1764, 0.0
      %v1893 = vmax.f32 %v1765, 0.0
      %v1894 = vmax.f32 %v1766, 0.0
      %v1895 = vmax.f32 %v1767, 0.0
      %v1896 = vmax.f32 %v1768, 0.0
      %v1897 = vmax.f32 %v1769, 0.0
      %v1898 = vmax.f32 %v1770, 0.0
      %v1899 = vmax.f32 %v1771, 0.0
      %v1900 = vmax.f32 %v1772, 0.0
      %v1901 = vmax.f32 %v1773, 0.0
      %v1902 = vmax.f32 %v1774, 0.0
      %v1903 = vmax.f32 %v1775, 0.0
      %v1904 = vmax.f32 %v1776, 0.0
      %v1905 = vmax.f32 %v1777, 0.0
      %v1906 = vmax.f32 %v1778, 0.0
      %v1907 = vmax.f32 %v1779, 0.0
      %v1908 = vmax.f32 %v1780, 0.0
      %v1909 = vmax.f32 %v1781, 0.0
      %v1910 = vmax.f32 %v1782, 0.0
      %v1911 = vmax.f32 %v1783, 0.0
      %v1912 = vmax.f32 %v1784, 0.0
      %v1913 = vmax.f32 %v1785, 0.0
      %v1914 = vmax.f32 %v1786, 0.0
      %v1915 = vmax.f32 %v1787, 0.0
      %v1916 = vmax.f32 %v1788, 0.0
      %v1917 = vmax.f32 %v1789, 0.0
      %v1918 = vmax.f32 %v1790, 0.0
      %v1919 = vmax.f32 %v1791, 0.0
      %v1920 = vmax.f32 %v1792, 0.0
      %v1921 = vmax.f32 %v1793, 0.0
      %v1922 = vmax.f32 %v1794, 0.0
      %v1923 = vmax.f32 %v1795, 0.0
      %v1924 = vmax.f32 %v1796, 0.0
      %v1925 = vmax.f32 %v1797, 0.0
      %v1926 = vmax.f32 %v1798, 0.0
      %v1927 = vmax.f32 %v1799, 0.0
      %v1928 = vmax.f32 %v1800, 0.0
      %v1929 = vmax.f32 %v1801, 0.0
      %v1930 = vmax.f32 %v1802, 0.0
      %v1931 = vmax.f32 %v1803, 0.0
      %v1932 = vmax.f32 %v1804, 0.0
      %v1933 = vmax.f32 %v1805, 0.0
      %v1934 = vmax.f32 %v1806, 0.0
      %v1935 = vmax.f32 %v1807, 0.0
      %v1936 = vmax.f32 %v1808, 0.0
      %v1937 = vmax.f32 %v1809, 0.0
      %v1938 = vmax.f32 %v1810, 0.0
      %v1939 = vmax.f32 %v1811, 0.0
      %v1940 = vmax.f32 %v1812, 0.0
      %v1941 = vmax.f32 %v1813, 0.0
      %v1942 = vmax.f32 %v1814, 0.0
      %v1943 = vmax.f32 %v1815, 0.0
      %v1944 = vmax.f32 %v1816, 0.0
      %v1945 = vld [vmem:[%s2] sm:$0xff]
      %v1946 = vld [vmem:[%s2 + $0x8] sm:$0xff]
      %v1947 = vld [vmem:[%s2 + $0x10] sm:$0xff]
      %v1948 = vld [vmem:[%s2 + $0x18] sm:$0xff]
      %v1949 = vld [vmem:[%s2 + $0x20] sm:$0xff]
      %v1950 = vld [vmem:[%s2 + $0x28] sm:$0xff]
      %v1951 = vld [vmem:[%s2 + $0x30] sm:$0xff]
      %v1952 = vld [vmem:[%s2 + $0x38] sm:$0xff]
      %v1953 = vperm.slane %v1687, 1
      %vm1954 = vcmask 523264
      %v1956 = vsel %vm1954, %v1817, 0
      %v1959 = vsel %vm1954, %v1818, 0
      %v1962 = vsel %vm1954, %v1819, 0
      %v1965 = vsel %vm1954, %v1820, 0
      %v1968 = vsel %vm1954, %v1821, 0
      %v1971 = vsel %vm1954, %v1822, 0
      %v1974 = vsel %vm1954, %v1823, 0
      %v1977 = vsel %vm1954, %v1824, 0
      %v1980 = vsel %vm1954, %v1825, 0
      %v1983 = vsel %vm1954, %v1826, 0
      %v1986 = vsel %vm1954, %v1827, 0
      %v1989 = vsel %vm1954, %v1828, 0
      %v1992 = vsel %vm1954, %v1829, 0
      %v1995 = vsel %vm1954, %v1830, 0
      %v1998 = vsel %vm1954, %v1831, 0
      %v2001 = vsel %vm1954, %v1832, 0
      %v2004 = vsel %vm1954, %v1833, 0
      %v2007 = vsel %vm1954, %v1834, 0
      %v2010 = vsel %vm1954, %v1835, 0
      %v2013 = vsel %vm1954, %v1836, 0
      %v2016 = vsel %vm1954, %v1837, 0
      %v2019 = vsel %vm1954, %v1838, 0
      %v2022 = vsel %vm1954, %v1839, 0
      %v2025 = vsel %vm1954, %v1840, 0
      %v2028 = vsel %vm1954, %v1841, 0
      %v2031 = vsel %vm1954, %v1842, 0
      %v2034 = vsel %vm1954, %v1843, 0
      %v2037 = vsel %vm1954, %v1844, 0
      %v2040 = vsel %vm1954, %v1845, 0
      %v2043 = vsel %vm1954, %v1846, 0
      %v2046 = vsel %vm1954, %v1847, 0
      %v2049 = vsel %vm1954, %v1848, 0
      %v2052 = vsel %vm1954, %v1849, 0
      %v2055 = vsel %vm1954, %v1850, 0
      %v2058 = vsel %vm1954, %v1851, 0
      %v2061 = vsel %vm1954, %v1852, 0
      %v2064 = vsel %vm1954, %v1853, 0
      %v2067 = vsel %vm1954, %v1854, 0
      %v2070 = vsel %vm1954, %v1855, 0
      %v2073 = vsel %vm1954, %v1856, 0
      %v2076 = vsel %vm1954, %v1857, 0
      %v2079 = vsel %vm1954, %v1858, 0
      %v2082 = vsel %vm1954, %v1859, 0
      %v2085 = vsel %vm1954, %v1860, 0
      %v2088 = vsel %vm1954, %v1861, 0
      %v2091 = vsel %vm1954, %v1862, 0
      %v2094 = vsel %vm1954, %v1863, 0
      %v2097 = vsel %vm1954, %v1864, 0
      %v2100 = vsel %vm1954, %v1865, 0
      %v2103 = vsel %vm1954, %v1866, 0
      %v2106 = vsel %vm1954, %v1867, 0
      %v2109 = vsel %vm1954, %v1868, 0
      %v2112 = vsel %vm1954, %v1869, 0
      %v2115 = vsel %vm1954, %v1870, 0
      %v2118 = vsel %vm1954, %v1871, 0
      %v2121 = vsel %vm1954, %v1872, 0
      %v2124 = vsel %vm1954, %v1873, 0
      %v2127 = vsel %vm1954, %v1874, 0
      %v2130 = vsel %vm1954, %v1875, 0
      %v2133 = vsel %vm1954, %v1876, 0
      %v2136 = vsel %vm1954, %v1877, 0
      %v2139 = vsel %vm1954, %v1878, 0
      %v2142 = vsel %vm1954, %v1879, 0
      %v2145 = vsel %vm1954, %v1880, 0
      %v2148 = vsel %vm1954, %v1881, 0
      %v2151 = vsel %vm1954, %v1882, 0
      %v2154 = vsel %vm1954, %v1883, 0
      %v2157 = vsel %vm1954, %v1884, 0
      %v2160 = vsel %vm1954, %v1885, 0
      %v2163 = vsel %vm1954, %v1886, 0
      %v2166 = vsel %vm1954, %v1887, 0
      %v2169 = vsel %vm1954, %v1888, 0
      %v2172 = vsel %vm1954, %v1889, 0
      %v2175 = vsel %vm1954, %v1890, 0
      %v2178 = vsel %vm1954, %v1891, 0
      %v2181 = vsel %vm1954, %v1892, 0
      %v2184 = vsel %vm1954, %v1893, 0
      %v2187 = vsel %vm1954, %v1894, 0
      %v2190 = vsel %vm1954, %v1895, 0
      %v2193 = vsel %vm1954, %v1896, 0
      %v2196 = vsel %vm1954, %v1897, 0
      %v2199 = vsel %vm1954, %v1898, 0
      %v2202 = vsel %vm1954, %v1899, 0
      %v2205 = vsel %vm1954, %v1900, 0
      %v2208 = vsel %vm1954, %v1901, 0
      %v2211 = vsel %vm1954, %v1902, 0
      %v2214 = vsel %vm1954, %v1903, 0
      %v2217 = vsel %vm1954, %v1904, 0
      %v2220 = vsel %vm1954, %v1905, 0
      %v2223 = vsel %vm1954, %v1906, 0
      %v2226 = vsel %vm1954, %v1907, 0
      %v2229 = vsel %vm1954, %v1908, 0
      %v2232 = vsel %vm1954, %v1909, 0
      %v2235 = vsel %vm1954, %v1910, 0
      %v2238 = vsel %vm1954, %v1911, 0
      %v2241 = vsel %vm1954, %v1912, 0
      %v2244 = vsel %vm1954, %v1913, 0
      %v2247 = vsel %vm1954, %v1914, 0
      %v2250 = vsel %vm1954, %v1915, 0
      %v2253 = vsel %vm1954, %v1916, 0
      %v2256 = vsel %vm1954, %v1917, 0
      %v2259 = vsel %vm1954, %v1918, 0
      %v2262 = vsel %vm1954, %v1919, 0
      %v2265 = vsel %vm1954, %v1920, 0
      %v2268 = vsel %vm1954, %v1921, 0
      %v2271 = vsel %vm1954, %v1922, 0
      %v2274 = vsel %vm1954, %v1923, 0
      %v2277 = vsel %vm1954, %v1924, 0
      %v2280 = vsel %vm1954, %v1925, 0
      %v2283 = vsel %vm1954, %v1926, 0
      %v2286 = vsel %vm1954, %v1927, 0
      %v2289 = vsel %vm1954, %v1928, 0
      %v2292 = vsel %vm1954, %v1929, 0
      %v2295 = vsel %vm1954, %v1930, 0
      %v2298 = vsel %vm1954, %v1931, 0
      %v2301 = vsel %vm1954, %v1932, 0
      %v2304 = vsel %vm1954, %v1933, 0
      %v2307 = vsel %vm1954, %v1934, 0
      %v2310 = vsel %vm1954, %v1935, 0
      %v2313 = vsel %vm1954, %v1936, 0
      %v2316 = vsel %vm1954, %v1937, 0
      %v2319 = vsel %vm1954, %v1938, 0
      %v2322 = vsel %vm1954, %v1939, 0
      %v2325 = vsel %vm1954, %v1940, 0
      %v2328 = vsel %vm1954, %v1941, 0
      %v2331 = vsel %vm1954, %v1942, 0
      %v2334 = vsel %vm1954, %v1943, 0
      %v2337 = vsel %vm1954, %v1944, 0
      %2339 = vmatpush.msra.mxu0 0.0
      %2340 = vmatpush.msra.mxu0 0.0
      %2341 = vmatpush.msra.mxu0 0.0
      %2342 = vmatpush.msra.mxu0 0.0
      %2343 = vmatpush.msra.mxu0 0.0
      %2344 = vmatpush.msra.mxu0 0.0
      %2345 = vmatpush.msra.mxu0 0.0
      %2346 = vmatpush.msra.mxu0 0.0
      %2347 = vmatpush.msra.mxu0 %v1952
      %2348 = vmatpush.msra.mxu0 %v1951
      %2349 = vmatpush.msra.mxu0 %v1950
      %2350 = vmatpush.msra.mxu0 %v1949
      %2351 = vmatpush.msra.mxu0 %v1948
      %2352 = vmatpush.msra.mxu0 %v1947
      %2353 = vmatpush.msra.mxu0 %v1946
      %2354 = vmatpush.msra.mxu0 %v1945
      %2355 = vmatmul.f32.gmra.mxu0 %v1956
      %v2356 = vpop.f32.mrf.mxu0
      %v2357 = vadd.f32 %v1953, %v2356
      %2358 = vmatmul.f32.gmra.mxu0 %v1959
      %v2359 = vpop.f32.mrf.mxu0
      %v2360 = vadd.f32 %v1953, %v2359
      %2361 = vmatmul.f32.gmra.mxu0 %v1962
      %v2362 = vpop.f32.mrf.mxu0
      %v2363 = vadd.f32 %v1953, %v2362
      %2364 = vmatmul.f32.gmra.mxu0 %v1965
      %v2365 = vpop.f32.mrf.mxu0
      %v2366 = vadd.f32 %v1953, %v2365
      %2367 = vmatmul.f32.gmra.mxu0 %v1968
      %v2368 = vpop.f32.mrf.mxu0
      %v2369 = vadd.f32 %v1953, %v2368
      %2370 = vmatmul.f32.gmra.mxu0 %v1971
      %v2371 = vpop.f32.mrf.mxu0
      %v2372 = vadd.f32 %v1953, %v2371
      %2373 = vmatmul.f32.gmra.mxu0 %v1974
      %v2374 = vpop.f32.mrf.mxu0
      %v2375 = vadd.f32 %v1953, %v2374
      %2376 = vmatmul.f32.gmra.mxu0 %v1977
      %v2377 = vpop.f32.mrf.mxu0
      %v2378 = vadd.f32 %v1953, %v2377
      %2379 = vmatmul.f32.gmra.mxu0 %v1980
      %v2380 = vpop.f32.mrf.mxu0
      %v2381 = vadd.f32 %v1953, %v2380
      %2382 = vmatmul.f32.gmra.mxu0 %v1983
      %v2383 = vpop.f32.mrf.mxu0
      %v2384 = vadd.f32 %v1953, %v2383
      %2385 = vmatmul.f32.gmra.mxu0 %v1986
      %v2386 = vpop.f32.mrf.mxu0
      %v2387 = vadd.f32 %v1953, %v2386
      %2388 = vmatmul.f32.gmra.mxu0 %v1989
      %v2389 = vpop.f32.mrf.mxu0
      %v2390 = vadd.f32 %v1953, %v2389
      %2391 = vmatmul.f32.gmra.mxu0 %v1992
      %v2392 = vpop.f32.mrf.mxu0
      %v2393 = vadd.f32 %v1953, %v2392
      %2394 = vmatmul.f32.gmra.mxu0 %v1995
      %v2395 = vpop.f32.mrf.mxu0
      %v2396 = vadd.f32 %v1953, %v2395
      %2397 = vmatmul.f32.gmra.mxu0 %v1998
      %v2398 = vpop.f32.mrf.mxu0
      %v2399 = vadd.f32 %v1953, %v2398
      %2400 = vmatmul.f32.gmra.mxu0 %v2001
      %v2401 = vpop.f32.mrf.mxu0
      %v2402 = vadd.f32 %v1953, %v2401
      %2403 = vmatmul.f32.gmra.mxu0 %v2004
      %v2404 = vpop.f32.mrf.mxu0
      %v2405 = vadd.f32 %v1953, %v2404
      %2406 = vmatmul.f32.gmra.mxu0 %v2007
      %v2407 = vpop.f32.mrf.mxu0
      %v2408 = vadd.f32 %v1953, %v2407
      %2409 = vmatmul.f32.gmra.mxu0 %v2010
      %v2410 = vpop.f32.mrf.mxu0
      %v2411 = vadd.f32 %v1953, %v2410
      %2412 = vmatmul.f32.gmra.mxu0 %v2013
      %v2413 = vpop.f32.mrf.mxu0
      %v2414 = vadd.f32 %v1953, %v2413
      %2415 = vmatmul.f32.gmra.mxu0 %v2016
      %v2416 = vpop.f32.mrf.mxu0
      %v2417 = vadd.f32 %v1953, %v2416
      %2418 = vmatmul.f32.gmra.mxu0 %v2019
      %v2419 = vpop.f32.mrf.mxu0
      %v2420 = vadd.f32 %v1953, %v2419
      %2421 = vmatmul.f32.gmra.mxu0 %v2022
      %v2422 = vpop.f32.mrf.mxu0
      %v2423 = vadd.f32 %v1953, %v2422
      %2424 = vmatmul.f32.gmra.mxu0 %v2025
      %v2425 = vpop.f32.mrf.mxu0
      %v2426 = vadd.f32 %v1953, %v2425
      %2427 = vmatmul.f32.gmra.mxu0 %v2028
      %v2428 = vpop.f32.mrf.mxu0
      %v2429 = vadd.f32 %v1953, %v2428
      %2430 = vmatmul.f32.gmra.mxu0 %v2031
      %v2431 = vpop.f32.mrf.mxu0
      %v2432 = vadd.f32 %v1953, %v2431
      %2433 = vmatmul.f32.gmra.mxu0 %v2034
      %v2434 = vpop.f32.mrf.mxu0
      %v2435 = vadd.f32 %v1953, %v2434
      %2436 = vmatmul.f32.gmra.mxu0 %v2037
      %v2437 = vpop.f32.mrf.mxu0
      %v2438 = vadd.f32 %v1953, %v2437
      %2439 = vmatmul.f32.gmra.mxu0 %v2040
      %v2440 = vpop.f32.mrf.mxu0
      %v2441 = vadd.f32 %v1953, %v2440
      %2442 = vmatmul.f32.gmra.mxu0 %v2043
      %v2443 = vpop.f32.mrf.mxu0
      %v2444 = vadd.f32 %v1953, %v2443
      %2445 = vmatmul.f32.gmra.mxu0 %v2046
      %v2446 = vpop.f32.mrf.mxu0
      %v2447 = vadd.f32 %v1953, %v2446
      %2448 = vmatmul.f32.gmra.mxu0 %v2049
      %v2449 = vpop.f32.mrf.mxu0
      %v2450 = vadd.f32 %v1953, %v2449
      %2451 = vmatmul.f32.gmra.mxu0 %v2052
      %v2452 = vpop.f32.mrf.mxu0
      %v2453 = vadd.f32 %v1953, %v2452
      %2454 = vmatmul.f32.gmra.mxu0 %v2055
      %v2455 = vpop.f32.mrf.mxu0
      %v2456 = vadd.f32 %v1953, %v2455
      %2457 = vmatmul.f32.gmra.mxu0 %v2058
      %v2458 = vpop.f32.mrf.mxu0
      %v2459 = vadd.f32 %v1953, %v2458
      %2460 = vmatmul.f32.gmra.mxu0 %v2061
      %v2461 = vpop.f32.mrf.mxu0
      %v2462 = vadd.f32 %v1953, %v2461
      %2463 = vmatmul.f32.gmra.mxu0 %v2064
      %v2464 = vpop.f32.mrf.mxu0
      %v2465 = vadd.f32 %v1953, %v2464
      %2466 = vmatmul.f32.gmra.mxu0 %v2067
      %v2467 = vpop.f32.mrf.mxu0
      %v2468 = vadd.f32 %v1953, %v2467
      %2469 = vmatmul.f32.gmra.mxu0 %v2070
      %v2470 = vpop.f32.mrf.mxu0
      %v2471 = vadd.f32 %v1953, %v2470
      %2472 = vmatmul.f32.gmra.mxu0 %v2073
      %v2473 = vpop.f32.mrf.mxu0
      %v2474 = vadd.f32 %v1953, %v2473
      %2475 = vmatmul.f32.gmra.mxu0 %v2076
      %v2476 = vpop.f32.mrf.mxu0
      %v2477 = vadd.f32 %v1953, %v2476
      %2478 = vmatmul.f32.gmra.mxu0 %v2079
      %v2479 = vpop.f32.mrf.mxu0
      %v2480 = vadd.f32 %v1953, %v2479
      %2481 = vmatmul.f32.gmra.mxu0 %v2082
      %v2482 = vpop.f32.mrf.mxu0
      %v2483 = vadd.f32 %v1953, %v2482
      %2484 = vmatmul.f32.gmra.mxu0 %v2085
      %v2485 = vpop.f32.mrf.mxu0
      %v2486 = vadd.f32 %v1953, %v2485
      %2487 = vmatmul.f32.gmra.mxu0 %v2088
      %v2488 = vpop.f32.mrf.mxu0
      %v2489 = vadd.f32 %v1953, %v2488
      %2490 = vmatmul.f32.gmra.mxu0 %v2091
      %v2491 = vpop.f32.mrf.mxu0
      %v2492 = vadd.f32 %v1953, %v2491
      %2493 = vmatmul.f32.gmra.mxu0 %v2094
      %v2494 = vpop.f32.mrf.mxu0
      %v2495 = vadd.f32 %v1953, %v2494
      %2496 = vmatmul.f32.gmra.mxu0 %v2097
      %v2497 = vpop.f32.mrf.mxu0
      %v2498 = vadd.f32 %v1953, %v2497
      %2499 = vmatmul.f32.gmra.mxu0 %v2100
      %v2500 = vpop.f32.mrf.mxu0
      %v2501 = vadd.f32 %v1953, %v2500
      %2502 = vmatmul.f32.gmra.mxu0 %v2103
      %v2503 = vpop.f32.mrf.mxu0
      %v2504 = vadd.f32 %v1953, %v2503
      %2505 = vmatmul.f32.gmra.mxu0 %v2106
      %v2506 = vpop.f32.mrf.mxu0
      %v2507 = vadd.f32 %v1953, %v2506
      %2508 = vmatmul.f32.gmra.mxu0 %v2109
      %v2509 = vpop.f32.mrf.mxu0
      %v2510 = vadd.f32 %v1953, %v2509
      %2511 = vmatmul.f32.gmra.mxu0 %v2112
      %v2512 = vpop.f32.mrf.mxu0
      %v2513 = vadd.f32 %v1953, %v2512
      %2514 = vmatmul.f32.gmra.mxu0 %v2115
      %v2515 = vpop.f32.mrf.mxu0
      %v2516 = vadd.f32 %v1953, %v2515
      %2517 = vmatmul.f32.gmra.mxu0 %v2118
      %v2518 = vpop.f32.mrf.mxu0
      %v2519 = vadd.f32 %v1953, %v2518
      %2520 = vmatmul.f32.gmra.mxu0 %v2121
      %v2521 = vpop.f32.mrf.mxu0
      %v2522 = vadd.f32 %v1953, %v2521
      %2523 = vmatmul.f32.gmra.mxu0 %v2124
      %v2524 = vpop.f32.mrf.mxu0
      %v2525 = vadd.f32 %v1953, %v2524
      %2526 = vmatmul.f32.gmra.mxu0 %v2127
      %v2527 = vpop.f32.mrf.mxu0
      %v2528 = vadd.f32 %v1953, %v2527
      %2529 = vmatmul.f32.gmra.mxu0 %v2130
      %v2530 = vpop.f32.mrf.mxu0
      %v2531 = vadd.f32 %v1953, %v2530
      %2532 = vmatmul.f32.gmra.mxu0 %v2133
      %v2533 = vpop.f32.mrf.mxu0
      %v2534 = vadd.f32 %v1953, %v2533
      %2535 = vmatmul.f32.gmra.mxu0 %v2136
      %v2536 = vpop.f32.mrf.mxu0
      %v2537 = vadd.f32 %v1953, %v2536
      %2538 = vmatmul.f32.gmra.mxu0 %v2139
      %v2539 = vpop.f32.mrf.mxu0
      %v2540 = vadd.f32 %v1953, %v2539
      %2541 = vmatmul.f32.gmra.mxu0 %v2142
      %v2542 = vpop.f32.mrf.mxu0
      %v2543 = vadd.f32 %v1953, %v2542
      %2544 = vmatmul.f32.gmra.mxu0 %v2145
      %v2545 = vpop.f32.mrf.mxu0
      %v2546 = vadd.f32 %v1953, %v2545
      %2547 = vmatmul.f32.gmra.mxu0 %v2148
      %v2548 = vpop.f32.mrf.mxu0
      %v2549 = vadd.f32 %v1953, %v2548
      %2550 = vmatmul.f32.gmra.mxu0 %v2151
      %v2551 = vpop.f32.mrf.mxu0
      %v2552 = vadd.f32 %v1953, %v2551
      %2553 = vmatmul.f32.gmra.mxu0 %v2154
      %v2554 = vpop.f32.mrf.mxu0
      %v2555 = vadd.f32 %v1953, %v2554
      %2556 = vmatmul.f32.gmra.mxu0 %v2157
      %v2557 = vpop.f32.mrf.mxu0
      %v2558 = vadd.f32 %v1953, %v2557
      %2559 = vmatmul.f32.gmra.mxu0 %v2160
      %v2560 = vpop.f32.mrf.mxu0
      %v2561 = vadd.f32 %v1953, %v2560
      %2562 = vmatmul.f32.gmra.mxu0 %v2163
      %v2563 = vpop.f32.mrf.mxu0
      %v2564 = vadd.f32 %v1953, %v2563
      %2565 = vmatmul.f32.gmra.mxu0 %v2166
      %v2566 = vpop.f32.mrf.mxu0
      %v2567 = vadd.f32 %v1953, %v2566
      %2568 = vmatmul.f32.gmra.mxu0 %v2169
      %v2569 = vpop.f32.mrf.mxu0
      %v2570 = vadd.f32 %v1953, %v2569
      %2571 = vmatmul.f32.gmra.mxu0 %v2172
      %v2572 = vpop.f32.mrf.mxu0
      %v2573 = vadd.f32 %v1953, %v2572
      %2574 = vmatmul.f32.gmra.mxu0 %v2175
      %v2575 = vpop.f32.mrf.mxu0
      %v2576 = vadd.f32 %v1953, %v2575
      %2577 = vmatmul.f32.gmra.mxu0 %v2178
      %v2578 = vpop.f32.mrf.mxu0
      %v2579 = vadd.f32 %v1953, %v2578
      %2580 = vmatmul.f32.gmra.mxu0 %v2181
      %v2581 = vpop.f32.mrf.mxu0
      %v2582 = vadd.f32 %v1953, %v2581
      %2583 = vmatmul.f32.gmra.mxu0 %v2184
      %v2584 = vpop.f32.mrf.mxu0
      %v2585 = vadd.f32 %v1953, %v2584
      %2586 = vmatmul.f32.gmra.mxu0 %v2187
      %v2587 = vpop.f32.mrf.mxu0
      %v2588 = vadd.f32 %v1953, %v2587
      %2589 = vmatmul.f32.gmra.mxu0 %v2190
      %v2590 = vpop.f32.mrf.mxu0
      %v2591 = vadd.f32 %v1953, %v2590
      %2592 = vmatmul.f32.gmra.mxu0 %v2193
      %v2593 = vpop.f32.mrf.mxu0
      %v2594 = vadd.f32 %v1953, %v2593
      %2595 = vmatmul.f32.gmra.mxu0 %v2196
      %v2596 = vpop.f32.mrf.mxu0
      %v2597 = vadd.f32 %v1953, %v2596
      %2598 = vmatmul.f32.gmra.mxu0 %v2199
      %v2599 = vpop.f32.mrf.mxu0
      %v2600 = vadd.f32 %v1953, %v2599
      %2601 = vmatmul.f32.gmra.mxu0 %v2202
      %v2602 = vpop.f32.mrf.mxu0
      %v2603 = vadd.f32 %v1953, %v2602
      %2604 = vmatmul.f32.gmra.mxu0 %v2205
      %v2605 = vpop.f32.mrf.mxu0
      %v2606 = vadd.f32 %v1953, %v2605
      %2607 = vmatmul.f32.gmra.mxu0 %v2208
      %v2608 = vpop.f32.mrf.mxu0
      %v2609 = vadd.f32 %v1953, %v2608
      %2610 = vmatmul.f32.gmra.mxu0 %v2211
      %v2611 = vpop.f32.mrf.mxu0
      %v2612 = vadd.f32 %v1953, %v2611
      %2613 = vmatmul.f32.gmra.mxu0 %v2214
      %v2614 = vpop.f32.mrf.mxu0
      %v2615 = vadd.f32 %v1953, %v2614
      %2616 = vmatmul.f32.gmra.mxu0 %v2217
      %v2617 = vpop.f32.mrf.mxu0
      %v2618 = vadd.f32 %v1953, %v2617
      %2619 = vmatmul.f32.gmra.mxu0 %v2220
      %v2620 = vpop.f32.mrf.mxu0
      %v2621 = vadd.f32 %v1953, %v2620
      %2622 = vmatmul.f32.gmra.mxu0 %v2223
      %v2623 = vpop.f32.mrf.mxu0
      %v2624 = vadd.f32 %v1953, %v2623
      %2625 = vmatmul.f32.gmra.mxu0 %v2226
      %v2626 = vpop.f32.mrf.mxu0
      %v2627 = vadd.f32 %v1953, %v2626
      %2628 = vmatmul.f32.gmra.mxu0 %v2229
      %v2629 = vpop.f32.mrf.mxu0
      %v2630 = vadd.f32 %v1953, %v2629
      %2631 = vmatmul.f32.gmra.mxu0 %v2232
      %v2632 = vpop.f32.mrf.mxu0
      %v2633 = vadd.f32 %v1953, %v2632
      %2634 = vmatmul.f32.gmra.mxu0 %v2235
      %v2635 = vpop.f32.mrf.mxu0
      %v2636 = vadd.f32 %v1953, %v2635
      %2637 = vmatmul.f32.gmra.mxu0 %v2238
      %v2638 = vpop.f32.mrf.mxu0
      %v2639 = vadd.f32 %v1953, %v2638
      %2640 = vmatmul.f32.gmra.mxu0 %v2241
      %v2641 = vpop.f32.mrf.mxu0
      %v2642 = vadd.f32 %v1953, %v2641
      %2643 = vmatmul.f32.gmra.mxu0 %v2244
      %v2644 = vpop.f32.mrf.mxu0
      %v2645 = vadd.f32 %v1953, %v2644
      %2646 = vmatmul.f32.gmra.mxu0 %v2247
      %v2647 = vpop.f32.mrf.mxu0
      %v2648 = vadd.f32 %v1953, %v2647
      %2649 = vmatmul.f32.gmra.mxu0 %v2250
      %v2650 = vpop.f32.mrf.mxu0
      %v2651 = vadd.f32 %v1953, %v2650
      %2652 = vmatmul.f32.gmra.mxu0 %v2253
      %v2653 = vpop.f32.mrf.mxu0
      %v2654 = vadd.f32 %v1953, %v2653
      %2655 = vmatmul.f32.gmra.mxu0 %v2256
      %v2656 = vpop.f32.mrf.mxu0
      %v2657 = vadd.f32 %v1953, %v2656
      %2658 = vmatmul.f32.gmra.mxu0 %v2259
      %v2659 = vpop.f32.mrf.mxu0
      %v2660 = vadd.f32 %v1953, %v2659
      %2661 = vmatmul.f32.gmra.mxu0 %v2262
      %v2662 = vpop.f32.mrf.mxu0
      %v2663 = vadd.f32 %v1953, %v2662
      %2664 = vmatmul.f32.gmra.mxu0 %v2265
      %v2665 = vpop.f32.mrf.mxu0
      %v2666 = vadd.f32 %v1953, %v2665
      %2667 = vmatmul.f32.gmra.mxu0 %v2268
      %v2668 = vpop.f32.mrf.mxu0
      %v2669 = vadd.f32 %v1953, %v2668
      %2670 = vmatmul.f32.gmra.mxu0 %v2271
      %v2671 = vpop.f32.mrf.mxu0
      %v2672 = vadd.f32 %v1953, %v2671
      %2673 = vmatmul.f32.gmra.mxu0 %v2274
      %v2674 = vpop.f32.mrf.mxu0
      %v2675 = vadd.f32 %v1953, %v2674
      %2676 = vmatmul.f32.gmra.mxu0 %v2277
      %v2677 = vpop.f32.mrf.mxu0
      %v2678 = vadd.f32 %v1953, %v2677
      %2679 = vmatmul.f32.gmra.mxu0 %v2280
      %v2680 = vpop.f32.mrf.mxu0
      %v2681 = vadd.f32 %v1953, %v2680
      %2682 = vmatmul.f32.gmra.mxu0 %v2283
      %v2683 = vpop.f32.mrf.mxu0
      %v2684 = vadd.f32 %v1953, %v2683
      %2685 = vmatmul.f32.gmra.mxu0 %v2286
      %v2686 = vpop.f32.mrf.mxu0
      %v2687 = vadd.f32 %v1953, %v2686
      %2688 = vmatmul.f32.gmra.mxu0 %v2289
      %v2689 = vpop.f32.mrf.mxu0
      %v2690 = vadd.f32 %v1953, %v2689
      %2691 = vmatmul.f32.gmra.mxu0 %v2292
      %v2692 = vpop.f32.mrf.mxu0
      %v2693 = vadd.f32 %v1953, %v2692
      %2694 = vmatmul.f32.gmra.mxu0 %v2295
      %v2695 = vpop.f32.mrf.mxu0
      %v2696 = vadd.f32 %v1953, %v2695
      %2697 = vmatmul.f32.gmra.mxu0 %v2298
      %v2698 = vpop.f32.mrf.mxu0
      %v2699 = vadd.f32 %v1953, %v2698
      %2700 = vmatmul.f32.gmra.mxu0 %v2301
      %v2701 = vpop.f32.mrf.mxu0
      %v2702 = vadd.f32 %v1953, %v2701
      %2703 = vmatmul.f32.gmra.mxu0 %v2304
      %v2704 = vpop.f32.mrf.mxu0
      %v2705 = vadd.f32 %v1953, %v2704
      %2706 = vmatmul.f32.gmra.mxu0 %v2307
      %v2707 = vpop.f32.mrf.mxu0
      %v2708 = vadd.f32 %v1953, %v2707
      %2709 = vmatmul.f32.gmra.mxu0 %v2310
      %v2710 = vpop.f32.mrf.mxu0
      %v2711 = vadd.f32 %v1953, %v2710
      %2712 = vmatmul.f32.gmra.mxu0 %v2313
      %v2713 = vpop.f32.mrf.mxu0
      %v2714 = vadd.f32 %v1953, %v2713
      %2715 = vmatmul.f32.gmra.mxu0 %v2316
      %v2716 = vpop.f32.mrf.mxu0
      %v2717 = vadd.f32 %v1953, %v2716
      %2718 = vmatmul.f32.gmra.mxu0 %v2319
      %v2719 = vpop.f32.mrf.mxu0
      %v2720 = vadd.f32 %v1953, %v2719
      %2721 = vmatmul.f32.gmra.mxu0 %v2322
      %v2722 = vpop.f32.mrf.mxu0
      %v2723 = vadd.f32 %v1953, %v2722
      %2724 = vmatmul.f32.gmra.mxu0 %v2325
      %v2725 = vpop.f32.mrf.mxu0
      %v2726 = vadd.f32 %v1953, %v2725
      %2727 = vmatmul.f32.gmra.mxu0 %v2328
      %v2728 = vpop.f32.mrf.mxu0
      %v2729 = vadd.f32 %v1953, %v2728
      %2730 = vmatmul.f32.gmra.mxu0 %v2331
      %v2731 = vpop.f32.mrf.mxu0
      %v2732 = vadd.f32 %v1953, %v2731
      %2733 = vmatmul.f32.gmra.mxu0 %v2334
      %v2734 = vpop.f32.mrf.mxu0
      %v2735 = vadd.f32 %v1953, %v2734
      %2736 = vmatmul.f32.gmra.mxu0 %v2337
      %v2737 = vpop.f32.mrf.mxu0
      %v2738 = vadd.f32 %v1953, %v2737
      %2739 = vdwg.mxu0
      %v2740 = vmax.f32 %v2357, 0.0
      %v2741 = vmax.f32 %v2360, 0.0
      %v2742 = vmax.f32 %v2363, 0.0
      %v2743 = vmax.f32 %v2366, 0.0
      %v2744 = vmax.f32 %v2369, 0.0
      %v2745 = vmax.f32 %v2372, 0.0
      %v2746 = vmax.f32 %v2375, 0.0
      %v2747 = vmax.f32 %v2378, 0.0
      %v2748 = vmax.f32 %v2381, 0.0
      %v2749 = vmax.f32 %v2384, 0.0
      %v2750 = vmax.f32 %v2387, 0.0
      %v2751 = vmax.f32 %v2390, 0.0
      %v2752 = vmax.f32 %v2393, 0.0
      %v2753 = vmax.f32 %v2396, 0.0
      %v2754 = vmax.f32 %v2399, 0.0
      %v2755 = vmax.f32 %v2402, 0.0
      %v2756 = vmax.f32 %v2405, 0.0
      %v2757 = vmax.f32 %v2408, 0.0
      %v2758 = vmax.f32 %v2411, 0.0
      %v2759 = vmax.f32 %v2414, 0.0
      %v2760 = vmax.f32 %v2417, 0.0
      %v2761 = vmax.f32 %v2420, 0.0
      %v2762 = vmax.f32 %v2423, 0.0
      %v2763 = vmax.f32 %v2426, 0.0
      %v2764 = vmax.f32 %v2429, 0.0
      %v2765 = vmax.f32 %v2432, 0.0
      %v2766 = vmax.f32 %v2435, 0.0
      %v2767 = vmax.f32 %v2438, 0.0
      %v2768 = vmax.f32 %v2441, 0.0
      %v2769 = vmax.f32 %v2444, 0.0
      %v2770 = vmax.f32 %v2447, 0.0
      %v2771 = vmax.f32 %v2450, 0.0
      %v2772 = vmax.f32 %v2453, 0.0
      %v2773 = vmax.f32 %v2456, 0.0
      %v2774 = vmax.f32 %v2459, 0.0
      %v2775 = vmax.f32 %v2462, 0.0
      %v2776 = vmax.f32 %v2465, 0.0
      %v2777 = vmax.f32 %v2468, 0.0
      %v2778 = vmax.f32 %v2471, 0.0
      %v2779 = vmax.f32 %v2474, 0.0
      %v2780 = vmax.f32 %v2477, 0.0
      %v2781 = vmax.f32 %v2480, 0.0
      %v2782 = vmax.f32 %v2483, 0.0
      %v2783 = vmax.f32 %v2486, 0.0
      %v2784 = vmax.f32 %v2489, 0.0
      %v2785 = vmax.f32 %v2492, 0.0
      %v2786 = vmax.f32 %v2495, 0.0
      %v2787 = vmax.f32 %v2498, 0.0
      %v2788 = vmax.f32 %v2501, 0.0
      %v2789 = vmax.f32 %v2504, 0.0
      %v2790 = vmax.f32 %v2507, 0.0
      %v2791 = vmax.f32 %v2510, 0.0
      %v2792 = vmax.f32 %v2513, 0.0
      %v2793 = vmax.f32 %v2516, 0.0
      %v2794 = vmax.f32 %v2519, 0.0
      %v2795 = vmax.f32 %v2522, 0.0
      %v2796 = vmax.f32 %v2525, 0.0
      %v2797 = vmax.f32 %v2528, 0.0
      %v2798 = vmax.f32 %v2531, 0.0
      %v2799 = vmax.f32 %v2534, 0.0
      %v2800 = vmax.f32 %v2537, 0.0
      %v2801 = vmax.f32 %v2540, 0.0
      %v2802 = vmax.f32 %v2543, 0.0
      %v2803 = vmax.f32 %v2546, 0.0
      %v2804 = vmax.f32 %v2549, 0.0
      %v2805 = vmax.f32 %v2552, 0.0
      %v2806 = vmax.f32 %v2555, 0.0
      %v2807 = vmax.f32 %v2558, 0.0
      %v2808 = vmax.f32 %v2561, 0.0
      %v2809 = vmax.f32 %v2564, 0.0
      %v2810 = vmax.f32 %v2567, 0.0
      %v2811 = vmax.f32 %v2570, 0.0
      %v2812 = vmax.f32 %v2573, 0.0
      %v2813 = vmax.f32 %v2576, 0.0
      %v2814 = vmax.f32 %v2579, 0.0
      %v2815 = vmax.f32 %v2582, 0.0
      %v2816 = vmax.f32 %v2585, 0.0
      %v2817 = vmax.f32 %v2588, 0.0
      %v2818 = vmax.f32 %v2591, 0.0
      %v2819 = vmax.f32 %v2594, 0.0
      %v2820 = vmax.f32 %v2597, 0.0
      %v2821 = vmax.f32 %v2600, 0.0
      %v2822 = vmax.f32 %v2603, 0.0
      %v2823 = vmax.f32 %v2606, 0.0
      %v2824 = vmax.f32 %v2609, 0.0
      %v2825 = vmax.f32 %v2612, 0.0
      %v2826 = vmax.f32 %v2615, 0.0
      %v2827 = vmax.f32 %v2618, 0.0
      %v2828 = vmax.f32 %v2621, 0.0
      %v2829 = vmax.f32 %v2624, 0.0
      %v2830 = vmax.f32 %v2627, 0.0
      %v2831 = vmax.f32 %v2630, 0.0
      %v2832 = vmax.f32 %v2633, 0.0
      %v2833 = vmax.f32 %v2636, 0.0
      %v2834 = vmax.f32 %v2639, 0.0
      %v2835 = vmax.f32 %v2642, 0.0
      %v2836 = vmax.f32 %v2645, 0.0
      %v2837 = vmax.f32 %v2648, 0.0
      %v2838 = vmax.f32 %v2651, 0.0
      %v2839 = vmax.f32 %v2654, 0.0
      %v2840 = vmax.f32 %v2657, 0.0
      %v2841 = vmax.f32 %v2660, 0.0
      %v2842 = vmax.f32 %v2663, 0.0
      %v2843 = vmax.f32 %v2666, 0.0
      %v2844 = vmax.f32 %v2669, 0.0
      %v2845 = vmax.f32 %v2672, 0.0
      %v2846 = vmax.f32 %v2675, 0.0
      %v2847 = vmax.f32 %v2678, 0.0
      %v2848 = vmax.f32 %v2681, 0.0
      %v2849 = vmax.f32 %v2684, 0.0
      %v2850 = vmax.f32 %v2687, 0.0
      %v2851 = vmax.f32 %v2690, 0.0
      %v2852 = vmax.f32 %v2693, 0.0
      %v2853 = vmax.f32 %v2696, 0.0
      %v2854 = vmax.f32 %v2699, 0.0
      %v2855 = vmax.f32 %v2702, 0.0
      %v2856 = vmax.f32 %v2705, 0.0
      %v2857 = vmax.f32 %v2708, 0.0
      %v2858 = vmax.f32 %v2711, 0.0
      %v2859 = vmax.f32 %v2714, 0.0
      %v2860 = vmax.f32 %v2717, 0.0
      %v2861 = vmax.f32 %v2720, 0.0
      %v2862 = vmax.f32 %v2723, 0.0
      %v2863 = vmax.f32 %v2726, 0.0
      %v2864 = vmax.f32 %v2729, 0.0
      %v2865 = vmax.f32 %v2732, 0.0
      %v2866 = vmax.f32 %v2735, 0.0
      %v2867 = vmax.f32 %v2738, 0.0
      %s2868 = scalar_lea.vmem %s2, 64
      %v2869 = vld [vmem:[%s2868] sm:$0xff]
      %v2870 = vld [vmem:[%s2868 + $0x8] sm:$0xff]
      %v2871 = vld [vmem:[%s2868 + $0x10] sm:$0xff]
      %v2872 = vld [vmem:[%s2868 + $0x18] sm:$0xff]
      %v2873 = vld [vmem:[%s2868 + $0x20] sm:$0xff]
      %v2874 = vld [vmem:[%s2868 + $0x28] sm:$0xff]
      %v2875 = vld [vmem:[%s2868 + $0x30] sm:$0xff]
      %v2876 = vld [vmem:[%s2868 + $0x38] sm:$0xff]
      %v2877 = vperm.slane %v1687, 2
      %v2879 = vsel %vm1954, %v2740, 0
      %v2882 = vsel %vm1954, %v2741, 0
      %v2885 = vsel %vm1954, %v2742, 0
      %v2888 = vsel %vm1954, %v2743, 0
      %v2891 = vsel %vm1954, %v2744, 0
      %v2894 = vsel %vm1954, %v2745, 0
      %v2897 = vsel %vm1954, %v2746, 0
      %v2900 = vsel %vm1954, %v2747, 0
      %v2903 = vsel %vm1954, %v2748, 0
      %v2906 = vsel %vm1954, %v2749, 0
      %v2909 = vsel %vm1954, %v2750, 0
      %v2912 = vsel %vm1954, %v2751, 0
      %v2915 = vsel %vm1954, %v2752, 0
      %v2918 = vsel %vm1954, %v2753, 0
      %v2921 = vsel %vm1954, %v2754, 0
      %v2924 = vsel %vm1954, %v2755, 0
      %v2927 = vsel %vm1954, %v2756, 0
      %v2930 = vsel %vm1954, %v2757, 0
      %v2933 = vsel %vm1954, %v2758, 0
      %v2936 = vsel %vm1954, %v2759, 0
      %v2939 = vsel %vm1954, %v2760, 0
      %v2942 = vsel %vm1954, %v2761, 0
      %v2945 = vsel %vm1954, %v2762, 0
      %v2948 = vsel %vm1954, %v2763, 0
      %v2951 = vsel %vm1954, %v2764, 0
      %v2954 = vsel %vm1954, %v2765, 0
      %v2957 = vsel %vm1954, %v2766, 0
      %v2960 = vsel %vm1954, %v2767, 0
      %v2963 = vsel %vm1954, %v2768, 0
      %v2966 = vsel %vm1954, %v2769, 0
      %v2969 = vsel %vm1954, %v2770, 0
      %v2972 = vsel %vm1954, %v2771, 0
      %v2975 = vsel %vm1954, %v2772, 0
      %v2978 = vsel %vm1954, %v2773, 0
      %v2981 = vsel %vm1954, %v2774, 0
      %v2984 = vsel %vm1954, %v2775, 0
      %v2987 = vsel %vm1954, %v2776, 0
      %v2990 = vsel %vm1954, %v2777, 0
      %v2993 = vsel %vm1954, %v2778, 0
      %v2996 = vsel %vm1954, %v2779, 0
      %v2999 = vsel %vm1954, %v2780, 0
      %v3002 = vsel %vm1954, %v2781, 0
      %v3005 = vsel %vm1954, %v2782, 0
      %v3008 = vsel %vm1954, %v2783, 0
      %v3011 = vsel %vm1954, %v2784, 0
      %v3014 = vsel %vm1954, %v2785, 0
      %v3017 = vsel %vm1954, %v2786, 0
      %v3020 = vsel %vm1954, %v2787, 0
      %v3023 = vsel %vm1954, %v2788, 0
      %v3026 = vsel %vm1954, %v2789, 0
      %v3029 = vsel %vm1954, %v2790, 0
      %v3032 = vsel %vm1954, %v2791, 0
      %v3035 = vsel %vm1954, %v2792, 0
      %v3038 = vsel %vm1954, %v2793, 0
      %v3041 = vsel %vm1954, %v2794, 0
      %v3044 = vsel %vm1954, %v2795, 0
      %v3047 = vsel %vm1954, %v2796, 0
      %v3050 = vsel %vm1954, %v2797, 0
      %v3053 = vsel %vm1954, %v2798, 0
      %v3056 = vsel %vm1954, %v2799, 0
      %v3059 = vsel %vm1954, %v2800, 0
      %v3062 = vsel %vm1954, %v2801, 0
      %v3065 = vsel %vm1954, %v2802, 0
      %v3068 = vsel %vm1954, %v2803, 0
      %v3071 = vsel %vm1954, %v2804, 0
      %v3074 = vsel %vm1954, %v2805, 0
      %v3077 = vsel %vm1954, %v2806, 0
      %v3080 = vsel %vm1954, %v2807, 0
      %v3083 = vsel %vm1954, %v2808, 0
      %v3086 = vsel %vm1954, %v2809, 0
      %v3089 = vsel %vm1954, %v2810, 0
      %v3092 = vsel %vm1954, %v2811, 0
      %v3095 = vsel %vm1954, %v2812, 0
      %v3098 = vsel %vm1954, %v2813, 0
      %v3101 = vsel %vm1954, %v2814, 0
      %v3104 = vsel %vm1954, %v2815, 0
      %v3107 = vsel %vm1954, %v2816, 0
      %v3110 = vsel %vm1954, %v2817, 0
      %v3113 = vsel %vm1954, %v2818, 0
      %v3116 = vsel %vm1954, %v2819, 0
      %v3119 = vsel %vm1954, %v2820, 0
      %v3122 = vsel %vm1954, %v2821, 0
      %v3125 = vsel %vm1954, %v2822, 0
      %v3128 = vsel %vm1954, %v2823, 0
      %v3131 = vsel %vm1954, %v2824, 0
      %v3134 = vsel %vm1954, %v2825, 0
      %v3137 = vsel %vm1954, %v2826, 0
      %v3140 = vsel %vm1954, %v2827, 0
      %v3143 = vsel %vm1954, %v2828, 0
      %v3146 = vsel %vm1954, %v2829, 0
      %v3149 = vsel %vm1954, %v2830, 0
      %v3152 = vsel %vm1954, %v2831, 0
      %v3155 = vsel %vm1954, %v2832, 0
      %v3158 = vsel %vm1954, %v2833, 0
      %v3161 = vsel %vm1954, %v2834, 0
      %v3164 = vsel %vm1954, %v2835, 0
      %v3167 = vsel %vm1954, %v2836, 0
      %v3170 = vsel %vm1954, %v2837, 0
      %v3173 = vsel %vm1954, %v2838, 0
      %v3176 = vsel %vm1954, %v2839, 0
      %v3179 = vsel %vm1954, %v2840, 0
      %v3182 = vsel %vm1954, %v2841, 0
      %v3185 = vsel %vm1954, %v2842, 0
      %v3188 = vsel %vm1954, %v2843, 0
      %v3191 = vsel %vm1954, %v2844, 0
      %v3194 = vsel %vm1954, %v2845, 0
      %v3197 = vsel %vm1954, %v2846, 0
      %v3200 = vsel %vm1954, %v2847, 0
      %v3203 = vsel %vm1954, %v2848, 0
      %v3206 = vsel %vm1954, %v2849, 0
      %v3209 = vsel %vm1954, %v2850, 0
      %v3212 = vsel %vm1954, %v2851, 0
      %v3215 = vsel %vm1954, %v2852, 0
      %v3218 = vsel %vm1954, %v2853, 0
      %v3221 = vsel %vm1954, %v2854, 0
      %v3224 = vsel %vm1954, %v2855, 0
      %v3227 = vsel %vm1954, %v2856, 0
      %v3230 = vsel %vm1954, %v2857, 0
      %v3233 = vsel %vm1954, %v2858, 0
      %v3236 = vsel %vm1954, %v2859, 0
      %v3239 = vsel %vm1954, %v2860, 0
      %v3242 = vsel %vm1954, %v2861, 0
      %v3245 = vsel %vm1954, %v2862, 0
      %v3248 = vsel %vm1954, %v2863, 0
      %v3251 = vsel %vm1954, %v2864, 0
      %v3254 = vsel %vm1954, %v2865, 0
      %v3257 = vsel %vm1954, %v2866, 0
      %v3260 = vsel %vm1954, %v2867, 0
      %3262 = vmatpush.msra.mxu0 0.0
      %3263 = vmatpush.msra.mxu0 0.0
      %3264 = vmatpush.msra.mxu0 0.0
      %3265 = vmatpush.msra.mxu0 0.0
      %3266 = vmatpush.msra.mxu0 0.0
      %3267 = vmatpush.msra.mxu0 0.0
      %3268 = vmatpush.msra.mxu0 0.0
      %3269 = vmatpush.msra.mxu0 0.0
      %3270 = vmatpush.msra.mxu0 %v2876
      %3271 = vmatpush.msra.mxu0 %v2875
      %3272 = vmatpush.msra.mxu0 %v2874
      %3273 = vmatpush.msra.mxu0 %v2873
      %3274 = vmatpush.msra.mxu0 %v2872
      %3275 = vmatpush.msra.mxu0 %v2871
      %3276 = vmatpush.msra.mxu0 %v2870
      %3277 = vmatpush.msra.mxu0 %v2869
      %3278 = vmatmul.f32.gmra.mxu0 %v2879
      %v3279 = vpop.f32.mrf.mxu0
      %v3280 = vadd.f32 %v2877, %v3279
      %3281 = vmatmul.f32.gmra.mxu0 %v2882
      %v3282 = vpop.f32.mrf.mxu0
      %v3283 = vadd.f32 %v2877, %v3282
      %3284 = vmatmul.f32.gmra.mxu0 %v2885
      %v3285 = vpop.f32.mrf.mxu0
      %v3286 = vadd.f32 %v2877, %v3285
      %3287 = vmatmul.f32.gmra.mxu0 %v2888
      %v3288 = vpop.f32.mrf.mxu0
      %v3289 = vadd.f32 %v2877, %v3288
      %3290 = vmatmul.f32.gmra.mxu0 %v2891
      %v3291 = vpop.f32.mrf.mxu0
      %v3292 = vadd.f32 %v2877, %v3291
      %3293 = vmatmul.f32.gmra.mxu0 %v2894
      %v3294 = vpop.f32.mrf.mxu0
      %v3295 = vadd.f32 %v2877, %v3294
      %3296 = vmatmul.f32.gmra.mxu0 %v2897
      %v3297 = vpop.f32.mrf.mxu0
      %v3298 = vadd.f32 %v2877, %v3297
      %3299 = vmatmul.f32.gmra.mxu0 %v2900
      %v3300 = vpop.f32.mrf.mxu0
      %v3301 = vadd.f32 %v2877, %v3300
      %3302 = vmatmul.f32.gmra.mxu0 %v2903
      %v3303 = vpop.f32.mrf.mxu0
      %v3304 = vadd.f32 %v2877, %v3303
      %3305 = vmatmul.f32.gmra.mxu0 %v2906
      %v3306 = vpop.f32.mrf.mxu0
      %v3307 = vadd.f32 %v2877, %v3306
      %3308 = vmatmul.f32.gmra.mxu0 %v2909
      %v3309 = vpop.f32.mrf.mxu0
      %v3310 = vadd.f32 %v2877, %v3309
      %3311 = vmatmul.f32.gmra.mxu0 %v2912
      %v3312 = vpop.f32.mrf.mxu0
      %v3313 = vadd.f32 %v2877, %v3312
      %3314 = vmatmul.f32.gmra.mxu0 %v2915
      %v3315 = vpop.f32.mrf.mxu0
      %v3316 = vadd.f32 %v2877, %v3315
      %3317 = vmatmul.f32.gmra.mxu0 %v2918
      %v3318 = vpop.f32.mrf.mxu0
      %v3319 = vadd.f32 %v2877, %v3318
      %3320 = vmatmul.f32.gmra.mxu0 %v2921
      %v3321 = vpop.f32.mrf.mxu0
      %v3322 = vadd.f32 %v2877, %v3321
      %3323 = vmatmul.f32.gmra.mxu0 %v2924
      %v3324 = vpop.f32.mrf.mxu0
      %v3325 = vadd.f32 %v2877, %v3324
      %3326 = vmatmul.f32.gmra.mxu0 %v2927
      %v3327 = vpop.f32.mrf.mxu0
      %v3328 = vadd.f32 %v2877, %v3327
      %3329 = vmatmul.f32.gmra.mxu0 %v2930
      %v3330 = vpop.f32.mrf.mxu0
      %v3331 = vadd.f32 %v2877, %v3330
      %3332 = vmatmul.f32.gmra.mxu0 %v2933
      %v3333 = vpop.f32.mrf.mxu0
      %v3334 = vadd.f32 %v2877, %v3333
      %3335 = vmatmul.f32.gmra.mxu0 %v2936
      %v3336 = vpop.f32.mrf.mxu0
      %v3337 = vadd.f32 %v2877, %v3336
      %3338 = vmatmul.f32.gmra.mxu0 %v2939
      %v3339 = vpop.f32.mrf.mxu0
      %v3340 = vadd.f32 %v2877, %v3339
      %3341 = vmatmul.f32.gmra.mxu0 %v2942
      %v3342 = vpop.f32.mrf.mxu0
      %v3343 = vadd.f32 %v2877, %v3342
      %3344 = vmatmul.f32.gmra.mxu0 %v2945
      %v3345 = vpop.f32.mrf.mxu0
      %v3346 = vadd.f32 %v2877, %v3345
      %3347 = vmatmul.f32.gmra.mxu0 %v2948
      %v3348 = vpop.f32.mrf.mxu0
      %v3349 = vadd.f32 %v2877, %v3348
      %3350 = vmatmul.f32.gmra.mxu0 %v2951
      %v3351 = vpop.f32.mrf.mxu0
      %v3352 = vadd.f32 %v2877, %v3351
      %3353 = vmatmul.f32.gmra.mxu0 %v2954
      %v3354 = vpop.f32.mrf.mxu0
      %v3355 = vadd.f32 %v2877, %v3354
      %3356 = vmatmul.f32.gmra.mxu0 %v2957
      %v3357 = vpop.f32.mrf.mxu0
      %v3358 = vadd.f32 %v2877, %v3357
      %3359 = vmatmul.f32.gmra.mxu0 %v2960
      %v3360 = vpop.f32.mrf.mxu0
      %v3361 = vadd.f32 %v2877, %v3360
      %3362 = vmatmul.f32.gmra.mxu0 %v2963
      %v3363 = vpop.f32.mrf.mxu0
      %v3364 = vadd.f32 %v2877, %v3363
      %3365 = vmatmul.f32.gmra.mxu0 %v2966
      %v3366 = vpop.f32.mrf.mxu0
      %v3367 = vadd.f32 %v2877, %v3366
      %3368 = vmatmul.f32.gmra.mxu0 %v2969
      %v3369 = vpop.f32.mrf.mxu0
      %v3370 = vadd.f32 %v2877, %v3369
      %3371 = vmatmul.f32.gmra.mxu0 %v2972
      %v3372 = vpop.f32.mrf.mxu0
      %v3373 = vadd.f32 %v2877, %v3372
      %3374 = vmatmul.f32.gmra.mxu0 %v2975
      %v3375 = vpop.f32.mrf.mxu0
      %v3376 = vadd.f32 %v2877, %v3375
      %3377 = vmatmul.f32.gmra.mxu0 %v2978
      %v3378 = vpop.f32.mrf.mxu0
      %v3379 = vadd.f32 %v2877, %v3378
      %3380 = vmatmul.f32.gmra.mxu0 %v2981
      %v3381 = vpop.f32.mrf.mxu0
      %v3382 = vadd.f32 %v2877, %v3381
      %3383 = vmatmul.f32.gmra.mxu0 %v2984
      %v3384 = vpop.f32.mrf.mxu0
      %v3385 = vadd.f32 %v2877, %v3384
      %3386 = vmatmul.f32.gmra.mxu0 %v2987
      %v3387 = vpop.f32.mrf.mxu0
      %v3388 = vadd.f32 %v2877, %v3387
      %3389 = vmatmul.f32.gmra.mxu0 %v2990
      %v3390 = vpop.f32.mrf.mxu0
      %v3391 = vadd.f32 %v2877, %v3390
      %3392 = vmatmul.f32.gmra.mxu0 %v2993
      %v3393 = vpop.f32.mrf.mxu0
      %v3394 = vadd.f32 %v2877, %v3393
      %3395 = vmatmul.f32.gmra.mxu0 %v2996
      %v3396 = vpop.f32.mrf.mxu0
      %v3397 = vadd.f32 %v2877, %v3396
      %3398 = vmatmul.f32.gmra.mxu0 %v2999
      %v3399 = vpop.f32.mrf.mxu0
      %v3400 = vadd.f32 %v2877, %v3399
      %3401 = vmatmul.f32.gmra.mxu0 %v3002
      %v3402 = vpop.f32.mrf.mxu0
      %v3403 = vadd.f32 %v2877, %v3402
      %3404 = vmatmul.f32.gmra.mxu0 %v3005
      %v3405 = vpop.f32.mrf.mxu0
      %v3406 = vadd.f32 %v2877, %v3405
      %3407 = vmatmul.f32.gmra.mxu0 %v3008
      %v3408 = vpop.f32.mrf.mxu0
      %v3409 = vadd.f32 %v2877, %v3408
      %3410 = vmatmul.f32.gmra.mxu0 %v3011
      %v3411 = vpop.f32.mrf.mxu0
      %v3412 = vadd.f32 %v2877, %v3411
      %3413 = vmatmul.f32.gmra.mxu0 %v3014
      %v3414 = vpop.f32.mrf.mxu0
      %v3415 = vadd.f32 %v2877, %v3414
      %3416 = vmatmul.f32.gmra.mxu0 %v3017
      %v3417 = vpop.f32.mrf.mxu0
      %v3418 = vadd.f32 %v2877, %v3417
      %3419 = vmatmul.f32.gmra.mxu0 %v3020
      %v3420 = vpop.f32.mrf.mxu0
      %v3421 = vadd.f32 %v2877, %v3420
      %3422 = vmatmul.f32.gmra.mxu0 %v3023
      %v3423 = vpop.f32.mrf.mxu0
      %v3424 = vadd.f32 %v2877, %v3423
      %3425 = vmatmul.f32.gmra.mxu0 %v3026
      %v3426 = vpop.f32.mrf.mxu0
      %v3427 = vadd.f32 %v2877, %v3426
      %3428 = vmatmul.f32.gmra.mxu0 %v3029
      %v3429 = vpop.f32.mrf.mxu0
      %v3430 = vadd.f32 %v2877, %v3429
      %3431 = vmatmul.f32.gmra.mxu0 %v3032
      %v3432 = vpop.f32.mrf.mxu0
      %v3433 = vadd.f32 %v2877, %v3432
      %3434 = vmatmul.f32.gmra.mxu0 %v3035
      %v3435 = vpop.f32.mrf.mxu0
      %v3436 = vadd.f32 %v2877, %v3435
      %3437 = vmatmul.f32.gmra.mxu0 %v3038
      %v3438 = vpop.f32.mrf.mxu0
      %v3439 = vadd.f32 %v2877, %v3438
      %3440 = vmatmul.f32.gmra.mxu0 %v3041
      %v3441 = vpop.f32.mrf.mxu0
      %v3442 = vadd.f32 %v2877, %v3441
      %3443 = vmatmul.f32.gmra.mxu0 %v3044
      %v3444 = vpop.f32.mrf.mxu0
      %v3445 = vadd.f32 %v2877, %v3444
      %3446 = vmatmul.f32.gmra.mxu0 %v3047
      %v3447 = vpop.f32.mrf.mxu0
      %v3448 = vadd.f32 %v2877, %v3447
      %3449 = vmatmul.f32.gmra.mxu0 %v3050
      %v3450 = vpop.f32.mrf.mxu0
      %v3451 = vadd.f32 %v2877, %v3450
      %3452 = vmatmul.f32.gmra.mxu0 %v3053
      %v3453 = vpop.f32.mrf.mxu0
      %v3454 = vadd.f32 %v2877, %v3453
      %3455 = vmatmul.f32.gmra.mxu0 %v3056
      %v3456 = vpop.f32.mrf.mxu0
      %v3457 = vadd.f32 %v2877, %v3456
      %3458 = vmatmul.f32.gmra.mxu0 %v3059
      %v3459 = vpop.f32.mrf.mxu0
      %v3460 = vadd.f32 %v2877, %v3459
      %3461 = vmatmul.f32.gmra.mxu0 %v3062
      %v3462 = vpop.f32.mrf.mxu0
      %v3463 = vadd.f32 %v2877, %v3462
      %3464 = vmatmul.f32.gmra.mxu0 %v3065
      %v3465 = vpop.f32.mrf.mxu0
      %v3466 = vadd.f32 %v2877, %v3465
      %3467 = vmatmul.f32.gmra.mxu0 %v3068
      %v3468 = vpop.f32.mrf.mxu0
      %v3469 = vadd.f32 %v2877, %v3468
      %3470 = vmatmul.f32.gmra.mxu0 %v3071
      %v3471 = vpop.f32.mrf.mxu0
      %v3472 = vadd.f32 %v2877, %v3471
      %3473 = vmatmul.f32.gmra.mxu0 %v3074
      %v3474 = vpop.f32.mrf.mxu0
      %v3475 = vadd.f32 %v2877, %v3474
      %3476 = vmatmul.f32.gmra.mxu0 %v3077
      %v3477 = vpop.f32.mrf.mxu0
      %v3478 = vadd.f32 %v2877, %v3477
      %3479 = vmatmul.f32.gmra.mxu0 %v3080
      %v3480 = vpop.f32.mrf.mxu0
      %v3481 = vadd.f32 %v2877, %v3480
      %3482 = vmatmul.f32.gmra.mxu0 %v3083
      %v3483 = vpop.f32.mrf.mxu0
      %v3484 = vadd.f32 %v2877, %v3483
      %3485 = vmatmul.f32.gmra.mxu0 %v3086
      %v3486 = vpop.f32.mrf.mxu0
      %v3487 = vadd.f32 %v2877, %v3486
      %3488 = vmatmul.f32.gmra.mxu0 %v3089
      %v3489 = vpop.f32.mrf.mxu0
      %v3490 = vadd.f32 %v2877, %v3489
      %3491 = vmatmul.f32.gmra.mxu0 %v3092
      %v3492 = vpop.f32.mrf.mxu0
      %v3493 = vadd.f32 %v2877, %v3492
      %3494 = vmatmul.f32.gmra.mxu0 %v3095
      %v3495 = vpop.f32.mrf.mxu0
      %v3496 = vadd.f32 %v2877, %v3495
      %3497 = vmatmul.f32.gmra.mxu0 %v3098
      %v3498 = vpop.f32.mrf.mxu0
      %v3499 = vadd.f32 %v2877, %v3498
      %3500 = vmatmul.f32.gmra.mxu0 %v3101
      %v3501 = vpop.f32.mrf.mxu0
      %v3502 = vadd.f32 %v2877, %v3501
      %3503 = vmatmul.f32.gmra.mxu0 %v3104
      %v3504 = vpop.f32.mrf.mxu0
      %v3505 = vadd.f32 %v2877, %v3504
      %3506 = vmatmul.f32.gmra.mxu0 %v3107
      %v3507 = vpop.f32.mrf.mxu0
      %v3508 = vadd.f32 %v2877, %v3507
      %3509 = vmatmul.f32.gmra.mxu0 %v3110
      %v3510 = vpop.f32.mrf.mxu0
      %v3511 = vadd.f32 %v2877, %v3510
      %3512 = vmatmul.f32.gmra.mxu0 %v3113
      %v3513 = vpop.f32.mrf.mxu0
      %v3514 = vadd.f32 %v2877, %v3513
      %3515 = vmatmul.f32.gmra.mxu0 %v3116
      %v3516 = vpop.f32.mrf.mxu0
      %v3517 = vadd.f32 %v2877, %v3516
      %3518 = vmatmul.f32.gmra.mxu0 %v3119
      %v3519 = vpop.f32.mrf.mxu0
      %v3520 = vadd.f32 %v2877, %v3519
      %3521 = vmatmul.f32.gmra.mxu0 %v3122
      %v3522 = vpop.f32.mrf.mxu0
      %v3523 = vadd.f32 %v2877, %v3522
      %3524 = vmatmul.f32.gmra.mxu0 %v3125
      %v3525 = vpop.f32.mrf.mxu0
      %v3526 = vadd.f32 %v2877, %v3525
      %3527 = vmatmul.f32.gmra.mxu0 %v3128
      %v3528 = vpop.f32.mrf.mxu0
      %v3529 = vadd.f32 %v2877, %v3528
      %3530 = vmatmul.f32.gmra.mxu0 %v3131
      %v3531 = vpop.f32.mrf.mxu0
      %v3532 = vadd.f32 %v2877, %v3531
      %3533 = vmatmul.f32.gmra.mxu0 %v3134
      %v3534 = vpop.f32.mrf.mxu0
      %v3535 = vadd.f32 %v2877, %v3534
      %3536 = vmatmul.f32.gmra.mxu0 %v3137
      %v3537 = vpop.f32.mrf.mxu0
      %v3538 = vadd.f32 %v2877, %v3537
      %3539 = vmatmul.f32.gmra.mxu0 %v3140
      %v3540 = vpop.f32.mrf.mxu0
      %v3541 = vadd.f32 %v2877, %v3540
      %3542 = vmatmul.f32.gmra.mxu0 %v3143
      %v3543 = vpop.f32.mrf.mxu0
      %v3544 = vadd.f32 %v2877, %v3543
      %3545 = vmatmul.f32.gmra.mxu0 %v3146
      %v3546 = vpop.f32.mrf.mxu0
      %v3547 = vadd.f32 %v2877, %v3546
      %3548 = vmatmul.f32.gmra.mxu0 %v3149
      %v3549 = vpop.f32.mrf.mxu0
      %v3550 = vadd.f32 %v2877, %v3549
      %3551 = vmatmul.f32.gmra.mxu0 %v3152
      %v3552 = vpop.f32.mrf.mxu0
      %v3553 = vadd.f32 %v2877, %v3552
      %3554 = vmatmul.f32.gmra.mxu0 %v3155
      %v3555 = vpop.f32.mrf.mxu0
      %v3556 = vadd.f32 %v2877, %v3555
      %3557 = vmatmul.f32.gmra.mxu0 %v3158
      %v3558 = vpop.f32.mrf.mxu0
      %v3559 = vadd.f32 %v2877, %v3558
      %3560 = vmatmul.f32.gmra.mxu0 %v3161
      %v3561 = vpop.f32.mrf.mxu0
      %v3562 = vadd.f32 %v2877, %v3561
      %3563 = vmatmul.f32.gmra.mxu0 %v3164
      %v3564 = vpop.f32.mrf.mxu0
      %v3565 = vadd.f32 %v2877, %v3564
      %3566 = vmatmul.f32.gmra.mxu0 %v3167
      %v3567 = vpop.f32.mrf.mxu0
      %v3568 = vadd.f32 %v2877, %v3567
      %3569 = vmatmul.f32.gmra.mxu0 %v3170
      %v3570 = vpop.f32.mrf.mxu0
      %v3571 = vadd.f32 %v2877, %v3570
      %3572 = vmatmul.f32.gmra.mxu0 %v3173
      %v3573 = vpop.f32.mrf.mxu0
      %v3574 = vadd.f32 %v2877, %v3573
      %3575 = vmatmul.f32.gmra.mxu0 %v3176
      %v3576 = vpop.f32.mrf.mxu0
      %v3577 = vadd.f32 %v2877, %v3576
      %3578 = vmatmul.f32.gmra.mxu0 %v3179
      %v3579 = vpop.f32.mrf.mxu0
      %v3580 = vadd.f32 %v2877, %v3579
      %3581 = vmatmul.f32.gmra.mxu0 %v3182
      %v3582 = vpop.f32.mrf.mxu0
      %v3583 = vadd.f32 %v2877, %v3582
      %3584 = vmatmul.f32.gmra.mxu0 %v3185
      %v3585 = vpop.f32.mrf.mxu0
      %v3586 = vadd.f32 %v2877, %v3585
      %3587 = vmatmul.f32.gmra.mxu0 %v3188
      %v3588 = vpop.f32.mrf.mxu0
      %v3589 = vadd.f32 %v2877, %v3588
      %3590 = vmatmul.f32.gmra.mxu0 %v3191
      %v3591 = vpop.f32.mrf.mxu0
      %v3592 = vadd.f32 %v2877, %v3591
      %3593 = vmatmul.f32.gmra.mxu0 %v3194
      %v3594 = vpop.f32.mrf.mxu0
      %v3595 = vadd.f32 %v2877, %v3594
      %3596 = vmatmul.f32.gmra.mxu0 %v3197
      %v3597 = vpop.f32.mrf.mxu0
      %v3598 = vadd.f32 %v2877, %v3597
      %3599 = vmatmul.f32.gmra.mxu0 %v3200
      %v3600 = vpop.f32.mrf.mxu0
      %v3601 = vadd.f32 %v2877, %v3600
      %3602 = vmatmul.f32.gmra.mxu0 %v3203
      %v3603 = vpop.f32.mrf.mxu0
      %v3604 = vadd.f32 %v2877, %v3603
      %3605 = vmatmul.f32.gmra.mxu0 %v3206
      %v3606 = vpop.f32.mrf.mxu0
      %v3607 = vadd.f32 %v2877, %v3606
      %3608 = vmatmul.f32.gmra.mxu0 %v3209
      %v3609 = vpop.f32.mrf.mxu0
      %v3610 = vadd.f32 %v2877, %v3609
      %3611 = vmatmul.f32.gmra.mxu0 %v3212
      %v3612 = vpop.f32.mrf.mxu0
      %v3613 = vadd.f32 %v2877, %v3612
      %3614 = vmatmul.f32.gmra.mxu0 %v3215
      %v3615 = vpop.f32.mrf.mxu0
      %v3616 = vadd.f32 %v2877, %v3615
      %3617 = vmatmul.f32.gmra.mxu0 %v3218
      %v3618 = vpop.f32.mrf.mxu0
      %v3619 = vadd.f32 %v2877, %v3618
      %3620 = vmatmul.f32.gmra.mxu0 %v3221
      %v3621 = vpop.f32.mrf.mxu0
      %v3622 = vadd.f32 %v2877, %v3621
      %3623 = vmatmul.f32.gmra.mxu0 %v3224
      %v3624 = vpop.f32.mrf.mxu0
      %v3625 = vadd.f32 %v2877, %v3624
      %3626 = vmatmul.f32.gmra.mxu0 %v3227
      %v3627 = vpop.f32.mrf.mxu0
      %v3628 = vadd.f32 %v2877, %v3627
      %3629 = vmatmul.f32.gmra.mxu0 %v3230
      %v3630 = vpop.f32.mrf.mxu0
      %v3631 = vadd.f32 %v2877, %v3630
      %3632 = vmatmul.f32.gmra.mxu0 %v3233
      %v3633 = vpop.f32.mrf.mxu0
      %v3634 = vadd.f32 %v2877, %v3633
      %3635 = vmatmul.f32.gmra.mxu0 %v3236
      %v3636 = vpop.f32.mrf.mxu0
      %v3637 = vadd.f32 %v2877, %v3636
      %3638 = vmatmul.f32.gmra.mxu0 %v3239
      %v3639 = vpop.f32.mrf.mxu0
      %v3640 = vadd.f32 %v2877, %v3639
      %3641 = vmatmul.f32.gmra.mxu0 %v3242
      %v3642 = vpop.f32.mrf.mxu0
      %v3643 = vadd.f32 %v2877, %v3642
      %3644 = vmatmul.f32.gmra.mxu0 %v3245
      %v3645 = vpop.f32.mrf.mxu0
      %v3646 = vadd.f32 %v2877, %v3645
      %3647 = vmatmul.f32.gmra.mxu0 %v3248
      %v3648 = vpop.f32.mrf.mxu0
      %v3649 = vadd.f32 %v2877, %v3648
      %3650 = vmatmul.f32.gmra.mxu0 %v3251
      %v3651 = vpop.f32.mrf.mxu0
      %v3652 = vadd.f32 %v2877, %v3651
      %3653 = vmatmul.f32.gmra.mxu0 %v3254
      %v3654 = vpop.f32.mrf.mxu0
      %v3655 = vadd.f32 %v2877, %v3654
      %3656 = vmatmul.f32.gmra.mxu0 %v3257
      %v3657 = vpop.f32.mrf.mxu0
      %v3658 = vadd.f32 %v2877, %v3657
      %3659 = vmatmul.f32.gmra.mxu0 %v3260
      %v3660 = vpop.f32.mrf.mxu0
      %v3661 = vadd.f32 %v2877, %v3660
      %3662 = vdwg.mxu0
      %v3663 = vmax.f32 %v3280, 0.0
      %v3664 = vmax.f32 %v3283, 0.0
      %v3665 = vmax.f32 %v3286, 0.0
      %v3666 = vmax.f32 %v3289, 0.0
      %v3667 = vmax.f32 %v3292, 0.0
      %v3668 = vmax.f32 %v3295, 0.0
      %v3669 = vmax.f32 %v3298, 0.0
      %v3670 = vmax.f32 %v3301, 0.0
      %v3671 = vmax.f32 %v3304, 0.0
      %v3672 = vmax.f32 %v3307, 0.0
      %v3673 = vmax.f32 %v3310, 0.0
      %v3674 = vmax.f32 %v3313, 0.0
      %v3675 = vmax.f32 %v3316, 0.0
      %v3676 = vmax.f32 %v3319, 0.0
      %v3677 = vmax.f32 %v3322, 0.0
      %v3678 = vmax.f32 %v3325, 0.0
      %v3679 = vmax.f32 %v3328, 0.0
      %v3680 = vmax.f32 %v3331, 0.0
      %v3681 = vmax.f32 %v3334, 0.0
      %v3682 = vmax.f32 %v3337, 0.0
      %v3683 = vmax.f32 %v3340, 0.0
      %v3684 = vmax.f32 %v3343, 0.0
      %v3685 = vmax.f32 %v3346, 0.0
      %v3686 = vmax.f32 %v3349, 0.0
      %v3687 = vmax.f32 %v3352, 0.0
      %v3688 = vmax.f32 %v3355, 0.0
      %v3689 = vmax.f32 %v3358, 0.0
      %v3690 = vmax.f32 %v3361, 0.0
      %v3691 = vmax.f32 %v3364, 0.0
      %v3692 = vmax.f32 %v3367, 0.0
      %v3693 = vmax.f32 %v3370, 0.0
      %v3694 = vmax.f32 %v3373, 0.0
      %v3695 = vmax.f32 %v3376, 0.0
      %v3696 = vmax.f32 %v3379, 0.0
      %v3697 = vmax.f32 %v3382, 0.0
      %v3698 = vmax.f32 %v3385, 0.0
      %v3699 = vmax.f32 %v3388, 0.0
      %v3700 = vmax.f32 %v3391, 0.0
      %v3701 = vmax.f32 %v3394, 0.0
      %v3702 = vmax.f32 %v3397, 0.0
      %v3703 = vmax.f32 %v3400, 0.0
      %v3704 = vmax.f32 %v3403, 0.0
      %v3705 = vmax.f32 %v3406, 0.0
      %v3706 = vmax.f32 %v3409, 0.0
      %v3707 = vmax.f32 %v3412, 0.0
      %v3708 = vmax.f32 %v3415, 0.0
      %v3709 = vmax.f32 %v3418, 0.0
      %v3710 = vmax.f32 %v3421, 0.0
      %v3711 = vmax.f32 %v3424, 0.0
      %v3712 = vmax.f32 %v3427, 0.0
      %v3713 = vmax.f32 %v3430, 0.0
      %v3714 = vmax.f32 %v3433, 0.0
      %v3715 = vmax.f32 %v3436, 0.0
      %v3716 = vmax.f32 %v3439, 0.0
      %v3717 = vmax.f32 %v3442, 0.0
      %v3718 = vmax.f32 %v3445, 0.0
      %v3719 = vmax.f32 %v3448, 0.0
      %v3720 = vmax.f32 %v3451, 0.0
      %v3721 = vmax.f32 %v3454, 0.0
      %v3722 = vmax.f32 %v3457, 0.0
      %v3723 = vmax.f32 %v3460, 0.0
      %v3724 = vmax.f32 %v3463, 0.0
      %v3725 = vmax.f32 %v3466, 0.0
      %v3726 = vmax.f32 %v3469, 0.0
      %v3727 = vmax.f32 %v3472, 0.0
      %v3728 = vmax.f32 %v3475, 0.0
      %v3729 = vmax.f32 %v3478, 0.0
      %v3730 = vmax.f32 %v3481, 0.0
      %v3731 = vmax.f32 %v3484, 0.0
      %v3732 = vmax.f32 %v3487, 0.0
      %v3733 = vmax.f32 %v3490, 0.0
      %v3734 = vmax.f32 %v3493, 0.0
      %v3735 = vmax.f32 %v3496, 0.0
      %v3736 = vmax.f32 %v3499, 0.0
      %v3737 = vmax.f32 %v3502, 0.0
      %v3738 = vmax.f32 %v3505, 0.0
      %v3739 = vmax.f32 %v3508, 0.0
      %v3740 = vmax.f32 %v3511, 0.0
      %v3741 = vmax.f32 %v3514, 0.0
      %v3742 = vmax.f32 %v3517, 0.0
      %v3743 = vmax.f32 %v3520, 0.0
      %v3744 = vmax.f32 %v3523, 0.0
      %v3745 = vmax.f32 %v3526, 0.0
      %v3746 = vmax.f32 %v3529, 0.0
      %v3747 = vmax.f32 %v3532, 0.0
      %v3748 = vmax.f32 %v3535, 0.0
      %v3749 = vmax.f32 %v3538, 0.0
      %v3750 = vmax.f32 %v3541, 0.0
      %v3751 = vmax.f32 %v3544, 0.0
      %v3752 = vmax.f32 %v3547, 0.0
      %v3753 = vmax.f32 %v3550, 0.0
      %v3754 = vmax.f32 %v3553, 0.0
      %v3755 = vmax.f32 %v3556, 0.0
      %v3756 = vmax.f32 %v3559, 0.0
      %v3757 = vmax.f32 %v3562, 0.0
      %v3758 = vmax.f32 %v3565, 0.0
      %v3759 = vmax.f32 %v3568, 0.0
      %v3760 = vmax.f32 %v3571, 0.0
      %v3761 = vmax.f32 %v3574, 0.0
      %v3762 = vmax.f32 %v3577, 0.0
      %v3763 = vmax.f32 %v3580, 0.0
      %v3764 = vmax.f32 %v3583, 0.0
      %v3765 = vmax.f32 %v3586, 0.0
      %v3766 = vmax.f32 %v3589, 0.0
      %v3767 = vmax.f32 %v3592, 0.0
      %v3768 = vmax.f32 %v3595, 0.0
      %v3769 = vmax.f32 %v3598, 0.0
      %v3770 = vmax.f32 %v3601, 0.0
      %v3771 = vmax.f32 %v3604, 0.0
      %v3772 = vmax.f32 %v3607, 0.0
      %v3773 = vmax.f32 %v3610, 0.0
      %v3774 = vmax.f32 %v3613, 0.0
      %v3775 = vmax.f32 %v3616, 0.0
      %v3776 = vmax.f32 %v3619, 0.0
      %v3777 = vmax.f32 %v3622, 0.0
      %v3778 = vmax.f32 %v3625, 0.0
      %v3779 = vmax.f32 %v3628, 0.0
      %v3780 = vmax.f32 %v3631, 0.0
      %v3781 = vmax.f32 %v3634, 0.0
      %v3782 = vmax.f32 %v3637, 0.0
      %v3783 = vmax.f32 %v3640, 0.0
      %v3784 = vmax.f32 %v3643, 0.0
      %v3785 = vmax.f32 %v3646, 0.0
      %v3786 = vmax.f32 %v3649, 0.0
      %v3787 = vmax.f32 %v3652, 0.0
      %v3788 = vmax.f32 %v3655, 0.0
      %v3789 = vmax.f32 %v3658, 0.0
      %v3790 = vmax.f32 %v3661, 0.0
      %s3791 = scalar_lea.vmem %s2, 128
      %v3792 = vld [vmem:[%s3791] sm:$0xff]
      %v3793 = vld [vmem:[%s3791 + $0x8] sm:$0xff]
      %v3794 = vld [vmem:[%s3791 + $0x10] sm:$0xff]
      %v3795 = vld [vmem:[%s3791 + $0x18] sm:$0xff]
      %v3796 = vld [vmem:[%s3791 + $0x20] sm:$0xff]
      %v3797 = vld [vmem:[%s3791 + $0x28] sm:$0xff]
      %v3798 = vld [vmem:[%s3791 + $0x30] sm:$0xff]
      %v3799 = vld [vmem:[%s3791 + $0x38] sm:$0xff]
      %v3800 = vperm.slane %v1687, 3
      %v3802 = vsel %vm1954, %v3663, 0
      %v3805 = vsel %vm1954, %v3664, 0
      %v3808 = vsel %vm1954, %v3665, 0
      %v3811 = vsel %vm1954, %v3666, 0
      %v3814 = vsel %vm1954, %v3667, 0
      %v3817 = vsel %vm1954, %v3668, 0
      %v3820 = vsel %vm1954, %v3669, 0
      %v3823 = vsel %vm1954, %v3670, 0
      %v3826 = vsel %vm1954, %v3671, 0
      %v3829 = vsel %vm1954, %v3672, 0
      %v3832 = vsel %vm1954, %v3673, 0
      %v3835 = vsel %vm1954, %v3674, 0
      %v3838 = vsel %vm1954, %v3675, 0
      %v3841 = vsel %vm1954, %v3676, 0
      %v3844 = vsel %vm1954, %v3677, 0
      %v3847 = vsel %vm1954, %v3678, 0
      %v3850 = vsel %vm1954, %v3679, 0
      %v3853 = vsel %vm1954, %v3680, 0
      %v3856 = vsel %vm1954, %v3681, 0
      %v3859 = vsel %vm1954, %v3682, 0
      %v3862 = vsel %vm1954, %v3683, 0
      %v3865 = vsel %vm1954, %v3684, 0
      %v3868 = vsel %vm1954, %v3685, 0
      %v3871 = vsel %vm1954, %v3686, 0
      %v3874 = vsel %vm1954, %v3687, 0
      %v3877 = vsel %vm1954, %v3688, 0
      %v3880 = vsel %vm1954, %v3689, 0
      %v3883 = vsel %vm1954, %v3690, 0
      %v3886 = vsel %vm1954, %v3691, 0
      %v3889 = vsel %vm1954, %v3692, 0
      %v3892 = vsel %vm1954, %v3693, 0
      %v3895 = vsel %vm1954, %v3694, 0
      %v3898 = vsel %vm1954, %v3695, 0
      %v3901 = vsel %vm1954, %v3696, 0
      %v3904 = vsel %vm1954, %v3697, 0
      %v3907 = vsel %vm1954, %v3698, 0
      %v3910 = vsel %vm1954, %v3699, 0
      %v3913 = vsel %vm1954, %v3700, 0
      %v3916 = vsel %vm1954, %v3701, 0
      %v3919 = vsel %vm1954, %v3702, 0
      %v3922 = vsel %vm1954, %v3703, 0
      %v3925 = vsel %vm1954, %v3704, 0
      %v3928 = vsel %vm1954, %v3705, 0
      %v3931 = vsel %vm1954, %v3706, 0
      %v3934 = vsel %vm1954, %v3707, 0
      %v3937 = vsel %vm1954, %v3708, 0
      %v3940 = vsel %vm1954, %v3709, 0
      %v3943 = vsel %vm1954, %v3710, 0
      %v3946 = vsel %vm1954, %v3711, 0
      %v3949 = vsel %vm1954, %v3712, 0
      %v3952 = vsel %vm1954, %v3713, 0
      %v3955 = vsel %vm1954, %v3714, 0
      %v3958 = vsel %vm1954, %v3715, 0
      %v3961 = vsel %vm1954, %v3716, 0
      %v3964 = vsel %vm1954, %v3717, 0
      %v3967 = vsel %vm1954, %v3718, 0
      %v3970 = vsel %vm1954, %v3719, 0
      %v3973 = vsel %vm1954, %v3720, 0
      %v3976 = vsel %vm1954, %v3721, 0
      %v3979 = vsel %vm1954, %v3722, 0
      %v3982 = vsel %vm1954, %v3723, 0
      %v3985 = vsel %vm1954, %v3724, 0
      %v3988 = vsel %vm1954, %v3725, 0
      %v3991 = vsel %vm1954, %v3726, 0
      %v3994 = vsel %vm1954, %v3727, 0
      %v3997 = vsel %vm1954, %v3728, 0
      %v4000 = vsel %vm1954, %v3729, 0
      %v4003 = vsel %vm1954, %v3730, 0
      %v4006 = vsel %vm1954, %v3731, 0
      %v4009 = vsel %vm1954, %v3732, 0
      %v4012 = vsel %vm1954, %v3733, 0
      %v4015 = vsel %vm1954, %v3734, 0
      %v4018 = vsel %vm1954, %v3735, 0
      %v4021 = vsel %vm1954, %v3736, 0
      %v4024 = vsel %vm1954, %v3737, 0
      %v4027 = vsel %vm1954, %v3738, 0
      %v4030 = vsel %vm1954, %v3739, 0
      %v4033 = vsel %vm1954, %v3740, 0
      %v4036 = vsel %vm1954, %v3741, 0
      %v4039 = vsel %vm1954, %v3742, 0
      %v4042 = vsel %vm1954, %v3743, 0
      %v4045 = vsel %vm1954, %v3744, 0
      %v4048 = vsel %vm1954, %v3745, 0
      %v4051 = vsel %vm1954, %v3746, 0
      %v4054 = vsel %vm1954, %v3747, 0
      %v4057 = vsel %vm1954, %v3748, 0
      %v4060 = vsel %vm1954, %v3749, 0
      %v4063 = vsel %vm1954, %v3750, 0
      %v4066 = vsel %vm1954, %v3751, 0
      %v4069 = vsel %vm1954, %v3752, 0
      %v4072 = vsel %vm1954, %v3753, 0
      %v4075 = vsel %vm1954, %v3754, 0
      %v4078 = vsel %vm1954, %v3755, 0
      %v4081 = vsel %vm1954, %v3756, 0
      %v4084 = vsel %vm1954, %v3757, 0
      %v4087 = vsel %vm1954, %v3758, 0
      %v4090 = vsel %vm1954, %v3759, 0
      %v4093 = vsel %vm1954, %v3760, 0
      %v4096 = vsel %vm1954, %v3761, 0
      %v4099 = vsel %vm1954, %v3762, 0
      %v4102 = vsel %vm1954, %v3763, 0
      %v4105 = vsel %vm1954, %v3764, 0
      %v4108 = vsel %vm1954, %v3765, 0
      %v4111 = vsel %vm1954, %v3766, 0
      %v4114 = vsel %vm1954, %v3767, 0
      %v4117 = vsel %vm1954, %v3768, 0
      %v4120 = vsel %vm1954, %v3769, 0
      %v4123 = vsel %vm1954, %v3770, 0
      %v4126 = vsel %vm1954, %v3771, 0
      %v4129 = vsel %vm1954, %v3772, 0
      %v4132 = vsel %vm1954, %v3773, 0
      %v4135 = vsel %vm1954, %v3774, 0
      %v4138 = vsel %vm1954, %v3775, 0
      %v4141 = vsel %vm1954, %v3776, 0
      %v4144 = vsel %vm1954, %v3777, 0
      %v4147 = vsel %vm1954, %v3778, 0
      %v4150 = vsel %vm1954, %v3779, 0
      %v4153 = vsel %vm1954, %v3780, 0
      %v4156 = vsel %vm1954, %v3781, 0
      %v4159 = vsel %vm1954, %v3782, 0
      %v4162 = vsel %vm1954, %v3783, 0
      %v4165 = vsel %vm1954, %v3784, 0
      %v4168 = vsel %vm1954, %v3785, 0
      %v4171 = vsel %vm1954, %v3786, 0
      %v4174 = vsel %vm1954, %v3787, 0
      %v4177 = vsel %vm1954, %v3788, 0
      %v4180 = vsel %vm1954, %v3789, 0
      %v4183 = vsel %vm1954, %v3790, 0
      %4185 = vmatpush.msra.mxu0 0.0
      %4186 = vmatpush.msra.mxu0 0.0
      %4187 = vmatpush.msra.mxu0 0.0
      %4188 = vmatpush.msra.mxu0 0.0
      %4189 = vmatpush.msra.mxu0 0.0
      %4190 = vmatpush.msra.mxu0 0.0
      %4191 = vmatpush.msra.mxu0 0.0
      %4192 = vmatpush.msra.mxu0 0.0
      %4193 = vmatpush.msra.mxu0 %v3799
      %4194 = vmatpush.msra.mxu0 %v3798
      %4195 = vmatpush.msra.mxu0 %v3797
      %4196 = vmatpush.msra.mxu0 %v3796
      %4197 = vmatpush.msra.mxu0 %v3795
      %4198 = vmatpush.msra.mxu0 %v3794
      %4199 = vmatpush.msra.mxu0 %v3793
      %4200 = vmatpush.msra.mxu0 %v3792
      %4201 = vmatmul.f32.gmra.mxu0 %v3802
      %v4202 = vpop.f32.mrf.mxu0
      %v4203 = vadd.f32 %v3800, %v4202
      %4204 = vmatmul.f32.gmra.mxu0 %v3805
      %v4205 = vpop.f32.mrf.mxu0
      %v4206 = vadd.f32 %v3800, %v4205
      %4207 = vmatmul.f32.gmra.mxu0 %v3808
      %v4208 = vpop.f32.mrf.mxu0
      %v4209 = vadd.f32 %v3800, %v4208
      %4210 = vmatmul.f32.gmra.mxu0 %v3811
      %v4211 = vpop.f32.mrf.mxu0
      %v4212 = vadd.f32 %v3800, %v4211
      %4213 = vmatmul.f32.gmra.mxu0 %v3814
      %v4214 = vpop.f32.mrf.mxu0
      %v4215 = vadd.f32 %v3800, %v4214
      %4216 = vmatmul.f32.gmra.mxu0 %v3817
      %v4217 = vpop.f32.mrf.mxu0
      %v4218 = vadd.f32 %v3800, %v4217
      %4219 = vmatmul.f32.gmra.mxu0 %v3820
      %v4220 = vpop.f32.mrf.mxu0
      %v4221 = vadd.f32 %v3800, %v4220
      %4222 = vmatmul.f32.gmra.mxu0 %v3823
      %v4223 = vpop.f32.mrf.mxu0
      %v4224 = vadd.f32 %v3800, %v4223
      %4225 = vmatmul.f32.gmra.mxu0 %v3826
      %v4226 = vpop.f32.mrf.mxu0
      %v4227 = vadd.f32 %v3800, %v4226
      %4228 = vmatmul.f32.gmra.mxu0 %v3829
      %v4229 = vpop.f32.mrf.mxu0
      %v4230 = vadd.f32 %v3800, %v4229
      %4231 = vmatmul.f32.gmra.mxu0 %v3832
      %v4232 = vpop.f32.mrf.mxu0
      %v4233 = vadd.f32 %v3800, %v4232
      %4234 = vmatmul.f32.gmra.mxu0 %v3835
      %v4235 = vpop.f32.mrf.mxu0
      %v4236 = vadd.f32 %v3800, %v4235
      %4237 = vmatmul.f32.gmra.mxu0 %v3838
      %v4238 = vpop.f32.mrf.mxu0
      %v4239 = vadd.f32 %v3800, %v4238
      %4240 = vmatmul.f32.gmra.mxu0 %v3841
      %v4241 = vpop.f32.mrf.mxu0
      %v4242 = vadd.f32 %v3800, %v4241
      %4243 = vmatmul.f32.gmra.mxu0 %v3844
      %v4244 = vpop.f32.mrf.mxu0
      %v4245 = vadd.f32 %v3800, %v4244
      %4246 = vmatmul.f32.gmra.mxu0 %v3847
      %v4247 = vpop.f32.mrf.mxu0
      %v4248 = vadd.f32 %v3800, %v4247
      %4249 = vmatmul.f32.gmra.mxu0 %v3850
      %v4250 = vpop.f32.mrf.mxu0
      %v4251 = vadd.f32 %v3800, %v4250
      %4252 = vmatmul.f32.gmra.mxu0 %v3853
      %v4253 = vpop.f32.mrf.mxu0
      %v4254 = vadd.f32 %v3800, %v4253
      %4255 = vmatmul.f32.gmra.mxu0 %v3856
      %v4256 = vpop.f32.mrf.mxu0
      %v4257 = vadd.f32 %v3800, %v4256
      %4258 = vmatmul.f32.gmra.mxu0 %v3859
      %v4259 = vpop.f32.mrf.mxu0
      %v4260 = vadd.f32 %v3800, %v4259
      %4261 = vmatmul.f32.gmra.mxu0 %v3862
      %v4262 = vpop.f32.mrf.mxu0
      %v4263 = vadd.f32 %v3800, %v4262
      %4264 = vmatmul.f32.gmra.mxu0 %v3865
      %v4265 = vpop.f32.mrf.mxu0
      %v4266 = vadd.f32 %v3800, %v4265
      %4267 = vmatmul.f32.gmra.mxu0 %v3868
      %v4268 = vpop.f32.mrf.mxu0
      %v4269 = vadd.f32 %v3800, %v4268
      %4270 = vmatmul.f32.gmra.mxu0 %v3871
      %v4271 = vpop.f32.mrf.mxu0
      %v4272 = vadd.f32 %v3800, %v4271
      %4273 = vmatmul.f32.gmra.mxu0 %v3874
      %v4274 = vpop.f32.mrf.mxu0
      %v4275 = vadd.f32 %v3800, %v4274
      %4276 = vmatmul.f32.gmra.mxu0 %v3877
      %v4277 = vpop.f32.mrf.mxu0
      %v4278 = vadd.f32 %v3800, %v4277
      %4279 = vmatmul.f32.gmra.mxu0 %v3880
      %v4280 = vpop.f32.mrf.mxu0
      %v4281 = vadd.f32 %v3800, %v4280
      %4282 = vmatmul.f32.gmra.mxu0 %v3883
      %v4283 = vpop.f32.mrf.mxu0
      %v4284 = vadd.f32 %v3800, %v4283
      %4285 = vmatmul.f32.gmra.mxu0 %v3886
      %v4286 = vpop.f32.mrf.mxu0
      %v4287 = vadd.f32 %v3800, %v4286
      %4288 = vmatmul.f32.gmra.mxu0 %v3889
      %v4289 = vpop.f32.mrf.mxu0
      %v4290 = vadd.f32 %v3800, %v4289
      %4291 = vmatmul.f32.gmra.mxu0 %v3892
      %v4292 = vpop.f32.mrf.mxu0
      %v4293 = vadd.f32 %v3800, %v4292
      %4294 = vmatmul.f32.gmra.mxu0 %v3895
      %v4295 = vpop.f32.mrf.mxu0
      %v4296 = vadd.f32 %v3800, %v4295
      %4297 = vmatmul.f32.gmra.mxu0 %v3898
      %v4298 = vpop.f32.mrf.mxu0
      %v4299 = vadd.f32 %v3800, %v4298
      %4300 = vmatmul.f32.gmra.mxu0 %v3901
      %v4301 = vpop.f32.mrf.mxu0
      %v4302 = vadd.f32 %v3800, %v4301
      %4303 = vmatmul.f32.gmra.mxu0 %v3904
      %v4304 = vpop.f32.mrf.mxu0
      %v4305 = vadd.f32 %v3800, %v4304
      %4306 = vmatmul.f32.gmra.mxu0 %v3907
      %v4307 = vpop.f32.mrf.mxu0
      %v4308 = vadd.f32 %v3800, %v4307
      %4309 = vmatmul.f32.gmra.mxu0 %v3910
      %v4310 = vpop.f32.mrf.mxu0
      %v4311 = vadd.f32 %v3800, %v4310
      %4312 = vmatmul.f32.gmra.mxu0 %v3913
      %v4313 = vpop.f32.mrf.mxu0
      %v4314 = vadd.f32 %v3800, %v4313
      %4315 = vmatmul.f32.gmra.mxu0 %v3916
      %v4316 = vpop.f32.mrf.mxu0
      %v4317 = vadd.f32 %v3800, %v4316
      %4318 = vmatmul.f32.gmra.mxu0 %v3919
      %v4319 = vpop.f32.mrf.mxu0
      %v4320 = vadd.f32 %v3800, %v4319
      %4321 = vmatmul.f32.gmra.mxu0 %v3922
      %v4322 = vpop.f32.mrf.mxu0
      %v4323 = vadd.f32 %v3800, %v4322
      %4324 = vmatmul.f32.gmra.mxu0 %v3925
      %v4325 = vpop.f32.mrf.mxu0
      %v4326 = vadd.f32 %v3800, %v4325
      %4327 = vmatmul.f32.gmra.mxu0 %v3928
      %v4328 = vpop.f32.mrf.mxu0
      %v4329 = vadd.f32 %v3800, %v4328
      %4330 = vmatmul.f32.gmra.mxu0 %v3931
      %v4331 = vpop.f32.mrf.mxu0
      %v4332 = vadd.f32 %v3800, %v4331
      %4333 = vmatmul.f32.gmra.mxu0 %v3934
      %v4334 = vpop.f32.mrf.mxu0
      %v4335 = vadd.f32 %v3800, %v4334
      %4336 = vmatmul.f32.gmra.mxu0 %v3937
      %v4337 = vpop.f32.mrf.mxu0
      %v4338 = vadd.f32 %v3800, %v4337
      %4339 = vmatmul.f32.gmra.mxu0 %v3940
      %v4340 = vpop.f32.mrf.mxu0
      %v4341 = vadd.f32 %v3800, %v4340
      %4342 = vmatmul.f32.gmra.mxu0 %v3943
      %v4343 = vpop.f32.mrf.mxu0
      %v4344 = vadd.f32 %v3800, %v4343
      %4345 = vmatmul.f32.gmra.mxu0 %v3946
      %v4346 = vpop.f32.mrf.mxu0
      %v4347 = vadd.f32 %v3800, %v4346
      %4348 = vmatmul.f32.gmra.mxu0 %v3949
      %v4349 = vpop.f32.mrf.mxu0
      %v4350 = vadd.f32 %v3800, %v4349
      %4351 = vmatmul.f32.gmra.mxu0 %v3952
      %v4352 = vpop.f32.mrf.mxu0
      %v4353 = vadd.f32 %v3800, %v4352
      %4354 = vmatmul.f32.gmra.mxu0 %v3955
      %v4355 = vpop.f32.mrf.mxu0
      %v4356 = vadd.f32 %v3800, %v4355
      %4357 = vmatmul.f32.gmra.mxu0 %v3958
      %v4358 = vpop.f32.mrf.mxu0
      %v4359 = vadd.f32 %v3800, %v4358
      %4360 = vmatmul.f32.gmra.mxu0 %v3961
      %v4361 = vpop.f32.mrf.mxu0
      %v4362 = vadd.f32 %v3800, %v4361
      %4363 = vmatmul.f32.gmra.mxu0 %v3964
      %v4364 = vpop.f32.mrf.mxu0
      %v4365 = vadd.f32 %v3800, %v4364
      %4366 = vmatmul.f32.gmra.mxu0 %v3967
      %v4367 = vpop.f32.mrf.mxu0
      %v4368 = vadd.f32 %v3800, %v4367
      %4369 = vmatmul.f32.gmra.mxu0 %v3970
      %v4370 = vpop.f32.mrf.mxu0
      %v4371 = vadd.f32 %v3800, %v4370
      %4372 = vmatmul.f32.gmra.mxu0 %v3973
      %v4373 = vpop.f32.mrf.mxu0
      %v4374 = vadd.f32 %v3800, %v4373
      %4375 = vmatmul.f32.gmra.mxu0 %v3976
      %v4376 = vpop.f32.mrf.mxu0
      %v4377 = vadd.f32 %v3800, %v4376
      %4378 = vmatmul.f32.gmra.mxu0 %v3979
      %v4379 = vpop.f32.mrf.mxu0
      %v4380 = vadd.f32 %v3800, %v4379
      %4381 = vmatmul.f32.gmra.mxu0 %v3982
      %v4382 = vpop.f32.mrf.mxu0
      %v4383 = vadd.f32 %v3800, %v4382
      %4384 = vmatmul.f32.gmra.mxu0 %v3985
      %v4385 = vpop.f32.mrf.mxu0
      %v4386 = vadd.f32 %v3800, %v4385
      %4387 = vmatmul.f32.gmra.mxu0 %v3988
      %v4388 = vpop.f32.mrf.mxu0
      %v4389 = vadd.f32 %v3800, %v4388
      %4390 = vmatmul.f32.gmra.mxu0 %v3991
      %v4391 = vpop.f32.mrf.mxu0
      %v4392 = vadd.f32 %v3800, %v4391
      %4393 = vmatmul.f32.gmra.mxu0 %v3994
      %v4394 = vpop.f32.mrf.mxu0
      %v4395 = vadd.f32 %v3800, %v4394
      %4396 = vmatmul.f32.gmra.mxu0 %v3997
      %v4397 = vpop.f32.mrf.mxu0
      %v4398 = vadd.f32 %v3800, %v4397
      %4399 = vmatmul.f32.gmra.mxu0 %v4000
      %v4400 = vpop.f32.mrf.mxu0
      %v4401 = vadd.f32 %v3800, %v4400
      %4402 = vmatmul.f32.gmra.mxu0 %v4003
      %v4403 = vpop.f32.mrf.mxu0
      %v4404 = vadd.f32 %v3800, %v4403
      %4405 = vmatmul.f32.gmra.mxu0 %v4006
      %v4406 = vpop.f32.mrf.mxu0
      %v4407 = vadd.f32 %v3800, %v4406
      %4408 = vmatmul.f32.gmra.mxu0 %v4009
      %v4409 = vpop.f32.mrf.mxu0
      %v4410 = vadd.f32 %v3800, %v4409
      %4411 = vmatmul.f32.gmra.mxu0 %v4012
      %v4412 = vpop.f32.mrf.mxu0
      %v4413 = vadd.f32 %v3800, %v4412
      %4414 = vmatmul.f32.gmra.mxu0 %v4015
      %v4415 = vpop.f32.mrf.mxu0
      %v4416 = vadd.f32 %v3800, %v4415
      %4417 = vmatmul.f32.gmra.mxu0 %v4018
      %v4418 = vpop.f32.mrf.mxu0
      %v4419 = vadd.f32 %v3800, %v4418
      %4420 = vmatmul.f32.gmra.mxu0 %v4021
      %v4421 = vpop.f32.mrf.mxu0
      %v4422 = vadd.f32 %v3800, %v4421
      %4423 = vmatmul.f32.gmra.mxu0 %v4024
      %v4424 = vpop.f32.mrf.mxu0
      %v4425 = vadd.f32 %v3800, %v4424
      %4426 = vmatmul.f32.gmra.mxu0 %v4027
      %v4427 = vpop.f32.mrf.mxu0
      %v4428 = vadd.f32 %v3800, %v4427
      %4429 = vmatmul.f32.gmra.mxu0 %v4030
      %v4430 = vpop.f32.mrf.mxu0
      %v4431 = vadd.f32 %v3800, %v4430
      %4432 = vmatmul.f32.gmra.mxu0 %v4033
      %v4433 = vpop.f32.mrf.mxu0
      %v4434 = vadd.f32 %v3800, %v4433
      %4435 = vmatmul.f32.gmra.mxu0 %v4036
      %v4436 = vpop.f32.mrf.mxu0
      %v4437 = vadd.f32 %v3800, %v4436
      %4438 = vmatmul.f32.gmra.mxu0 %v4039
      %v4439 = vpop.f32.mrf.mxu0
      %v4440 = vadd.f32 %v3800, %v4439
      %4441 = vmatmul.f32.gmra.mxu0 %v4042
      %v4442 = vpop.f32.mrf.mxu0
      %v4443 = vadd.f32 %v3800, %v4442
      %4444 = vmatmul.f32.gmra.mxu0 %v4045
      %v4445 = vpop.f32.mrf.mxu0
      %v4446 = vadd.f32 %v3800, %v4445
      %4447 = vmatmul.f32.gmra.mxu0 %v4048
      %v4448 = vpop.f32.mrf.mxu0
      %v4449 = vadd.f32 %v3800, %v4448
      %4450 = vmatmul.f32.gmra.mxu0 %v4051
      %v4451 = vpop.f32.mrf.mxu0
      %v4452 = vadd.f32 %v3800, %v4451
      %4453 = vmatmul.f32.gmra.mxu0 %v4054
      %v4454 = vpop.f32.mrf.mxu0
      %v4455 = vadd.f32 %v3800, %v4454
      %4456 = vmatmul.f32.gmra.mxu0 %v4057
      %v4457 = vpop.f32.mrf.mxu0
      %v4458 = vadd.f32 %v3800, %v4457
      %4459 = vmatmul.f32.gmra.mxu0 %v4060
      %v4460 = vpop.f32.mrf.mxu0
      %v4461 = vadd.f32 %v3800, %v4460
      %4462 = vmatmul.f32.gmra.mxu0 %v4063
      %v4463 = vpop.f32.mrf.mxu0
      %v4464 = vadd.f32 %v3800, %v4463
      %4465 = vmatmul.f32.gmra.mxu0 %v4066
      %v4466 = vpop.f32.mrf.mxu0
      %v4467 = vadd.f32 %v3800, %v4466
      %4468 = vmatmul.f32.gmra.mxu0 %v4069
      %v4469 = vpop.f32.mrf.mxu0
      %v4470 = vadd.f32 %v3800, %v4469
      %4471 = vmatmul.f32.gmra.mxu0 %v4072
      %v4472 = vpop.f32.mrf.mxu0
      %v4473 = vadd.f32 %v3800, %v4472
      %4474 = vmatmul.f32.gmra.mxu0 %v4075
      %v4475 = vpop.f32.mrf.mxu0
      %v4476 = vadd.f32 %v3800, %v4475
      %4477 = vmatmul.f32.gmra.mxu0 %v4078
      %v4478 = vpop.f32.mrf.mxu0
      %v4479 = vadd.f32 %v3800, %v4478
      %4480 = vmatmul.f32.gmra.mxu0 %v4081
      %v4481 = vpop.f32.mrf.mxu0
      %v4482 = vadd.f32 %v3800, %v4481
      %4483 = vmatmul.f32.gmra.mxu0 %v4084
      %v4484 = vpop.f32.mrf.mxu0
      %v4485 = vadd.f32 %v3800, %v4484
      %4486 = vmatmul.f32.gmra.mxu0 %v4087
      %v4487 = vpop.f32.mrf.mxu0
      %v4488 = vadd.f32 %v3800, %v4487
      %4489 = vmatmul.f32.gmra.mxu0 %v4090
      %v4490 = vpop.f32.mrf.mxu0
      %v4491 = vadd.f32 %v3800, %v4490
      %4492 = vmatmul.f32.gmra.mxu0 %v4093
      %v4493 = vpop.f32.mrf.mxu0
      %v4494 = vadd.f32 %v3800, %v4493
      %4495 = vmatmul.f32.gmra.mxu0 %v4096
      %v4496 = vpop.f32.mrf.mxu0
      %v4497 = vadd.f32 %v3800, %v4496
      %4498 = vmatmul.f32.gmra.mxu0 %v4099
      %v4499 = vpop.f32.mrf.mxu0
      %v4500 = vadd.f32 %v3800, %v4499
      %4501 = vmatmul.f32.gmra.mxu0 %v4102
      %v4502 = vpop.f32.mrf.mxu0
      %v4503 = vadd.f32 %v3800, %v4502
      %4504 = vmatmul.f32.gmra.mxu0 %v4105
      %v4505 = vpop.f32.mrf.mxu0
      %v4506 = vadd.f32 %v3800, %v4505
      %4507 = vmatmul.f32.gmra.mxu0 %v4108
      %v4508 = vpop.f32.mrf.mxu0
      %v4509 = vadd.f32 %v3800, %v4508
      %4510 = vmatmul.f32.gmra.mxu0 %v4111
      %v4511 = vpop.f32.mrf.mxu0
      %v4512 = vadd.f32 %v3800, %v4511
      %4513 = vmatmul.f32.gmra.mxu0 %v4114
      %v4514 = vpop.f32.mrf.mxu0
      %v4515 = vadd.f32 %v3800, %v4514
      %4516 = vmatmul.f32.gmra.mxu0 %v4117
      %v4517 = vpop.f32.mrf.mxu0
      %v4518 = vadd.f32 %v3800, %v4517
      %4519 = vmatmul.f32.gmra.mxu0 %v4120
      %v4520 = vpop.f32.mrf.mxu0
      %v4521 = vadd.f32 %v3800, %v4520
      %4522 = vmatmul.f32.gmra.mxu0 %v4123
      %v4523 = vpop.f32.mrf.mxu0
      %v4524 = vadd.f32 %v3800, %v4523
      %4525 = vmatmul.f32.gmra.mxu0 %v4126
      %v4526 = vpop.f32.mrf.mxu0
      %v4527 = vadd.f32 %v3800, %v4526
      %4528 = vmatmul.f32.gmra.mxu0 %v4129
      %v4529 = vpop.f32.mrf.mxu0
      %v4530 = vadd.f32 %v3800, %v4529
      %4531 = vmatmul.f32.gmra.mxu0 %v4132
      %v4532 = vpop.f32.mrf.mxu0
      %v4533 = vadd.f32 %v3800, %v4532
      %4534 = vmatmul.f32.gmra.mxu0 %v4135
      %v4535 = vpop.f32.mrf.mxu0
      %v4536 = vadd.f32 %v3800, %v4535
      %4537 = vmatmul.f32.gmra.mxu0 %v4138
      %v4538 = vpop.f32.mrf.mxu0
      %v4539 = vadd.f32 %v3800, %v4538
      %4540 = vmatmul.f32.gmra.mxu0 %v4141
      %v4541 = vpop.f32.mrf.mxu0
      %v4542 = vadd.f32 %v3800, %v4541
      %4543 = vmatmul.f32.gmra.mxu0 %v4144
      %v4544 = vpop.f32.mrf.mxu0
      %v4545 = vadd.f32 %v3800, %v4544
      %4546 = vmatmul.f32.gmra.mxu0 %v4147
      %v4547 = vpop.f32.mrf.mxu0
      %v4548 = vadd.f32 %v3800, %v4547
      %4549 = vmatmul.f32.gmra.mxu0 %v4150
      %v4550 = vpop.f32.mrf.mxu0
      %v4551 = vadd.f32 %v3800, %v4550
      %4552 = vmatmul.f32.gmra.mxu0 %v4153
      %v4553 = vpop.f32.mrf.mxu0
      %v4554 = vadd.f32 %v3800, %v4553
      %4555 = vmatmul.f32.gmra.mxu0 %v4156
      %v4556 = vpop.f32.mrf.mxu0
      %v4557 = vadd.f32 %v3800, %v4556
      %4558 = vmatmul.f32.gmra.mxu0 %v4159
      %v4559 = vpop.f32.mrf.mxu0
      %v4560 = vadd.f32 %v3800, %v4559
      %4561 = vmatmul.f32.gmra.mxu0 %v4162
      %v4562 = vpop.f32.mrf.mxu0
      %v4563 = vadd.f32 %v3800, %v4562
      %4564 = vmatmul.f32.gmra.mxu0 %v4165
      %v4565 = vpop.f32.mrf.mxu0
      %v4566 = vadd.f32 %v3800, %v4565
      %4567 = vmatmul.f32.gmra.mxu0 %v4168
      %v4568 = vpop.f32.mrf.mxu0
      %v4569 = vadd.f32 %v3800, %v4568
      %4570 = vmatmul.f32.gmra.mxu0 %v4171
      %v4571 = vpop.f32.mrf.mxu0
      %v4572 = vadd.f32 %v3800, %v4571
      %4573 = vmatmul.f32.gmra.mxu0 %v4174
      %v4574 = vpop.f32.mrf.mxu0
      %v4575 = vadd.f32 %v3800, %v4574
      %4576 = vmatmul.f32.gmra.mxu0 %v4177
      %v4577 = vpop.f32.mrf.mxu0
      %v4578 = vadd.f32 %v3800, %v4577
      %4579 = vmatmul.f32.gmra.mxu0 %v4180
      %v4580 = vpop.f32.mrf.mxu0
      %v4581 = vadd.f32 %v3800, %v4580
      %4582 = vmatmul.f32.gmra.mxu0 %v4183
      %v4583 = vpop.f32.mrf.mxu0
      %v4584 = vadd.f32 %v3800, %v4583
      %4585 = vdwg.mxu0
      %v4586 = vmax.f32 %v4203, 0.0
      %v4587 = vmax.f32 %v4206, 0.0
      %v4588 = vmax.f32 %v4209, 0.0
      %v4589 = vmax.f32 %v4212, 0.0
      %v4590 = vmax.f32 %v4215, 0.0
      %v4591 = vmax.f32 %v4218, 0.0
      %v4592 = vmax.f32 %v4221, 0.0
      %v4593 = vmax.f32 %v4224, 0.0
      %v4594 = vmax.f32 %v4227, 0.0
      %v4595 = vmax.f32 %v4230, 0.0
      %v4596 = vmax.f32 %v4233, 0.0
      %v4597 = vmax.f32 %v4236, 0.0
      %v4598 = vmax.f32 %v4239, 0.0
      %v4599 = vmax.f32 %v4242, 0.0
      %v4600 = vmax.f32 %v4245, 0.0
      %v4601 = vmax.f32 %v4248, 0.0
      %v4602 = vmax.f32 %v4251, 0.0
      %v4603 = vmax.f32 %v4254, 0.0
      %v4604 = vmax.f32 %v4257, 0.0
      %v4605 = vmax.f32 %v4260, 0.0
      %v4606 = vmax.f32 %v4263, 0.0
      %v4607 = vmax.f32 %v4266, 0.0
      %v4608 = vmax.f32 %v4269, 0.0
      %v4609 = vmax.f32 %v4272, 0.0
      %v4610 = vmax.f32 %v4275, 0.0
      %v4611 = vmax.f32 %v4278, 0.0
      %v4612 = vmax.f32 %v4281, 0.0
      %v4613 = vmax.f32 %v4284, 0.0
      %v4614 = vmax.f32 %v4287, 0.0
      %v4615 = vmax.f32 %v4290, 0.0
      %v4616 = vmax.f32 %v4293, 0.0
      %v4617 = vmax.f32 %v4296, 0.0
      %v4618 = vmax.f32 %v4299, 0.0
      %v4619 = vmax.f32 %v4302, 0.0
      %v4620 = vmax.f32 %v4305, 0.0
      %v4621 = vmax.f32 %v4308, 0.0
      %v4622 = vmax.f32 %v4311, 0.0
      %v4623 = vmax.f32 %v4314, 0.0
      %v4624 = vmax.f32 %v4317, 0.0
      %v4625 = vmax.f32 %v4320, 0.0
      %v4626 = vmax.f32 %v4323, 0.0
      %v4627 = vmax.f32 %v4326, 0.0
      %v4628 = vmax.f32 %v4329, 0.0
      %v4629 = vmax.f32 %v4332, 0.0
      %v4630 = vmax.f32 %v4335, 0.0
      %v4631 = vmax.f32 %v4338, 0.0
      %v4632 = vmax.f32 %v4341, 0.0
      %v4633 = vmax.f32 %v4344, 0.0
      %v4634 = vmax.f32 %v4347, 0.0
      %v4635 = vmax.f32 %v4350, 0.0
      %v4636 = vmax.f32 %v4353, 0.0
      %v4637 = vmax.f32 %v4356, 0.0
      %v4638 = vmax.f32 %v4359, 0.0
      %v4639 = vmax.f32 %v4362, 0.0
      %v4640 = vmax.f32 %v4365, 0.0
      %v4641 = vmax.f32 %v4368, 0.0
      %v4642 = vmax.f32 %v4371, 0.0
      %v4643 = vmax.f32 %v4374, 0.0
      %v4644 = vmax.f32 %v4377, 0.0
      %v4645 = vmax.f32 %v4380, 0.0
      %v4646 = vmax.f32 %v4383, 0.0
      %v4647 = vmax.f32 %v4386, 0.0
      %v4648 = vmax.f32 %v4389, 0.0
      %v4649 = vmax.f32 %v4392, 0.0
      %v4650 = vmax.f32 %v4395, 0.0
      %v4651 = vmax.f32 %v4398, 0.0
      %v4652 = vmax.f32 %v4401, 0.0
      %v4653 = vmax.f32 %v4404, 0.0
      %v4654 = vmax.f32 %v4407, 0.0
      %v4655 = vmax.f32 %v4410, 0.0
      %v4656 = vmax.f32 %v4413, 0.0
      %v4657 = vmax.f32 %v4416, 0.0
      %v4658 = vmax.f32 %v4419, 0.0
      %v4659 = vmax.f32 %v4422, 0.0
      %v4660 = vmax.f32 %v4425, 0.0
      %v4661 = vmax.f32 %v4428, 0.0
      %v4662 = vmax.f32 %v4431, 0.0
      %v4663 = vmax.f32 %v4434, 0.0
      %v4664 = vmax.f32 %v4437, 0.0
      %v4665 = vmax.f32 %v4440, 0.0
      %v4666 = vmax.f32 %v4443, 0.0
      %v4667 = vmax.f32 %v4446, 0.0
      %v4668 = vmax.f32 %v4449, 0.0
      %v4669 = vmax.f32 %v4452, 0.0
      %v4670 = vmax.f32 %v4455, 0.0
      %v4671 = vmax.f32 %v4458, 0.0
      %v4672 = vmax.f32 %v4461, 0.0
      %v4673 = vmax.f32 %v4464, 0.0
      %v4674 = vmax.f32 %v4467, 0.0
      %v4675 = vmax.f32 %v4470, 0.0
      %v4676 = vmax.f32 %v4473, 0.0
      %v4677 = vmax.f32 %v4476, 0.0
      %v4678 = vmax.f32 %v4479, 0.0
      %v4679 = vmax.f32 %v4482, 0.0
      %v4680 = vmax.f32 %v4485, 0.0
      %v4681 = vmax.f32 %v4488, 0.0
      %v4682 = vmax.f32 %v4491, 0.0
      %v4683 = vmax.f32 %v4494, 0.0
      %v4684 = vmax.f32 %v4497, 0.0
      %v4685 = vmax.f32 %v4500, 0.0
      %v4686 = vmax.f32 %v4503, 0.0
      %v4687 = vmax.f32 %v4506, 0.0
      %v4688 = vmax.f32 %v4509, 0.0
      %v4689 = vmax.f32 %v4512, 0.0
      %v4690 = vmax.f32 %v4515, 0.0
      %v4691 = vmax.f32 %v4518, 0.0
      %v4692 = vmax.f32 %v4521, 0.0
      %v4693 = vmax.f32 %v4524, 0.0
      %v4694 = vmax.f32 %v4527, 0.0
      %v4695 = vmax.f32 %v4530, 0.0
      %v4696 = vmax.f32 %v4533, 0.0
      %v4697 = vmax.f32 %v4536, 0.0
      %v4698 = vmax.f32 %v4539, 0.0
      %v4699 = vmax.f32 %v4542, 0.0
      %v4700 = vmax.f32 %v4545, 0.0
      %v4701 = vmax.f32 %v4548, 0.0
      %v4702 = vmax.f32 %v4551, 0.0
      %v4703 = vmax.f32 %v4554, 0.0
      %v4704 = vmax.f32 %v4557, 0.0
      %v4705 = vmax.f32 %v4560, 0.0
      %v4706 = vmax.f32 %v4563, 0.0
      %v4707 = vmax.f32 %v4566, 0.0
      %v4708 = vmax.f32 %v4569, 0.0
      %v4709 = vmax.f32 %v4572, 0.0
      %v4710 = vmax.f32 %v4575, 0.0
      %v4711 = vmax.f32 %v4578, 0.0
      %v4712 = vmax.f32 %v4581, 0.0
      %v4713 = vmax.f32 %v4584, 0.0
      %s4714 = scalar_lea.vmem %s2, 192
      %v4715 = vld [vmem:[%s4714] sm:$0xff]
      %v4716 = vld [vmem:[%s4714 + $0x8] sm:$0xff]
      %v4717 = vld [vmem:[%s4714 + $0x10] sm:$0xff]
      %v4718 = vld [vmem:[%s4714 + $0x18] sm:$0xff]
      %v4719 = vld [vmem:[%s4714 + $0x20] sm:$0xff]
      %v4720 = vld [vmem:[%s4714 + $0x28] sm:$0xff]
      %v4721 = vld [vmem:[%s4714 + $0x30] sm:$0xff]
      %v4722 = vld [vmem:[%s4714 + $0x38] sm:$0xff]
      %v4723 = vperm.slane %v1687, 4
      %v4725 = vsel %vm1954, %v4586, 0
      %v4728 = vsel %vm1954, %v4587, 0
      %v4731 = vsel %vm1954, %v4588, 0
      %v4734 = vsel %vm1954, %v4589, 0
      %v4737 = vsel %vm1954, %v4590, 0
      %v4740 = vsel %vm1954, %v4591, 0
      %v4743 = vsel %vm1954, %v4592, 0
      %v4746 = vsel %vm1954, %v4593, 0
      %v4749 = vsel %vm1954, %v4594, 0
      %v4752 = vsel %vm1954, %v4595, 0
      %v4755 = vsel %vm1954, %v4596, 0
      %v4758 = vsel %vm1954, %v4597, 0
      %v4761 = vsel %vm1954, %v4598, 0
      %v4764 = vsel %vm1954, %v4599, 0
      %v4767 = vsel %vm1954, %v4600, 0
      %v4770 = vsel %vm1954, %v4601, 0
      %v4773 = vsel %vm1954, %v4602, 0
      %v4776 = vsel %vm1954, %v4603, 0
      %v4779 = vsel %vm1954, %v4604, 0
      %v4782 = vsel %vm1954, %v4605, 0
      %v4785 = vsel %vm1954, %v4606, 0
      %v4788 = vsel %vm1954, %v4607, 0
      %v4791 = vsel %vm1954, %v4608, 0
      %v4794 = vsel %vm1954, %v4609, 0
      %v4797 = vsel %vm1954, %v4610, 0
      %v4800 = vsel %vm1954, %v4611, 0
      %v4803 = vsel %vm1954, %v4612, 0
      %v4806 = vsel %vm1954, %v4613, 0
      %v4809 = vsel %vm1954, %v4614, 0
      %v4812 = vsel %vm1954, %v4615, 0
      %v4815 = vsel %vm1954, %v4616, 0
      %v4818 = vsel %vm1954, %v4617, 0
      %v4821 = vsel %vm1954, %v4618, 0
      %v4824 = vsel %vm1954, %v4619, 0
      %v4827 = vsel %vm1954, %v4620, 0
      %v4830 = vsel %vm1954, %v4621, 0
      %v4833 = vsel %vm1954, %v4622, 0
      %v4836 = vsel %vm1954, %v4623, 0
      %v4839 = vsel %vm1954, %v4624, 0
      %v4842 = vsel %vm1954, %v4625, 0
      %v4845 = vsel %vm1954, %v4626, 0
      %v4848 = vsel %vm1954, %v4627, 0
      %v4851 = vsel %vm1954, %v4628, 0
      %v4854 = vsel %vm1954, %v4629, 0
      %v4857 = vsel %vm1954, %v4630, 0
      %v4860 = vsel %vm1954, %v4631, 0
      %v4863 = vsel %vm1954, %v4632, 0
      %v4866 = vsel %vm1954, %v4633, 0
      %v4869 = vsel %vm1954, %v4634, 0
      %v4872 = vsel %vm1954, %v4635, 0
      %v4875 = vsel %vm1954, %v4636, 0
      %v4878 = vsel %vm1954, %v4637, 0
      %v4881 = vsel %vm1954, %v4638, 0
      %v4884 = vsel %vm1954, %v4639, 0
      %v4887 = vsel %vm1954, %v4640, 0
      %v4890 = vsel %vm1954, %v4641, 0
      %v4893 = vsel %vm1954, %v4642, 0
      %v4896 = vsel %vm1954, %v4643, 0
      %v4899 = vsel %vm1954, %v4644, 0
      %v4902 = vsel %vm1954, %v4645, 0
      %v4905 = vsel %vm1954, %v4646, 0
      %v4908 = vsel %vm1954, %v4647, 0
      %v4911 = vsel %vm1954, %v4648, 0
      %v4914 = vsel %vm1954, %v4649, 0
      %v4917 = vsel %vm1954, %v4650, 0
      %v4920 = vsel %vm1954, %v4651, 0
      %v4923 = vsel %vm1954, %v4652, 0
      %v4926 = vsel %vm1954, %v4653, 0
      %v4929 = vsel %vm1954, %v4654, 0
      %v4932 = vsel %vm1954, %v4655, 0
      %v4935 = vsel %vm1954, %v4656, 0
      %v4938 = vsel %vm1954, %v4657, 0
      %v4941 = vsel %vm1954, %v4658, 0
      %v4944 = vsel %vm1954, %v4659, 0
      %v4947 = vsel %vm1954, %v4660, 0
      %v4950 = vsel %vm1954, %v4661, 0
      %v4953 = vsel %vm1954, %v4662, 0
      %v4956 = vsel %vm1954, %v4663, 0
      %v4959 = vsel %vm1954, %v4664, 0
      %v4962 = vsel %vm1954, %v4665, 0
      %v4965 = vsel %vm1954, %v4666, 0
      %v4968 = vsel %vm1954, %v4667, 0
      %v4971 = vsel %vm1954, %v4668, 0
      %v4974 = vsel %vm1954, %v4669, 0
      %v4977 = vsel %vm1954, %v4670, 0
      %v4980 = vsel %vm1954, %v4671, 0
      %v4983 = vsel %vm1954, %v4672, 0
      %v4986 = vsel %vm1954, %v4673, 0
      %v4989 = vsel %vm1954, %v4674, 0
      %v4992 = vsel %vm1954, %v4675, 0
      %v4995 = vsel %vm1954, %v4676, 0
      %v4998 = vsel %vm1954, %v4677, 0
      %v5001 = vsel %vm1954, %v4678, 0
      %v5004 = vsel %vm1954, %v4679, 0
      %v5007 = vsel %vm1954, %v4680, 0
      %v5010 = vsel %vm1954, %v4681, 0
      %v5013 = vsel %vm1954, %v4682, 0
      %v5016 = vsel %vm1954, %v4683, 0
      %v5019 = vsel %vm1954, %v4684, 0
      %v5022 = vsel %vm1954, %v4685, 0
      %v5025 = vsel %vm1954, %v4686, 0
      %v5028 = vsel %vm1954, %v4687, 0
      %v5031 = vsel %vm1954, %v4688, 0
      %v5034 = vsel %vm1954, %v4689, 0
      %v5037 = vsel %vm1954, %v4690, 0
      %v5040 = vsel %vm1954, %v4691, 0
      %v5043 = vsel %vm1954, %v4692, 0
      %v5046 = vsel %vm1954, %v4693, 0
      %v5049 = vsel %vm1954, %v4694, 0
      %v5052 = vsel %vm1954, %v4695, 0
      %v5055 = vsel %vm1954, %v4696, 0
      %v5058 = vsel %vm1954, %v4697, 0
      %v5061 = vsel %vm1954, %v4698, 0
      %v5064 = vsel %vm1954, %v4699, 0
      %v5067 = vsel %vm1954, %v4700, 0
      %v5070 = vsel %vm1954, %v4701, 0
      %v5073 = vsel %vm1954, %v4702, 0
      %v5076 = vsel %vm1954, %v4703, 0
      %v5079 = vsel %vm1954, %v4704, 0
      %v5082 = vsel %vm1954, %v4705, 0
      %v5085 = vsel %vm1954, %v4706, 0
      %v5088 = vsel %vm1954, %v4707, 0
      %v5091 = vsel %vm1954, %v4708, 0
      %v5094 = vsel %vm1954, %v4709, 0
      %v5097 = vsel %vm1954, %v4710, 0
      %v5100 = vsel %vm1954, %v4711, 0
      %v5103 = vsel %vm1954, %v4712, 0
      %v5106 = vsel %vm1954, %v4713, 0
      %5108 = vmatpush.msra.mxu0 0.0
      %5109 = vmatpush.msra.mxu0 0.0
      %5110 = vmatpush.msra.mxu0 0.0
      %5111 = vmatpush.msra.mxu0 0.0
      %5112 = vmatpush.msra.mxu0 0.0
      %5113 = vmatpush.msra.mxu0 0.0
      %5114 = vmatpush.msra.mxu0 0.0
      %5115 = vmatpush.msra.mxu0 0.0
      %5116 = vmatpush.msra.mxu0 %v4722
      %5117 = vmatpush.msra.mxu0 %v4721
      %5118 = vmatpush.msra.mxu0 %v4720
      %5119 = vmatpush.msra.mxu0 %v4719
      %5120 = vmatpush.msra.mxu0 %v4718
      %5121 = vmatpush.msra.mxu0 %v4717
      %5122 = vmatpush.msra.mxu0 %v4716
      %5123 = vmatpush.msra.mxu0 %v4715
      %5124 = vmatmul.f32.gmra.mxu0 %v4725
      %v5125 = vpop.f32.mrf.mxu0
      %v5126 = vadd.f32 %v4723, %v5125
      %5127 = vmatmul.f32.gmra.mxu0 %v4728
      %v5128 = vpop.f32.mrf.mxu0
      %v5129 = vadd.f32 %v4723, %v5128
      %5130 = vmatmul.f32.gmra.mxu0 %v4731
      %v5131 = vpop.f32.mrf.mxu0
      %v5132 = vadd.f32 %v4723, %v5131
      %5133 = vmatmul.f32.gmra.mxu0 %v4734
      %v5134 = vpop.f32.mrf.mxu0
      %v5135 = vadd.f32 %v4723, %v5134
      %5136 = vmatmul.f32.gmra.mxu0 %v4737
      %v5137 = vpop.f32.mrf.mxu0
      %v5138 = vadd.f32 %v4723, %v5137
      %5139 = vmatmul.f32.gmra.mxu0 %v4740
      %v5140 = vpop.f32.mrf.mxu0
      %v5141 = vadd.f32 %v4723, %v5140
      %5142 = vmatmul.f32.gmra.mxu0 %v4743
      %v5143 = vpop.f32.mrf.mxu0
      %v5144 = vadd.f32 %v4723, %v5143
      %5145 = vmatmul.f32.gmra.mxu0 %v4746
      %v5146 = vpop.f32.mrf.mxu0
      %v5147 = vadd.f32 %v4723, %v5146
      %5148 = vmatmul.f32.gmra.mxu0 %v4749
      %v5149 = vpop.f32.mrf.mxu0
      %v5150 = vadd.f32 %v4723, %v5149
      %5151 = vmatmul.f32.gmra.mxu0 %v4752
      %v5152 = vpop.f32.mrf.mxu0
      %v5153 = vadd.f32 %v4723, %v5152
      %5154 = vmatmul.f32.gmra.mxu0 %v4755
      %v5155 = vpop.f32.mrf.mxu0
      %v5156 = vadd.f32 %v4723, %v5155
      %5157 = vmatmul.f32.gmra.mxu0 %v4758
      %v5158 = vpop.f32.mrf.mxu0
      %v5159 = vadd.f32 %v4723, %v5158
      %5160 = vmatmul.f32.gmra.mxu0 %v4761
      %v5161 = vpop.f32.mrf.mxu0
      %v5162 = vadd.f32 %v4723, %v5161
      %5163 = vmatmul.f32.gmra.mxu0 %v4764
      %v5164 = vpop.f32.mrf.mxu0
      %v5165 = vadd.f32 %v4723, %v5164
      %5166 = vmatmul.f32.gmra.mxu0 %v4767
      %v5167 = vpop.f32.mrf.mxu0
      %v5168 = vadd.f32 %v4723, %v5167
      %5169 = vmatmul.f32.gmra.mxu0 %v4770
      %v5170 = vpop.f32.mrf.mxu0
      %v5171 = vadd.f32 %v4723, %v5170
      %5172 = vmatmul.f32.gmra.mxu0 %v4773
      %v5173 = vpop.f32.mrf.mxu0
      %v5174 = vadd.f32 %v4723, %v5173
      %5175 = vmatmul.f32.gmra.mxu0 %v4776
      %v5176 = vpop.f32.mrf.mxu0
      %v5177 = vadd.f32 %v4723, %v5176
      %5178 = vmatmul.f32.gmra.mxu0 %v4779
      %v5179 = vpop.f32.mrf.mxu0
      %v5180 = vadd.f32 %v4723, %v5179
      %5181 = vmatmul.f32.gmra.mxu0 %v4782
      %v5182 = vpop.f32.mrf.mxu0
      %v5183 = vadd.f32 %v4723, %v5182
      %5184 = vmatmul.f32.gmra.mxu0 %v4785
      %v5185 = vpop.f32.mrf.mxu0
      %v5186 = vadd.f32 %v4723, %v5185
      %5187 = vmatmul.f32.gmra.mxu0 %v4788
      %v5188 = vpop.f32.mrf.mxu0
      %v5189 = vadd.f32 %v4723, %v5188
      %5190 = vmatmul.f32.gmra.mxu0 %v4791
      %v5191 = vpop.f32.mrf.mxu0
      %v5192 = vadd.f32 %v4723, %v5191
      %5193 = vmatmul.f32.gmra.mxu0 %v4794
      %v5194 = vpop.f32.mrf.mxu0
      %v5195 = vadd.f32 %v4723, %v5194
      %5196 = vmatmul.f32.gmra.mxu0 %v4797
      %v5197 = vpop.f32.mrf.mxu0
      %v5198 = vadd.f32 %v4723, %v5197
      %5199 = vmatmul.f32.gmra.mxu0 %v4800
      %v5200 = vpop.f32.mrf.mxu0
      %v5201 = vadd.f32 %v4723, %v5200
      %5202 = vmatmul.f32.gmra.mxu0 %v4803
      %v5203 = vpop.f32.mrf.mxu0
      %v5204 = vadd.f32 %v4723, %v5203
      %5205 = vmatmul.f32.gmra.mxu0 %v4806
      %v5206 = vpop.f32.mrf.mxu0
      %v5207 = vadd.f32 %v4723, %v5206
      %5208 = vmatmul.f32.gmra.mxu0 %v4809
      %v5209 = vpop.f32.mrf.mxu0
      %v5210 = vadd.f32 %v4723, %v5209
      %5211 = vmatmul.f32.gmra.mxu0 %v4812
      %v5212 = vpop.f32.mrf.mxu0
      %v5213 = vadd.f32 %v4723, %v5212
      %5214 = vmatmul.f32.gmra.mxu0 %v4815
      %v5215 = vpop.f32.mrf.mxu0
      %v5216 = vadd.f32 %v4723, %v5215
      %5217 = vmatmul.f32.gmra.mxu0 %v4818
      %v5218 = vpop.f32.mrf.mxu0
      %v5219 = vadd.f32 %v4723, %v5218
      %5220 = vmatmul.f32.gmra.mxu0 %v4821
      %v5221 = vpop.f32.mrf.mxu0
      %v5222 = vadd.f32 %v4723, %v5221
      %5223 = vmatmul.f32.gmra.mxu0 %v4824
      %v5224 = vpop.f32.mrf.mxu0
      %v5225 = vadd.f32 %v4723, %v5224
      %5226 = vmatmul.f32.gmra.mxu0 %v4827
      %v5227 = vpop.f32.mrf.mxu0
      %v5228 = vadd.f32 %v4723, %v5227
      %5229 = vmatmul.f32.gmra.mxu0 %v4830
      %v5230 = vpop.f32.mrf.mxu0
      %v5231 = vadd.f32 %v4723, %v5230
      %5232 = vmatmul.f32.gmra.mxu0 %v4833
      %v5233 = vpop.f32.mrf.mxu0
      %v5234 = vadd.f32 %v4723, %v5233
      %5235 = vmatmul.f32.gmra.mxu0 %v4836
      %v5236 = vpop.f32.mrf.mxu0
      %v5237 = vadd.f32 %v4723, %v5236
      %5238 = vmatmul.f32.gmra.mxu0 %v4839
      %v5239 = vpop.f32.mrf.mxu0
      %v5240 = vadd.f32 %v4723, %v5239
      %5241 = vmatmul.f32.gmra.mxu0 %v4842
      %v5242 = vpop.f32.mrf.mxu0
      %v5243 = vadd.f32 %v4723, %v5242
      %5244 = vmatmul.f32.gmra.mxu0 %v4845
      %v5245 = vpop.f32.mrf.mxu0
      %v5246 = vadd.f32 %v4723, %v5245
      %5247 = vmatmul.f32.gmra.mxu0 %v4848
      %v5248 = vpop.f32.mrf.mxu0
      %v5249 = vadd.f32 %v4723, %v5248
      %5250 = vmatmul.f32.gmra.mxu0 %v4851
      %v5251 = vpop.f32.mrf.mxu0
      %v5252 = vadd.f32 %v4723, %v5251
      %5253 = vmatmul.f32.gmra.mxu0 %v4854
      %v5254 = vpop.f32.mrf.mxu0
      %v5255 = vadd.f32 %v4723, %v5254
      %5256 = vmatmul.f32.gmra.mxu0 %v4857
      %v5257 = vpop.f32.mrf.mxu0
      %v5258 = vadd.f32 %v4723, %v5257
      %5259 = vmatmul.f32.gmra.mxu0 %v4860
      %v5260 = vpop.f32.mrf.mxu0
      %v5261 = vadd.f32 %v4723, %v5260
      %5262 = vmatmul.f32.gmra.mxu0 %v4863
      %v5263 = vpop.f32.mrf.mxu0
      %v5264 = vadd.f32 %v4723, %v5263
      %5265 = vmatmul.f32.gmra.mxu0 %v4866
      %v5266 = vpop.f32.mrf.mxu0
      %v5267 = vadd.f32 %v4723, %v5266
      %5268 = vmatmul.f32.gmra.mxu0 %v4869
      %v5269 = vpop.f32.mrf.mxu0
      %v5270 = vadd.f32 %v4723, %v5269
      %5271 = vmatmul.f32.gmra.mxu0 %v4872
      %v5272 = vpop.f32.mrf.mxu0
      %v5273 = vadd.f32 %v4723, %v5272
      %5274 = vmatmul.f32.gmra.mxu0 %v4875
      %v5275 = vpop.f32.mrf.mxu0
      %v5276 = vadd.f32 %v4723, %v5275
      %5277 = vmatmul.f32.gmra.mxu0 %v4878
      %v5278 = vpop.f32.mrf.mxu0
      %v5279 = vadd.f32 %v4723, %v5278
      %5280 = vmatmul.f32.gmra.mxu0 %v4881
      %v5281 = vpop.f32.mrf.mxu0
      %v5282 = vadd.f32 %v4723, %v5281
      %5283 = vmatmul.f32.gmra.mxu0 %v4884
      %v5284 = vpop.f32.mrf.mxu0
      %v5285 = vadd.f32 %v4723, %v5284
      %5286 = vmatmul.f32.gmra.mxu0 %v4887
      %v5287 = vpop.f32.mrf.mxu0
      %v5288 = vadd.f32 %v4723, %v5287
      %5289 = vmatmul.f32.gmra.mxu0 %v4890
      %v5290 = vpop.f32.mrf.mxu0
      %v5291 = vadd.f32 %v4723, %v5290
      %5292 = vmatmul.f32.gmra.mxu0 %v4893
      %v5293 = vpop.f32.mrf.mxu0
      %v5294 = vadd.f32 %v4723, %v5293
      %5295 = vmatmul.f32.gmra.mxu0 %v4896
      %v5296 = vpop.f32.mrf.mxu0
      %v5297 = vadd.f32 %v4723, %v5296
      %5298 = vmatmul.f32.gmra.mxu0 %v4899
      %v5299 = vpop.f32.mrf.mxu0
      %v5300 = vadd.f32 %v4723, %v5299
      %5301 = vmatmul.f32.gmra.mxu0 %v4902
      %v5302 = vpop.f32.mrf.mxu0
      %v5303 = vadd.f32 %v4723, %v5302
      %5304 = vmatmul.f32.gmra.mxu0 %v4905
      %v5305 = vpop.f32.mrf.mxu0
      %v5306 = vadd.f32 %v4723, %v5305
      %5307 = vmatmul.f32.gmra.mxu0 %v4908
      %v5308 = vpop.f32.mrf.mxu0
      %v5309 = vadd.f32 %v4723, %v5308
      %5310 = vmatmul.f32.gmra.mxu0 %v4911
      %v5311 = vpop.f32.mrf.mxu0
      %v5312 = vadd.f32 %v4723, %v5311
      %5313 = vmatmul.f32.gmra.mxu0 %v4914
      %v5314 = vpop.f32.mrf.mxu0
      %v5315 = vadd.f32 %v4723, %v5314
      %5316 = vmatmul.f32.gmra.mxu0 %v4917
      %v5317 = vpop.f32.mrf.mxu0
      %v5318 = vadd.f32 %v4723, %v5317
      %5319 = vmatmul.f32.gmra.mxu0 %v4920
      %v5320 = vpop.f32.mrf.mxu0
      %v5321 = vadd.f32 %v4723, %v5320
      %5322 = vmatmul.f32.gmra.mxu0 %v4923
      %v5323 = vpop.f32.mrf.mxu0
      %v5324 = vadd.f32 %v4723, %v5323
      %5325 = vmatmul.f32.gmra.mxu0 %v4926
      %v5326 = vpop.f32.mrf.mxu0
      %v5327 = vadd.f32 %v4723, %v5326
      %5328 = vmatmul.f32.gmra.mxu0 %v4929
      %v5329 = vpop.f32.mrf.mxu0
      %v5330 = vadd.f32 %v4723, %v5329
      %5331 = vmatmul.f32.gmra.mxu0 %v4932
      %v5332 = vpop.f32.mrf.mxu0
      %v5333 = vadd.f32 %v4723, %v5332
      %5334 = vmatmul.f32.gmra.mxu0 %v4935
      %v5335 = vpop.f32.mrf.mxu0
      %v5336 = vadd.f32 %v4723, %v5335
      %5337 = vmatmul.f32.gmra.mxu0 %v4938
      %v5338 = vpop.f32.mrf.mxu0
      %v5339 = vadd.f32 %v4723, %v5338
      %5340 = vmatmul.f32.gmra.mxu0 %v4941
      %v5341 = vpop.f32.mrf.mxu0
      %v5342 = vadd.f32 %v4723, %v5341
      %5343 = vmatmul.f32.gmra.mxu0 %v4944
      %v5344 = vpop.f32.mrf.mxu0
      %v5345 = vadd.f32 %v4723, %v5344
      %5346 = vmatmul.f32.gmra.mxu0 %v4947
      %v5347 = vpop.f32.mrf.mxu0
      %v5348 = vadd.f32 %v4723, %v5347
      %5349 = vmatmul.f32.gmra.mxu0 %v4950
      %v5350 = vpop.f32.mrf.mxu0
      %v5351 = vadd.f32 %v4723, %v5350
      %5352 = vmatmul.f32.gmra.mxu0 %v4953
      %v5353 = vpop.f32.mrf.mxu0
      %v5354 = vadd.f32 %v4723, %v5353
      %5355 = vmatmul.f32.gmra.mxu0 %v4956
      %v5356 = vpop.f32.mrf.mxu0
      %v5357 = vadd.f32 %v4723, %v5356
      %5358 = vmatmul.f32.gmra.mxu0 %v4959
      %v5359 = vpop.f32.mrf.mxu0
      %v5360 = vadd.f32 %v4723, %v5359
      %5361 = vmatmul.f32.gmra.mxu0 %v4962
      %v5362 = vpop.f32.mrf.mxu0
      %v5363 = vadd.f32 %v4723, %v5362
      %5364 = vmatmul.f32.gmra.mxu0 %v4965
      %v5365 = vpop.f32.mrf.mxu0
      %v5366 = vadd.f32 %v4723, %v5365
      %5367 = vmatmul.f32.gmra.mxu0 %v4968
      %v5368 = vpop.f32.mrf.mxu0
      %v5369 = vadd.f32 %v4723, %v5368
      %5370 = vmatmul.f32.gmra.mxu0 %v4971
      %v5371 = vpop.f32.mrf.mxu0
      %v5372 = vadd.f32 %v4723, %v5371
      %5373 = vmatmul.f32.gmra.mxu0 %v4974
      %v5374 = vpop.f32.mrf.mxu0
      %v5375 = vadd.f32 %v4723, %v5374
      %5376 = vmatmul.f32.gmra.mxu0 %v4977
      %v5377 = vpop.f32.mrf.mxu0
      %v5378 = vadd.f32 %v4723, %v5377
      %5379 = vmatmul.f32.gmra.mxu0 %v4980
      %v5380 = vpop.f32.mrf.mxu0
      %v5381 = vadd.f32 %v4723, %v5380
      %5382 = vmatmul.f32.gmra.mxu0 %v4983
      %v5383 = vpop.f32.mrf.mxu0
      %v5384 = vadd.f32 %v4723, %v5383
      %5385 = vmatmul.f32.gmra.mxu0 %v4986
      %v5386 = vpop.f32.mrf.mxu0
      %v5387 = vadd.f32 %v4723, %v5386
      %5388 = vmatmul.f32.gmra.mxu0 %v4989
      %v5389 = vpop.f32.mrf.mxu0
      %v5390 = vadd.f32 %v4723, %v5389
      %5391 = vmatmul.f32.gmra.mxu0 %v4992
      %v5392 = vpop.f32.mrf.mxu0
      %v5393 = vadd.f32 %v4723, %v5392
      %5394 = vmatmul.f32.gmra.mxu0 %v4995
      %v5395 = vpop.f32.mrf.mxu0
      %v5396 = vadd.f32 %v4723, %v5395
      %5397 = vmatmul.f32.gmra.mxu0 %v4998
      %v5398 = vpop.f32.mrf.mxu0
      %v5399 = vadd.f32 %v4723, %v5398
      %5400 = vmatmul.f32.gmra.mxu0 %v5001
      %v5401 = vpop.f32.mrf.mxu0
      %v5402 = vadd.f32 %v4723, %v5401
      %5403 = vmatmul.f32.gmra.mxu0 %v5004
      %v5404 = vpop.f32.mrf.mxu0
      %v5405 = vadd.f32 %v4723, %v5404
      %5406 = vmatmul.f32.gmra.mxu0 %v5007
      %v5407 = vpop.f32.mrf.mxu0
      %v5408 = vadd.f32 %v4723, %v5407
      %5409 = vmatmul.f32.gmra.mxu0 %v5010
      %v5410 = vpop.f32.mrf.mxu0
      %v5411 = vadd.f32 %v4723, %v5410
      %5412 = vmatmul.f32.gmra.mxu0 %v5013
      %v5413 = vpop.f32.mrf.mxu0
      %v5414 = vadd.f32 %v4723, %v5413
      %5415 = vmatmul.f32.gmra.mxu0 %v5016
      %v5416 = vpop.f32.mrf.mxu0
      %v5417 = vadd.f32 %v4723, %v5416
      %5418 = vmatmul.f32.gmra.mxu0 %v5019
      %v5419 = vpop.f32.mrf.mxu0
      %v5420 = vadd.f32 %v4723, %v5419
      %5421 = vmatmul.f32.gmra.mxu0 %v5022
      %v5422 = vpop.f32.mrf.mxu0
      %v5423 = vadd.f32 %v4723, %v5422
      %5424 = vmatmul.f32.gmra.mxu0 %v5025
      %v5425 = vpop.f32.mrf.mxu0
      %v5426 = vadd.f32 %v4723, %v5425
      %5427 = vmatmul.f32.gmra.mxu0 %v5028
      %v5428 = vpop.f32.mrf.mxu0
      %v5429 = vadd.f32 %v4723, %v5428
      %5430 = vmatmul.f32.gmra.mxu0 %v5031
      %v5431 = vpop.f32.mrf.mxu0
      %v5432 = vadd.f32 %v4723, %v5431
      %5433 = vmatmul.f32.gmra.mxu0 %v5034
      %v5434 = vpop.f32.mrf.mxu0
      %v5435 = vadd.f32 %v4723, %v5434
      %5436 = vmatmul.f32.gmra.mxu0 %v5037
      %v5437 = vpop.f32.mrf.mxu0
      %v5438 = vadd.f32 %v4723, %v5437
      %5439 = vmatmul.f32.gmra.mxu0 %v5040
      %v5440 = vpop.f32.mrf.mxu0
      %v5441 = vadd.f32 %v4723, %v5440
      %5442 = vmatmul.f32.gmra.mxu0 %v5043
      %v5443 = vpop.f32.mrf.mxu0
      %v5444 = vadd.f32 %v4723, %v5443
      %5445 = vmatmul.f32.gmra.mxu0 %v5046
      %v5446 = vpop.f32.mrf.mxu0
      %v5447 = vadd.f32 %v4723, %v5446
      %5448 = vmatmul.f32.gmra.mxu0 %v5049
      %v5449 = vpop.f32.mrf.mxu0
      %v5450 = vadd.f32 %v4723, %v5449
      %5451 = vmatmul.f32.gmra.mxu0 %v5052
      %v5452 = vpop.f32.mrf.mxu0
      %v5453 = vadd.f32 %v4723, %v5452
      %5454 = vmatmul.f32.gmra.mxu0 %v5055
      %v5455 = vpop.f32.mrf.mxu0
      %v5456 = vadd.f32 %v4723, %v5455
      %5457 = vmatmul.f32.gmra.mxu0 %v5058
      %v5458 = vpop.f32.mrf.mxu0
      %v5459 = vadd.f32 %v4723, %v5458
      %5460 = vmatmul.f32.gmra.mxu0 %v5061
      %v5461 = vpop.f32.mrf.mxu0
      %v5462 = vadd.f32 %v4723, %v5461
      %5463 = vmatmul.f32.gmra.mxu0 %v5064
      %v5464 = vpop.f32.mrf.mxu0
      %v5465 = vadd.f32 %v4723, %v5464
      %5466 = vmatmul.f32.gmra.mxu0 %v5067
      %v5467 = vpop.f32.mrf.mxu0
      %v5468 = vadd.f32 %v4723, %v5467
      %5469 = vmatmul.f32.gmra.mxu0 %v5070
      %v5470 = vpop.f32.mrf.mxu0
      %v5471 = vadd.f32 %v4723, %v5470
      %5472 = vmatmul.f32.gmra.mxu0 %v5073
      %v5473 = vpop.f32.mrf.mxu0
      %v5474 = vadd.f32 %v4723, %v5473
      %5475 = vmatmul.f32.gmra.mxu0 %v5076
      %v5476 = vpop.f32.mrf.mxu0
      %v5477 = vadd.f32 %v4723, %v5476
      %5478 = vmatmul.f32.gmra.mxu0 %v5079
      %v5479 = vpop.f32.mrf.mxu0
      %v5480 = vadd.f32 %v4723, %v5479
      %5481 = vmatmul.f32.gmra.mxu0 %v5082
      %v5482 = vpop.f32.mrf.mxu0
      %v5483 = vadd.f32 %v4723, %v5482
      %5484 = vmatmul.f32.gmra.mxu0 %v5085
      %v5485 = vpop.f32.mrf.mxu0
      %v5486 = vadd.f32 %v4723, %v5485
      %5487 = vmatmul.f32.gmra.mxu0 %v5088
      %v5488 = vpop.f32.mrf.mxu0
      %v5489 = vadd.f32 %v4723, %v5488
      %5490 = vmatmul.f32.gmra.mxu0 %v5091
      %v5491 = vpop.f32.mrf.mxu0
      %v5492 = vadd.f32 %v4723, %v5491
      %5493 = vmatmul.f32.gmra.mxu0 %v5094
      %v5494 = vpop.f32.mrf.mxu0
      %v5495 = vadd.f32 %v4723, %v5494
      %5496 = vmatmul.f32.gmra.mxu0 %v5097
      %v5497 = vpop.f32.mrf.mxu0
      %v5498 = vadd.f32 %v4723, %v5497
      %5499 = vmatmul.f32.gmra.mxu0 %v5100
      %v5500 = vpop.f32.mrf.mxu0
      %v5501 = vadd.f32 %v4723, %v5500
      %5502 = vmatmul.f32.gmra.mxu0 %v5103
      %v5503 = vpop.f32.mrf.mxu0
      %v5504 = vadd.f32 %v4723, %v5503
      %5505 = vmatmul.f32.gmra.mxu0 %v5106
      %v5506 = vpop.f32.mrf.mxu0
      %v5507 = vadd.f32 %v4723, %v5506
      %5508 = vdwg.mxu0
      %v5509 = vmax.f32 %v5126, 0.0
      %v5510 = vmax.f32 %v5129, 0.0
      %v5511 = vmax.f32 %v5132, 0.0
      %v5512 = vmax.f32 %v5135, 0.0
      %v5513 = vmax.f32 %v5138, 0.0
      %v5514 = vmax.f32 %v5141, 0.0
      %v5515 = vmax.f32 %v5144, 0.0
      %v5516 = vmax.f32 %v5147, 0.0
      %v5517 = vmax.f32 %v5150, 0.0
      %v5518 = vmax.f32 %v5153, 0.0
      %v5519 = vmax.f32 %v5156, 0.0
      %v5520 = vmax.f32 %v5159, 0.0
      %v5521 = vmax.f32 %v5162, 0.0
      %v5522 = vmax.f32 %v5165, 0.0
      %v5523 = vmax.f32 %v5168, 0.0
      %v5524 = vmax.f32 %v5171, 0.0
      %v5525 = vmax.f32 %v5174, 0.0
      %v5526 = vmax.f32 %v5177, 0.0
      %v5527 = vmax.f32 %v5180, 0.0
      %v5528 = vmax.f32 %v5183, 0.0
      %v5529 = vmax.f32 %v5186, 0.0
      %v5530 = vmax.f32 %v5189, 0.0
      %v5531 = vmax.f32 %v5192, 0.0
      %v5532 = vmax.f32 %v5195, 0.0
      %v5533 = vmax.f32 %v5198, 0.0
      %v5534 = vmax.f32 %v5201, 0.0
      %v5535 = vmax.f32 %v5204, 0.0
      %v5536 = vmax.f32 %v5207, 0.0
      %v5537 = vmax.f32 %v5210, 0.0
      %v5538 = vmax.f32 %v5213, 0.0
      %v5539 = vmax.f32 %v5216, 0.0
      %v5540 = vmax.f32 %v5219, 0.0
      %v5541 = vmax.f32 %v5222, 0.0
      %v5542 = vmax.f32 %v5225, 0.0
      %v5543 = vmax.f32 %v5228, 0.0
      %v5544 = vmax.f32 %v5231, 0.0
      %v5545 = vmax.f32 %v5234, 0.0
      %v5546 = vmax.f32 %v5237, 0.0
      %v5547 = vmax.f32 %v5240, 0.0
      %v5548 = vmax.f32 %v5243, 0.0
      %v5549 = vmax.f32 %v5246, 0.0
      %v5550 = vmax.f32 %v5249, 0.0
      %v5551 = vmax.f32 %v5252, 0.0
      %v5552 = vmax.f32 %v5255, 0.0
      %v5553 = vmax.f32 %v5258, 0.0
      %v5554 = vmax.f32 %v5261, 0.0
      %v5555 = vmax.f32 %v5264, 0.0
      %v5556 = vmax.f32 %v5267, 0.0
      %v5557 = vmax.f32 %v5270, 0.0
      %v5558 = vmax.f32 %v5273, 0.0
      %v5559 = vmax.f32 %v5276, 0.0
      %v5560 = vmax.f32 %v5279, 0.0
      %v5561 = vmax.f32 %v5282, 0.0
      %v5562 = vmax.f32 %v5285, 0.0
      %v5563 = vmax.f32 %v5288, 0.0
      %v5564 = vmax.f32 %v5291, 0.0
      %v5565 = vmax.f32 %v5294, 0.0
      %v5566 = vmax.f32 %v5297, 0.0
      %v5567 = vmax.f32 %v5300, 0.0
      %v5568 = vmax.f32 %v5303, 0.0
      %v5569 = vmax.f32 %v5306, 0.0
      %v5570 = vmax.f32 %v5309, 0.0
      %v5571 = vmax.f32 %v5312, 0.0
      %v5572 = vmax.f32 %v5315, 0.0
      %v5573 = vmax.f32 %v5318, 0.0
      %v5574 = vmax.f32 %v5321, 0.0
      %v5575 = vmax.f32 %v5324, 0.0
      %v5576 = vmax.f32 %v5327, 0.0
      %v5577 = vmax.f32 %v5330, 0.0
      %v5578 = vmax.f32 %v5333, 0.0
      %v5579 = vmax.f32 %v5336, 0.0
      %v5580 = vmax.f32 %v5339, 0.0
      %v5581 = vmax.f32 %v5342, 0.0
      %v5582 = vmax.f32 %v5345, 0.0
      %v5583 = vmax.f32 %v5348, 0.0
      %v5584 = vmax.f32 %v5351, 0.0
      %v5585 = vmax.f32 %v5354, 0.0
      %v5586 = vmax.f32 %v5357, 0.0
      %v5587 = vmax.f32 %v5360, 0.0
      %v5588 = vmax.f32 %v5363, 0.0
      %v5589 = vmax.f32 %v5366, 0.0
      %v5590 = vmax.f32 %v5369, 0.0
      %v5591 = vmax.f32 %v5372, 0.0
      %v5592 = vmax.f32 %v5375, 0.0
      %v5593 = vmax.f32 %v5378, 0.0
      %v5594 = vmax.f32 %v5381, 0.0
      %v5595 = vmax.f32 %v5384, 0.0
      %v5596 = vmax.f32 %v5387, 0.0
      %v5597 = vmax.f32 %v5390, 0.0
      %v5598 = vmax.f32 %v5393, 0.0
      %v5599 = vmax.f32 %v5396, 0.0
      %v5600 = vmax.f32 %v5399, 0.0
      %v5601 = vmax.f32 %v5402, 0.0
      %v5602 = vmax.f32 %v5405, 0.0
      %v5603 = vmax.f32 %v5408, 0.0
      %v5604 = vmax.f32 %v5411, 0.0
      %v5605 = vmax.f32 %v5414, 0.0
      %v5606 = vmax.f32 %v5417, 0.0
      %v5607 = vmax.f32 %v5420, 0.0
      %v5608 = vmax.f32 %v5423, 0.0
      %v5609 = vmax.f32 %v5426, 0.0
      %v5610 = vmax.f32 %v5429, 0.0
      %v5611 = vmax.f32 %v5432, 0.0
      %v5612 = vmax.f32 %v5435, 0.0
      %v5613 = vmax.f32 %v5438, 0.0
      %v5614 = vmax.f32 %v5441, 0.0
      %v5615 = vmax.f32 %v5444, 0.0
      %v5616 = vmax.f32 %v5447, 0.0
      %v5617 = vmax.f32 %v5450, 0.0
      %v5618 = vmax.f32 %v5453, 0.0
      %v5619 = vmax.f32 %v5456, 0.0
      %v5620 = vmax.f32 %v5459, 0.0
      %v5621 = vmax.f32 %v5462, 0.0
      %v5622 = vmax.f32 %v5465, 0.0
      %v5623 = vmax.f32 %v5468, 0.0
      %v5624 = vmax.f32 %v5471, 0.0
      %v5625 = vmax.f32 %v5474, 0.0
      %v5626 = vmax.f32 %v5477, 0.0
      %v5627 = vmax.f32 %v5480, 0.0
      %v5628 = vmax.f32 %v5483, 0.0
      %v5629 = vmax.f32 %v5486, 0.0
      %v5630 = vmax.f32 %v5489, 0.0
      %v5631 = vmax.f32 %v5492, 0.0
      %v5632 = vmax.f32 %v5495, 0.0
      %v5633 = vmax.f32 %v5498, 0.0
      %v5634 = vmax.f32 %v5501, 0.0
      %v5635 = vmax.f32 %v5504, 0.0
      %v5636 = vmax.f32 %v5507, 0.0
      %s5637 = scalar_lea.vmem %s2, 256
      %v5638 = vld [vmem:[%s5637] sm:$0xff]
      %v5639 = vld [vmem:[%s5637 + $0x8] sm:$0xff]
      %v5640 = vld [vmem:[%s5637 + $0x10] sm:$0xff]
      %v5641 = vld [vmem:[%s5637 + $0x18] sm:$0xff]
      %v5642 = vld [vmem:[%s5637 + $0x20] sm:$0xff]
      %v5643 = vld [vmem:[%s5637 + $0x28] sm:$0xff]
      %v5644 = vld [vmem:[%s5637 + $0x30] sm:$0xff]
      %v5645 = vld [vmem:[%s5637 + $0x38] sm:$0xff]
      %v5646 = vperm.slane %v1687, 5
      %v5648 = vsel %vm1954, %v5509, 0
      %v5651 = vsel %vm1954, %v5510, 0
      %v5654 = vsel %vm1954, %v5511, 0
      %v5657 = vsel %vm1954, %v5512, 0
      %v5660 = vsel %vm1954, %v5513, 0
      %v5663 = vsel %vm1954, %v5514, 0
      %v5666 = vsel %vm1954, %v5515, 0
      %v5669 = vsel %vm1954, %v5516, 0
      %v5672 = vsel %vm1954, %v5517, 0
      %v5675 = vsel %vm1954, %v5518, 0
      %v5678 = vsel %vm1954, %v5519, 0
      %v5681 = vsel %vm1954, %v5520, 0
      %v5684 = vsel %vm1954, %v5521, 0
      %v5687 = vsel %vm1954, %v5522, 0
      %v5690 = vsel %vm1954, %v5523, 0
      %v5693 = vsel %vm1954, %v5524, 0
      %v5696 = vsel %vm1954, %v5525, 0
      %v5699 = vsel %vm1954, %v5526, 0
      %v5702 = vsel %vm1954, %v5527, 0
      %v5705 = vsel %vm1954, %v5528, 0
      %v5708 = vsel %vm1954, %v5529, 0
      %v5711 = vsel %vm1954, %v5530, 0
      %v5714 = vsel %vm1954, %v5531, 0
      %v5717 = vsel %vm1954, %v5532, 0
      %v5720 = vsel %vm1954, %v5533, 0
      %v5723 = vsel %vm1954, %v5534, 0
      %v5726 = vsel %vm1954, %v5535, 0
      %v5729 = vsel %vm1954, %v5536, 0
      %v5732 = vsel %vm1954, %v5537, 0
      %v5735 = vsel %vm1954, %v5538, 0
      %v5738 = vsel %vm1954, %v5539, 0
      %v5741 = vsel %vm1954, %v5540, 0
      %v5744 = vsel %vm1954, %v5541, 0
      %v5747 = vsel %vm1954, %v5542, 0
      %v5750 = vsel %vm1954, %v5543, 0
      %v5753 = vsel %vm1954, %v5544, 0
      %v5756 = vsel %vm1954, %v5545, 0
      %v5759 = vsel %vm1954, %v5546, 0
      %v5762 = vsel %vm1954, %v5547, 0
      %v5765 = vsel %vm1954, %v5548, 0
      %v5768 = vsel %vm1954, %v5549, 0
      %v5771 = vsel %vm1954, %v5550, 0
      %v5774 = vsel %vm1954, %v5551, 0
      %v5777 = vsel %vm1954, %v5552, 0
      %v5780 = vsel %vm1954, %v5553, 0
      %v5783 = vsel %vm1954, %v5554, 0
      %v5786 = vsel %vm1954, %v5555, 0
      %v5789 = vsel %vm1954, %v5556, 0
      %v5792 = vsel %vm1954, %v5557, 0
      %v5795 = vsel %vm1954, %v5558, 0
      %v5798 = vsel %vm1954, %v5559, 0
      %v5801 = vsel %vm1954, %v5560, 0
      %v5804 = vsel %vm1954, %v5561, 0
      %v5807 = vsel %vm1954, %v5562, 0
      %v5810 = vsel %vm1954, %v5563, 0
      %v5813 = vsel %vm1954, %v5564, 0
      %v5816 = vsel %vm1954, %v5565, 0
      %v5819 = vsel %vm1954, %v5566, 0
      %v5822 = vsel %vm1954, %v5567, 0
      %v5825 = vsel %vm1954, %v5568, 0
      %v5828 = vsel %vm1954, %v5569, 0
      %v5831 = vsel %vm1954, %v5570, 0
      %v5834 = vsel %vm1954, %v5571, 0
      %v5837 = vsel %vm1954, %v5572, 0
      %v5840 = vsel %vm1954, %v5573, 0
      %v5843 = vsel %vm1954, %v5574, 0
      %v5846 = vsel %vm1954, %v5575, 0
      %v5849 = vsel %vm1954, %v5576, 0
      %v5852 = vsel %vm1954, %v5577, 0
      %v5855 = vsel %vm1954, %v5578, 0
      %v5858 = vsel %vm1954, %v5579, 0
      %v5861 = vsel %vm1954, %v5580, 0
      %v5864 = vsel %vm1954, %v5581, 0
      %v5867 = vsel %vm1954, %v5582, 0
      %v5870 = vsel %vm1954, %v5583, 0
      %v5873 = vsel %vm1954, %v5584, 0
      %v5876 = vsel %vm1954, %v5585, 0
      %v5879 = vsel %vm1954, %v5586, 0
      %v5882 = vsel %vm1954, %v5587, 0
      %v5885 = vsel %vm1954, %v5588, 0
      %v5888 = vsel %vm1954, %v5589, 0
      %v5891 = vsel %vm1954, %v5590, 0
      %v5894 = vsel %vm1954, %v5591, 0
      %v5897 = vsel %vm1954, %v5592, 0
      %v5900 = vsel %vm1954, %v5593, 0
      %v5903 = vsel %vm1954, %v5594, 0
      %v5906 = vsel %vm1954, %v5595, 0
      %v5909 = vsel %vm1954, %v5596, 0
      %v5912 = vsel %vm1954, %v5597, 0
      %v5915 = vsel %vm1954, %v5598, 0
      %v5918 = vsel %vm1954, %v5599, 0
      %v5921 = vsel %vm1954, %v5600, 0
      %v5924 = vsel %vm1954, %v5601, 0
      %v5927 = vsel %vm1954, %v5602, 0
      %v5930 = vsel %vm1954, %v5603, 0
      %v5933 = vsel %vm1954, %v5604, 0
      %v5936 = vsel %vm1954, %v5605, 0
      %v5939 = vsel %vm1954, %v5606, 0
      %v5942 = vsel %vm1954, %v5607, 0
      %v5945 = vsel %vm1954, %v5608, 0
      %v5948 = vsel %vm1954, %v5609, 0
      %v5951 = vsel %vm1954, %v5610, 0
      %v5954 = vsel %vm1954, %v5611, 0
      %v5957 = vsel %vm1954, %v5612, 0
      %v5960 = vsel %vm1954, %v5613, 0
      %v5963 = vsel %vm1954, %v5614, 0
      %v5966 = vsel %vm1954, %v5615, 0
      %v5969 = vsel %vm1954, %v5616, 0
      %v5972 = vsel %vm1954, %v5617, 0
      %v5975 = vsel %vm1954, %v5618, 0
      %v5978 = vsel %vm1954, %v5619, 0
      %v5981 = vsel %vm1954, %v5620, 0
      %v5984 = vsel %vm1954, %v5621, 0
      %v5987 = vsel %vm1954, %v5622, 0
      %v5990 = vsel %vm1954, %v5623, 0
      %v5993 = vsel %vm1954, %v5624, 0
      %v5996 = vsel %vm1954, %v5625, 0
      %v5999 = vsel %vm1954, %v5626, 0
      %v6002 = vsel %vm1954, %v5627, 0
      %v6005 = vsel %vm1954, %v5628, 0
      %v6008 = vsel %vm1954, %v5629, 0
      %v6011 = vsel %vm1954, %v5630, 0
      %v6014 = vsel %vm1954, %v5631, 0
      %v6017 = vsel %vm1954, %v5632, 0
      %v6020 = vsel %vm1954, %v5633, 0
      %v6023 = vsel %vm1954, %v5634, 0
      %v6026 = vsel %vm1954, %v5635, 0
      %v6029 = vsel %vm1954, %v5636, 0
      %6031 = vmatpush.msra.mxu0 0.0
      %6032 = vmatpush.msra.mxu0 0.0
      %6033 = vmatpush.msra.mxu0 0.0
      %6034 = vmatpush.msra.mxu0 0.0
      %6035 = vmatpush.msra.mxu0 0.0
      %6036 = vmatpush.msra.mxu0 0.0
      %6037 = vmatpush.msra.mxu0 0.0
      %6038 = vmatpush.msra.mxu0 0.0
      %6039 = vmatpush.msra.mxu0 %v5645
      %6040 = vmatpush.msra.mxu0 %v5644
      %6041 = vmatpush.msra.mxu0 %v5643
      %6042 = vmatpush.msra.mxu0 %v5642
      %6043 = vmatpush.msra.mxu0 %v5641
      %6044 = vmatpush.msra.mxu0 %v5640
      %6045 = vmatpush.msra.mxu0 %v5639
      %6046 = vmatpush.msra.mxu0 %v5638
      %6047 = vmatmul.f32.gmra.mxu0 %v5648
      %v6048 = vpop.f32.mrf.mxu0
      %v6049 = vadd.f32 %v5646, %v6048
      %6050 = vmatmul.f32.gmra.mxu0 %v5651
      %v6051 = vpop.f32.mrf.mxu0
      %v6052 = vadd.f32 %v5646, %v6051
      %6053 = vmatmul.f32.gmra.mxu0 %v5654
      %v6054 = vpop.f32.mrf.mxu0
      %v6055 = vadd.f32 %v5646, %v6054
      %6056 = vmatmul.f32.gmra.mxu0 %v5657
      %v6057 = vpop.f32.mrf.mxu0
      %v6058 = vadd.f32 %v5646, %v6057
      %6059 = vmatmul.f32.gmra.mxu0 %v5660
      %v6060 = vpop.f32.mrf.mxu0
      %v6061 = vadd.f32 %v5646, %v6060
      %6062 = vmatmul.f32.gmra.mxu0 %v5663
      %v6063 = vpop.f32.mrf.mxu0
      %v6064 = vadd.f32 %v5646, %v6063
      %6065 = vmatmul.f32.gmra.mxu0 %v5666
      %v6066 = vpop.f32.mrf.mxu0
      %v6067 = vadd.f32 %v5646, %v6066
      %6068 = vmatmul.f32.gmra.mxu0 %v5669
      %v6069 = vpop.f32.mrf.mxu0
      %v6070 = vadd.f32 %v5646, %v6069
      %6071 = vmatmul.f32.gmra.mxu0 %v5672
      %v6072 = vpop.f32.mrf.mxu0
      %v6073 = vadd.f32 %v5646, %v6072
      %6074 = vmatmul.f32.gmra.mxu0 %v5675
      %v6075 = vpop.f32.mrf.mxu0
      %v6076 = vadd.f32 %v5646, %v6075
      %6077 = vmatmul.f32.gmra.mxu0 %v5678
      %v6078 = vpop.f32.mrf.mxu0
      %v6079 = vadd.f32 %v5646, %v6078
      %6080 = vmatmul.f32.gmra.mxu0 %v5681
      %v6081 = vpop.f32.mrf.mxu0
      %v6082 = vadd.f32 %v5646, %v6081
      %6083 = vmatmul.f32.gmra.mxu0 %v5684
      %v6084 = vpop.f32.mrf.mxu0
      %v6085 = vadd.f32 %v5646, %v6084
      %6086 = vmatmul.f32.gmra.mxu0 %v5687
      %v6087 = vpop.f32.mrf.mxu0
      %v6088 = vadd.f32 %v5646, %v6087
      %6089 = vmatmul.f32.gmra.mxu0 %v5690
      %v6090 = vpop.f32.mrf.mxu0
      %v6091 = vadd.f32 %v5646, %v6090
      %6092 = vmatmul.f32.gmra.mxu0 %v5693
      %v6093 = vpop.f32.mrf.mxu0
      %v6094 = vadd.f32 %v5646, %v6093
      %6095 = vmatmul.f32.gmra.mxu0 %v5696
      %v6096 = vpop.f32.mrf.mxu0
      %v6097 = vadd.f32 %v5646, %v6096
      %6098 = vmatmul.f32.gmra.mxu0 %v5699
      %v6099 = vpop.f32.mrf.mxu0
      %v6100 = vadd.f32 %v5646, %v6099
      %6101 = vmatmul.f32.gmra.mxu0 %v5702
      %v6102 = vpop.f32.mrf.mxu0
      %v6103 = vadd.f32 %v5646, %v6102
      %6104 = vmatmul.f32.gmra.mxu0 %v5705
      %v6105 = vpop.f32.mrf.mxu0
      %v6106 = vadd.f32 %v5646, %v6105
      %6107 = vmatmul.f32.gmra.mxu0 %v5708
      %v6108 = vpop.f32.mrf.mxu0
      %v6109 = vadd.f32 %v5646, %v6108
      %6110 = vmatmul.f32.gmra.mxu0 %v5711
      %v6111 = vpop.f32.mrf.mxu0
      %v6112 = vadd.f32 %v5646, %v6111
      %6113 = vmatmul.f32.gmra.mxu0 %v5714
      %v6114 = vpop.f32.mrf.mxu0
      %v6115 = vadd.f32 %v5646, %v6114
      %6116 = vmatmul.f32.gmra.mxu0 %v5717
      %v6117 = vpop.f32.mrf.mxu0
      %v6118 = vadd.f32 %v5646, %v6117
      %6119 = vmatmul.f32.gmra.mxu0 %v5720
      %v6120 = vpop.f32.mrf.mxu0
      %v6121 = vadd.f32 %v5646, %v6120
      %6122 = vmatmul.f32.gmra.mxu0 %v5723
      %v6123 = vpop.f32.mrf.mxu0
      %v6124 = vadd.f32 %v5646, %v6123
      %6125 = vmatmul.f32.gmra.mxu0 %v5726
      %v6126 = vpop.f32.mrf.mxu0
      %v6127 = vadd.f32 %v5646, %v6126
      %6128 = vmatmul.f32.gmra.mxu0 %v5729
      %v6129 = vpop.f32.mrf.mxu0
      %v6130 = vadd.f32 %v5646, %v6129
      %6131 = vmatmul.f32.gmra.mxu0 %v5732
      %v6132 = vpop.f32.mrf.mxu0
      %v6133 = vadd.f32 %v5646, %v6132
      %6134 = vmatmul.f32.gmra.mxu0 %v5735
      %v6135 = vpop.f32.mrf.mxu0
      %v6136 = vadd.f32 %v5646, %v6135
      %6137 = vmatmul.f32.gmra.mxu0 %v5738
      %v6138 = vpop.f32.mrf.mxu0
      %v6139 = vadd.f32 %v5646, %v6138
      %6140 = vmatmul.f32.gmra.mxu0 %v5741
      %v6141 = vpop.f32.mrf.mxu0
      %v6142 = vadd.f32 %v5646, %v6141
      %6143 = vmatmul.f32.gmra.mxu0 %v5744
      %v6144 = vpop.f32.mrf.mxu0
      %v6145 = vadd.f32 %v5646, %v6144
      %6146 = vmatmul.f32.gmra.mxu0 %v5747
      %v6147 = vpop.f32.mrf.mxu0
      %v6148 = vadd.f32 %v5646, %v6147
      %6149 = vmatmul.f32.gmra.mxu0 %v5750
      %v6150 = vpop.f32.mrf.mxu0
      %v6151 = vadd.f32 %v5646, %v6150
      %6152 = vmatmul.f32.gmra.mxu0 %v5753
      %v6153 = vpop.f32.mrf.mxu0
      %v6154 = vadd.f32 %v5646, %v6153
      %6155 = vmatmul.f32.gmra.mxu0 %v5756
      %v6156 = vpop.f32.mrf.mxu0
      %v6157 = vadd.f32 %v5646, %v6156
      %6158 = vmatmul.f32.gmra.mxu0 %v5759
      %v6159 = vpop.f32.mrf.mxu0
      %v6160 = vadd.f32 %v5646, %v6159
      %6161 = vmatmul.f32.gmra.mxu0 %v5762
      %v6162 = vpop.f32.mrf.mxu0
      %v6163 = vadd.f32 %v5646, %v6162
      %6164 = vmatmul.f32.gmra.mxu0 %v5765
      %v6165 = vpop.f32.mrf.mxu0
      %v6166 = vadd.f32 %v5646, %v6165
      %6167 = vmatmul.f32.gmra.mxu0 %v5768
      %v6168 = vpop.f32.mrf.mxu0
      %v6169 = vadd.f32 %v5646, %v6168
      %6170 = vmatmul.f32.gmra.mxu0 %v5771
      %v6171 = vpop.f32.mrf.mxu0
      %v6172 = vadd.f32 %v5646, %v6171
      %6173 = vmatmul.f32.gmra.mxu0 %v5774
      %v6174 = vpop.f32.mrf.mxu0
      %v6175 = vadd.f32 %v5646, %v6174
      %6176 = vmatmul.f32.gmra.mxu0 %v5777
      %v6177 = vpop.f32.mrf.mxu0
      %v6178 = vadd.f32 %v5646, %v6177
      %6179 = vmatmul.f32.gmra.mxu0 %v5780
      %v6180 = vpop.f32.mrf.mxu0
      %v6181 = vadd.f32 %v5646, %v6180
      %6182 = vmatmul.f32.gmra.mxu0 %v5783
      %v6183 = vpop.f32.mrf.mxu0
      %v6184 = vadd.f32 %v5646, %v6183
      %6185 = vmatmul.f32.gmra.mxu0 %v5786
      %v6186 = vpop.f32.mrf.mxu0
      %v6187 = vadd.f32 %v5646, %v6186
      %6188 = vmatmul.f32.gmra.mxu0 %v5789
      %v6189 = vpop.f32.mrf.mxu0
      %v6190 = vadd.f32 %v5646, %v6189
      %6191 = vmatmul.f32.gmra.mxu0 %v5792
      %v6192 = vpop.f32.mrf.mxu0
      %v6193 = vadd.f32 %v5646, %v6192
      %6194 = vmatmul.f32.gmra.mxu0 %v5795
      %v6195 = vpop.f32.mrf.mxu0
      %v6196 = vadd.f32 %v5646, %v6195
      %6197 = vmatmul.f32.gmra.mxu0 %v5798
      %v6198 = vpop.f32.mrf.mxu0
      %v6199 = vadd.f32 %v5646, %v6198
      %6200 = vmatmul.f32.gmra.mxu0 %v5801
      %v6201 = vpop.f32.mrf.mxu0
      %v6202 = vadd.f32 %v5646, %v6201
      %6203 = vmatmul.f32.gmra.mxu0 %v5804
      %v6204 = vpop.f32.mrf.mxu0
      %v6205 = vadd.f32 %v5646, %v6204
      %6206 = vmatmul.f32.gmra.mxu0 %v5807
      %v6207 = vpop.f32.mrf.mxu0
      %v6208 = vadd.f32 %v5646, %v6207
      %6209 = vmatmul.f32.gmra.mxu0 %v5810
      %v6210 = vpop.f32.mrf.mxu0
      %v6211 = vadd.f32 %v5646, %v6210
      %6212 = vmatmul.f32.gmra.mxu0 %v5813
      %v6213 = vpop.f32.mrf.mxu0
      %v6214 = vadd.f32 %v5646, %v6213
      %6215 = vmatmul.f32.gmra.mxu0 %v5816
      %v6216 = vpop.f32.mrf.mxu0
      %v6217 = vadd.f32 %v5646, %v6216
      %6218 = vmatmul.f32.gmra.mxu0 %v5819
      %v6219 = vpop.f32.mrf.mxu0
      %v6220 = vadd.f32 %v5646, %v6219
      %6221 = vmatmul.f32.gmra.mxu0 %v5822
      %v6222 = vpop.f32.mrf.mxu0
      %v6223 = vadd.f32 %v5646, %v6222
      %6224 = vmatmul.f32.gmra.mxu0 %v5825
      %v6225 = vpop.f32.mrf.mxu0
      %v6226 = vadd.f32 %v5646, %v6225
      %6227 = vmatmul.f32.gmra.mxu0 %v5828
      %v6228 = vpop.f32.mrf.mxu0
      %v6229 = vadd.f32 %v5646, %v6228
      %6230 = vmatmul.f32.gmra.mxu0 %v5831
      %v6231 = vpop.f32.mrf.mxu0
      %v6232 = vadd.f32 %v5646, %v6231
      %6233 = vmatmul.f32.gmra.mxu0 %v5834
      %v6234 = vpop.f32.mrf.mxu0
      %v6235 = vadd.f32 %v5646, %v6234
      %6236 = vmatmul.f32.gmra.mxu0 %v5837
      %v6237 = vpop.f32.mrf.mxu0
      %v6238 = vadd.f32 %v5646, %v6237
      %6239 = vmatmul.f32.gmra.mxu0 %v5840
      %v6240 = vpop.f32.mrf.mxu0
      %v6241 = vadd.f32 %v5646, %v6240
      %6242 = vmatmul.f32.gmra.mxu0 %v5843
      %v6243 = vpop.f32.mrf.mxu0
      %v6244 = vadd.f32 %v5646, %v6243
      %6245 = vmatmul.f32.gmra.mxu0 %v5846
      %v6246 = vpop.f32.mrf.mxu0
      %v6247 = vadd.f32 %v5646, %v6246
      %6248 = vmatmul.f32.gmra.mxu0 %v5849
      %v6249 = vpop.f32.mrf.mxu0
      %v6250 = vadd.f32 %v5646, %v6249
      %6251 = vmatmul.f32.gmra.mxu0 %v5852
      %v6252 = vpop.f32.mrf.mxu0
      %v6253 = vadd.f32 %v5646, %v6252
      %6254 = vmatmul.f32.gmra.mxu0 %v5855
      %v6255 = vpop.f32.mrf.mxu0
      %v6256 = vadd.f32 %v5646, %v6255
      %6257 = vmatmul.f32.gmra.mxu0 %v5858
      %v6258 = vpop.f32.mrf.mxu0
      %v6259 = vadd.f32 %v5646, %v6258
      %6260 = vmatmul.f32.gmra.mxu0 %v5861
      %v6261 = vpop.f32.mrf.mxu0
      %v6262 = vadd.f32 %v5646, %v6261
      %6263 = vmatmul.f32.gmra.mxu0 %v5864
      %v6264 = vpop.f32.mrf.mxu0
      %v6265 = vadd.f32 %v5646, %v6264
      %6266 = vmatmul.f32.gmra.mxu0 %v5867
      %v6267 = vpop.f32.mrf.mxu0
      %v6268 = vadd.f32 %v5646, %v6267
      %6269 = vmatmul.f32.gmra.mxu0 %v5870
      %v6270 = vpop.f32.mrf.mxu0
      %v6271 = vadd.f32 %v5646, %v6270
      %6272 = vmatmul.f32.gmra.mxu0 %v5873
      %v6273 = vpop.f32.mrf.mxu0
      %v6274 = vadd.f32 %v5646, %v6273
      %6275 = vmatmul.f32.gmra.mxu0 %v5876
      %v6276 = vpop.f32.mrf.mxu0
      %v6277 = vadd.f32 %v5646, %v6276
      %6278 = vmatmul.f32.gmra.mxu0 %v5879
      %v6279 = vpop.f32.mrf.mxu0
      %v6280 = vadd.f32 %v5646, %v6279
      %6281 = vmatmul.f32.gmra.mxu0 %v5882
      %v6282 = vpop.f32.mrf.mxu0
      %v6283 = vadd.f32 %v5646, %v6282
      %6284 = vmatmul.f32.gmra.mxu0 %v5885
      %v6285 = vpop.f32.mrf.mxu0
      %v6286 = vadd.f32 %v5646, %v6285
      %6287 = vmatmul.f32.gmra.mxu0 %v5888
      %v6288 = vpop.f32.mrf.mxu0
      %v6289 = vadd.f32 %v5646, %v6288
      %6290 = vmatmul.f32.gmra.mxu0 %v5891
      %v6291 = vpop.f32.mrf.mxu0
      %v6292 = vadd.f32 %v5646, %v6291
      %6293 = vmatmul.f32.gmra.mxu0 %v5894
      %v6294 = vpop.f32.mrf.mxu0
      %v6295 = vadd.f32 %v5646, %v6294
      %6296 = vmatmul.f32.gmra.mxu0 %v5897
      %v6297 = vpop.f32.mrf.mxu0
      %v6298 = vadd.f32 %v5646, %v6297
      %6299 = vmatmul.f32.gmra.mxu0 %v5900
      %v6300 = vpop.f32.mrf.mxu0
      %v6301 = vadd.f32 %v5646, %v6300
      %6302 = vmatmul.f32.gmra.mxu0 %v5903
      %v6303 = vpop.f32.mrf.mxu0
      %v6304 = vadd.f32 %v5646, %v6303
      %6305 = vmatmul.f32.gmra.mxu0 %v5906
      %v6306 = vpop.f32.mrf.mxu0
      %v6307 = vadd.f32 %v5646, %v6306
      %6308 = vmatmul.f32.gmra.mxu0 %v5909
      %v6309 = vpop.f32.mrf.mxu0
      %v6310 = vadd.f32 %v5646, %v6309
      %6311 = vmatmul.f32.gmra.mxu0 %v5912
      %v6312 = vpop.f32.mrf.mxu0
      %v6313 = vadd.f32 %v5646, %v6312
      %6314 = vmatmul.f32.gmra.mxu0 %v5915
      %v6315 = vpop.f32.mrf.mxu0
      %v6316 = vadd.f32 %v5646, %v6315
      %6317 = vmatmul.f32.gmra.mxu0 %v5918
      %v6318 = vpop.f32.mrf.mxu0
      %v6319 = vadd.f32 %v5646, %v6318
      %6320 = vmatmul.f32.gmra.mxu0 %v5921
      %v6321 = vpop.f32.mrf.mxu0
      %v6322 = vadd.f32 %v5646, %v6321
      %6323 = vmatmul.f32.gmra.mxu0 %v5924
      %v6324 = vpop.f32.mrf.mxu0
      %v6325 = vadd.f32 %v5646, %v6324
      %6326 = vmatmul.f32.gmra.mxu0 %v5927
      %v6327 = vpop.f32.mrf.mxu0
      %v6328 = vadd.f32 %v5646, %v6327
      %6329 = vmatmul.f32.gmra.mxu0 %v5930
      %v6330 = vpop.f32.mrf.mxu0
      %v6331 = vadd.f32 %v5646, %v6330
      %6332 = vmatmul.f32.gmra.mxu0 %v5933
      %v6333 = vpop.f32.mrf.mxu0
      %v6334 = vadd.f32 %v5646, %v6333
      %6335 = vmatmul.f32.gmra.mxu0 %v5936
      %v6336 = vpop.f32.mrf.mxu0
      %v6337 = vadd.f32 %v5646, %v6336
      %6338 = vmatmul.f32.gmra.mxu0 %v5939
      %v6339 = vpop.f32.mrf.mxu0
      %v6340 = vadd.f32 %v5646, %v6339
      %6341 = vmatmul.f32.gmra.mxu0 %v5942
      %v6342 = vpop.f32.mrf.mxu0
      %v6343 = vadd.f32 %v5646, %v6342
      %6344 = vmatmul.f32.gmra.mxu0 %v5945
      %v6345 = vpop.f32.mrf.mxu0
      %v6346 = vadd.f32 %v5646, %v6345
      %6347 = vmatmul.f32.gmra.mxu0 %v5948
      %v6348 = vpop.f32.mrf.mxu0
      %v6349 = vadd.f32 %v5646, %v6348
      %6350 = vmatmul.f32.gmra.mxu0 %v5951
      %v6351 = vpop.f32.mrf.mxu0
      %v6352 = vadd.f32 %v5646, %v6351
      %6353 = vmatmul.f32.gmra.mxu0 %v5954
      %v6354 = vpop.f32.mrf.mxu0
      %v6355 = vadd.f32 %v5646, %v6354
      %6356 = vmatmul.f32.gmra.mxu0 %v5957
      %v6357 = vpop.f32.mrf.mxu0
      %v6358 = vadd.f32 %v5646, %v6357
      %6359 = vmatmul.f32.gmra.mxu0 %v5960
      %v6360 = vpop.f32.mrf.mxu0
      %v6361 = vadd.f32 %v5646, %v6360
      %6362 = vmatmul.f32.gmra.mxu0 %v5963
      %v6363 = vpop.f32.mrf.mxu0
      %v6364 = vadd.f32 %v5646, %v6363
      %6365 = vmatmul.f32.gmra.mxu0 %v5966
      %v6366 = vpop.f32.mrf.mxu0
      %v6367 = vadd.f32 %v5646, %v6366
      %6368 = vmatmul.f32.gmra.mxu0 %v5969
      %v6369 = vpop.f32.mrf.mxu0
      %v6370 = vadd.f32 %v5646, %v6369
      %6371 = vmatmul.f32.gmra.mxu0 %v5972
      %v6372 = vpop.f32.mrf.mxu0
      %v6373 = vadd.f32 %v5646, %v6372
      %6374 = vmatmul.f32.gmra.mxu0 %v5975
      %v6375 = vpop.f32.mrf.mxu0
      %v6376 = vadd.f32 %v5646, %v6375
      %6377 = vmatmul.f32.gmra.mxu0 %v5978
      %v6378 = vpop.f32.mrf.mxu0
      %v6379 = vadd.f32 %v5646, %v6378
      %6380 = vmatmul.f32.gmra.mxu0 %v5981
      %v6381 = vpop.f32.mrf.mxu0
      %v6382 = vadd.f32 %v5646, %v6381
      %6383 = vmatmul.f32.gmra.mxu0 %v5984
      %v6384 = vpop.f32.mrf.mxu0
      %v6385 = vadd.f32 %v5646, %v6384
      %6386 = vmatmul.f32.gmra.mxu0 %v5987
      %v6387 = vpop.f32.mrf.mxu0
      %v6388 = vadd.f32 %v5646, %v6387
      %6389 = vmatmul.f32.gmra.mxu0 %v5990
      %v6390 = vpop.f32.mrf.mxu0
      %v6391 = vadd.f32 %v5646, %v6390
      %6392 = vmatmul.f32.gmra.mxu0 %v5993
      %v6393 = vpop.f32.mrf.mxu0
      %v6394 = vadd.f32 %v5646, %v6393
      %6395 = vmatmul.f32.gmra.mxu0 %v5996
      %v6396 = vpop.f32.mrf.mxu0
      %v6397 = vadd.f32 %v5646, %v6396
      %6398 = vmatmul.f32.gmra.mxu0 %v5999
      %v6399 = vpop.f32.mrf.mxu0
      %v6400 = vadd.f32 %v5646, %v6399
      %6401 = vmatmul.f32.gmra.mxu0 %v6002
      %v6402 = vpop.f32.mrf.mxu0
      %v6403 = vadd.f32 %v5646, %v6402
      %6404 = vmatmul.f32.gmra.mxu0 %v6005
      %v6405 = vpop.f32.mrf.mxu0
      %v6406 = vadd.f32 %v5646, %v6405
      %6407 = vmatmul.f32.gmra.mxu0 %v6008
      %v6408 = vpop.f32.mrf.mxu0
      %v6409 = vadd.f32 %v5646, %v6408
      %6410 = vmatmul.f32.gmra.mxu0 %v6011
      %v6411 = vpop.f32.mrf.mxu0
      %v6412 = vadd.f32 %v5646, %v6411
      %6413 = vmatmul.f32.gmra.mxu0 %v6014
      %v6414 = vpop.f32.mrf.mxu0
      %v6415 = vadd.f32 %v5646, %v6414
      %6416 = vmatmul.f32.gmra.mxu0 %v6017
      %v6417 = vpop.f32.mrf.mxu0
      %v6418 = vadd.f32 %v5646, %v6417
      %6419 = vmatmul.f32.gmra.mxu0 %v6020
      %v6420 = vpop.f32.mrf.mxu0
      %v6421 = vadd.f32 %v5646, %v6420
      %6422 = vmatmul.f32.gmra.mxu0 %v6023
      %v6423 = vpop.f32.mrf.mxu0
      %v6424 = vadd.f32 %v5646, %v6423
      %6425 = vmatmul.f32.gmra.mxu0 %v6026
      %v6426 = vpop.f32.mrf.mxu0
      %v6427 = vadd.f32 %v5646, %v6426
      %6428 = vmatmul.f32.gmra.mxu0 %v6029
      %v6429 = vpop.f32.mrf.mxu0
      %v6430 = vadd.f32 %v5646, %v6429
      %6431 = vdwg.mxu0
      %6560 = vrot.lane.b32.xlu0 %v903, 64
      %v6561 = vpop.permute.xlu0 %6560
      %6562 = vrot.lane.b32.xlu0 %v906, 64
      %v6563 = vpop.permute.xlu0 %6562
      %6564 = vrot.lane.b32.xlu0 %v909, 64
      %v6565 = vpop.permute.xlu0 %6564
      %6566 = vrot.lane.b32.xlu0 %v912, 64
      %v6567 = vpop.permute.xlu0 %6566
      %6568 = vrot.lane.b32.xlu0 %v915, 64
      %v6569 = vpop.permute.xlu0 %6568
      %6570 = vrot.lane.b32.xlu0 %v918, 64
      %v6571 = vpop.permute.xlu0 %6570
      %6572 = vrot.lane.b32.xlu0 %v921, 64
      %v6573 = vpop.permute.xlu0 %6572
      %6574 = vrot.lane.b32.xlu0 %v924, 64
      %v6575 = vpop.permute.xlu0 %6574
      %6576 = vrot.lane.b32.xlu0 %v927, 64
      %v6577 = vpop.permute.xlu0 %6576
      %6578 = vrot.lane.b32.xlu0 %v930, 64
      %v6579 = vpop.permute.xlu0 %6578
      %6580 = vrot.lane.b32.xlu0 %v933, 64
      %v6581 = vpop.permute.xlu0 %6580
      %6582 = vrot.lane.b32.xlu0 %v936, 64
      %v6583 = vpop.permute.xlu0 %6582
      %6584 = vrot.lane.b32.xlu0 %v939, 64
      %v6585 = vpop.permute.xlu0 %6584
      %6586 = vrot.lane.b32.xlu0 %v942, 64
      %v6587 = vpop.permute.xlu0 %6586
      %6588 = vrot.lane.b32.xlu0 %v945, 64
      %v6589 = vpop.permute.xlu0 %6588
      %6590 = vrot.lane.b32.xlu0 %v948, 64
      %v6591 = vpop.permute.xlu0 %6590
      %6592 = vrot.lane.b32.xlu0 %v951, 64
      %v6593 = vpop.permute.xlu0 %6592
      %6594 = vrot.lane.b32.xlu0 %v954, 64
      %v6595 = vpop.permute.xlu0 %6594
      %6596 = vrot.lane.b32.xlu0 %v957, 64
      %v6597 = vpop.permute.xlu0 %6596
      %6598 = vrot.lane.b32.xlu0 %v960, 64
      %v6599 = vpop.permute.xlu0 %6598
      %6600 = vrot.lane.b32.xlu0 %v963, 64
      %v6601 = vpop.permute.xlu0 %6600
      %6602 = vrot.lane.b32.xlu0 %v966, 64
      %v6603 = vpop.permute.xlu0 %6602
      %6604 = vrot.lane.b32.xlu0 %v969, 64
      %v6605 = vpop.permute.xlu0 %6604
      %6606 = vrot.lane.b32.xlu0 %v972, 64
      %v6607 = vpop.permute.xlu0 %6606
      %6608 = vrot.lane.b32.xlu0 %v975, 64
      %v6609 = vpop.permute.xlu0 %6608
      %6610 = vrot.lane.b32.xlu0 %v978, 64
      %v6611 = vpop.permute.xlu0 %6610
      %6612 = vrot.lane.b32.xlu0 %v981, 64
      %v6613 = vpop.permute.xlu0 %6612
      %6614 = vrot.lane.b32.xlu0 %v984, 64
      %v6615 = vpop.permute.xlu0 %6614
      %6616 = vrot.lane.b32.xlu0 %v987, 64
      %v6617 = vpop.permute.xlu0 %6616
      %6618 = vrot.lane.b32.xlu0 %v990, 64
      %v6619 = vpop.permute.xlu0 %6618
      %6620 = vrot.lane.b32.xlu0 %v993, 64
      %v6621 = vpop.permute.xlu0 %6620
      %6622 = vrot.lane.b32.xlu0 %v996, 64
      %v6623 = vpop.permute.xlu0 %6622
      %6624 = vrot.lane.b32.xlu0 %v999, 64
      %v6625 = vpop.permute.xlu0 %6624
      %6626 = vrot.lane.b32.xlu0 %v1002, 64
      %v6627 = vpop.permute.xlu0 %6626
      %6628 = vrot.lane.b32.xlu0 %v1005, 64
      %v6629 = vpop.permute.xlu0 %6628
      %6630 = vrot.lane.b32.xlu0 %v1008, 64
      %v6631 = vpop.permute.xlu0 %6630
      %6632 = vrot.lane.b32.xlu0 %v1011, 64
      %v6633 = vpop.permute.xlu0 %6632
      %6634 = vrot.lane.b32.xlu0 %v1014, 64
      %v6635 = vpop.permute.xlu0 %6634
      %6636 = vrot.lane.b32.xlu0 %v1017, 64
      %v6637 = vpop.permute.xlu0 %6636
      %6638 = vrot.lane.b32.xlu0 %v1020, 64
      %v6639 = vpop.permute.xlu0 %6638
      %6640 = vrot.lane.b32.xlu0 %v1023, 64
      %v6641 = vpop.permute.xlu0 %6640
      %6642 = vrot.lane.b32.xlu0 %v1026, 64
      %v6643 = vpop.permute.xlu0 %6642
      %6644 = vrot.lane.b32.xlu0 %v1029, 64
      %v6645 = vpop.permute.xlu0 %6644
      %6646 = vrot.lane.b32.xlu0 %v1032, 64
      %v6647 = vpop.permute.xlu0 %6646
      %6648 = vrot.lane.b32.xlu0 %v1035, 64
      %v6649 = vpop.permute.xlu0 %6648
      %6650 = vrot.lane.b32.xlu0 %v1038, 64
      %v6651 = vpop.permute.xlu0 %6650
      %6652 = vrot.lane.b32.xlu0 %v1041, 64
      %v6653 = vpop.permute.xlu0 %6652
      %6654 = vrot.lane.b32.xlu0 %v1044, 64
      %v6655 = vpop.permute.xlu0 %6654
      %6656 = vrot.lane.b32.xlu0 %v1047, 64
      %v6657 = vpop.permute.xlu0 %6656
      %6658 = vrot.lane.b32.xlu0 %v1050, 64
      %v6659 = vpop.permute.xlu0 %6658
      %6660 = vrot.lane.b32.xlu0 %v1053, 64
      %v6661 = vpop.permute.xlu0 %6660
      %6662 = vrot.lane.b32.xlu0 %v1056, 64
      %v6663 = vpop.permute.xlu0 %6662
      %6664 = vrot.lane.b32.xlu0 %v1059, 64
      %v6665 = vpop.permute.xlu0 %6664
      %6666 = vrot.lane.b32.xlu0 %v1062, 64
      %v6667 = vpop.permute.xlu0 %6666
      %6668 = vrot.lane.b32.xlu0 %v1065, 64
      %v6669 = vpop.permute.xlu0 %6668
      %6670 = vrot.lane.b32.xlu0 %v1068, 64
      %v6671 = vpop.permute.xlu0 %6670
      %6672 = vrot.lane.b32.xlu0 %v1071, 64
      %v6673 = vpop.permute.xlu0 %6672
      %6674 = vrot.lane.b32.xlu0 %v1074, 64
      %v6675 = vpop.permute.xlu0 %6674
      %6676 = vrot.lane.b32.xlu0 %v1077, 64
      %v6677 = vpop.permute.xlu0 %6676
      %6678 = vrot.lane.b32.xlu0 %v1080, 64
      %v6679 = vpop.permute.xlu0 %6678
      %6680 = vrot.lane.b32.xlu0 %v1083, 64
      %v6681 = vpop.permute.xlu0 %6680
      %6682 = vrot.lane.b32.xlu0 %v1086, 64
      %v6683 = vpop.permute.xlu0 %6682
      %6684 = vrot.lane.b32.xlu0 %v1089, 64
      %v6685 = vpop.permute.xlu0 %6684
      %6686 = vrot.lane.b32.xlu0 %v1092, 64
      %v6687 = vpop.permute.xlu0 %6686
      %6688 = vrot.lane.b32.xlu0 %v1095, 64
      %v6689 = vpop.permute.xlu0 %6688
      %6690 = vrot.lane.b32.xlu0 %v1098, 64
      %v6691 = vpop.permute.xlu0 %6690
      %6692 = vrot.lane.b32.xlu0 %v1101, 64
      %v6693 = vpop.permute.xlu0 %6692
      %6694 = vrot.lane.b32.xlu0 %v1104, 64
      %v6695 = vpop.permute.xlu0 %6694
      %6696 = vrot.lane.b32.xlu0 %v1107, 64
      %v6697 = vpop.permute.xlu0 %6696
      %6698 = vrot.lane.b32.xlu0 %v1110, 64
      %v6699 = vpop.permute.xlu0 %6698
      %6700 = vrot.lane.b32.xlu0 %v1113, 64
      %v6701 = vpop.permute.xlu0 %6700
      %6702 = vrot.lane.b32.xlu0 %v1116, 64
      %v6703 = vpop.permute.xlu0 %6702
      %6704 = vrot.lane.b32.xlu0 %v1119, 64
      %v6705 = vpop.permute.xlu0 %6704
      %6706 = vrot.lane.b32.xlu0 %v1122, 64
      %v6707 = vpop.permute.xlu0 %6706
      %6708 = vrot.lane.b32.xlu0 %v1125, 64
      %v6709 = vpop.permute.xlu0 %6708
      %6710 = vrot.lane.b32.xlu0 %v1128, 64
      %v6711 = vpop.permute.xlu0 %6710
      %6712 = vrot.lane.b32.xlu0 %v1131, 64
      %v6713 = vpop.permute.xlu0 %6712
      %6714 = vrot.lane.b32.xlu0 %v1134, 64
      %v6715 = vpop.permute.xlu0 %6714
      %6716 = vrot.lane.b32.xlu0 %v1137, 64
      %v6717 = vpop.permute.xlu0 %6716
      %6718 = vrot.lane.b32.xlu0 %v1140, 64
      %v6719 = vpop.permute.xlu0 %6718
      %6720 = vrot.lane.b32.xlu0 %v1143, 64
      %v6721 = vpop.permute.xlu0 %6720
      %6722 = vrot.lane.b32.xlu0 %v1146, 64
      %v6723 = vpop.permute.xlu0 %6722
      %6724 = vrot.lane.b32.xlu0 %v1149, 64
      %v6725 = vpop.permute.xlu0 %6724
      %6726 = vrot.lane.b32.xlu0 %v1152, 64
      %v6727 = vpop.permute.xlu0 %6726
      %6728 = vrot.lane.b32.xlu0 %v1155, 64
      %v6729 = vpop.permute.xlu0 %6728
      %6730 = vrot.lane.b32.xlu0 %v1158, 64
      %v6731 = vpop.permute.xlu0 %6730
      %6732 = vrot.lane.b32.xlu0 %v1161, 64
      %v6733 = vpop.permute.xlu0 %6732
      %6734 = vrot.lane.b32.xlu0 %v1164, 64
      %v6735 = vpop.permute.xlu0 %6734
      %6736 = vrot.lane.b32.xlu0 %v1167, 64
      %v6737 = vpop.permute.xlu0 %6736
      %6738 = vrot.lane.b32.xlu0 %v1170, 64
      %v6739 = vpop.permute.xlu0 %6738
      %6740 = vrot.lane.b32.xlu0 %v1173, 64
      %v6741 = vpop.permute.xlu0 %6740
      %6742 = vrot.lane.b32.xlu0 %v1176, 64
      %v6743 = vpop.permute.xlu0 %6742
      %6744 = vrot.lane.b32.xlu0 %v1179, 64
      %v6745 = vpop.permute.xlu0 %6744
      %6746 = vrot.lane.b32.xlu0 %v1182, 64
      %v6747 = vpop.permute.xlu0 %6746
      %6748 = vrot.lane.b32.xlu0 %v1185, 64
      %v6749 = vpop.permute.xlu0 %6748
      %6750 = vrot.lane.b32.xlu0 %v1188, 64
      %v6751 = vpop.permute.xlu0 %6750
      %6752 = vrot.lane.b32.xlu0 %v1191, 64
      %v6753 = vpop.permute.xlu0 %6752
      %6754 = vrot.lane.b32.xlu0 %v1194, 64
      %v6755 = vpop.permute.xlu0 %6754
      %6756 = vrot.lane.b32.xlu0 %v1197, 64
      %v6757 = vpop.permute.xlu0 %6756
      %6758 = vrot.lane.b32.xlu0 %v1200, 64
      %v6759 = vpop.permute.xlu0 %6758
      %6760 = vrot.lane.b32.xlu0 %v1203, 64
      %v6761 = vpop.permute.xlu0 %6760
      %6762 = vrot.lane.b32.xlu0 %v1206, 64
      %v6763 = vpop.permute.xlu0 %6762
      %6764 = vrot.lane.b32.xlu0 %v1209, 64
      %v6765 = vpop.permute.xlu0 %6764
      %6766 = vrot.lane.b32.xlu0 %v1212, 64
      %v6767 = vpop.permute.xlu0 %6766
      %6768 = vrot.lane.b32.xlu0 %v1215, 64
      %v6769 = vpop.permute.xlu0 %6768
      %6770 = vrot.lane.b32.xlu0 %v1218, 64
      %v6771 = vpop.permute.xlu0 %6770
      %6772 = vrot.lane.b32.xlu0 %v1221, 64
      %v6773 = vpop.permute.xlu0 %6772
      %6774 = vrot.lane.b32.xlu0 %v1224, 64
      %v6775 = vpop.permute.xlu0 %6774
      %6776 = vrot.lane.b32.xlu0 %v1227, 64
      %v6777 = vpop.permute.xlu0 %6776
      %6778 = vrot.lane.b32.xlu0 %v1230, 64
      %v6779 = vpop.permute.xlu0 %6778
      %6780 = vrot.lane.b32.xlu0 %v1233, 64
      %v6781 = vpop.permute.xlu0 %6780
      %6782 = vrot.lane.b32.xlu0 %v1236, 64
      %v6783 = vpop.permute.xlu0 %6782
      %6784 = vrot.lane.b32.xlu0 %v1239, 64
      %v6785 = vpop.permute.xlu0 %6784
      %6786 = vrot.lane.b32.xlu0 %v1242, 64
      %v6787 = vpop.permute.xlu0 %6786
      %6788 = vrot.lane.b32.xlu0 %v1245, 64
      %v6789 = vpop.permute.xlu0 %6788
      %6790 = vrot.lane.b32.xlu0 %v1248, 64
      %v6791 = vpop.permute.xlu0 %6790
      %6792 = vrot.lane.b32.xlu0 %v1251, 64
      %v6793 = vpop.permute.xlu0 %6792
      %6794 = vrot.lane.b32.xlu0 %v1254, 64
      %v6795 = vpop.permute.xlu0 %6794
      %6796 = vrot.lane.b32.xlu0 %v1257, 64
      %v6797 = vpop.permute.xlu0 %6796
      %6798 = vrot.lane.b32.xlu0 %v1260, 64
      %v6799 = vpop.permute.xlu0 %6798
      %6800 = vrot.lane.b32.xlu0 %v1263, 64
      %v6801 = vpop.permute.xlu0 %6800
      %6802 = vrot.lane.b32.xlu0 %v1266, 64
      %v6803 = vpop.permute.xlu0 %6802
      %6804 = vrot.lane.b32.xlu0 %v1269, 64
      %v6805 = vpop.permute.xlu0 %6804
      %6806 = vrot.lane.b32.xlu0 %v1272, 64
      %v6807 = vpop.permute.xlu0 %6806
      %6808 = vrot.lane.b32.xlu0 %v1275, 64
      %v6809 = vpop.permute.xlu0 %6808
      %6810 = vrot.lane.b32.xlu0 %v1278, 64
      %v6811 = vpop.permute.xlu0 %6810
      %6812 = vrot.lane.b32.xlu0 %v1281, 64
      %v6813 = vpop.permute.xlu0 %6812
      %6814 = vrot.lane.b32.xlu0 %v1284, 64
      %v6815 = vpop.permute.xlu0 %6814
      %v6944 = vadd.f32 %v6049, %v6561
      %v6945 = vadd.f32 %v6052, %v6563
      %v6946 = vadd.f32 %v6055, %v6565
      %v6947 = vadd.f32 %v6058, %v6567
      %v6948 = vadd.f32 %v6061, %v6569
      %v6949 = vadd.f32 %v6064, %v6571
      %v6950 = vadd.f32 %v6067, %v6573
      %v6951 = vadd.f32 %v6070, %v6575
      %v6952 = vadd.f32 %v6073, %v6577
      %v6953 = vadd.f32 %v6076, %v6579
      %v6954 = vadd.f32 %v6079, %v6581
      %v6955 = vadd.f32 %v6082, %v6583
      %v6956 = vadd.f32 %v6085, %v6585
      %v6957 = vadd.f32 %v6088, %v6587
      %v6958 = vadd.f32 %v6091, %v6589
      %v6959 = vadd.f32 %v6094, %v6591
      %v6960 = vadd.f32 %v6097, %v6593
      %v6961 = vadd.f32 %v6100, %v6595
      %v6962 = vadd.f32 %v6103, %v6597
      %v6963 = vadd.f32 %v6106, %v6599
      %v6964 = vadd.f32 %v6109, %v6601
      %v6965 = vadd.f32 %v6112, %v6603
      %v6966 = vadd.f32 %v6115, %v6605
      %v6967 = vadd.f32 %v6118, %v6607
      %v6968 = vadd.f32 %v6121, %v6609
      %v6969 = vadd.f32 %v6124, %v6611
      %v6970 = vadd.f32 %v6127, %v6613
      %v6971 = vadd.f32 %v6130, %v6615
      %v6972 = vadd.f32 %v6133, %v6617
      %v6973 = vadd.f32 %v6136, %v6619
      %v6974 = vadd.f32 %v6139, %v6621
      %v6975 = vadd.f32 %v6142, %v6623
      %v6976 = vadd.f32 %v6145, %v6625
      %v6977 = vadd.f32 %v6148, %v6627
      %v6978 = vadd.f32 %v6151, %v6629
      %v6979 = vadd.f32 %v6154, %v6631
      %v6980 = vadd.f32 %v6157, %v6633
      %v6981 = vadd.f32 %v6160, %v6635
      %v6982 = vadd.f32 %v6163, %v6637
      %v6983 = vadd.f32 %v6166, %v6639
      %v6984 = vadd.f32 %v6169, %v6641
      %v6985 = vadd.f32 %v6172, %v6643
      %v6986 = vadd.f32 %v6175, %v6645
      %v6987 = vadd.f32 %v6178, %v6647
      %v6988 = vadd.f32 %v6181, %v6649
      %v6989 = vadd.f32 %v6184, %v6651
      %v6990 = vadd.f32 %v6187, %v6653
      %v6991 = vadd.f32 %v6190, %v6655
      %v6992 = vadd.f32 %v6193, %v6657
      %v6993 = vadd.f32 %v6196, %v6659
      %v6994 = vadd.f32 %v6199, %v6661
      %v6995 = vadd.f32 %v6202, %v6663
      %v6996 = vadd.f32 %v6205, %v6665
      %v6997 = vadd.f32 %v6208, %v6667
      %v6998 = vadd.f32 %v6211, %v6669
      %v6999 = vadd.f32 %v6214, %v6671
      %v7000 = vadd.f32 %v6217, %v6673
      %v7001 = vadd.f32 %v6220, %v6675
      %v7002 = vadd.f32 %v6223, %v6677
      %v7003 = vadd.f32 %v6226, %v6679
      %v7004 = vadd.f32 %v6229, %v6681
      %v7005 = vadd.f32 %v6232, %v6683
      %v7006 = vadd.f32 %v6235, %v6685
      %v7007 = vadd.f32 %v6238, %v6687
      %v7008 = vadd.f32 %v6241, %v6689
      %v7009 = vadd.f32 %v6244, %v6691
      %v7010 = vadd.f32 %v6247, %v6693
      %v7011 = vadd.f32 %v6250, %v6695
      %v7012 = vadd.f32 %v6253, %v6697
      %v7013 = vadd.f32 %v6256, %v6699
      %v7014 = vadd.f32 %v6259, %v6701
      %v7015 = vadd.f32 %v6262, %v6703
      %v7016 = vadd.f32 %v6265, %v6705
      %v7017 = vadd.f32 %v6268, %v6707
      %v7018 = vadd.f32 %v6271, %v6709
      %v7019 = vadd.f32 %v6274, %v6711
      %v7020 = vadd.f32 %v6277, %v6713
      %v7021 = vadd.f32 %v6280, %v6715
      %v7022 = vadd.f32 %v6283, %v6717
      %v7023 = vadd.f32 %v6286, %v6719
      %v7024 = vadd.f32 %v6289, %v6721
      %v7025 = vadd.f32 %v6292, %v6723
      %v7026 = vadd.f32 %v6295, %v6725
      %v7027 = vadd.f32 %v6298, %v6727
      %v7028 = vadd.f32 %v6301, %v6729
      %v7029 = vadd.f32 %v6304, %v6731
      %v7030 = vadd.f32 %v6307, %v6733
      %v7031 = vadd.f32 %v6310, %v6735
      %v7032 = vadd.f32 %v6313, %v6737
      %v7033 = vadd.f32 %v6316, %v6739
      %v7034 = vadd.f32 %v6319, %v6741
      %v7035 = vadd.f32 %v6322, %v6743
      %v7036 = vadd.f32 %v6325, %v6745
      %v7037 = vadd.f32 %v6328, %v6747
      %v7038 = vadd.f32 %v6331, %v6749
      %v7039 = vadd.f32 %v6334, %v6751
      %v7040 = vadd.f32 %v6337, %v6753
      %v7041 = vadd.f32 %v6340, %v6755
      %v7042 = vadd.f32 %v6343, %v6757
      %v7043 = vadd.f32 %v6346, %v6759
      %v7044 = vadd.f32 %v6349, %v6761
      %v7045 = vadd.f32 %v6352, %v6763
      %v7046 = vadd.f32 %v6355, %v6765
      %v7047 = vadd.f32 %v6358, %v6767
      %v7048 = vadd.f32 %v6361, %v6769
      %v7049 = vadd.f32 %v6364, %v6771
      %v7050 = vadd.f32 %v6367, %v6773
      %v7051 = vadd.f32 %v6370, %v6775
      %v7052 = vadd.f32 %v6373, %v6777
      %v7053 = vadd.f32 %v6376, %v6779
      %v7054 = vadd.f32 %v6379, %v6781
      %v7055 = vadd.f32 %v6382, %v6783
      %v7056 = vadd.f32 %v6385, %v6785
      %v7057 = vadd.f32 %v6388, %v6787
      %v7058 = vadd.f32 %v6391, %v6789
      %v7059 = vadd.f32 %v6394, %v6791
      %v7060 = vadd.f32 %v6397, %v6793
      %v7061 = vadd.f32 %v6400, %v6795
      %v7062 = vadd.f32 %v6403, %v6797
      %v7063 = vadd.f32 %v6406, %v6799
      %v7064 = vadd.f32 %v6409, %v6801
      %v7065 = vadd.f32 %v6412, %v6803
      %v7066 = vadd.f32 %v6415, %v6805
      %v7067 = vadd.f32 %v6418, %v6807
      %v7068 = vadd.f32 %v6421, %v6809
      %v7069 = vadd.f32 %v6424, %v6811
      %v7070 = vadd.f32 %v6427, %v6813
      %v7071 = vadd.f32 %v6430, %v6815
      %v7072 = vmax.f32 %v6944, 0.0
      %v7073 = vmax.f32 %v6945, 0.0
      %v7074 = vmax.f32 %v6946, 0.0
      %v7075 = vmax.f32 %v6947, 0.0
      %v7076 = vmax.f32 %v6948, 0.0
      %v7077 = vmax.f32 %v6949, 0.0
      %v7078 = vmax.f32 %v6950, 0.0
      %v7079 = vmax.f32 %v6951, 0.0
      %v7080 = vmax.f32 %v6952, 0.0
      %v7081 = vmax.f32 %v6953, 0.0
      %v7082 = vmax.f32 %v6954, 0.0
      %v7083 = vmax.f32 %v6955, 0.0
      %v7084 = vmax.f32 %v6956, 0.0
      %v7085 = vmax.f32 %v6957, 0.0
      %v7086 = vmax.f32 %v6958, 0.0
      %v7087 = vmax.f32 %v6959, 0.0
      %v7088 = vmax.f32 %v6960, 0.0
      %v7089 = vmax.f32 %v6961, 0.0
      %v7090 = vmax.f32 %v6962, 0.0
      %v7091 = vmax.f32 %v6963, 0.0
      %v7092 = vmax.f32 %v6964, 0.0
      %v7093 = vmax.f32 %v6965, 0.0
      %v7094 = vmax.f32 %v6966, 0.0
      %v7095 = vmax.f32 %v6967, 0.0
      %v7096 = vmax.f32 %v6968, 0.0
      %v7097 = vmax.f32 %v6969, 0.0
      %v7098 = vmax.f32 %v6970, 0.0
      %v7099 = vmax.f32 %v6971, 0.0
      %v7100 = vmax.f32 %v6972, 0.0
      %v7101 = vmax.f32 %v6973, 0.0
      %v7102 = vmax.f32 %v6974, 0.0
      %v7103 = vmax.f32 %v6975, 0.0
      %v7104 = vmax.f32 %v6976, 0.0
      %v7105 = vmax.f32 %v6977, 0.0
      %v7106 = vmax.f32 %v6978, 0.0
      %v7107 = vmax.f32 %v6979, 0.0
      %v7108 = vmax.f32 %v6980, 0.0
      %v7109 = vmax.f32 %v6981, 0.0
      %v7110 = vmax.f32 %v6982, 0.0
      %v7111 = vmax.f32 %v6983, 0.0
      %v7112 = vmax.f32 %v6984, 0.0
      %v7113 = vmax.f32 %v6985, 0.0
      %v7114 = vmax.f32 %v6986, 0.0
      %v7115 = vmax.f32 %v6987, 0.0
      %v7116 = vmax.f32 %v6988, 0.0
      %v7117 = vmax.f32 %v6989, 0.0
      %v7118 = vmax.f32 %v6990, 0.0
      %v7119 = vmax.f32 %v6991, 0.0
      %v7120 = vmax.f32 %v6992, 0.0
      %v7121 = vmax.f32 %v6993, 0.0
      %v7122 = vmax.f32 %v6994, 0.0
      %v7123 = vmax.f32 %v6995, 0.0
      %v7124 = vmax.f32 %v6996, 0.0
      %v7125 = vmax.f32 %v6997, 0.0
      %v7126 = vmax.f32 %v6998, 0.0
      %v7127 = vmax.f32 %v6999, 0.0
      %v7128 = vmax.f32 %v7000, 0.0
      %v7129 = vmax.f32 %v7001, 0.0
      %v7130 = vmax.f32 %v7002, 0.0
      %v7131 = vmax.f32 %v7003, 0.0
      %v7132 = vmax.f32 %v7004, 0.0
      %v7133 = vmax.f32 %v7005, 0.0
      %v7134 = vmax.f32 %v7006, 0.0
      %v7135 = vmax.f32 %v7007, 0.0
      %v7136 = vmax.f32 %v7008, 0.0
      %v7137 = vmax.f32 %v7009, 0.0
      %v7138 = vmax.f32 %v7010, 0.0
      %v7139 = vmax.f32 %v7011, 0.0
      %v7140 = vmax.f32 %v7012, 0.0
      %v7141 = vmax.f32 %v7013, 0.0
      %v7142 = vmax.f32 %v7014, 0.0
      %v7143 = vmax.f32 %v7015, 0.0
      %v7144 = vmax.f32 %v7016, 0.0
      %v7145 = vmax.f32 %v7017, 0.0
      %v7146 = vmax.f32 %v7018, 0.0
      %v7147 = vmax.f32 %v7019, 0.0
      %v7148 = vmax.f32 %v7020, 0.0
      %v7149 = vmax.f32 %v7021, 0.0
      %v7150 = vmax.f32 %v7022, 0.0
      %v7151 = vmax.f32 %v7023, 0.0
      %v7152 = vmax.f32 %v7024, 0.0
      %v7153 = vmax.f32 %v7025, 0.0
      %v7154 = vmax.f32 %v7026, 0.0
      %v7155 = vmax.f32 %v7027, 0.0
      %v7156 = vmax.f32 %v7028, 0.0
      %v7157 = vmax.f32 %v7029, 0.0
      %v7158 = vmax.f32 %v7030, 0.0
      %v7159 = vmax.f32 %v7031, 0.0
      %v7160 = vmax.f32 %v7032, 0.0
      %v7161 = vmax.f32 %v7033, 0.0
      %v7162 = vmax.f32 %v7034, 0.0
      %v7163 = vmax.f32 %v7035, 0.0
      %v7164 = vmax.f32 %v7036, 0.0
      %v7165 = vmax.f32 %v7037, 0.0
      %v7166 = vmax.f32 %v7038, 0.0
      %v7167 = vmax.f32 %v7039, 0.0
      %v7168 = vmax.f32 %v7040, 0.0
      %v7169 = vmax.f32 %v7041, 0.0
      %v7170 = vmax.f32 %v7042, 0.0
      %v7171 = vmax.f32 %v7043, 0.0
      %v7172 = vmax.f32 %v7044, 0.0
      %v7173 = vmax.f32 %v7045, 0.0
      %v7174 = vmax.f32 %v7046, 0.0
      %v7175 = vmax.f32 %v7047, 0.0
      %v7176 = vmax.f32 %v7048, 0.0
      %v7177 = vmax.f32 %v7049, 0.0
      %v7178 = vmax.f32 %v7050, 0.0
      %v7179 = vmax.f32 %v7051, 0.0
      %v7180 = vmax.f32 %v7052, 0.0
      %v7181 = vmax.f32 %v7053, 0.0
      %v7182 = vmax.f32 %v7054, 0.0
      %v7183 = vmax.f32 %v7055, 0.0
      %v7184 = vmax.f32 %v7056, 0.0
      %v7185 = vmax.f32 %v7057, 0.0
      %v7186 = vmax.f32 %v7058, 0.0
      %v7187 = vmax.f32 %v7059, 0.0
      %v7188 = vmax.f32 %v7060, 0.0
      %v7189 = vmax.f32 %v7061, 0.0
      %v7190 = vmax.f32 %v7062, 0.0
      %v7191 = vmax.f32 %v7063, 0.0
      %v7192 = vmax.f32 %v7064, 0.0
      %v7193 = vmax.f32 %v7065, 0.0
      %v7194 = vmax.f32 %v7066, 0.0
      %v7195 = vmax.f32 %v7067, 0.0
      %v7196 = vmax.f32 %v7068, 0.0
      %v7197 = vmax.f32 %v7069, 0.0
      %v7198 = vmax.f32 %v7070, 0.0
      %v7199 = vmax.f32 %v7071, 0.0
      %s7200 = scalar_lea.vmem %s2, 320
      %v7201 = vld [vmem:[%s7200] sm:$0xff]
      %v7202 = vld [vmem:[%s7200 + $0x8] sm:$0xff]
      %v7203 = vld [vmem:[%s7200 + $0x10] sm:$0xff]
      %v7204 = vld [vmem:[%s7200 + $0x18] sm:$0xff]
      %v7205 = vld [vmem:[%s7200 + $0x20] sm:$0xff]
      %v7206 = vld [vmem:[%s7200 + $0x28] sm:$0xff]
      %v7207 = vld [vmem:[%s7200 + $0x30] sm:$0xff]
      %v7208 = vld [vmem:[%s7200 + $0x38] sm:$0xff]
      %v7209 = vperm.slane %v1687, 6
      %v7211 = vsel %vm1954, %v7072, 0
      %v7214 = vsel %vm1954, %v7073, 0
      %v7217 = vsel %vm1954, %v7074, 0
      %v7220 = vsel %vm1954, %v7075, 0
      %v7223 = vsel %vm1954, %v7076, 0
      %v7226 = vsel %vm1954, %v7077, 0
      %v7229 = vsel %vm1954, %v7078, 0
      %v7232 = vsel %vm1954, %v7079, 0
      %v7235 = vsel %vm1954, %v7080, 0
      %v7238 = vsel %vm1954, %v7081, 0
      %v7241 = vsel %vm1954, %v7082, 0
      %v7244 = vsel %vm1954, %v7083, 0
      %v7247 = vsel %vm1954, %v7084, 0
      %v7250 = vsel %vm1954, %v7085, 0
      %v7253 = vsel %vm1954, %v7086, 0
      %v7256 = vsel %vm1954, %v7087, 0
      %v7259 = vsel %vm1954, %v7088, 0
      %v7262 = vsel %vm1954, %v7089, 0
      %v7265 = vsel %vm1954, %v7090, 0
      %v7268 = vsel %vm1954, %v7091, 0
      %v7271 = vsel %vm1954, %v7092, 0
      %v7274 = vsel %vm1954, %v7093, 0
      %v7277 = vsel %vm1954, %v7094, 0
      %v7280 = vsel %vm1954, %v7095, 0
      %v7283 = vsel %vm1954, %v7096, 0
      %v7286 = vsel %vm1954, %v7097, 0
      %v7289 = vsel %vm1954, %v7098, 0
      %v7292 = vsel %vm1954, %v7099, 0
      %v7295 = vsel %vm1954, %v7100, 0
      %v7298 = vsel %vm1954, %v7101, 0
      %v7301 = vsel %vm1954, %v7102, 0
      %v7304 = vsel %vm1954, %v7103, 0
      %v7307 = vsel %vm1954, %v7104, 0
      %v7310 = vsel %vm1954, %v7105, 0
      %v7313 = vsel %vm1954, %v7106, 0
      %v7316 = vsel %vm1954, %v7107, 0
      %v7319 = vsel %vm1954, %v7108, 0
      %v7322 = vsel %vm1954, %v7109, 0
      %v7325 = vsel %vm1954, %v7110, 0
      %v7328 = vsel %vm1954, %v7111, 0
      %v7331 = vsel %vm1954, %v7112, 0
      %v7334 = vsel %vm1954, %v7113, 0
      %v7337 = vsel %vm1954, %v7114, 0
      %v7340 = vsel %vm1954, %v7115, 0
      %v7343 = vsel %vm1954, %v7116, 0
      %v7346 = vsel %vm1954, %v7117, 0
      %v7349 = vsel %vm1954, %v7118, 0
      %v7352 = vsel %vm1954, %v7119, 0
      %v7355 = vsel %vm1954, %v7120, 0
      %v7358 = vsel %vm1954, %v7121, 0
      %v7361 = vsel %vm1954, %v7122, 0
      %v7364 = vsel %vm1954, %v7123, 0
      %v7367 = vsel %vm1954, %v7124, 0
      %v7370 = vsel %vm1954, %v7125, 0
      %v7373 = vsel %vm1954, %v7126, 0
      %v7376 = vsel %vm1954, %v7127, 0
      %v7379 = vsel %vm1954, %v7128, 0
      %v7382 = vsel %vm1954, %v7129, 0
      %v7385 = vsel %vm1954, %v7130, 0
      %v7388 = vsel %vm1954, %v7131, 0
      %v7391 = vsel %vm1954, %v7132, 0
      %v7394 = vsel %vm1954, %v7133, 0
      %v7397 = vsel %vm1954, %v7134, 0
      %v7400 = vsel %vm1954, %v7135, 0
      %v7403 = vsel %vm1954, %v7136, 0
      %v7406 = vsel %vm1954, %v7137, 0
      %v7409 = vsel %vm1954, %v7138, 0
      %v7412 = vsel %vm1954, %v7139, 0
      %v7415 = vsel %vm1954, %v7140, 0
      %v7418 = vsel %vm1954, %v7141, 0
      %v7421 = vsel %vm1954, %v7142, 0
      %v7424 = vsel %vm1954, %v7143, 0
      %v7427 = vsel %vm1954, %v7144, 0
      %v7430 = vsel %vm1954, %v7145, 0
      %v7433 = vsel %vm1954, %v7146, 0
      %v7436 = vsel %vm1954, %v7147, 0
      %v7439 = vsel %vm1954, %v7148, 0
      %v7442 = vsel %vm1954, %v7149, 0
      %v7445 = vsel %vm1954, %v7150, 0
      %v7448 = vsel %vm1954, %v7151, 0
      %v7451 = vsel %vm1954, %v7152, 0
      %v7454 = vsel %vm1954, %v7153, 0
      %v7457 = vsel %vm1954, %v7154, 0
      %v7460 = vsel %vm1954, %v7155, 0
      %v7463 = vsel %vm1954, %v7156, 0
      %v7466 = vsel %vm1954, %v7157, 0
      %v7469 = vsel %vm1954, %v7158, 0
      %v7472 = vsel %vm1954, %v7159, 0
      %v7475 = vsel %vm1954, %v7160, 0
      %v7478 = vsel %vm1954, %v7161, 0
      %v7481 = vsel %vm1954, %v7162, 0
      %v7484 = vsel %vm1954, %v7163, 0
      %v7487 = vsel %vm1954, %v7164, 0
      %v7490 = vsel %vm1954, %v7165, 0
      %v7493 = vsel %vm1954, %v7166, 0
      %v7496 = vsel %vm1954, %v7167, 0
      %v7499 = vsel %vm1954, %v7168, 0
      %v7502 = vsel %vm1954, %v7169, 0
      %v7505 = vsel %vm1954, %v7170, 0
      %v7508 = vsel %vm1954, %v7171, 0
      %v7511 = vsel %vm1954, %v7172, 0
      %v7514 = vsel %vm1954, %v7173, 0
      %v7517 = vsel %vm1954, %v7174, 0
      %v7520 = vsel %vm1954, %v7175, 0
      %v7523 = vsel %vm1954, %v7176, 0
      %v7526 = vsel %vm1954, %v7177, 0
      %v7529 = vsel %vm1954, %v7178, 0
      %v7532 = vsel %vm1954, %v7179, 0
      %v7535 = vsel %vm1954, %v7180, 0
      %v7538 = vsel %vm1954, %v7181, 0
      %v7541 = vsel %vm1954, %v7182, 0
      %v7544 = vsel %vm1954, %v7183, 0
      %v7547 = vsel %vm1954, %v7184, 0
      %v7550 = vsel %vm1954, %v7185, 0
      %v7553 = vsel %vm1954, %v7186, 0
      %v7556 = vsel %vm1954, %v7187, 0
      %v7559 = vsel %vm1954, %v7188, 0
      %v7562 = vsel %vm1954, %v7189, 0
      %v7565 = vsel %vm1954, %v7190, 0
      %v7568 = vsel %vm1954, %v7191, 0
      %v7571 = vsel %vm1954, %v7192, 0
      %v7574 = vsel %vm1954, %v7193, 0
      %v7577 = vsel %vm1954, %v7194, 0
      %v7580 = vsel %vm1954, %v7195, 0
      %v7583 = vsel %vm1954, %v7196, 0
      %v7586 = vsel %vm1954, %v7197, 0
      %v7589 = vsel %vm1954, %v7198, 0
      %v7592 = vsel %vm1954, %v7199, 0
      %7594 = vmatpush.msra.mxu0 0.0
      %7595 = vmatpush.msra.mxu0 0.0
      %7596 = vmatpush.msra.mxu0 0.0
      %7597 = vmatpush.msra.mxu0 0.0
      %7598 = vmatpush.msra.mxu0 0.0
      %7599 = vmatpush.msra.mxu0 0.0
      %7600 = vmatpush.msra.mxu0 0.0
      %7601 = vmatpush.msra.mxu0 0.0
      %7602 = vmatpush.msra.mxu0 %v7208
      %7603 = vmatpush.msra.mxu0 %v7207
      %7604 = vmatpush.msra.mxu0 %v7206
      %7605 = vmatpush.msra.mxu0 %v7205
      %7606 = vmatpush.msra.mxu0 %v7204
      %7607 = vmatpush.msra.mxu0 %v7203
      %7608 = vmatpush.msra.mxu0 %v7202
      %7609 = vmatpush.msra.mxu0 %v7201
      %7610 = vmatmul.f32.gmra.mxu0 %v7211
      %v7611 = vpop.f32.mrf.mxu0
      %v7612 = vadd.f32 %v7209, %v7611
      %7613 = vmatmul.f32.gmra.mxu0 %v7214
      %v7614 = vpop.f32.mrf.mxu0
      %v7615 = vadd.f32 %v7209, %v7614
      %7616 = vmatmul.f32.gmra.mxu0 %v7217
      %v7617 = vpop.f32.mrf.mxu0
      %v7618 = vadd.f32 %v7209, %v7617
      %7619 = vmatmul.f32.gmra.mxu0 %v7220
      %v7620 = vpop.f32.mrf.mxu0
      %v7621 = vadd.f32 %v7209, %v7620
      %7622 = vmatmul.f32.gmra.mxu0 %v7223
      %v7623 = vpop.f32.mrf.mxu0
      %v7624 = vadd.f32 %v7209, %v7623
      %7625 = vmatmul.f32.gmra.mxu0 %v7226
      %v7626 = vpop.f32.mrf.mxu0
      %v7627 = vadd.f32 %v7209, %v7626
      %7628 = vmatmul.f32.gmra.mxu0 %v7229
      %v7629 = vpop.f32.mrf.mxu0
      %v7630 = vadd.f32 %v7209, %v7629
      %7631 = vmatmul.f32.gmra.mxu0 %v7232
      %v7632 = vpop.f32.mrf.mxu0
      %v7633 = vadd.f32 %v7209, %v7632
      %7634 = vmatmul.f32.gmra.mxu0 %v7235
      %v7635 = vpop.f32.mrf.mxu0
      %v7636 = vadd.f32 %v7209, %v7635
      %7637 = vmatmul.f32.gmra.mxu0 %v7238
      %v7638 = vpop.f32.mrf.mxu0
      %v7639 = vadd.f32 %v7209, %v7638
      %7640 = vmatmul.f32.gmra.mxu0 %v7241
      %v7641 = vpop.f32.mrf.mxu0
      %v7642 = vadd.f32 %v7209, %v7641
      %7643 = vmatmul.f32.gmra.mxu0 %v7244
      %v7644 = vpop.f32.mrf.mxu0
      %v7645 = vadd.f32 %v7209, %v7644
      %7646 = vmatmul.f32.gmra.mxu0 %v7247
      %v7647 = vpop.f32.mrf.mxu0
      %v7648 = vadd.f32 %v7209, %v7647
      %7649 = vmatmul.f32.gmra.mxu0 %v7250
      %v7650 = vpop.f32.mrf.mxu0
      %v7651 = vadd.f32 %v7209, %v7650
      %7652 = vmatmul.f32.gmra.mxu0 %v7253
      %v7653 = vpop.f32.mrf.mxu0
      %v7654 = vadd.f32 %v7209, %v7653
      %7655 = vmatmul.f32.gmra.mxu0 %v7256
      %v7656 = vpop.f32.mrf.mxu0
      %v7657 = vadd.f32 %v7209, %v7656
      %7658 = vmatmul.f32.gmra.mxu0 %v7259
      %v7659 = vpop.f32.mrf.mxu0
      %v7660 = vadd.f32 %v7209, %v7659
      %7661 = vmatmul.f32.gmra.mxu0 %v7262
      %v7662 = vpop.f32.mrf.mxu0
      %v7663 = vadd.f32 %v7209, %v7662
      %7664 = vmatmul.f32.gmra.mxu0 %v7265
      %v7665 = vpop.f32.mrf.mxu0
      %v7666 = vadd.f32 %v7209, %v7665
      %7667 = vmatmul.f32.gmra.mxu0 %v7268
      %v7668 = vpop.f32.mrf.mxu0
      %v7669 = vadd.f32 %v7209, %v7668
      %7670 = vmatmul.f32.gmra.mxu0 %v7271
      %v7671 = vpop.f32.mrf.mxu0
      %v7672 = vadd.f32 %v7209, %v7671
      %7673 = vmatmul.f32.gmra.mxu0 %v7274
      %v7674 = vpop.f32.mrf.mxu0
      %v7675 = vadd.f32 %v7209, %v7674
      %7676 = vmatmul.f32.gmra.mxu0 %v7277
      %v7677 = vpop.f32.mrf.mxu0
      %v7678 = vadd.f32 %v7209, %v7677
      %7679 = vmatmul.f32.gmra.mxu0 %v7280
      %v7680 = vpop.f32.mrf.mxu0
      %v7681 = vadd.f32 %v7209, %v7680
      %7682 = vmatmul.f32.gmra.mxu0 %v7283
      %v7683 = vpop.f32.mrf.mxu0
      %v7684 = vadd.f32 %v7209, %v7683
      %7685 = vmatmul.f32.gmra.mxu0 %v7286
      %v7686 = vpop.f32.mrf.mxu0
      %v7687 = vadd.f32 %v7209, %v7686
      %7688 = vmatmul.f32.gmra.mxu0 %v7289
      %v7689 = vpop.f32.mrf.mxu0
      %v7690 = vadd.f32 %v7209, %v7689
      %7691 = vmatmul.f32.gmra.mxu0 %v7292
      %v7692 = vpop.f32.mrf.mxu0
      %v7693 = vadd.f32 %v7209, %v7692
      %7694 = vmatmul.f32.gmra.mxu0 %v7295
      %v7695 = vpop.f32.mrf.mxu0
      %v7696 = vadd.f32 %v7209, %v7695
      %7697 = vmatmul.f32.gmra.mxu0 %v7298
      %v7698 = vpop.f32.mrf.mxu0
      %v7699 = vadd.f32 %v7209, %v7698
      %7700 = vmatmul.f32.gmra.mxu0 %v7301
      %v7701 = vpop.f32.mrf.mxu0
      %v7702 = vadd.f32 %v7209, %v7701
      %7703 = vmatmul.f32.gmra.mxu0 %v7304
      %v7704 = vpop.f32.mrf.mxu0
      %v7705 = vadd.f32 %v7209, %v7704
      %7706 = vmatmul.f32.gmra.mxu0 %v7307
      %v7707 = vpop.f32.mrf.mxu0
      %v7708 = vadd.f32 %v7209, %v7707
      %7709 = vmatmul.f32.gmra.mxu0 %v7310
      %v7710 = vpop.f32.mrf.mxu0
      %v7711 = vadd.f32 %v7209, %v7710
      %7712 = vmatmul.f32.gmra.mxu0 %v7313
      %v7713 = vpop.f32.mrf.mxu0
      %v7714 = vadd.f32 %v7209, %v7713
      %7715 = vmatmul.f32.gmra.mxu0 %v7316
      %v7716 = vpop.f32.mrf.mxu0
      %v7717 = vadd.f32 %v7209, %v7716
      %7718 = vmatmul.f32.gmra.mxu0 %v7319
      %v7719 = vpop.f32.mrf.mxu0
      %v7720 = vadd.f32 %v7209, %v7719
      %7721 = vmatmul.f32.gmra.mxu0 %v7322
      %v7722 = vpop.f32.mrf.mxu0
      %v7723 = vadd.f32 %v7209, %v7722
      %7724 = vmatmul.f32.gmra.mxu0 %v7325
      %v7725 = vpop.f32.mrf.mxu0
      %v7726 = vadd.f32 %v7209, %v7725
      %7727 = vmatmul.f32.gmra.mxu0 %v7328
      %v7728 = vpop.f32.mrf.mxu0
      %v7729 = vadd.f32 %v7209, %v7728
      %7730 = vmatmul.f32.gmra.mxu0 %v7331
      %v7731 = vpop.f32.mrf.mxu0
      %v7732 = vadd.f32 %v7209, %v7731
      %7733 = vmatmul.f32.gmra.mxu0 %v7334
      %v7734 = vpop.f32.mrf.mxu0
      %v7735 = vadd.f32 %v7209, %v7734
      %7736 = vmatmul.f32.gmra.mxu0 %v7337
      %v7737 = vpop.f32.mrf.mxu0
      %v7738 = vadd.f32 %v7209, %v7737
      %7739 = vmatmul.f32.gmra.mxu0 %v7340
      %v7740 = vpop.f32.mrf.mxu0
      %v7741 = vadd.f32 %v7209, %v7740
      %7742 = vmatmul.f32.gmra.mxu0 %v7343
      %v7743 = vpop.f32.mrf.mxu0
      %v7744 = vadd.f32 %v7209, %v7743
      %7745 = vmatmul.f32.gmra.mxu0 %v7346
      %v7746 = vpop.f32.mrf.mxu0
      %v7747 = vadd.f32 %v7209, %v7746
      %7748 = vmatmul.f32.gmra.mxu0 %v7349
      %v7749 = vpop.f32.mrf.mxu0
      %v7750 = vadd.f32 %v7209, %v7749
      %7751 = vmatmul.f32.gmra.mxu0 %v7352
      %v7752 = vpop.f32.mrf.mxu0
      %v7753 = vadd.f32 %v7209, %v7752
      %7754 = vmatmul.f32.gmra.mxu0 %v7355
      %v7755 = vpop.f32.mrf.mxu0
      %v7756 = vadd.f32 %v7209, %v7755
      %7757 = vmatmul.f32.gmra.mxu0 %v7358
      %v7758 = vpop.f32.mrf.mxu0
      %v7759 = vadd.f32 %v7209, %v7758
      %7760 = vmatmul.f32.gmra.mxu0 %v7361
      %v7761 = vpop.f32.mrf.mxu0
      %v7762 = vadd.f32 %v7209, %v7761
      %7763 = vmatmul.f32.gmra.mxu0 %v7364
      %v7764 = vpop.f32.mrf.mxu0
      %v7765 = vadd.f32 %v7209, %v7764
      %7766 = vmatmul.f32.gmra.mxu0 %v7367
      %v7767 = vpop.f32.mrf.mxu0
      %v7768 = vadd.f32 %v7209, %v7767
      %7769 = vmatmul.f32.gmra.mxu0 %v7370
      %v7770 = vpop.f32.mrf.mxu0
      %v7771 = vadd.f32 %v7209, %v7770
      %7772 = vmatmul.f32.gmra.mxu0 %v7373
      %v7773 = vpop.f32.mrf.mxu0
      %v7774 = vadd.f32 %v7209, %v7773
      %7775 = vmatmul.f32.gmra.mxu0 %v7376
      %v7776 = vpop.f32.mrf.mxu0
      %v7777 = vadd.f32 %v7209, %v7776
      %7778 = vmatmul.f32.gmra.mxu0 %v7379
      %v7779 = vpop.f32.mrf.mxu0
      %v7780 = vadd.f32 %v7209, %v7779
      %7781 = vmatmul.f32.gmra.mxu0 %v7382
      %v7782 = vpop.f32.mrf.mxu0
      %v7783 = vadd.f32 %v7209, %v7782
      %7784 = vmatmul.f32.gmra.mxu0 %v7385
      %v7785 = vpop.f32.mrf.mxu0
      %v7786 = vadd.f32 %v7209, %v7785
      %7787 = vmatmul.f32.gmra.mxu0 %v7388
      %v7788 = vpop.f32.mrf.mxu0
      %v7789 = vadd.f32 %v7209, %v7788
      %7790 = vmatmul.f32.gmra.mxu0 %v7391
      %v7791 = vpop.f32.mrf.mxu0
      %v7792 = vadd.f32 %v7209, %v7791
      %7793 = vmatmul.f32.gmra.mxu0 %v7394
      %v7794 = vpop.f32.mrf.mxu0
      %v7795 = vadd.f32 %v7209, %v7794
      %7796 = vmatmul.f32.gmra.mxu0 %v7397
      %v7797 = vpop.f32.mrf.mxu0
      %v7798 = vadd.f32 %v7209, %v7797
      %7799 = vmatmul.f32.gmra.mxu0 %v7400
      %v7800 = vpop.f32.mrf.mxu0
      %v7801 = vadd.f32 %v7209, %v7800
      %7802 = vmatmul.f32.gmra.mxu0 %v7403
      %v7803 = vpop.f32.mrf.mxu0
      %v7804 = vadd.f32 %v7209, %v7803
      %7805 = vmatmul.f32.gmra.mxu0 %v7406
      %v7806 = vpop.f32.mrf.mxu0
      %v7807 = vadd.f32 %v7209, %v7806
      %7808 = vmatmul.f32.gmra.mxu0 %v7409
      %v7809 = vpop.f32.mrf.mxu0
      %v7810 = vadd.f32 %v7209, %v7809
      %7811 = vmatmul.f32.gmra.mxu0 %v7412
      %v7812 = vpop.f32.mrf.mxu0
      %v7813 = vadd.f32 %v7209, %v7812
      %7814 = vmatmul.f32.gmra.mxu0 %v7415
      %v7815 = vpop.f32.mrf.mxu0
      %v7816 = vadd.f32 %v7209, %v7815
      %7817 = vmatmul.f32.gmra.mxu0 %v7418
      %v7818 = vpop.f32.mrf.mxu0
      %v7819 = vadd.f32 %v7209, %v7818
      %7820 = vmatmul.f32.gmra.mxu0 %v7421
      %v7821 = vpop.f32.mrf.mxu0
      %v7822 = vadd.f32 %v7209, %v7821
      %7823 = vmatmul.f32.gmra.mxu0 %v7424
      %v7824 = vpop.f32.mrf.mxu0
      %v7825 = vadd.f32 %v7209, %v7824
      %7826 = vmatmul.f32.gmra.mxu0 %v7427
      %v7827 = vpop.f32.mrf.mxu0
      %v7828 = vadd.f32 %v7209, %v7827
      %7829 = vmatmul.f32.gmra.mxu0 %v7430
      %v7830 = vpop.f32.mrf.mxu0
      %v7831 = vadd.f32 %v7209, %v7830
      %7832 = vmatmul.f32.gmra.mxu0 %v7433
      %v7833 = vpop.f32.mrf.mxu0
      %v7834 = vadd.f32 %v7209, %v7833
      %7835 = vmatmul.f32.gmra.mxu0 %v7436
      %v7836 = vpop.f32.mrf.mxu0
      %v7837 = vadd.f32 %v7209, %v7836
      %7838 = vmatmul.f32.gmra.mxu0 %v7439
      %v7839 = vpop.f32.mrf.mxu0
      %v7840 = vadd.f32 %v7209, %v7839
      %7841 = vmatmul.f32.gmra.mxu0 %v7442
      %v7842 = vpop.f32.mrf.mxu0
      %v7843 = vadd.f32 %v7209, %v7842
      %7844 = vmatmul.f32.gmra.mxu0 %v7445
      %v7845 = vpop.f32.mrf.mxu0
      %v7846 = vadd.f32 %v7209, %v7845
      %7847 = vmatmul.f32.gmra.mxu0 %v7448
      %v7848 = vpop.f32.mrf.mxu0
      %v7849 = vadd.f32 %v7209, %v7848
      %7850 = vmatmul.f32.gmra.mxu0 %v7451
      %v7851 = vpop.f32.mrf.mxu0
      %v7852 = vadd.f32 %v7209, %v7851
      %7853 = vmatmul.f32.gmra.mxu0 %v7454
      %v7854 = vpop.f32.mrf.mxu0
      %v7855 = vadd.f32 %v7209, %v7854
      %7856 = vmatmul.f32.gmra.mxu0 %v7457
      %v7857 = vpop.f32.mrf.mxu0
      %v7858 = vadd.f32 %v7209, %v7857
      %7859 = vmatmul.f32.gmra.mxu0 %v7460
      %v7860 = vpop.f32.mrf.mxu0
      %v7861 = vadd.f32 %v7209, %v7860
      %7862 = vmatmul.f32.gmra.mxu0 %v7463
      %v7863 = vpop.f32.mrf.mxu0
      %v7864 = vadd.f32 %v7209, %v7863
      %7865 = vmatmul.f32.gmra.mxu0 %v7466
      %v7866 = vpop.f32.mrf.mxu0
      %v7867 = vadd.f32 %v7209, %v7866
      %7868 = vmatmul.f32.gmra.mxu0 %v7469
      %v7869 = vpop.f32.mrf.mxu0
      %v7870 = vadd.f32 %v7209, %v7869
      %7871 = vmatmul.f32.gmra.mxu0 %v7472
      %v7872 = vpop.f32.mrf.mxu0
      %v7873 = vadd.f32 %v7209, %v7872
      %7874 = vmatmul.f32.gmra.mxu0 %v7475
      %v7875 = vpop.f32.mrf.mxu0
      %v7876 = vadd.f32 %v7209, %v7875
      %7877 = vmatmul.f32.gmra.mxu0 %v7478
      %v7878 = vpop.f32.mrf.mxu0
      %v7879 = vadd.f32 %v7209, %v7878
      %7880 = vmatmul.f32.gmra.mxu0 %v7481
      %v7881 = vpop.f32.mrf.mxu0
      %v7882 = vadd.f32 %v7209, %v7881
      %7883 = vmatmul.f32.gmra.mxu0 %v7484
      %v7884 = vpop.f32.mrf.mxu0
      %v7885 = vadd.f32 %v7209, %v7884
      %7886 = vmatmul.f32.gmra.mxu0 %v7487
      %v7887 = vpop.f32.mrf.mxu0
      %v7888 = vadd.f32 %v7209, %v7887
      %7889 = vmatmul.f32.gmra.mxu0 %v7490
      %v7890 = vpop.f32.mrf.mxu0
      %v7891 = vadd.f32 %v7209, %v7890
      %7892 = vmatmul.f32.gmra.mxu0 %v7493
      %v7893 = vpop.f32.mrf.mxu0
      %v7894 = vadd.f32 %v7209, %v7893
      %7895 = vmatmul.f32.gmra.mxu0 %v7496
      %v7896 = vpop.f32.mrf.mxu0
      %v7897 = vadd.f32 %v7209, %v7896
      %7898 = vmatmul.f32.gmra.mxu0 %v7499
      %v7899 = vpop.f32.mrf.mxu0
      %v7900 = vadd.f32 %v7209, %v7899
      %7901 = vmatmul.f32.gmra.mxu0 %v7502
      %v7902 = vpop.f32.mrf.mxu0
      %v7903 = vadd.f32 %v7209, %v7902
      %7904 = vmatmul.f32.gmra.mxu0 %v7505
      %v7905 = vpop.f32.mrf.mxu0
      %v7906 = vadd.f32 %v7209, %v7905
      %7907 = vmatmul.f32.gmra.mxu0 %v7508
      %v7908 = vpop.f32.mrf.mxu0
      %v7909 = vadd.f32 %v7209, %v7908
      %7910 = vmatmul.f32.gmra.mxu0 %v7511
      %v7911 = vpop.f32.mrf.mxu0
      %v7912 = vadd.f32 %v7209, %v7911
      %7913 = vmatmul.f32.gmra.mxu0 %v7514
      %v7914 = vpop.f32.mrf.mxu0
      %v7915 = vadd.f32 %v7209, %v7914
      %7916 = vmatmul.f32.gmra.mxu0 %v7517
      %v7917 = vpop.f32.mrf.mxu0
      %v7918 = vadd.f32 %v7209, %v7917
      %7919 = vmatmul.f32.gmra.mxu0 %v7520
      %v7920 = vpop.f32.mrf.mxu0
      %v7921 = vadd.f32 %v7209, %v7920
      %7922 = vmatmul.f32.gmra.mxu0 %v7523
      %v7923 = vpop.f32.mrf.mxu0
      %v7924 = vadd.f32 %v7209, %v7923
      %7925 = vmatmul.f32.gmra.mxu0 %v7526
      %v7926 = vpop.f32.mrf.mxu0
      %v7927 = vadd.f32 %v7209, %v7926
      %7928 = vmatmul.f32.gmra.mxu0 %v7529
      %v7929 = vpop.f32.mrf.mxu0
      %v7930 = vadd.f32 %v7209, %v7929
      %7931 = vmatmul.f32.gmra.mxu0 %v7532
      %v7932 = vpop.f32.mrf.mxu0
      %v7933 = vadd.f32 %v7209, %v7932
      %7934 = vmatmul.f32.gmra.mxu0 %v7535
      %v7935 = vpop.f32.mrf.mxu0
      %v7936 = vadd.f32 %v7209, %v7935
      %7937 = vmatmul.f32.gmra.mxu0 %v7538
      %v7938 = vpop.f32.mrf.mxu0
      %v7939 = vadd.f32 %v7209, %v7938
      %7940 = vmatmul.f32.gmra.mxu0 %v7541
      %v7941 = vpop.f32.mrf.mxu0
      %v7942 = vadd.f32 %v7209, %v7941
      %7943 = vmatmul.f32.gmra.mxu0 %v7544
      %v7944 = vpop.f32.mrf.mxu0
      %v7945 = vadd.f32 %v7209, %v7944
      %7946 = vmatmul.f32.gmra.mxu0 %v7547
      %v7947 = vpop.f32.mrf.mxu0
      %v7948 = vadd.f32 %v7209, %v7947
      %7949 = vmatmul.f32.gmra.mxu0 %v7550
      %v7950 = vpop.f32.mrf.mxu0
      %v7951 = vadd.f32 %v7209, %v7950
      %7952 = vmatmul.f32.gmra.mxu0 %v7553
      %v7953 = vpop.f32.mrf.mxu0
      %v7954 = vadd.f32 %v7209, %v7953
      %7955 = vmatmul.f32.gmra.mxu0 %v7556
      %v7956 = vpop.f32.mrf.mxu0
      %v7957 = vadd.f32 %v7209, %v7956
      %7958 = vmatmul.f32.gmra.mxu0 %v7559
      %v7959 = vpop.f32.mrf.mxu0
      %v7960 = vadd.f32 %v7209, %v7959
      %7961 = vmatmul.f32.gmra.mxu0 %v7562
      %v7962 = vpop.f32.mrf.mxu0
      %v7963 = vadd.f32 %v7209, %v7962
      %7964 = vmatmul.f32.gmra.mxu0 %v7565
      %v7965 = vpop.f32.mrf.mxu0
      %v7966 = vadd.f32 %v7209, %v7965
      %7967 = vmatmul.f32.gmra.mxu0 %v7568
      %v7968 = vpop.f32.mrf.mxu0
      %v7969 = vadd.f32 %v7209, %v7968
      %7970 = vmatmul.f32.gmra.mxu0 %v7571
      %v7971 = vpop.f32.mrf.mxu0
      %v7972 = vadd.f32 %v7209, %v7971
      %7973 = vmatmul.f32.gmra.mxu0 %v7574
      %v7974 = vpop.f32.mrf.mxu0
      %v7975 = vadd.f32 %v7209, %v7974
      %7976 = vmatmul.f32.gmra.mxu0 %v7577
      %v7977 = vpop.f32.mrf.mxu0
      %v7978 = vadd.f32 %v7209, %v7977
      %7979 = vmatmul.f32.gmra.mxu0 %v7580
      %v7980 = vpop.f32.mrf.mxu0
      %v7981 = vadd.f32 %v7209, %v7980
      %7982 = vmatmul.f32.gmra.mxu0 %v7583
      %v7983 = vpop.f32.mrf.mxu0
      %v7984 = vadd.f32 %v7209, %v7983
      %7985 = vmatmul.f32.gmra.mxu0 %v7586
      %v7986 = vpop.f32.mrf.mxu0
      %v7987 = vadd.f32 %v7209, %v7986
      %7988 = vmatmul.f32.gmra.mxu0 %v7589
      %v7989 = vpop.f32.mrf.mxu0
      %v7990 = vadd.f32 %v7209, %v7989
      %7991 = vmatmul.f32.gmra.mxu0 %v7592
      %v7992 = vpop.f32.mrf.mxu0
      %v7993 = vadd.f32 %v7209, %v7992
      %7994 = vdwg.mxu0
      %v7995 = vmax.f32 %v7612, 0.0
      %v7996 = vmax.f32 %v7615, 0.0
      %v7997 = vmax.f32 %v7618, 0.0
      %v7998 = vmax.f32 %v7621, 0.0
      %v7999 = vmax.f32 %v7624, 0.0
      %v8000 = vmax.f32 %v7627, 0.0
      %v8001 = vmax.f32 %v7630, 0.0
      %v8002 = vmax.f32 %v7633, 0.0
      %v8003 = vmax.f32 %v7636, 0.0
      %v8004 = vmax.f32 %v7639, 0.0
      %v8005 = vmax.f32 %v7642, 0.0
      %v8006 = vmax.f32 %v7645, 0.0
      %v8007 = vmax.f32 %v7648, 0.0
      %v8008 = vmax.f32 %v7651, 0.0
      %v8009 = vmax.f32 %v7654, 0.0
      %v8010 = vmax.f32 %v7657, 0.0
      %v8011 = vmax.f32 %v7660, 0.0
      %v8012 = vmax.f32 %v7663, 0.0
      %v8013 = vmax.f32 %v7666, 0.0
      %v8014 = vmax.f32 %v7669, 0.0
      %v8015 = vmax.f32 %v7672, 0.0
      %v8016 = vmax.f32 %v7675, 0.0
      %v8017 = vmax.f32 %v7678, 0.0
      %v8018 = vmax.f32 %v7681, 0.0
      %v8019 = vmax.f32 %v7684, 0.0
      %v8020 = vmax.f32 %v7687, 0.0
      %v8021 = vmax.f32 %v7690, 0.0
      %v8022 = vmax.f32 %v7693, 0.0
      %v8023 = vmax.f32 %v7696, 0.0
      %v8024 = vmax.f32 %v7699, 0.0
      %v8025 = vmax.f32 %v7702, 0.0
      %v8026 = vmax.f32 %v7705, 0.0
      %v8027 = vmax.f32 %v7708, 0.0
      %v8028 = vmax.f32 %v7711, 0.0
      %v8029 = vmax.f32 %v7714, 0.0
      %v8030 = vmax.f32 %v7717, 0.0
      %v8031 = vmax.f32 %v7720, 0.0
      %v8032 = vmax.f32 %v7723, 0.0
      %v8033 = vmax.f32 %v7726, 0.0
      %v8034 = vmax.f32 %v7729, 0.0
      %v8035 = vmax.f32 %v7732, 0.0
      %v8036 = vmax.f32 %v7735, 0.0
      %v8037 = vmax.f32 %v7738, 0.0
      %v8038 = vmax.f32 %v7741, 0.0
      %v8039 = vmax.f32 %v7744, 0.0
      %v8040 = vmax.f32 %v7747, 0.0
      %v8041 = vmax.f32 %v7750, 0.0
      %v8042 = vmax.f32 %v7753, 0.0
      %v8043 = vmax.f32 %v7756, 0.0
      %v8044 = vmax.f32 %v7759, 0.0
      %v8045 = vmax.f32 %v7762, 0.0
      %v8046 = vmax.f32 %v7765, 0.0
      %v8047 = vmax.f32 %v7768, 0.0
      %v8048 = vmax.f32 %v7771, 0.0
      %v8049 = vmax.f32 %v7774, 0.0
      %v8050 = vmax.f32 %v7777, 0.0
      %v8051 = vmax.f32 %v7780, 0.0
      %v8052 = vmax.f32 %v7783, 0.0
      %v8053 = vmax.f32 %v7786, 0.0
      %v8054 = vmax.f32 %v7789, 0.0
      %v8055 = vmax.f32 %v7792, 0.0
      %v8056 = vmax.f32 %v7795, 0.0
      %v8057 = vmax.f32 %v7798, 0.0
      %v8058 = vmax.f32 %v7801, 0.0
      %v8059 = vmax.f32 %v7804, 0.0
      %v8060 = vmax.f32 %v7807, 0.0
      %v8061 = vmax.f32 %v7810, 0.0
      %v8062 = vmax.f32 %v7813, 0.0
      %v8063 = vmax.f32 %v7816, 0.0
      %v8064 = vmax.f32 %v7819, 0.0
      %v8065 = vmax.f32 %v7822, 0.0
      %v8066 = vmax.f32 %v7825, 0.0
      %v8067 = vmax.f32 %v7828, 0.0
      %v8068 = vmax.f32 %v7831, 0.0
      %v8069 = vmax.f32 %v7834, 0.0
      %v8070 = vmax.f32 %v7837, 0.0
      %v8071 = vmax.f32 %v7840, 0.0
      %v8072 = vmax.f32 %v7843, 0.0
      %v8073 = vmax.f32 %v7846, 0.0
      %v8074 = vmax.f32 %v7849, 0.0
      %v8075 = vmax.f32 %v7852, 0.0
      %v8076 = vmax.f32 %v7855, 0.0
      %v8077 = vmax.f32 %v7858, 0.0
      %v8078 = vmax.f32 %v7861, 0.0
      %v8079 = vmax.f32 %v7864, 0.0
      %v8080 = vmax.f32 %v7867, 0.0
      %v8081 = vmax.f32 %v7870, 0.0
      %v8082 = vmax.f32 %v7873, 0.0
      %v8083 = vmax.f32 %v7876, 0.0
      %v8084 = vmax.f32 %v7879, 0.0
      %v8085 = vmax.f32 %v7882, 0.0
      %v8086 = vmax.f32 %v7885, 0.0
      %v8087 = vmax.f32 %v7888, 0.0
      %v8088 = vmax.f32 %v7891, 0.0
      %v8089 = vmax.f32 %v7894, 0.0
      %v8090 = vmax.f32 %v7897, 0.0
      %v8091 = vmax.f32 %v7900, 0.0
      %v8092 = vmax.f32 %v7903, 0.0
      %v8093 = vmax.f32 %v7906, 0.0
      %v8094 = vmax.f32 %v7909, 0.0
      %v8095 = vmax.f32 %v7912, 0.0
      %v8096 = vmax.f32 %v7915, 0.0
      %v8097 = vmax.f32 %v7918, 0.0
      %v8098 = vmax.f32 %v7921, 0.0
      %v8099 = vmax.f32 %v7924, 0.0
      %v8100 = vmax.f32 %v7927, 0.0
      %v8101 = vmax.f32 %v7930, 0.0
      %v8102 = vmax.f32 %v7933, 0.0
      %v8103 = vmax.f32 %v7936, 0.0
      %v8104 = vmax.f32 %v7939, 0.0
      %v8105 = vmax.f32 %v7942, 0.0
      %v8106 = vmax.f32 %v7945, 0.0
      %v8107 = vmax.f32 %v7948, 0.0
      %v8108 = vmax.f32 %v7951, 0.0
      %v8109 = vmax.f32 %v7954, 0.0
      %v8110 = vmax.f32 %v7957, 0.0
      %v8111 = vmax.f32 %v7960, 0.0
      %v8112 = vmax.f32 %v7963, 0.0
      %v8113 = vmax.f32 %v7966, 0.0
      %v8114 = vmax.f32 %v7969, 0.0
      %v8115 = vmax.f32 %v7972, 0.0
      %v8116 = vmax.f32 %v7975, 0.0
      %v8117 = vmax.f32 %v7978, 0.0
      %v8118 = vmax.f32 %v7981, 0.0
      %v8119 = vmax.f32 %v7984, 0.0
      %v8120 = vmax.f32 %v7987, 0.0
      %v8121 = vmax.f32 %v7990, 0.0
      %v8122 = vmax.f32 %v7993, 0.0
      %s8123 = scalar_lea.vmem %s2, 384
      %v8124 = vld [vmem:[%s8123] sm:$0xff]
      %v8125 = vld [vmem:[%s8123 + $0x8] sm:$0xff]
      %v8126 = vld [vmem:[%s8123 + $0x10] sm:$0xff]
      %v8127 = vld [vmem:[%s8123 + $0x18] sm:$0xff]
      %v8128 = vld [vmem:[%s8123 + $0x20] sm:$0xff]
      %v8129 = vld [vmem:[%s8123 + $0x28] sm:$0xff]
      %v8130 = vld [vmem:[%s8123 + $0x30] sm:$0xff]
      %v8131 = vld [vmem:[%s8123 + $0x38] sm:$0xff]
      %v8132 = vperm.slane %v1687, 7
      %v8134 = vsel %vm1954, %v7995, 0
      %v8137 = vsel %vm1954, %v7996, 0
      %v8140 = vsel %vm1954, %v7997, 0
      %v8143 = vsel %vm1954, %v7998, 0
      %v8146 = vsel %vm1954, %v7999, 0
      %v8149 = vsel %vm1954, %v8000, 0
      %v8152 = vsel %vm1954, %v8001, 0
      %v8155 = vsel %vm1954, %v8002, 0
      %v8158 = vsel %vm1954, %v8003, 0
      %v8161 = vsel %vm1954, %v8004, 0
      %v8164 = vsel %vm1954, %v8005, 0
      %v8167 = vsel %vm1954, %v8006, 0
      %v8170 = vsel %vm1954, %v8007, 0
      %v8173 = vsel %vm1954, %v8008, 0
      %v8176 = vsel %vm1954, %v8009, 0
      %v8179 = vsel %vm1954, %v8010, 0
      %v8182 = vsel %vm1954, %v8011, 0
      %v8185 = vsel %vm1954, %v8012, 0
      %v8188 = vsel %vm1954, %v8013, 0
      %v8191 = vsel %vm1954, %v8014, 0
      %v8194 = vsel %vm1954, %v8015, 0
      %v8197 = vsel %vm1954, %v8016, 0
      %v8200 = vsel %vm1954, %v8017, 0
      %v8203 = vsel %vm1954, %v8018, 0
      %v8206 = vsel %vm1954, %v8019, 0
      %v8209 = vsel %vm1954, %v8020, 0
      %v8212 = vsel %vm1954, %v8021, 0
      %v8215 = vsel %vm1954, %v8022, 0
      %v8218 = vsel %vm1954, %v8023, 0
      %v8221 = vsel %vm1954, %v8024, 0
      %v8224 = vsel %vm1954, %v8025, 0
      %v8227 = vsel %vm1954, %v8026, 0
      %v8230 = vsel %vm1954, %v8027, 0
      %v8233 = vsel %vm1954, %v8028, 0
      %v8236 = vsel %vm1954, %v8029, 0
      %v8239 = vsel %vm1954, %v8030, 0
      %v8242 = vsel %vm1954, %v8031, 0
      %v8245 = vsel %vm1954, %v8032, 0
      %v8248 = vsel %vm1954, %v8033, 0
      %v8251 = vsel %vm1954, %v8034, 0
      %v8254 = vsel %vm1954, %v8035, 0
      %v8257 = vsel %vm1954, %v8036, 0
      %v8260 = vsel %vm1954, %v8037, 0
      %v8263 = vsel %vm1954, %v8038, 0
      %v8266 = vsel %vm1954, %v8039, 0
      %v8269 = vsel %vm1954, %v8040, 0
      %v8272 = vsel %vm1954, %v8041, 0
      %v8275 = vsel %vm1954, %v8042, 0
      %v8278 = vsel %vm1954, %v8043, 0
      %v8281 = vsel %vm1954, %v8044, 0
      %v8284 = vsel %vm1954, %v8045, 0
      %v8287 = vsel %vm1954, %v8046, 0
      %v8290 = vsel %vm1954, %v8047, 0
      %v8293 = vsel %vm1954, %v8048, 0
      %v8296 = vsel %vm1954, %v8049, 0
      %v8299 = vsel %vm1954, %v8050, 0
      %v8302 = vsel %vm1954, %v8051, 0
      %v8305 = vsel %vm1954, %v8052, 0
      %v8308 = vsel %vm1954, %v8053, 0
      %v8311 = vsel %vm1954, %v8054, 0
      %v8314 = vsel %vm1954, %v8055, 0
      %v8317 = vsel %vm1954, %v8056, 0
      %v8320 = vsel %vm1954, %v8057, 0
      %v8323 = vsel %vm1954, %v8058, 0
      %v8326 = vsel %vm1954, %v8059, 0
      %v8329 = vsel %vm1954, %v8060, 0
      %v8332 = vsel %vm1954, %v8061, 0
      %v8335 = vsel %vm1954, %v8062, 0
      %v8338 = vsel %vm1954, %v8063, 0
      %v8341 = vsel %vm1954, %v8064, 0
      %v8344 = vsel %vm1954, %v8065, 0
      %v8347 = vsel %vm1954, %v8066, 0
      %v8350 = vsel %vm1954, %v8067, 0
      %v8353 = vsel %vm1954, %v8068, 0
      %v8356 = vsel %vm1954, %v8069, 0
      %v8359 = vsel %vm1954, %v8070, 0
      %v8362 = vsel %vm1954, %v8071, 0
      %v8365 = vsel %vm1954, %v8072, 0
      %v8368 = vsel %vm1954, %v8073, 0
      %v8371 = vsel %vm1954, %v8074, 0
      %v8374 = vsel %vm1954, %v8075, 0
      %v8377 = vsel %vm1954, %v8076, 0
      %v8380 = vsel %vm1954, %v8077, 0
      %v8383 = vsel %vm1954, %v8078, 0
      %v8386 = vsel %vm1954, %v8079, 0
      %v8389 = vsel %vm1954, %v8080, 0
      %v8392 = vsel %vm1954, %v8081, 0
      %v8395 = vsel %vm1954, %v8082, 0
      %v8398 = vsel %vm1954, %v8083, 0
      %v8401 = vsel %vm1954, %v8084, 0
      %v8404 = vsel %vm1954, %v8085, 0
      %v8407 = vsel %vm1954, %v8086, 0
      %v8410 = vsel %vm1954, %v8087, 0
      %v8413 = vsel %vm1954, %v8088, 0
      %v8416 = vsel %vm1954, %v8089, 0
      %v8419 = vsel %vm1954, %v8090, 0
      %v8422 = vsel %vm1954, %v8091, 0
      %v8425 = vsel %vm1954, %v8092, 0
      %v8428 = vsel %vm1954, %v8093, 0
      %v8431 = vsel %vm1954, %v8094, 0
      %v8434 = vsel %vm1954, %v8095, 0
      %v8437 = vsel %vm1954, %v8096, 0
      %v8440 = vsel %vm1954, %v8097, 0
      %v8443 = vsel %vm1954, %v8098, 0
      %v8446 = vsel %vm1954, %v8099, 0
      %v8449 = vsel %vm1954, %v8100, 0
      %v8452 = vsel %vm1954, %v8101, 0
      %v8455 = vsel %vm1954, %v8102, 0
      %v8458 = vsel %vm1954, %v8103, 0
      %v8461 = vsel %vm1954, %v8104, 0
      %v8464 = vsel %vm1954, %v8105, 0
      %v8467 = vsel %vm1954, %v8106, 0
      %v8470 = vsel %vm1954, %v8107, 0
      %v8473 = vsel %vm1954, %v8108, 0
      %v8476 = vsel %vm1954, %v8109, 0
      %v8479 = vsel %vm1954, %v8110, 0
      %v8482 = vsel %vm1954, %v8111, 0
      %v8485 = vsel %vm1954, %v8112, 0
      %v8488 = vsel %vm1954, %v8113, 0
      %v8491 = vsel %vm1954, %v8114, 0
      %v8494 = vsel %vm1954, %v8115, 0
      %v8497 = vsel %vm1954, %v8116, 0
      %v8500 = vsel %vm1954, %v8117, 0
      %v8503 = vsel %vm1954, %v8118, 0
      %v8506 = vsel %vm1954, %v8119, 0
      %v8509 = vsel %vm1954, %v8120, 0
      %v8512 = vsel %vm1954, %v8121, 0
      %v8515 = vsel %vm1954, %v8122, 0
      %8517 = vmatpush.msra.mxu0 0.0
      %8518 = vmatpush.msra.mxu0 0.0
      %8519 = vmatpush.msra.mxu0 0.0
      %8520 = vmatpush.msra.mxu0 0.0
      %8521 = vmatpush.msra.mxu0 0.0
      %8522 = vmatpush.msra.mxu0 0.0
      %8523 = vmatpush.msra.mxu0 0.0
      %8524 = vmatpush.msra.mxu0 0.0
      %8525 = vmatpush.msra.mxu0 %v8131
      %8526 = vmatpush.msra.mxu0 %v8130
      %8527 = vmatpush.msra.mxu0 %v8129
      %8528 = vmatpush.msra.mxu0 %v8128
      %8529 = vmatpush.msra.mxu0 %v8127
      %8530 = vmatpush.msra.mxu0 %v8126
      %8531 = vmatpush.msra.mxu0 %v8125
      %8532 = vmatpush.msra.mxu0 %v8124
      %8533 = vmatmul.f32.gmra.mxu0 %v8134
      %v8534 = vpop.f32.mrf.mxu0
      %v8535 = vadd.f32 %v8132, %v8534
      %8536 = vmatmul.f32.gmra.mxu0 %v8137
      %v8537 = vpop.f32.mrf.mxu0
      %v8538 = vadd.f32 %v8132, %v8537
      %8539 = vmatmul.f32.gmra.mxu0 %v8140
      %v8540 = vpop.f32.mrf.mxu0
      %v8541 = vadd.f32 %v8132, %v8540
      %8542 = vmatmul.f32.gmra.mxu0 %v8143
      %v8543 = vpop.f32.mrf.mxu0
      %v8544 = vadd.f32 %v8132, %v8543
      %8545 = vmatmul.f32.gmra.mxu0 %v8146
      %v8546 = vpop.f32.mrf.mxu0
      %v8547 = vadd.f32 %v8132, %v8546
      %8548 = vmatmul.f32.gmra.mxu0 %v8149
      %v8549 = vpop.f32.mrf.mxu0
      %v8550 = vadd.f32 %v8132, %v8549
      %8551 = vmatmul.f32.gmra.mxu0 %v8152
      %v8552 = vpop.f32.mrf.mxu0
      %v8553 = vadd.f32 %v8132, %v8552
      %8554 = vmatmul.f32.gmra.mxu0 %v8155
      %v8555 = vpop.f32.mrf.mxu0
      %v8556 = vadd.f32 %v8132, %v8555
      %8557 = vmatmul.f32.gmra.mxu0 %v8158
      %v8558 = vpop.f32.mrf.mxu0
      %v8559 = vadd.f32 %v8132, %v8558
      %8560 = vmatmul.f32.gmra.mxu0 %v8161
      %v8561 = vpop.f32.mrf.mxu0
      %v8562 = vadd.f32 %v8132, %v8561
      %8563 = vmatmul.f32.gmra.mxu0 %v8164
      %v8564 = vpop.f32.mrf.mxu0
      %v8565 = vadd.f32 %v8132, %v8564
      %8566 = vmatmul.f32.gmra.mxu0 %v8167
      %v8567 = vpop.f32.mrf.mxu0
      %v8568 = vadd.f32 %v8132, %v8567
      %8569 = vmatmul.f32.gmra.mxu0 %v8170
      %v8570 = vpop.f32.mrf.mxu0
      %v8571 = vadd.f32 %v8132, %v8570
      %8572 = vmatmul.f32.gmra.mxu0 %v8173
      %v8573 = vpop.f32.mrf.mxu0
      %v8574 = vadd.f32 %v8132, %v8573
      %8575 = vmatmul.f32.gmra.mxu0 %v8176
      %v8576 = vpop.f32.mrf.mxu0
      %v8577 = vadd.f32 %v8132, %v8576
      %8578 = vmatmul.f32.gmra.mxu0 %v8179
      %v8579 = vpop.f32.mrf.mxu0
      %v8580 = vadd.f32 %v8132, %v8579
      %8581 = vmatmul.f32.gmra.mxu0 %v8182
      %v8582 = vpop.f32.mrf.mxu0
      %v8583 = vadd.f32 %v8132, %v8582
      %8584 = vmatmul.f32.gmra.mxu0 %v8185
      %v8585 = vpop.f32.mrf.mxu0
      %v8586 = vadd.f32 %v8132, %v8585
      %8587 = vmatmul.f32.gmra.mxu0 %v8188
      %v8588 = vpop.f32.mrf.mxu0
      %v8589 = vadd.f32 %v8132, %v8588
      %8590 = vmatmul.f32.gmra.mxu0 %v8191
      %v8591 = vpop.f32.mrf.mxu0
      %v8592 = vadd.f32 %v8132, %v8591
      %8593 = vmatmul.f32.gmra.mxu0 %v8194
      %v8594 = vpop.f32.mrf.mxu0
      %v8595 = vadd.f32 %v8132, %v8594
      %8596 = vmatmul.f32.gmra.mxu0 %v8197
      %v8597 = vpop.f32.mrf.mxu0
      %v8598 = vadd.f32 %v8132, %v8597
      %8599 = vmatmul.f32.gmra.mxu0 %v8200
      %v8600 = vpop.f32.mrf.mxu0
      %v8601 = vadd.f32 %v8132, %v8600
      %8602 = vmatmul.f32.gmra.mxu0 %v8203
      %v8603 = vpop.f32.mrf.mxu0
      %v8604 = vadd.f32 %v8132, %v8603
      %8605 = vmatmul.f32.gmra.mxu0 %v8206
      %v8606 = vpop.f32.mrf.mxu0
      %v8607 = vadd.f32 %v8132, %v8606
      %8608 = vmatmul.f32.gmra.mxu0 %v8209
      %v8609 = vpop.f32.mrf.mxu0
      %v8610 = vadd.f32 %v8132, %v8609
      %8611 = vmatmul.f32.gmra.mxu0 %v8212
      %v8612 = vpop.f32.mrf.mxu0
      %v8613 = vadd.f32 %v8132, %v8612
      %8614 = vmatmul.f32.gmra.mxu0 %v8215
      %v8615 = vpop.f32.mrf.mxu0
      %v8616 = vadd.f32 %v8132, %v8615
      %8617 = vmatmul.f32.gmra.mxu0 %v8218
      %v8618 = vpop.f32.mrf.mxu0
      %v8619 = vadd.f32 %v8132, %v8618
      %8620 = vmatmul.f32.gmra.mxu0 %v8221
      %v8621 = vpop.f32.mrf.mxu0
      %v8622 = vadd.f32 %v8132, %v8621
      %8623 = vmatmul.f32.gmra.mxu0 %v8224
      %v8624 = vpop.f32.mrf.mxu0
      %v8625 = vadd.f32 %v8132, %v8624
      %8626 = vmatmul.f32.gmra.mxu0 %v8227
      %v8627 = vpop.f32.mrf.mxu0
      %v8628 = vadd.f32 %v8132, %v8627
      %8629 = vmatmul.f32.gmra.mxu0 %v8230
      %v8630 = vpop.f32.mrf.mxu0
      %v8631 = vadd.f32 %v8132, %v8630
      %8632 = vmatmul.f32.gmra.mxu0 %v8233
      %v8633 = vpop.f32.mrf.mxu0
      %v8634 = vadd.f32 %v8132, %v8633
      %8635 = vmatmul.f32.gmra.mxu0 %v8236
      %v8636 = vpop.f32.mrf.mxu0
      %v8637 = vadd.f32 %v8132, %v8636
      %8638 = vmatmul.f32.gmra.mxu0 %v8239
      %v8639 = vpop.f32.mrf.mxu0
      %v8640 = vadd.f32 %v8132, %v8639
      %8641 = vmatmul.f32.gmra.mxu0 %v8242
      %v8642 = vpop.f32.mrf.mxu0
      %v8643 = vadd.f32 %v8132, %v8642
      %8644 = vmatmul.f32.gmra.mxu0 %v8245
      %v8645 = vpop.f32.mrf.mxu0
      %v8646 = vadd.f32 %v8132, %v8645
      %8647 = vmatmul.f32.gmra.mxu0 %v8248
      %v8648 = vpop.f32.mrf.mxu0
      %v8649 = vadd.f32 %v8132, %v8648
      %8650 = vmatmul.f32.gmra.mxu0 %v8251
      %v8651 = vpop.f32.mrf.mxu0
      %v8652 = vadd.f32 %v8132, %v8651
      %8653 = vmatmul.f32.gmra.mxu0 %v8254
      %v8654 = vpop.f32.mrf.mxu0
      %v8655 = vadd.f32 %v8132, %v8654
      %8656 = vmatmul.f32.gmra.mxu0 %v8257
      %v8657 = vpop.f32.mrf.mxu0
      %v8658 = vadd.f32 %v8132, %v8657
      %8659 = vmatmul.f32.gmra.mxu0 %v8260
      %v8660 = vpop.f32.mrf.mxu0
      %v8661 = vadd.f32 %v8132, %v8660
      %8662 = vmatmul.f32.gmra.mxu0 %v8263
      %v8663 = vpop.f32.mrf.mxu0
      %v8664 = vadd.f32 %v8132, %v8663
      %8665 = vmatmul.f32.gmra.mxu0 %v8266
      %v8666 = vpop.f32.mrf.mxu0
      %v8667 = vadd.f32 %v8132, %v8666
      %8668 = vmatmul.f32.gmra.mxu0 %v8269
      %v8669 = vpop.f32.mrf.mxu0
      %v8670 = vadd.f32 %v8132, %v8669
      %8671 = vmatmul.f32.gmra.mxu0 %v8272
      %v8672 = vpop.f32.mrf.mxu0
      %v8673 = vadd.f32 %v8132, %v8672
      %8674 = vmatmul.f32.gmra.mxu0 %v8275
      %v8675 = vpop.f32.mrf.mxu0
      %v8676 = vadd.f32 %v8132, %v8675
      %8677 = vmatmul.f32.gmra.mxu0 %v8278
      %v8678 = vpop.f32.mrf.mxu0
      %v8679 = vadd.f32 %v8132, %v8678
      %8680 = vmatmul.f32.gmra.mxu0 %v8281
      %v8681 = vpop.f32.mrf.mxu0
      %v8682 = vadd.f32 %v8132, %v8681
      %8683 = vmatmul.f32.gmra.mxu0 %v8284
      %v8684 = vpop.f32.mrf.mxu0
      %v8685 = vadd.f32 %v8132, %v8684
      %8686 = vmatmul.f32.gmra.mxu0 %v8287
      %v8687 = vpop.f32.mrf.mxu0
      %v8688 = vadd.f32 %v8132, %v8687
      %8689 = vmatmul.f32.gmra.mxu0 %v8290
      %v8690 = vpop.f32.mrf.mxu0
      %v8691 = vadd.f32 %v8132, %v8690
      %8692 = vmatmul.f32.gmra.mxu0 %v8293
      %v8693 = vpop.f32.mrf.mxu0
      %v8694 = vadd.f32 %v8132, %v8693
      %8695 = vmatmul.f32.gmra.mxu0 %v8296
      %v8696 = vpop.f32.mrf.mxu0
      %v8697 = vadd.f32 %v8132, %v8696
      %8698 = vmatmul.f32.gmra.mxu0 %v8299
      %v8699 = vpop.f32.mrf.mxu0
      %v8700 = vadd.f32 %v8132, %v8699
      %8701 = vmatmul.f32.gmra.mxu0 %v8302
      %v8702 = vpop.f32.mrf.mxu0
      %v8703 = vadd.f32 %v8132, %v8702
      %8704 = vmatmul.f32.gmra.mxu0 %v8305
      %v8705 = vpop.f32.mrf.mxu0
      %v8706 = vadd.f32 %v8132, %v8705
      %8707 = vmatmul.f32.gmra.mxu0 %v8308
      %v8708 = vpop.f32.mrf.mxu0
      %v8709 = vadd.f32 %v8132, %v8708
      %8710 = vmatmul.f32.gmra.mxu0 %v8311
      %v8711 = vpop.f32.mrf.mxu0
      %v8712 = vadd.f32 %v8132, %v8711
      %8713 = vmatmul.f32.gmra.mxu0 %v8314
      %v8714 = vpop.f32.mrf.mxu0
      %v8715 = vadd.f32 %v8132, %v8714
      %8716 = vmatmul.f32.gmra.mxu0 %v8317
      %v8717 = vpop.f32.mrf.mxu0
      %v8718 = vadd.f32 %v8132, %v8717
      %8719 = vmatmul.f32.gmra.mxu0 %v8320
      %v8720 = vpop.f32.mrf.mxu0
      %v8721 = vadd.f32 %v8132, %v8720
      %8722 = vmatmul.f32.gmra.mxu0 %v8323
      %v8723 = vpop.f32.mrf.mxu0
      %v8724 = vadd.f32 %v8132, %v8723
      %8725 = vmatmul.f32.gmra.mxu0 %v8326
      %v8726 = vpop.f32.mrf.mxu0
      %v8727 = vadd.f32 %v8132, %v8726
      %8728 = vmatmul.f32.gmra.mxu0 %v8329
      %v8729 = vpop.f32.mrf.mxu0
      %v8730 = vadd.f32 %v8132, %v8729
      %8731 = vmatmul.f32.gmra.mxu0 %v8332
      %v8732 = vpop.f32.mrf.mxu0
      %v8733 = vadd.f32 %v8132, %v8732
      %8734 = vmatmul.f32.gmra.mxu0 %v8335
      %v8735 = vpop.f32.mrf.mxu0
      %v8736 = vadd.f32 %v8132, %v8735
      %8737 = vmatmul.f32.gmra.mxu0 %v8338
      %v8738 = vpop.f32.mrf.mxu0
      %v8739 = vadd.f32 %v8132, %v8738
      %8740 = vmatmul.f32.gmra.mxu0 %v8341
      %v8741 = vpop.f32.mrf.mxu0
      %v8742 = vadd.f32 %v8132, %v8741
      %8743 = vmatmul.f32.gmra.mxu0 %v8344
      %v8744 = vpop.f32.mrf.mxu0
      %v8745 = vadd.f32 %v8132, %v8744
      %8746 = vmatmul.f32.gmra.mxu0 %v8347
      %v8747 = vpop.f32.mrf.mxu0
      %v8748 = vadd.f32 %v8132, %v8747
      %8749 = vmatmul.f32.gmra.mxu0 %v8350
      %v8750 = vpop.f32.mrf.mxu0
      %v8751 = vadd.f32 %v8132, %v8750
      %8752 = vmatmul.f32.gmra.mxu0 %v8353
      %v8753 = vpop.f32.mrf.mxu0
      %v8754 = vadd.f32 %v8132, %v8753
      %8755 = vmatmul.f32.gmra.mxu0 %v8356
      %v8756 = vpop.f32.mrf.mxu0
      %v8757 = vadd.f32 %v8132, %v8756
      %8758 = vmatmul.f32.gmra.mxu0 %v8359
      %v8759 = vpop.f32.mrf.mxu0
      %v8760 = vadd.f32 %v8132, %v8759
      %8761 = vmatmul.f32.gmra.mxu0 %v8362
      %v8762 = vpop.f32.mrf.mxu0
      %v8763 = vadd.f32 %v8132, %v8762
      %8764 = vmatmul.f32.gmra.mxu0 %v8365
      %v8765 = vpop.f32.mrf.mxu0
      %v8766 = vadd.f32 %v8132, %v8765
      %8767 = vmatmul.f32.gmra.mxu0 %v8368
      %v8768 = vpop.f32.mrf.mxu0
      %v8769 = vadd.f32 %v8132, %v8768
      %8770 = vmatmul.f32.gmra.mxu0 %v8371
      %v8771 = vpop.f32.mrf.mxu0
      %v8772 = vadd.f32 %v8132, %v8771
      %8773 = vmatmul.f32.gmra.mxu0 %v8374
      %v8774 = vpop.f32.mrf.mxu0
      %v8775 = vadd.f32 %v8132, %v8774
      %8776 = vmatmul.f32.gmra.mxu0 %v8377
      %v8777 = vpop.f32.mrf.mxu0
      %v8778 = vadd.f32 %v8132, %v8777
      %8779 = vmatmul.f32.gmra.mxu0 %v8380
      %v8780 = vpop.f32.mrf.mxu0
      %v8781 = vadd.f32 %v8132, %v8780
      %8782 = vmatmul.f32.gmra.mxu0 %v8383
      %v8783 = vpop.f32.mrf.mxu0
      %v8784 = vadd.f32 %v8132, %v8783
      %8785 = vmatmul.f32.gmra.mxu0 %v8386
      %v8786 = vpop.f32.mrf.mxu0
      %v8787 = vadd.f32 %v8132, %v8786
      %8788 = vmatmul.f32.gmra.mxu0 %v8389
      %v8789 = vpop.f32.mrf.mxu0
      %v8790 = vadd.f32 %v8132, %v8789
      %8791 = vmatmul.f32.gmra.mxu0 %v8392
      %v8792 = vpop.f32.mrf.mxu0
      %v8793 = vadd.f32 %v8132, %v8792
      %8794 = vmatmul.f32.gmra.mxu0 %v8395
      %v8795 = vpop.f32.mrf.mxu0
      %v8796 = vadd.f32 %v8132, %v8795
      %8797 = vmatmul.f32.gmra.mxu0 %v8398
      %v8798 = vpop.f32.mrf.mxu0
      %v8799 = vadd.f32 %v8132, %v8798
      %8800 = vmatmul.f32.gmra.mxu0 %v8401
      %v8801 = vpop.f32.mrf.mxu0
      %v8802 = vadd.f32 %v8132, %v8801
      %8803 = vmatmul.f32.gmra.mxu0 %v8404
      %v8804 = vpop.f32.mrf.mxu0
      %v8805 = vadd.f32 %v8132, %v8804
      %8806 = vmatmul.f32.gmra.mxu0 %v8407
      %v8807 = vpop.f32.mrf.mxu0
      %v8808 = vadd.f32 %v8132, %v8807
      %8809 = vmatmul.f32.gmra.mxu0 %v8410
      %v8810 = vpop.f32.mrf.mxu0
      %v8811 = vadd.f32 %v8132, %v8810
      %8812 = vmatmul.f32.gmra.mxu0 %v8413
      %v8813 = vpop.f32.mrf.mxu0
      %v8814 = vadd.f32 %v8132, %v8813
      %8815 = vmatmul.f32.gmra.mxu0 %v8416
      %v8816 = vpop.f32.mrf.mxu0
      %v8817 = vadd.f32 %v8132, %v8816
      %8818 = vmatmul.f32.gmra.mxu0 %v8419
      %v8819 = vpop.f32.mrf.mxu0
      %v8820 = vadd.f32 %v8132, %v8819
      %8821 = vmatmul.f32.gmra.mxu0 %v8422
      %v8822 = vpop.f32.mrf.mxu0
      %v8823 = vadd.f32 %v8132, %v8822
      %8824 = vmatmul.f32.gmra.mxu0 %v8425
      %v8825 = vpop.f32.mrf.mxu0
      %v8826 = vadd.f32 %v8132, %v8825
      %8827 = vmatmul.f32.gmra.mxu0 %v8428
      %v8828 = vpop.f32.mrf.mxu0
      %v8829 = vadd.f32 %v8132, %v8828
      %8830 = vmatmul.f32.gmra.mxu0 %v8431
      %v8831 = vpop.f32.mrf.mxu0
      %v8832 = vadd.f32 %v8132, %v8831
      %8833 = vmatmul.f32.gmra.mxu0 %v8434
      %v8834 = vpop.f32.mrf.mxu0
      %v8835 = vadd.f32 %v8132, %v8834
      %8836 = vmatmul.f32.gmra.mxu0 %v8437
      %v8837 = vpop.f32.mrf.mxu0
      %v8838 = vadd.f32 %v8132, %v8837
      %8839 = vmatmul.f32.gmra.mxu0 %v8440
      %v8840 = vpop.f32.mrf.mxu0
      %v8841 = vadd.f32 %v8132, %v8840
      %8842 = vmatmul.f32.gmra.mxu0 %v8443
      %v8843 = vpop.f32.mrf.mxu0
      %v8844 = vadd.f32 %v8132, %v8843
      %8845 = vmatmul.f32.gmra.mxu0 %v8446
      %v8846 = vpop.f32.mrf.mxu0
      %v8847 = vadd.f32 %v8132, %v8846
      %8848 = vmatmul.f32.gmra.mxu0 %v8449
      %v8849 = vpop.f32.mrf.mxu0
      %v8850 = vadd.f32 %v8132, %v8849
      %8851 = vmatmul.f32.gmra.mxu0 %v8452
      %v8852 = vpop.f32.mrf.mxu0
      %v8853 = vadd.f32 %v8132, %v8852
      %8854 = vmatmul.f32.gmra.mxu0 %v8455
      %v8855 = vpop.f32.mrf.mxu0
      %v8856 = vadd.f32 %v8132, %v8855
      %8857 = vmatmul.f32.gmra.mxu0 %v8458
      %v8858 = vpop.f32.mrf.mxu0
      %v8859 = vadd.f32 %v8132, %v8858
      %8860 = vmatmul.f32.gmra.mxu0 %v8461
      %v8861 = vpop.f32.mrf.mxu0
      %v8862 = vadd.f32 %v8132, %v8861
      %8863 = vmatmul.f32.gmra.mxu0 %v8464
      %v8864 = vpop.f32.mrf.mxu0
      %v8865 = vadd.f32 %v8132, %v8864
      %8866 = vmatmul.f32.gmra.mxu0 %v8467
      %v8867 = vpop.f32.mrf.mxu0
      %v8868 = vadd.f32 %v8132, %v8867
      %8869 = vmatmul.f32.gmra.mxu0 %v8470
      %v8870 = vpop.f32.mrf.mxu0
      %v8871 = vadd.f32 %v8132, %v8870
      %8872 = vmatmul.f32.gmra.mxu0 %v8473
      %v8873 = vpop.f32.mrf.mxu0
      %v8874 = vadd.f32 %v8132, %v8873
      %8875 = vmatmul.f32.gmra.mxu0 %v8476
      %v8876 = vpop.f32.mrf.mxu0
      %v8877 = vadd.f32 %v8132, %v8876
      %8878 = vmatmul.f32.gmra.mxu0 %v8479
      %v8879 = vpop.f32.mrf.mxu0
      %v8880 = vadd.f32 %v8132, %v8879
      %8881 = vmatmul.f32.gmra.mxu0 %v8482
      %v8882 = vpop.f32.mrf.mxu0
      %v8883 = vadd.f32 %v8132, %v8882
      %8884 = vmatmul.f32.gmra.mxu0 %v8485
      %v8885 = vpop.f32.mrf.mxu0
      %v8886 = vadd.f32 %v8132, %v8885
      %8887 = vmatmul.f32.gmra.mxu0 %v8488
      %v8888 = vpop.f32.mrf.mxu0
      %v8889 = vadd.f32 %v8132, %v8888
      %8890 = vmatmul.f32.gmra.mxu0 %v8491
      %v8891 = vpop.f32.mrf.mxu0
      %v8892 = vadd.f32 %v8132, %v8891
      %8893 = vmatmul.f32.gmra.mxu0 %v8494
      %v8894 = vpop.f32.mrf.mxu0
      %v8895 = vadd.f32 %v8132, %v8894
      %8896 = vmatmul.f32.gmra.mxu0 %v8497
      %v8897 = vpop.f32.mrf.mxu0
      %v8898 = vadd.f32 %v8132, %v8897
      %8899 = vmatmul.f32.gmra.mxu0 %v8500
      %v8900 = vpop.f32.mrf.mxu0
      %v8901 = vadd.f32 %v8132, %v8900
      %8902 = vmatmul.f32.gmra.mxu0 %v8503
      %v8903 = vpop.f32.mrf.mxu0
      %v8904 = vadd.f32 %v8132, %v8903
      %8905 = vmatmul.f32.gmra.mxu0 %v8506
      %v8906 = vpop.f32.mrf.mxu0
      %v8907 = vadd.f32 %v8132, %v8906
      %8908 = vmatmul.f32.gmra.mxu0 %v8509
      %v8909 = vpop.f32.mrf.mxu0
      %v8910 = vadd.f32 %v8132, %v8909
      %8911 = vmatmul.f32.gmra.mxu0 %v8512
      %v8912 = vpop.f32.mrf.mxu0
      %v8913 = vadd.f32 %v8132, %v8912
      %8914 = vmatmul.f32.gmra.mxu0 %v8515
      %v8915 = vpop.f32.mrf.mxu0
      %v8916 = vadd.f32 %v8132, %v8915
      %8917 = vdwg.mxu0
      %v8918 = vmax.f32 %v8535, 0.0
      %v8919 = vmax.f32 %v8538, 0.0
      %v8920 = vmax.f32 %v8541, 0.0
      %v8921 = vmax.f32 %v8544, 0.0
      %v8922 = vmax.f32 %v8547, 0.0
      %v8923 = vmax.f32 %v8550, 0.0
      %v8924 = vmax.f32 %v8553, 0.0
      %v8925 = vmax.f32 %v8556, 0.0
      %v8926 = vmax.f32 %v8559, 0.0
      %v8927 = vmax.f32 %v8562, 0.0
      %v8928 = vmax.f32 %v8565, 0.0
      %v8929 = vmax.f32 %v8568, 0.0
      %v8930 = vmax.f32 %v8571, 0.0
      %v8931 = vmax.f32 %v8574, 0.0
      %v8932 = vmax.f32 %v8577, 0.0
      %v8933 = vmax.f32 %v8580, 0.0
      %v8934 = vmax.f32 %v8583, 0.0
      %v8935 = vmax.f32 %v8586, 0.0
      %v8936 = vmax.f32 %v8589, 0.0
      %v8937 = vmax.f32 %v8592, 0.0
      %v8938 = vmax.f32 %v8595, 0.0
      %v8939 = vmax.f32 %v8598, 0.0
      %v8940 = vmax.f32 %v8601, 0.0
      %v8941 = vmax.f32 %v8604, 0.0
      %v8942 = vmax.f32 %v8607, 0.0
      %v8943 = vmax.f32 %v8610, 0.0
      %v8944 = vmax.f32 %v8613, 0.0
      %v8945 = vmax.f32 %v8616, 0.0
      %v8946 = vmax.f32 %v8619, 0.0
      %v8947 = vmax.f32 %v8622, 0.0
      %v8948 = vmax.f32 %v8625, 0.0
      %v8949 = vmax.f32 %v8628, 0.0
      %v8950 = vmax.f32 %v8631, 0.0
      %v8951 = vmax.f32 %v8634, 0.0
      %v8952 = vmax.f32 %v8637, 0.0
      %v8953 = vmax.f32 %v8640, 0.0
      %v8954 = vmax.f32 %v8643, 0.0
      %v8955 = vmax.f32 %v8646, 0.0
      %v8956 = vmax.f32 %v8649, 0.0
      %v8957 = vmax.f32 %v8652, 0.0
      %v8958 = vmax.f32 %v8655, 0.0
      %v8959 = vmax.f32 %v8658, 0.0
      %v8960 = vmax.f32 %v8661, 0.0
      %v8961 = vmax.f32 %v8664, 0.0
      %v8962 = vmax.f32 %v8667, 0.0
      %v8963 = vmax.f32 %v8670, 0.0
      %v8964 = vmax.f32 %v8673, 0.0
      %v8965 = vmax.f32 %v8676, 0.0
      %v8966 = vmax.f32 %v8679, 0.0
      %v8967 = vmax.f32 %v8682, 0.0
      %v8968 = vmax.f32 %v8685, 0.0
      %v8969 = vmax.f32 %v8688, 0.0
      %v8970 = vmax.f32 %v8691, 0.0
      %v8971 = vmax.f32 %v8694, 0.0
      %v8972 = vmax.f32 %v8697, 0.0
      %v8973 = vmax.f32 %v8700, 0.0
      %v8974 = vmax.f32 %v8703, 0.0
      %v8975 = vmax.f32 %v8706, 0.0
      %v8976 = vmax.f32 %v8709, 0.0
      %v8977 = vmax.f32 %v8712, 0.0
      %v8978 = vmax.f32 %v8715, 0.0
      %v8979 = vmax.f32 %v8718, 0.0
      %v8980 = vmax.f32 %v8721, 0.0
      %v8981 = vmax.f32 %v8724, 0.0
      %v8982 = vmax.f32 %v8727, 0.0
      %v8983 = vmax.f32 %v8730, 0.0
      %v8984 = vmax.f32 %v8733, 0.0
      %v8985 = vmax.f32 %v8736, 0.0
      %v8986 = vmax.f32 %v8739, 0.0
      %v8987 = vmax.f32 %v8742, 0.0
      %v8988 = vmax.f32 %v8745, 0.0
      %v8989 = vmax.f32 %v8748, 0.0
      %v8990 = vmax.f32 %v8751, 0.0
      %v8991 = vmax.f32 %v8754, 0.0
      %v8992 = vmax.f32 %v8757, 0.0
      %v8993 = vmax.f32 %v8760, 0.0
      %v8994 = vmax.f32 %v8763, 0.0
      %v8995 = vmax.f32 %v8766, 0.0
      %v8996 = vmax.f32 %v8769, 0.0
      %v8997 = vmax.f32 %v8772, 0.0
      %v8998 = vmax.f32 %v8775, 0.0
      %v8999 = vmax.f32 %v8778, 0.0
      %v9000 = vmax.f32 %v8781, 0.0
      %v9001 = vmax.f32 %v8784, 0.0
      %v9002 = vmax.f32 %v8787, 0.0
      %v9003 = vmax.f32 %v8790, 0.0
      %v9004 = vmax.f32 %v8793, 0.0
      %v9005 = vmax.f32 %v8796, 0.0
      %v9006 = vmax.f32 %v8799, 0.0
      %v9007 = vmax.f32 %v8802, 0.0
      %v9008 = vmax.f32 %v8805, 0.0
      %v9009 = vmax.f32 %v8808, 0.0
      %v9010 = vmax.f32 %v8811, 0.0
      %v9011 = vmax.f32 %v8814, 0.0
      %v9012 = vmax.f32 %v8817, 0.0
      %v9013 = vmax.f32 %v8820, 0.0
      %v9014 = vmax.f32 %v8823, 0.0
      %v9015 = vmax.f32 %v8826, 0.0
      %v9016 = vmax.f32 %v8829, 0.0
      %v9017 = vmax.f32 %v8832, 0.0
      %v9018 = vmax.f32 %v8835, 0.0
      %v9019 = vmax.f32 %v8838, 0.0
      %v9020 = vmax.f32 %v8841, 0.0
      %v9021 = vmax.f32 %v8844, 0.0
      %v9022 = vmax.f32 %v8847, 0.0
      %v9023 = vmax.f32 %v8850, 0.0
      %v9024 = vmax.f32 %v8853, 0.0
      %v9025 = vmax.f32 %v8856, 0.0
      %v9026 = vmax.f32 %v8859, 0.0
      %v9027 = vmax.f32 %v8862, 0.0
      %v9028 = vmax.f32 %v8865, 0.0
      %v9029 = vmax.f32 %v8868, 0.0
      %v9030 = vmax.f32 %v8871, 0.0
      %v9031 = vmax.f32 %v8874, 0.0
      %v9032 = vmax.f32 %v8877, 0.0
      %v9033 = vmax.f32 %v8880, 0.0
      %v9034 = vmax.f32 %v8883, 0.0
      %v9035 = vmax.f32 %v8886, 0.0
      %v9036 = vmax.f32 %v8889, 0.0
      %v9037 = vmax.f32 %v8892, 0.0
      %v9038 = vmax.f32 %v8895, 0.0
      %v9039 = vmax.f32 %v8898, 0.0
      %v9040 = vmax.f32 %v8901, 0.0
      %v9041 = vmax.f32 %v8904, 0.0
      %v9042 = vmax.f32 %v8907, 0.0
      %v9043 = vmax.f32 %v8910, 0.0
      %v9044 = vmax.f32 %v8913, 0.0
      %v9045 = vmax.f32 %v8916, 0.0
      %v9046 = vld [vmem:[%s3] sm:$0xff]
      %v9047 = vld [vmem:[%s3 + $0x8] sm:$0xff]
      %v9048 = vld [vmem:[%s3 + $0x10] sm:$0xff]
      %v9049 = vld [vmem:[%s3 + $0x18] sm:$0xff]
      %v9050 = vld [vmem:[%s3 + $0x20] sm:$0xff]
      %v9051 = vld [vmem:[%s3 + $0x28] sm:$0xff]
      %v9052 = vld [vmem:[%s3 + $0x30] sm:$0xff]
      %v9053 = vld [vmem:[%s3 + $0x38] sm:$0xff]
      %v9054 = vld [vmem:[%s7] sm:$0x1]
      %v9056 = vperm.slane %v9054, 0
      %v9059 = vsel %vm1954, %v8918, 0
      %v9062 = vsel %vm1954, %v8919, 0
      %v9065 = vsel %vm1954, %v8920, 0
      %v9068 = vsel %vm1954, %v8921, 0
      %v9071 = vsel %vm1954, %v8922, 0
      %v9074 = vsel %vm1954, %v8923, 0
      %v9077 = vsel %vm1954, %v8924, 0
      %v9080 = vsel %vm1954, %v8925, 0
      %v9083 = vsel %vm1954, %v8926, 0
      %v9086 = vsel %vm1954, %v8927, 0
      %v9089 = vsel %vm1954, %v8928, 0
      %v9092 = vsel %vm1954, %v8929, 0
      %v9095 = vsel %vm1954, %v8930, 0
      %v9098 = vsel %vm1954, %v8931, 0
      %v9101 = vsel %vm1954, %v8932, 0
      %v9104 = vsel %vm1954, %v8933, 0
      %v9107 = vsel %vm1954, %v8934, 0
      %v9110 = vsel %vm1954, %v8935, 0
      %v9113 = vsel %vm1954, %v8936, 0
      %v9116 = vsel %vm1954, %v8937, 0
      %v9119 = vsel %vm1954, %v8938, 0
      %v9122 = vsel %vm1954, %v8939, 0
      %v9125 = vsel %vm1954, %v8940, 0
      %v9128 = vsel %vm1954, %v8941, 0
      %v9131 = vsel %vm1954, %v8942, 0
      %v9134 = vsel %vm1954, %v8943, 0
      %v9137 = vsel %vm1954, %v8944, 0
      %v9140 = vsel %vm1954, %v8945, 0
      %v9143 = vsel %vm1954, %v8946, 0
      %v9146 = vsel %vm1954, %v8947, 0
      %v9149 = vsel %vm1954, %v8948, 0
      %v9152 = vsel %vm1954, %v8949, 0
      %v9155 = vsel %vm1954, %v8950, 0
      %v9158 = vsel %vm1954, %v8951, 0
      %v9161 = vsel %vm1954, %v8952, 0
      %v9164 = vsel %vm1954, %v8953, 0
      %v9167 = vsel %vm1954, %v8954, 0
      %v9170 = vsel %vm1954, %v8955, 0
      %v9173 = vsel %vm1954, %v8956, 0
      %v9176 = vsel %vm1954, %v8957, 0
      %v9179 = vsel %vm1954, %v8958, 0
      %v9182 = vsel %vm1954, %v8959, 0
      %v9185 = vsel %vm1954, %v8960, 0
      %v9188 = vsel %vm1954, %v8961, 0
      %v9191 = vsel %vm1954, %v8962, 0
      %v9194 = vsel %vm1954, %v8963, 0
      %v9197 = vsel %vm1954, %v8964, 0
      %v9200 = vsel %vm1954, %v8965, 0
      %v9203 = vsel %vm1954, %v8966, 0
      %v9206 = vsel %vm1954, %v8967, 0
      %v9209 = vsel %vm1954, %v8968, 0
      %v9212 = vsel %vm1954, %v8969, 0
      %v9215 = vsel %vm1954, %v8970, 0
      %v9218 = vsel %vm1954, %v8971, 0
      %v9221 = vsel %vm1954, %v8972, 0
      %v9224 = vsel %vm1954, %v8973, 0
      %v9227 = vsel %vm1954, %v8974, 0
      %v9230 = vsel %vm1954, %v8975, 0
      %v9233 = vsel %vm1954, %v8976, 0
      %v9236 = vsel %vm1954, %v8977, 0
      %v9239 = vsel %vm1954, %v8978, 0
      %v9242 = vsel %vm1954, %v8979, 0
      %v9245 = vsel %vm1954, %v8980, 0
      %v9248 = vsel %vm1954, %v8981, 0
      %v9251 = vsel %vm1954, %v8982, 0
      %v9254 = vsel %vm1954, %v8983, 0
      %v9257 = vsel %vm1954, %v8984, 0
      %v9260 = vsel %vm1954, %v8985, 0
      %v9263 = vsel %vm1954, %v8986, 0
      %v9266 = vsel %vm1954, %v8987, 0
      %v9269 = vsel %vm1954, %v8988, 0
      %v9272 = vsel %vm1954, %v8989, 0
      %v9275 = vsel %vm1954, %v8990, 0
      %v9278 = vsel %vm1954, %v8991, 0
      %v9281 = vsel %vm1954, %v8992, 0
      %v9284 = vsel %vm1954, %v8993, 0
      %v9287 = vsel %vm1954, %v8994, 0
      %v9290 = vsel %vm1954, %v8995, 0
      %v9293 = vsel %vm1954, %v8996, 0
      %v9296 = vsel %vm1954, %v8997, 0
      %v9299 = vsel %vm1954, %v8998, 0
      %v9302 = vsel %vm1954, %v8999, 0
      %v9305 = vsel %vm1954, %v9000, 0
      %v9308 = vsel %vm1954, %v9001, 0
      %v9311 = vsel %vm1954, %v9002, 0
      %v9314 = vsel %vm1954, %v9003, 0
      %v9317 = vsel %vm1954, %v9004, 0
      %v9320 = vsel %vm1954, %v9005, 0
      %v9323 = vsel %vm1954, %v9006, 0
      %v9326 = vsel %vm1954, %v9007, 0
      %v9329 = vsel %vm1954, %v9008, 0
      %v9332 = vsel %vm1954, %v9009, 0
      %v9335 = vsel %vm1954, %v9010, 0
      %v9338 = vsel %vm1954, %v9011, 0
      %v9341 = vsel %vm1954, %v9012, 0
      %v9344 = vsel %vm1954, %v9013, 0
      %v9347 = vsel %vm1954, %v9014, 0
      %v9350 = vsel %vm1954, %v9015, 0
      %v9353 = vsel %vm1954, %v9016, 0
      %v9356 = vsel %vm1954, %v9017, 0
      %v9359 = vsel %vm1954, %v9018, 0
      %v9362 = vsel %vm1954, %v9019, 0
      %v9365 = vsel %vm1954, %v9020, 0
      %v9368 = vsel %vm1954, %v9021, 0
      %v9371 = vsel %vm1954, %v9022, 0
      %v9374 = vsel %vm1954, %v9023, 0
      %v9377 = vsel %vm1954, %v9024, 0
      %v9380 = vsel %vm1954, %v9025, 0
      %v9383 = vsel %vm1954, %v9026, 0
      %v9386 = vsel %vm1954, %v9027, 0
      %v9389 = vsel %vm1954, %v9028, 0
      %v9392 = vsel %vm1954, %v9029, 0
      %v9395 = vsel %vm1954, %v9030, 0
      %v9398 = vsel %vm1954, %v9031, 0
      %v9401 = vsel %vm1954, %v9032, 0
      %v9404 = vsel %vm1954, %v9033, 0
      %v9407 = vsel %vm1954, %v9034, 0
      %v9410 = vsel %vm1954, %v9035, 0
      %v9413 = vsel %vm1954, %v9036, 0
      %v9416 = vsel %vm1954, %v9037, 0
      %v9419 = vsel %vm1954, %v9038, 0
      %v9422 = vsel %vm1954, %v9039, 0
      %v9425 = vsel %vm1954, %v9040, 0
      %v9428 = vsel %vm1954, %v9041, 0
      %v9431 = vsel %vm1954, %v9042, 0
      %v9434 = vsel %vm1954, %v9043, 0
      %v9437 = vsel %vm1954, %v9044, 0
      %v9440 = vsel %vm1954, %v9045, 0
      %9442 = vmatpush.msra.mxu0 0.0
      %9443 = vmatpush.msra.mxu0 0.0
      %9444 = vmatpush.msra.mxu0 0.0
      %9445 = vmatpush.msra.mxu0 0.0
      %9446 = vmatpush.msra.mxu0 0.0
      %9447 = vmatpush.msra.mxu0 0.0
      %9448 = vmatpush.msra.mxu0 0.0
      %9449 = vmatpush.msra.mxu0 0.0
      %9450 = vmatpush.msra.mxu0 %v9053
      %9451 = vmatpush.msra.mxu0 %v9052
      %9452 = vmatpush.msra.mxu0 %v9051
      %9453 = vmatpush.msra.mxu0 %v9050
      %9454 = vmatpush.msra.mxu0 %v9049
      %9455 = vmatpush.msra.mxu0 %v9048
      %9456 = vmatpush.msra.mxu0 %v9047
      %9457 = vmatpush.msra.mxu0 %v9046
      %9458 = vmatmul.f32.gmra.mxu0 %v9059
      %v9459 = vpop.f32.mrf.mxu0
      %v9460 = vadd.f32 %v9056, %v9459
      %9461 = vmatmul.f32.gmra.mxu0 %v9062
      %v9462 = vpop.f32.mrf.mxu0
      %v9463 = vadd.f32 %v9056, %v9462
      %9464 = vmatmul.f32.gmra.mxu0 %v9065
      %v9465 = vpop.f32.mrf.mxu0
      %v9466 = vadd.f32 %v9056, %v9465
      %9467 = vmatmul.f32.gmra.mxu0 %v9068
      %v9468 = vpop.f32.mrf.mxu0
      %v9469 = vadd.f32 %v9056, %v9468
      %9470 = vmatmul.f32.gmra.mxu0 %v9071
      %v9471 = vpop.f32.mrf.mxu0
      %v9472 = vadd.f32 %v9056, %v9471
      %9473 = vmatmul.f32.gmra.mxu0 %v9074
      %v9474 = vpop.f32.mrf.mxu0
      %v9475 = vadd.f32 %v9056, %v9474
      %9476 = vmatmul.f32.gmra.mxu0 %v9077
      %v9477 = vpop.f32.mrf.mxu0
      %v9478 = vadd.f32 %v9056, %v9477
      %9479 = vmatmul.f32.gmra.mxu0 %v9080
      %v9480 = vpop.f32.mrf.mxu0
      %v9481 = vadd.f32 %v9056, %v9480
      %9482 = vmatmul.f32.gmra.mxu0 %v9083
      %v9483 = vpop.f32.mrf.mxu0
      %v9484 = vadd.f32 %v9056, %v9483
      %9485 = vmatmul.f32.gmra.mxu0 %v9086
      %v9486 = vpop.f32.mrf.mxu0
      %v9487 = vadd.f32 %v9056, %v9486
      %9488 = vmatmul.f32.gmra.mxu0 %v9089
      %v9489 = vpop.f32.mrf.mxu0
      %v9490 = vadd.f32 %v9056, %v9489
      %9491 = vmatmul.f32.gmra.mxu0 %v9092
      %v9492 = vpop.f32.mrf.mxu0
      %v9493 = vadd.f32 %v9056, %v9492
      %9494 = vmatmul.f32.gmra.mxu0 %v9095
      %v9495 = vpop.f32.mrf.mxu0
      %v9496 = vadd.f32 %v9056, %v9495
      %9497 = vmatmul.f32.gmra.mxu0 %v9098
      %v9498 = vpop.f32.mrf.mxu0
      %v9499 = vadd.f32 %v9056, %v9498
      %9500 = vmatmul.f32.gmra.mxu0 %v9101
      %v9501 = vpop.f32.mrf.mxu0
      %v9502 = vadd.f32 %v9056, %v9501
      %9503 = vmatmul.f32.gmra.mxu0 %v9104
      %v9504 = vpop.f32.mrf.mxu0
      %v9505 = vadd.f32 %v9056, %v9504
      %9506 = vmatmul.f32.gmra.mxu0 %v9107
      %v9507 = vpop.f32.mrf.mxu0
      %v9508 = vadd.f32 %v9056, %v9507
      %9509 = vmatmul.f32.gmra.mxu0 %v9110
      %v9510 = vpop.f32.mrf.mxu0
      %v9511 = vadd.f32 %v9056, %v9510
      %9512 = vmatmul.f32.gmra.mxu0 %v9113
      %v9513 = vpop.f32.mrf.mxu0
      %v9514 = vadd.f32 %v9056, %v9513
      %9515 = vmatmul.f32.gmra.mxu0 %v9116
      %v9516 = vpop.f32.mrf.mxu0
      %v9517 = vadd.f32 %v9056, %v9516
      %9518 = vmatmul.f32.gmra.mxu0 %v9119
      %v9519 = vpop.f32.mrf.mxu0
      %v9520 = vadd.f32 %v9056, %v9519
      %9521 = vmatmul.f32.gmra.mxu0 %v9122
      %v9522 = vpop.f32.mrf.mxu0
      %v9523 = vadd.f32 %v9056, %v9522
      %9524 = vmatmul.f32.gmra.mxu0 %v9125
      %v9525 = vpop.f32.mrf.mxu0
      %v9526 = vadd.f32 %v9056, %v9525
      %9527 = vmatmul.f32.gmra.mxu0 %v9128
      %v9528 = vpop.f32.mrf.mxu0
      %v9529 = vadd.f32 %v9056, %v9528
      %9530 = vmatmul.f32.gmra.mxu0 %v9131
      %v9531 = vpop.f32.mrf.mxu0
      %v9532 = vadd.f32 %v9056, %v9531
      %9533 = vmatmul.f32.gmra.mxu0 %v9134
      %v9534 = vpop.f32.mrf.mxu0
      %v9535 = vadd.f32 %v9056, %v9534
      %9536 = vmatmul.f32.gmra.mxu0 %v9137
      %v9537 = vpop.f32.mrf.mxu0
      %v9538 = vadd.f32 %v9056, %v9537
      %9539 = vmatmul.f32.gmra.mxu0 %v9140
      %v9540 = vpop.f32.mrf.mxu0
      %v9541 = vadd.f32 %v9056, %v9540
      %9542 = vmatmul.f32.gmra.mxu0 %v9143
      %v9543 = vpop.f32.mrf.mxu0
      %v9544 = vadd.f32 %v9056, %v9543
      %9545 = vmatmul.f32.gmra.mxu0 %v9146
      %v9546 = vpop.f32.mrf.mxu0
      %v9547 = vadd.f32 %v9056, %v9546
      %9548 = vmatmul.f32.gmra.mxu0 %v9149
      %v9549 = vpop.f32.mrf.mxu0
      %v9550 = vadd.f32 %v9056, %v9549
      %9551 = vmatmul.f32.gmra.mxu0 %v9152
      %v9552 = vpop.f32.mrf.mxu0
      %v9553 = vadd.f32 %v9056, %v9552
      %9554 = vmatmul.f32.gmra.mxu0 %v9155
      %v9555 = vpop.f32.mrf.mxu0
      %v9556 = vadd.f32 %v9056, %v9555
      %9557 = vmatmul.f32.gmra.mxu0 %v9158
      %v9558 = vpop.f32.mrf.mxu0
      %v9559 = vadd.f32 %v9056, %v9558
      %9560 = vmatmul.f32.gmra.mxu0 %v9161
      %v9561 = vpop.f32.mrf.mxu0
      %v9562 = vadd.f32 %v9056, %v9561
      %9563 = vmatmul.f32.gmra.mxu0 %v9164
      %v9564 = vpop.f32.mrf.mxu0
      %v9565 = vadd.f32 %v9056, %v9564
      %9566 = vmatmul.f32.gmra.mxu0 %v9167
      %v9567 = vpop.f32.mrf.mxu0
      %v9568 = vadd.f32 %v9056, %v9567
      %9569 = vmatmul.f32.gmra.mxu0 %v9170
      %v9570 = vpop.f32.mrf.mxu0
      %v9571 = vadd.f32 %v9056, %v9570
      %9572 = vmatmul.f32.gmra.mxu0 %v9173
      %v9573 = vpop.f32.mrf.mxu0
      %v9574 = vadd.f32 %v9056, %v9573
      %9575 = vmatmul.f32.gmra.mxu0 %v9176
      %v9576 = vpop.f32.mrf.mxu0
      %v9577 = vadd.f32 %v9056, %v9576
      %9578 = vmatmul.f32.gmra.mxu0 %v9179
      %v9579 = vpop.f32.mrf.mxu0
      %v9580 = vadd.f32 %v9056, %v9579
      %9581 = vmatmul.f32.gmra.mxu0 %v9182
      %v9582 = vpop.f32.mrf.mxu0
      %v9583 = vadd.f32 %v9056, %v9582
      %9584 = vmatmul.f32.gmra.mxu0 %v9185
      %v9585 = vpop.f32.mrf.mxu0
      %v9586 = vadd.f32 %v9056, %v9585
      %9587 = vmatmul.f32.gmra.mxu0 %v9188
      %v9588 = vpop.f32.mrf.mxu0
      %v9589 = vadd.f32 %v9056, %v9588
      %9590 = vmatmul.f32.gmra.mxu0 %v9191
      %v9591 = vpop.f32.mrf.mxu0
      %v9592 = vadd.f32 %v9056, %v9591
      %9593 = vmatmul.f32.gmra.mxu0 %v9194
      %v9594 = vpop.f32.mrf.mxu0
      %v9595 = vadd.f32 %v9056, %v9594
      %9596 = vmatmul.f32.gmra.mxu0 %v9197
      %v9597 = vpop.f32.mrf.mxu0
      %v9598 = vadd.f32 %v9056, %v9597
      %9599 = vmatmul.f32.gmra.mxu0 %v9200
      %v9600 = vpop.f32.mrf.mxu0
      %v9601 = vadd.f32 %v9056, %v9600
      %9602 = vmatmul.f32.gmra.mxu0 %v9203
      %v9603 = vpop.f32.mrf.mxu0
      %v9604 = vadd.f32 %v9056, %v9603
      %9605 = vmatmul.f32.gmra.mxu0 %v9206
      %v9606 = vpop.f32.mrf.mxu0
      %v9607 = vadd.f32 %v9056, %v9606
      %9608 = vmatmul.f32.gmra.mxu0 %v9209
      %v9609 = vpop.f32.mrf.mxu0
      %v9610 = vadd.f32 %v9056, %v9609
      %9611 = vmatmul.f32.gmra.mxu0 %v9212
      %v9612 = vpop.f32.mrf.mxu0
      %v9613 = vadd.f32 %v9056, %v9612
      %9614 = vmatmul.f32.gmra.mxu0 %v9215
      %v9615 = vpop.f32.mrf.mxu0
      %v9616 = vadd.f32 %v9056, %v9615
      %9617 = vmatmul.f32.gmra.mxu0 %v9218
      %v9618 = vpop.f32.mrf.mxu0
      %v9619 = vadd.f32 %v9056, %v9618
      %9620 = vmatmul.f32.gmra.mxu0 %v9221
      %v9621 = vpop.f32.mrf.mxu0
      %v9622 = vadd.f32 %v9056, %v9621
      %9623 = vmatmul.f32.gmra.mxu0 %v9224
      %v9624 = vpop.f32.mrf.mxu0
      %v9625 = vadd.f32 %v9056, %v9624
      %9626 = vmatmul.f32.gmra.mxu0 %v9227
      %v9627 = vpop.f32.mrf.mxu0
      %v9628 = vadd.f32 %v9056, %v9627
      %9629 = vmatmul.f32.gmra.mxu0 %v9230
      %v9630 = vpop.f32.mrf.mxu0
      %v9631 = vadd.f32 %v9056, %v9630
      %9632 = vmatmul.f32.gmra.mxu0 %v9233
      %v9633 = vpop.f32.mrf.mxu0
      %v9634 = vadd.f32 %v9056, %v9633
      %9635 = vmatmul.f32.gmra.mxu0 %v9236
      %v9636 = vpop.f32.mrf.mxu0
      %v9637 = vadd.f32 %v9056, %v9636
      %9638 = vmatmul.f32.gmra.mxu0 %v9239
      %v9639 = vpop.f32.mrf.mxu0
      %v9640 = vadd.f32 %v9056, %v9639
      %9641 = vmatmul.f32.gmra.mxu0 %v9242
      %v9642 = vpop.f32.mrf.mxu0
      %v9643 = vadd.f32 %v9056, %v9642
      %9644 = vmatmul.f32.gmra.mxu0 %v9245
      %v9645 = vpop.f32.mrf.mxu0
      %v9646 = vadd.f32 %v9056, %v9645
      %9647 = vmatmul.f32.gmra.mxu0 %v9248
      %v9648 = vpop.f32.mrf.mxu0
      %v9649 = vadd.f32 %v9056, %v9648
      %9650 = vmatmul.f32.gmra.mxu0 %v9251
      %v9651 = vpop.f32.mrf.mxu0
      %v9652 = vadd.f32 %v9056, %v9651
      %9653 = vmatmul.f32.gmra.mxu0 %v9254
      %v9654 = vpop.f32.mrf.mxu0
      %v9655 = vadd.f32 %v9056, %v9654
      %9656 = vmatmul.f32.gmra.mxu0 %v9257
      %v9657 = vpop.f32.mrf.mxu0
      %v9658 = vadd.f32 %v9056, %v9657
      %9659 = vmatmul.f32.gmra.mxu0 %v9260
      %v9660 = vpop.f32.mrf.mxu0
      %v9661 = vadd.f32 %v9056, %v9660
      %9662 = vmatmul.f32.gmra.mxu0 %v9263
      %v9663 = vpop.f32.mrf.mxu0
      %v9664 = vadd.f32 %v9056, %v9663
      %9665 = vmatmul.f32.gmra.mxu0 %v9266
      %v9666 = vpop.f32.mrf.mxu0
      %v9667 = vadd.f32 %v9056, %v9666
      %9668 = vmatmul.f32.gmra.mxu0 %v9269
      %v9669 = vpop.f32.mrf.mxu0
      %v9670 = vadd.f32 %v9056, %v9669
      %9671 = vmatmul.f32.gmra.mxu0 %v9272
      %v9672 = vpop.f32.mrf.mxu0
      %v9673 = vadd.f32 %v9056, %v9672
      %9674 = vmatmul.f32.gmra.mxu0 %v9275
      %v9675 = vpop.f32.mrf.mxu0
      %v9676 = vadd.f32 %v9056, %v9675
      %9677 = vmatmul.f32.gmra.mxu0 %v9278
      %v9678 = vpop.f32.mrf.mxu0
      %v9679 = vadd.f32 %v9056, %v9678
      %9680 = vmatmul.f32.gmra.mxu0 %v9281
      %v9681 = vpop.f32.mrf.mxu0
      %v9682 = vadd.f32 %v9056, %v9681
      %9683 = vmatmul.f32.gmra.mxu0 %v9284
      %v9684 = vpop.f32.mrf.mxu0
      %v9685 = vadd.f32 %v9056, %v9684
      %9686 = vmatmul.f32.gmra.mxu0 %v9287
      %v9687 = vpop.f32.mrf.mxu0
      %v9688 = vadd.f32 %v9056, %v9687
      %9689 = vmatmul.f32.gmra.mxu0 %v9290
      %v9690 = vpop.f32.mrf.mxu0
      %v9691 = vadd.f32 %v9056, %v9690
      %9692 = vmatmul.f32.gmra.mxu0 %v9293
      %v9693 = vpop.f32.mrf.mxu0
      %v9694 = vadd.f32 %v9056, %v9693
      %9695 = vmatmul.f32.gmra.mxu0 %v9296
      %v9696 = vpop.f32.mrf.mxu0
      %v9697 = vadd.f32 %v9056, %v9696
      %9698 = vmatmul.f32.gmra.mxu0 %v9299
      %v9699 = vpop.f32.mrf.mxu0
      %v9700 = vadd.f32 %v9056, %v9699
      %9701 = vmatmul.f32.gmra.mxu0 %v9302
      %v9702 = vpop.f32.mrf.mxu0
      %v9703 = vadd.f32 %v9056, %v9702
      %9704 = vmatmul.f32.gmra.mxu0 %v9305
      %v9705 = vpop.f32.mrf.mxu0
      %v9706 = vadd.f32 %v9056, %v9705
      %9707 = vmatmul.f32.gmra.mxu0 %v9308
      %v9708 = vpop.f32.mrf.mxu0
      %v9709 = vadd.f32 %v9056, %v9708
      %9710 = vmatmul.f32.gmra.mxu0 %v9311
      %v9711 = vpop.f32.mrf.mxu0
      %v9712 = vadd.f32 %v9056, %v9711
      %9713 = vmatmul.f32.gmra.mxu0 %v9314
      %v9714 = vpop.f32.mrf.mxu0
      %v9715 = vadd.f32 %v9056, %v9714
      %9716 = vmatmul.f32.gmra.mxu0 %v9317
      %v9717 = vpop.f32.mrf.mxu0
      %v9718 = vadd.f32 %v9056, %v9717
      %9719 = vmatmul.f32.gmra.mxu0 %v9320
      %v9720 = vpop.f32.mrf.mxu0
      %v9721 = vadd.f32 %v9056, %v9720
      %9722 = vmatmul.f32.gmra.mxu0 %v9323
      %v9723 = vpop.f32.mrf.mxu0
      %v9724 = vadd.f32 %v9056, %v9723
      %9725 = vmatmul.f32.gmra.mxu0 %v9326
      %v9726 = vpop.f32.mrf.mxu0
      %v9727 = vadd.f32 %v9056, %v9726
      %9728 = vmatmul.f32.gmra.mxu0 %v9329
      %v9729 = vpop.f32.mrf.mxu0
      %v9730 = vadd.f32 %v9056, %v9729
      %9731 = vmatmul.f32.gmra.mxu0 %v9332
      %v9732 = vpop.f32.mrf.mxu0
      %v9733 = vadd.f32 %v9056, %v9732
      %9734 = vmatmul.f32.gmra.mxu0 %v9335
      %v9735 = vpop.f32.mrf.mxu0
      %v9736 = vadd.f32 %v9056, %v9735
      %9737 = vmatmul.f32.gmra.mxu0 %v9338
      %v9738 = vpop.f32.mrf.mxu0
      %v9739 = vadd.f32 %v9056, %v9738
      %9740 = vmatmul.f32.gmra.mxu0 %v9341
      %v9741 = vpop.f32.mrf.mxu0
      %v9742 = vadd.f32 %v9056, %v9741
      %9743 = vmatmul.f32.gmra.mxu0 %v9344
      %v9744 = vpop.f32.mrf.mxu0
      %v9745 = vadd.f32 %v9056, %v9744
      %9746 = vmatmul.f32.gmra.mxu0 %v9347
      %v9747 = vpop.f32.mrf.mxu0
      %v9748 = vadd.f32 %v9056, %v9747
      %9749 = vmatmul.f32.gmra.mxu0 %v9350
      %v9750 = vpop.f32.mrf.mxu0
      %v9751 = vadd.f32 %v9056, %v9750
      %9752 = vmatmul.f32.gmra.mxu0 %v9353
      %v9753 = vpop.f32.mrf.mxu0
      %v9754 = vadd.f32 %v9056, %v9753
      %9755 = vmatmul.f32.gmra.mxu0 %v9356
      %v9756 = vpop.f32.mrf.mxu0
      %v9757 = vadd.f32 %v9056, %v9756
      %9758 = vmatmul.f32.gmra.mxu0 %v9359
      %v9759 = vpop.f32.mrf.mxu0
      %v9760 = vadd.f32 %v9056, %v9759
      %9761 = vmatmul.f32.gmra.mxu0 %v9362
      %v9762 = vpop.f32.mrf.mxu0
      %v9763 = vadd.f32 %v9056, %v9762
      %9764 = vmatmul.f32.gmra.mxu0 %v9365
      %v9765 = vpop.f32.mrf.mxu0
      %v9766 = vadd.f32 %v9056, %v9765
      %9767 = vmatmul.f32.gmra.mxu0 %v9368
      %v9768 = vpop.f32.mrf.mxu0
      %v9769 = vadd.f32 %v9056, %v9768
      %9770 = vmatmul.f32.gmra.mxu0 %v9371
      %v9771 = vpop.f32.mrf.mxu0
      %v9772 = vadd.f32 %v9056, %v9771
      %9773 = vmatmul.f32.gmra.mxu0 %v9374
      %v9774 = vpop.f32.mrf.mxu0
      %v9775 = vadd.f32 %v9056, %v9774
      %9776 = vmatmul.f32.gmra.mxu0 %v9377
      %v9777 = vpop.f32.mrf.mxu0
      %v9778 = vadd.f32 %v9056, %v9777
      %9779 = vmatmul.f32.gmra.mxu0 %v9380
      %v9780 = vpop.f32.mrf.mxu0
      %v9781 = vadd.f32 %v9056, %v9780
      %9782 = vmatmul.f32.gmra.mxu0 %v9383
      %v9783 = vpop.f32.mrf.mxu0
      %v9784 = vadd.f32 %v9056, %v9783
      %9785 = vmatmul.f32.gmra.mxu0 %v9386
      %v9786 = vpop.f32.mrf.mxu0
      %v9787 = vadd.f32 %v9056, %v9786
      %9788 = vmatmul.f32.gmra.mxu0 %v9389
      %v9789 = vpop.f32.mrf.mxu0
      %v9790 = vadd.f32 %v9056, %v9789
      %9791 = vmatmul.f32.gmra.mxu0 %v9392
      %v9792 = vpop.f32.mrf.mxu0
      %v9793 = vadd.f32 %v9056, %v9792
      %9794 = vmatmul.f32.gmra.mxu0 %v9395
      %v9795 = vpop.f32.mrf.mxu0
      %v9796 = vadd.f32 %v9056, %v9795
      %9797 = vmatmul.f32.gmra.mxu0 %v9398
      %v9798 = vpop.f32.mrf.mxu0
      %v9799 = vadd.f32 %v9056, %v9798
      %9800 = vmatmul.f32.gmra.mxu0 %v9401
      %v9801 = vpop.f32.mrf.mxu0
      %v9802 = vadd.f32 %v9056, %v9801
      %9803 = vmatmul.f32.gmra.mxu0 %v9404
      %v9804 = vpop.f32.mrf.mxu0
      %v9805 = vadd.f32 %v9056, %v9804
      %9806 = vmatmul.f32.gmra.mxu0 %v9407
      %v9807 = vpop.f32.mrf.mxu0
      %v9808 = vadd.f32 %v9056, %v9807
      %9809 = vmatmul.f32.gmra.mxu0 %v9410
      %v9810 = vpop.f32.mrf.mxu0
      %v9811 = vadd.f32 %v9056, %v9810
      %9812 = vmatmul.f32.gmra.mxu0 %v9413
      %v9813 = vpop.f32.mrf.mxu0
      %v9814 = vadd.f32 %v9056, %v9813
      %9815 = vmatmul.f32.gmra.mxu0 %v9416
      %v9816 = vpop.f32.mrf.mxu0
      %v9817 = vadd.f32 %v9056, %v9816
      %9818 = vmatmul.f32.gmra.mxu0 %v9419
      %v9819 = vpop.f32.mrf.mxu0
      %v9820 = vadd.f32 %v9056, %v9819
      %9821 = vmatmul.f32.gmra.mxu0 %v9422
      %v9822 = vpop.f32.mrf.mxu0
      %v9823 = vadd.f32 %v9056, %v9822
      %9824 = vmatmul.f32.gmra.mxu0 %v9425
      %v9825 = vpop.f32.mrf.mxu0
      %v9826 = vadd.f32 %v9056, %v9825
      %9827 = vmatmul.f32.gmra.mxu0 %v9428
      %v9828 = vpop.f32.mrf.mxu0
      %v9829 = vadd.f32 %v9056, %v9828
      %9830 = vmatmul.f32.gmra.mxu0 %v9431
      %v9831 = vpop.f32.mrf.mxu0
      %v9832 = vadd.f32 %v9056, %v9831
      %9833 = vmatmul.f32.gmra.mxu0 %v9434
      %v9834 = vpop.f32.mrf.mxu0
      %v9835 = vadd.f32 %v9056, %v9834
      %9836 = vmatmul.f32.gmra.mxu0 %v9437
      %v9837 = vpop.f32.mrf.mxu0
      %v9838 = vadd.f32 %v9056, %v9837
      %9839 = vmatmul.f32.gmra.mxu0 %v9440
      %v9840 = vpop.f32.mrf.mxu0
      %v9841 = vadd.f32 %v9056, %v9840
      %9842 = vdwg.mxu0
      %v9843 = vld [vmem:[%s4] sm:$0xff]
      %v9844 = vld [vmem:[%s4 + $0x8] sm:$0xff]
      %v9845 = vld [vmem:[%s4 + $0x10] sm:$0xff]
      %v9846 = vld [vmem:[%s4 + $0x18] sm:$0xff]
      %v9847 = vld [vmem:[%s4 + $0x20] sm:$0xff]
      %v9848 = vld [vmem:[%s4 + $0x28] sm:$0xff]
      %v9849 = vld [vmem:[%s4 + $0x30] sm:$0xff]
      %v9850 = vld [vmem:[%s4 + $0x38] sm:$0xff]
      %v9852 = vsel %vm1954, %v9460, 0
      %v9855 = vsel %vm1954, %v9463, 0
      %v9858 = vsel %vm1954, %v9466, 0
      %v9861 = vsel %vm1954, %v9469, 0
      %v9864 = vsel %vm1954, %v9472, 0
      %v9867 = vsel %vm1954, %v9475, 0
      %v9870 = vsel %vm1954, %v9478, 0
      %v9873 = vsel %vm1954, %v9481, 0
      %v9876 = vsel %vm1954, %v9484, 0
      %v9879 = vsel %vm1954, %v9487, 0
      %v9882 = vsel %vm1954, %v9490, 0
      %v9885 = vsel %vm1954, %v9493, 0
      %v9888 = vsel %vm1954, %v9496, 0
      %v9891 = vsel %vm1954, %v9499, 0
      %v9894 = vsel %vm1954, %v9502, 0
      %v9897 = vsel %vm1954, %v9505, 0
      %v9900 = vsel %vm1954, %v9508, 0
      %v9903 = vsel %vm1954, %v9511, 0
      %v9906 = vsel %vm1954, %v9514, 0
      %v9909 = vsel %vm1954, %v9517, 0
      %v9912 = vsel %vm1954, %v9520, 0
      %v9915 = vsel %vm1954, %v9523, 0
      %v9918 = vsel %vm1954, %v9526, 0
      %v9921 = vsel %vm1954, %v9529, 0
      %v9924 = vsel %vm1954, %v9532, 0
      %v9927 = vsel %vm1954, %v9535, 0
      %v9930 = vsel %vm1954, %v9538, 0
      %v9933 = vsel %vm1954, %v9541, 0
      %v9936 = vsel %vm1954, %v9544, 0
      %v9939 = vsel %vm1954, %v9547, 0
      %v9942 = vsel %vm1954, %v9550, 0
      %v9945 = vsel %vm1954, %v9553, 0
      %v9948 = vsel %vm1954, %v9556, 0
      %v9951 = vsel %vm1954, %v9559, 0
      %v9954 = vsel %vm1954, %v9562, 0
      %v9957 = vsel %vm1954, %v9565, 0
      %v9960 = vsel %vm1954, %v9568, 0
      %v9963 = vsel %vm1954, %v9571, 0
      %v9966 = vsel %vm1954, %v9574, 0
      %v9969 = vsel %vm1954, %v9577, 0
      %v9972 = vsel %vm1954, %v9580, 0
      %v9975 = vsel %vm1954, %v9583, 0
      %v9978 = vsel %vm1954, %v9586, 0
      %v9981 = vsel %vm1954, %v9589, 0
      %v9984 = vsel %vm1954, %v9592, 0
      %v9987 = vsel %vm1954, %v9595, 0
      %v9990 = vsel %vm1954, %v9598, 0
      %v9993 = vsel %vm1954, %v9601, 0
      %v9996 = vsel %vm1954, %v9604, 0
      %v9999 = vsel %vm1954, %v9607, 0
      %v10002 = vsel %vm1954, %v9610, 0
      %v10005 = vsel %vm1954, %v9613, 0
      %v10008 = vsel %vm1954, %v9616, 0
      %v10011 = vsel %vm1954, %v9619, 0
      %v10014 = vsel %vm1954, %v9622, 0
      %v10017 = vsel %vm1954, %v9625, 0
      %v10020 = vsel %vm1954, %v9628, 0
      %v10023 = vsel %vm1954, %v9631, 0
      %v10026 = vsel %vm1954, %v9634, 0
      %v10029 = vsel %vm1954, %v9637, 0
      %v10032 = vsel %vm1954, %v9640, 0
      %v10035 = vsel %vm1954, %v9643, 0
      %v10038 = vsel %vm1954, %v9646, 0
      %v10041 = vsel %vm1954, %v9649, 0
      %v10044 = vsel %vm1954, %v9652, 0
      %v10047 = vsel %vm1954, %v9655, 0
      %v10050 = vsel %vm1954, %v9658, 0
      %v10053 = vsel %vm1954, %v9661, 0
      %v10056 = vsel %vm1954, %v9664, 0
      %v10059 = vsel %vm1954, %v9667, 0
      %v10062 = vsel %vm1954, %v9670, 0
      %v10065 = vsel %vm1954, %v9673, 0
      %v10068 = vsel %vm1954, %v9676, 0
      %v10071 = vsel %vm1954, %v9679, 0
      %v10074 = vsel %vm1954, %v9682, 0
      %v10077 = vsel %vm1954, %v9685, 0
      %v10080 = vsel %vm1954, %v9688, 0
      %v10083 = vsel %vm1954, %v9691, 0
      %v10086 = vsel %vm1954, %v9694, 0
      %v10089 = vsel %vm1954, %v9697, 0
      %v10092 = vsel %vm1954, %v9700, 0
      %v10095 = vsel %vm1954, %v9703, 0
      %v10098 = vsel %vm1954, %v9706, 0
      %v10101 = vsel %vm1954, %v9709, 0
      %v10104 = vsel %vm1954, %v9712, 0
      %v10107 = vsel %vm1954, %v9715, 0
      %v10110 = vsel %vm1954, %v9718, 0
      %v10113 = vsel %vm1954, %v9721, 0
      %v10116 = vsel %vm1954, %v9724, 0
      %v10119 = vsel %vm1954, %v9727, 0
      %v10122 = vsel %vm1954, %v9730, 0
      %v10125 = vsel %vm1954, %v9733, 0
      %v10128 = vsel %vm1954, %v9736, 0
      %v10131 = vsel %vm1954, %v9739, 0
      %v10134 = vsel %vm1954, %v9742, 0
      %v10137 = vsel %vm1954, %v9745, 0
      %v10140 = vsel %vm1954, %v9748, 0
      %v10143 = vsel %vm1954, %v9751, 0
      %v10146 = vsel %vm1954, %v9754, 0
      %v10149 = vsel %vm1954, %v9757, 0
      %v10152 = vsel %vm1954, %v9760, 0
      %v10155 = vsel %vm1954, %v9763, 0
      %v10158 = vsel %vm1954, %v9766, 0
      %v10161 = vsel %vm1954, %v9769, 0
      %v10164 = vsel %vm1954, %v9772, 0
      %v10167 = vsel %vm1954, %v9775, 0
      %v10170 = vsel %vm1954, %v9778, 0
      %v10173 = vsel %vm1954, %v9781, 0
      %v10176 = vsel %vm1954, %v9784, 0
      %v10179 = vsel %vm1954, %v9787, 0
      %v10182 = vsel %vm1954, %v9790, 0
      %v10185 = vsel %vm1954, %v9793, 0
      %v10188 = vsel %vm1954, %v9796, 0
      %v10191 = vsel %vm1954, %v9799, 0
      %v10194 = vsel %vm1954, %v9802, 0
      %v10197 = vsel %vm1954, %v9805, 0
      %v10200 = vsel %vm1954, %v9808, 0
      %v10203 = vsel %vm1954, %v9811, 0
      %v10206 = vsel %vm1954, %v9814, 0
      %v10209 = vsel %vm1954, %v9817, 0
      %v10212 = vsel %vm1954, %v9820, 0
      %v10215 = vsel %vm1954, %v9823, 0
      %v10218 = vsel %vm1954, %v9826, 0
      %v10221 = vsel %vm1954, %v9829, 0
      %v10224 = vsel %vm1954, %v9832, 0
      %v10227 = vsel %vm1954, %v9835, 0
      %v10230 = vsel %vm1954, %v9838, 0
      %v10233 = vsel %vm1954, %v9841, 0
      %10235 = vmatpush.msra.mxu0 0.0
      %10236 = vmatpush.msra.mxu0 0.0
      %10237 = vmatpush.msra.mxu0 0.0
      %10238 = vmatpush.msra.mxu0 0.0
      %10239 = vmatpush.msra.mxu0 0.0
      %10240 = vmatpush.msra.mxu0 0.0
      %10241 = vmatpush.msra.mxu0 0.0
      %10242 = vmatpush.msra.mxu0 0.0
      %10243 = vmatpush.msra.mxu0 %v9850
      %10244 = vmatpush.msra.mxu0 %v9849
      %10245 = vmatpush.msra.mxu0 %v9848
      %10246 = vmatpush.msra.mxu0 %v9847
      %10247 = vmatpush.msra.mxu0 %v9846
      %10248 = vmatpush.msra.mxu0 %v9845
      %10249 = vmatpush.msra.mxu0 %v9844
      %10250 = vmatpush.msra.mxu0 %v9843
      %10251 = vmatmul.f32.gmra.mxu0 %v9852
      %v10252 = vpop.f32.mrf.mxu0
      %v10253 = vadd.f32 %v1304, %v10252
      %10254 = vmatmul.f32.gmra.mxu0 %v9855
      %v10255 = vpop.f32.mrf.mxu0
      %v10256 = vadd.f32 %v1307, %v10255
      %10257 = vmatmul.f32.gmra.mxu0 %v9858
      %v10258 = vpop.f32.mrf.mxu0
      %v10259 = vadd.f32 %v1310, %v10258
      %10260 = vmatmul.f32.gmra.mxu0 %v9861
      %v10261 = vpop.f32.mrf.mxu0
      %v10262 = vadd.f32 %v1313, %v10261
      %10263 = vmatmul.f32.gmra.mxu0 %v9864
      %v10264 = vpop.f32.mrf.mxu0
      %v10265 = vadd.f32 %v1316, %v10264
      %10266 = vmatmul.f32.gmra.mxu0 %v9867
      %v10267 = vpop.f32.mrf.mxu0
      %v10268 = vadd.f32 %v1319, %v10267
      %10269 = vmatmul.f32.gmra.mxu0 %v9870
      %v10270 = vpop.f32.mrf.mxu0
      %v10271 = vadd.f32 %v1322, %v10270
      %10272 = vmatmul.f32.gmra.mxu0 %v9873
      %v10273 = vpop.f32.mrf.mxu0
      %v10274 = vadd.f32 %v1325, %v10273
      %10275 = vmatmul.f32.gmra.mxu0 %v9876
      %v10276 = vpop.f32.mrf.mxu0
      %v10277 = vadd.f32 %v1328, %v10276
      %10278 = vmatmul.f32.gmra.mxu0 %v9879
      %v10279 = vpop.f32.mrf.mxu0
      %v10280 = vadd.f32 %v1331, %v10279
      %10281 = vmatmul.f32.gmra.mxu0 %v9882
      %v10282 = vpop.f32.mrf.mxu0
      %v10283 = vadd.f32 %v1334, %v10282
      %10284 = vmatmul.f32.gmra.mxu0 %v9885
      %v10285 = vpop.f32.mrf.mxu0
      %v10286 = vadd.f32 %v1337, %v10285
      %10287 = vmatmul.f32.gmra.mxu0 %v9888
      %v10288 = vpop.f32.mrf.mxu0
      %v10289 = vadd.f32 %v1340, %v10288
      %10290 = vmatmul.f32.gmra.mxu0 %v9891
      %v10291 = vpop.f32.mrf.mxu0
      %v10292 = vadd.f32 %v1343, %v10291
      %10293 = vmatmul.f32.gmra.mxu0 %v9894
      %v10294 = vpop.f32.mrf.mxu0
      %v10295 = vadd.f32 %v1346, %v10294
      %10296 = vmatmul.f32.gmra.mxu0 %v9897
      %v10297 = vpop.f32.mrf.mxu0
      %v10298 = vadd.f32 %v1349, %v10297
      %10299 = vmatmul.f32.gmra.mxu0 %v9900
      %v10300 = vpop.f32.mrf.mxu0
      %v10301 = vadd.f32 %v1352, %v10300
      %10302 = vmatmul.f32.gmra.mxu0 %v9903
      %v10303 = vpop.f32.mrf.mxu0
      %v10304 = vadd.f32 %v1355, %v10303
      %10305 = vmatmul.f32.gmra.mxu0 %v9906
      %v10306 = vpop.f32.mrf.mxu0
      %v10307 = vadd.f32 %v1358, %v10306
      %10308 = vmatmul.f32.gmra.mxu0 %v9909
      %v10309 = vpop.f32.mrf.mxu0
      %v10310 = vadd.f32 %v1361, %v10309
      %10311 = vmatmul.f32.gmra.mxu0 %v9912
      %v10312 = vpop.f32.mrf.mxu0
      %v10313 = vadd.f32 %v1364, %v10312
      %10314 = vmatmul.f32.gmra.mxu0 %v9915
      %v10315 = vpop.f32.mrf.mxu0
      %v10316 = vadd.f32 %v1367, %v10315
      %10317 = vmatmul.f32.gmra.mxu0 %v9918
      %v10318 = vpop.f32.mrf.mxu0
      %v10319 = vadd.f32 %v1370, %v10318
      %10320 = vmatmul.f32.gmra.mxu0 %v9921
      %v10321 = vpop.f32.mrf.mxu0
      %v10322 = vadd.f32 %v1373, %v10321
      %10323 = vmatmul.f32.gmra.mxu0 %v9924
      %v10324 = vpop.f32.mrf.mxu0
      %v10325 = vadd.f32 %v1376, %v10324
      %10326 = vmatmul.f32.gmra.mxu0 %v9927
      %v10327 = vpop.f32.mrf.mxu0
      %v10328 = vadd.f32 %v1379, %v10327
      %10329 = vmatmul.f32.gmra.mxu0 %v9930
      %v10330 = vpop.f32.mrf.mxu0
      %v10331 = vadd.f32 %v1382, %v10330
      %10332 = vmatmul.f32.gmra.mxu0 %v9933
      %v10333 = vpop.f32.mrf.mxu0
      %v10334 = vadd.f32 %v1385, %v10333
      %10335 = vmatmul.f32.gmra.mxu0 %v9936
      %v10336 = vpop.f32.mrf.mxu0
      %v10337 = vadd.f32 %v1388, %v10336
      %10338 = vmatmul.f32.gmra.mxu0 %v9939
      %v10339 = vpop.f32.mrf.mxu0
      %v10340 = vadd.f32 %v1391, %v10339
      %10341 = vmatmul.f32.gmra.mxu0 %v9942
      %v10342 = vpop.f32.mrf.mxu0
      %v10343 = vadd.f32 %v1394, %v10342
      %10344 = vmatmul.f32.gmra.mxu0 %v9945
      %v10345 = vpop.f32.mrf.mxu0
      %v10346 = vadd.f32 %v1397, %v10345
      %10347 = vmatmul.f32.gmra.mxu0 %v9948
      %v10348 = vpop.f32.mrf.mxu0
      %v10349 = vadd.f32 %v1400, %v10348
      %10350 = vmatmul.f32.gmra.mxu0 %v9951
      %v10351 = vpop.f32.mrf.mxu0
      %v10352 = vadd.f32 %v1403, %v10351
      %10353 = vmatmul.f32.gmra.mxu0 %v9954
      %v10354 = vpop.f32.mrf.mxu0
      %v10355 = vadd.f32 %v1406, %v10354
      %10356 = vmatmul.f32.gmra.mxu0 %v9957
      %v10357 = vpop.f32.mrf.mxu0
      %v10358 = vadd.f32 %v1409, %v10357
      %10359 = vmatmul.f32.gmra.mxu0 %v9960
      %v10360 = vpop.f32.mrf.mxu0
      %v10361 = vadd.f32 %v1412, %v10360
      %10362 = vmatmul.f32.gmra.mxu0 %v9963
      %v10363 = vpop.f32.mrf.mxu0
      %v10364 = vadd.f32 %v1415, %v10363
      %10365 = vmatmul.f32.gmra.mxu0 %v9966
      %v10366 = vpop.f32.mrf.mxu0
      %v10367 = vadd.f32 %v1418, %v10366
      %10368 = vmatmul.f32.gmra.mxu0 %v9969
      %v10369 = vpop.f32.mrf.mxu0
      %v10370 = vadd.f32 %v1421, %v10369
      %10371 = vmatmul.f32.gmra.mxu0 %v9972
      %v10372 = vpop.f32.mrf.mxu0
      %v10373 = vadd.f32 %v1424, %v10372
      %10374 = vmatmul.f32.gmra.mxu0 %v9975
      %v10375 = vpop.f32.mrf.mxu0
      %v10376 = vadd.f32 %v1427, %v10375
      %10377 = vmatmul.f32.gmra.mxu0 %v9978
      %v10378 = vpop.f32.mrf.mxu0
      %v10379 = vadd.f32 %v1430, %v10378
      %10380 = vmatmul.f32.gmra.mxu0 %v9981
      %v10381 = vpop.f32.mrf.mxu0
      %v10382 = vadd.f32 %v1433, %v10381
      %10383 = vmatmul.f32.gmra.mxu0 %v9984
      %v10384 = vpop.f32.mrf.mxu0
      %v10385 = vadd.f32 %v1436, %v10384
      %10386 = vmatmul.f32.gmra.mxu0 %v9987
      %v10387 = vpop.f32.mrf.mxu0
      %v10388 = vadd.f32 %v1439, %v10387
      %10389 = vmatmul.f32.gmra.mxu0 %v9990
      %v10390 = vpop.f32.mrf.mxu0
      %v10391 = vadd.f32 %v1442, %v10390
      %10392 = vmatmul.f32.gmra.mxu0 %v9993
      %v10393 = vpop.f32.mrf.mxu0
      %v10394 = vadd.f32 %v1445, %v10393
      %10395 = vmatmul.f32.gmra.mxu0 %v9996
      %v10396 = vpop.f32.mrf.mxu0
      %v10397 = vadd.f32 %v1448, %v10396
      %10398 = vmatmul.f32.gmra.mxu0 %v9999
      %v10399 = vpop.f32.mrf.mxu0
      %v10400 = vadd.f32 %v1451, %v10399
      %10401 = vmatmul.f32.gmra.mxu0 %v10002
      %v10402 = vpop.f32.mrf.mxu0
      %v10403 = vadd.f32 %v1454, %v10402
      %10404 = vmatmul.f32.gmra.mxu0 %v10005
      %v10405 = vpop.f32.mrf.mxu0
      %v10406 = vadd.f32 %v1457, %v10405
      %10407 = vmatmul.f32.gmra.mxu0 %v10008
      %v10408 = vpop.f32.mrf.mxu0
      %v10409 = vadd.f32 %v1460, %v10408
      %10410 = vmatmul.f32.gmra.mxu0 %v10011
      %v10411 = vpop.f32.mrf.mxu0
      %v10412 = vadd.f32 %v1463, %v10411
      %10413 = vmatmul.f32.gmra.mxu0 %v10014
      %v10414 = vpop.f32.mrf.mxu0
      %v10415 = vadd.f32 %v1466, %v10414
      %10416 = vmatmul.f32.gmra.mxu0 %v10017
      %v10417 = vpop.f32.mrf.mxu0
      %v10418 = vadd.f32 %v1469, %v10417
      %10419 = vmatmul.f32.gmra.mxu0 %v10020
      %v10420 = vpop.f32.mrf.mxu0
      %v10421 = vadd.f32 %v1472, %v10420
      %10422 = vmatmul.f32.gmra.mxu0 %v10023
      %v10423 = vpop.f32.mrf.mxu0
      %v10424 = vadd.f32 %v1475, %v10423
      %10425 = vmatmul.f32.gmra.mxu0 %v10026
      %v10426 = vpop.f32.mrf.mxu0
      %v10427 = vadd.f32 %v1478, %v10426
      %10428 = vmatmul.f32.gmra.mxu0 %v10029
      %v10429 = vpop.f32.mrf.mxu0
      %v10430 = vadd.f32 %v1481, %v10429
      %10431 = vmatmul.f32.gmra.mxu0 %v10032
      %v10432 = vpop.f32.mrf.mxu0
      %v10433 = vadd.f32 %v1484, %v10432
      %10434 = vmatmul.f32.gmra.mxu0 %v10035
      %v10435 = vpop.f32.mrf.mxu0
      %v10436 = vadd.f32 %v1487, %v10435
      %10437 = vmatmul.f32.gmra.mxu0 %v10038
      %v10438 = vpop.f32.mrf.mxu0
      %v10439 = vadd.f32 %v1490, %v10438
      %10440 = vmatmul.f32.gmra.mxu0 %v10041
      %v10441 = vpop.f32.mrf.mxu0
      %v10442 = vadd.f32 %v1493, %v10441
      %10443 = vmatmul.f32.gmra.mxu0 %v10044
      %v10444 = vpop.f32.mrf.mxu0
      %v10445 = vadd.f32 %v1496, %v10444
      %10446 = vmatmul.f32.gmra.mxu0 %v10047
      %v10447 = vpop.f32.mrf.mxu0
      %v10448 = vadd.f32 %v1499, %v10447
      %10449 = vmatmul.f32.gmra.mxu0 %v10050
      %v10450 = vpop.f32.mrf.mxu0
      %v10451 = vadd.f32 %v1502, %v10450
      %10452 = vmatmul.f32.gmra.mxu0 %v10053
      %v10453 = vpop.f32.mrf.mxu0
      %v10454 = vadd.f32 %v1505, %v10453
      %10455 = vmatmul.f32.gmra.mxu0 %v10056
      %v10456 = vpop.f32.mrf.mxu0
      %v10457 = vadd.f32 %v1508, %v10456
      %10458 = vmatmul.f32.gmra.mxu0 %v10059
      %v10459 = vpop.f32.mrf.mxu0
      %v10460 = vadd.f32 %v1511, %v10459
      %10461 = vmatmul.f32.gmra.mxu0 %v10062
      %v10462 = vpop.f32.mrf.mxu0
      %v10463 = vadd.f32 %v1514, %v10462
      %10464 = vmatmul.f32.gmra.mxu0 %v10065
      %v10465 = vpop.f32.mrf.mxu0
      %v10466 = vadd.f32 %v1517, %v10465
      %10467 = vmatmul.f32.gmra.mxu0 %v10068
      %v10468 = vpop.f32.mrf.mxu0
      %v10469 = vadd.f32 %v1520, %v10468
      %10470 = vmatmul.f32.gmra.mxu0 %v10071
      %v10471 = vpop.f32.mrf.mxu0
      %v10472 = vadd.f32 %v1523, %v10471
      %10473 = vmatmul.f32.gmra.mxu0 %v10074
      %v10474 = vpop.f32.mrf.mxu0
      %v10475 = vadd.f32 %v1526, %v10474
      %10476 = vmatmul.f32.gmra.mxu0 %v10077
      %v10477 = vpop.f32.mrf.mxu0
      %v10478 = vadd.f32 %v1529, %v10477
      %10479 = vmatmul.f32.gmra.mxu0 %v10080
      %v10480 = vpop.f32.mrf.mxu0
      %v10481 = vadd.f32 %v1532, %v10480
      %10482 = vmatmul.f32.gmra.mxu0 %v10083
      %v10483 = vpop.f32.mrf.mxu0
      %v10484 = vadd.f32 %v1535, %v10483
      %10485 = vmatmul.f32.gmra.mxu0 %v10086
      %v10486 = vpop.f32.mrf.mxu0
      %v10487 = vadd.f32 %v1538, %v10486
      %10488 = vmatmul.f32.gmra.mxu0 %v10089
      %v10489 = vpop.f32.mrf.mxu0
      %v10490 = vadd.f32 %v1541, %v10489
      %10491 = vmatmul.f32.gmra.mxu0 %v10092
      %v10492 = vpop.f32.mrf.mxu0
      %v10493 = vadd.f32 %v1544, %v10492
      %10494 = vmatmul.f32.gmra.mxu0 %v10095
      %v10495 = vpop.f32.mrf.mxu0
      %v10496 = vadd.f32 %v1547, %v10495
      %10497 = vmatmul.f32.gmra.mxu0 %v10098
      %v10498 = vpop.f32.mrf.mxu0
      %v10499 = vadd.f32 %v1550, %v10498
      %10500 = vmatmul.f32.gmra.mxu0 %v10101
      %v10501 = vpop.f32.mrf.mxu0
      %v10502 = vadd.f32 %v1553, %v10501
      %10503 = vmatmul.f32.gmra.mxu0 %v10104
      %v10504 = vpop.f32.mrf.mxu0
      %v10505 = vadd.f32 %v1556, %v10504
      %10506 = vmatmul.f32.gmra.mxu0 %v10107
      %v10507 = vpop.f32.mrf.mxu0
      %v10508 = vadd.f32 %v1559, %v10507
      %10509 = vmatmul.f32.gmra.mxu0 %v10110
      %v10510 = vpop.f32.mrf.mxu0
      %v10511 = vadd.f32 %v1562, %v10510
      %10512 = vmatmul.f32.gmra.mxu0 %v10113
      %v10513 = vpop.f32.mrf.mxu0
      %v10514 = vadd.f32 %v1565, %v10513
      %10515 = vmatmul.f32.gmra.mxu0 %v10116
      %v10516 = vpop.f32.mrf.mxu0
      %v10517 = vadd.f32 %v1568, %v10516
      %10518 = vmatmul.f32.gmra.mxu0 %v10119
      %v10519 = vpop.f32.mrf.mxu0
      %v10520 = vadd.f32 %v1571, %v10519
      %10521 = vmatmul.f32.gmra.mxu0 %v10122
      %v10522 = vpop.f32.mrf.mxu0
      %v10523 = vadd.f32 %v1574, %v10522
      %10524 = vmatmul.f32.gmra.mxu0 %v10125
      %v10525 = vpop.f32.mrf.mxu0
      %v10526 = vadd.f32 %v1577, %v10525
      %10527 = vmatmul.f32.gmra.mxu0 %v10128
      %v10528 = vpop.f32.mrf.mxu0
      %v10529 = vadd.f32 %v1580, %v10528
      %10530 = vmatmul.f32.gmra.mxu0 %v10131
      %v10531 = vpop.f32.mrf.mxu0
      %v10532 = vadd.f32 %v1583, %v10531
      %10533 = vmatmul.f32.gmra.mxu0 %v10134
      %v10534 = vpop.f32.mrf.mxu0
      %v10535 = vadd.f32 %v1586, %v10534
      %10536 = vmatmul.f32.gmra.mxu0 %v10137
      %v10537 = vpop.f32.mrf.mxu0
      %v10538 = vadd.f32 %v1589, %v10537
      %10539 = vmatmul.f32.gmra.mxu0 %v10140
      %v10540 = vpop.f32.mrf.mxu0
      %v10541 = vadd.f32 %v1592, %v10540
      %10542 = vmatmul.f32.gmra.mxu0 %v10143
      %v10543 = vpop.f32.mrf.mxu0
      %v10544 = vadd.f32 %v1595, %v10543
      %10545 = vmatmul.f32.gmra.mxu0 %v10146
      %v10546 = vpop.f32.mrf.mxu0
      %v10547 = vadd.f32 %v1598, %v10546
      %10548 = vmatmul.f32.gmra.mxu0 %v10149
      %v10549 = vpop.f32.mrf.mxu0
      %v10550 = vadd.f32 %v1601, %v10549
      %10551 = vmatmul.f32.gmra.mxu0 %v10152
      %v10552 = vpop.f32.mrf.mxu0
      %v10553 = vadd.f32 %v1604, %v10552
      %10554 = vmatmul.f32.gmra.mxu0 %v10155
      %v10555 = vpop.f32.mrf.mxu0
      %v10556 = vadd.f32 %v1607, %v10555
      %10557 = vmatmul.f32.gmra.mxu0 %v10158
      %v10558 = vpop.f32.mrf.mxu0
      %v10559 = vadd.f32 %v1610, %v10558
      %10560 = vmatmul.f32.gmra.mxu0 %v10161
      %v10561 = vpop.f32.mrf.mxu0
      %v10562 = vadd.f32 %v1613, %v10561
      %10563 = vmatmul.f32.gmra.mxu0 %v10164
      %v10564 = vpop.f32.mrf.mxu0
      %v10565 = vadd.f32 %v1616, %v10564
      %10566 = vmatmul.f32.gmra.mxu0 %v10167
      %v10567 = vpop.f32.mrf.mxu0
      %v10568 = vadd.f32 %v1619, %v10567
      %10569 = vmatmul.f32.gmra.mxu0 %v10170
      %v10570 = vpop.f32.mrf.mxu0
      %v10571 = vadd.f32 %v1622, %v10570
      %10572 = vmatmul.f32.gmra.mxu0 %v10173
      %v10573 = vpop.f32.mrf.mxu0
      %v10574 = vadd.f32 %v1625, %v10573
      %10575 = vmatmul.f32.gmra.mxu0 %v10176
      %v10576 = vpop.f32.mrf.mxu0
      %v10577 = vadd.f32 %v1628, %v10576
      %10578 = vmatmul.f32.gmra.mxu0 %v10179
      %v10579 = vpop.f32.mrf.mxu0
      %v10580 = vadd.f32 %v1631, %v10579
      %10581 = vmatmul.f32.gmra.mxu0 %v10182
      %v10582 = vpop.f32.mrf.mxu0
      %v10583 = vadd.f32 %v1634, %v10582
      %10584 = vmatmul.f32.gmra.mxu0 %v10185
      %v10585 = vpop.f32.mrf.mxu0
      %v10586 = vadd.f32 %v1637, %v10585
      %10587 = vmatmul.f32.gmra.mxu0 %v10188
      %v10588 = vpop.f32.mrf.mxu0
      %v10589 = vadd.f32 %v1640, %v10588
      %10590 = vmatmul.f32.gmra.mxu0 %v10191
      %v10591 = vpop.f32.mrf.mxu0
      %v10592 = vadd.f32 %v1643, %v10591
      %10593 = vmatmul.f32.gmra.mxu0 %v10194
      %v10594 = vpop.f32.mrf.mxu0
      %v10595 = vadd.f32 %v1646, %v10594
      %10596 = vmatmul.f32.gmra.mxu0 %v10197
      %v10597 = vpop.f32.mrf.mxu0
      %v10598 = vadd.f32 %v1649, %v10597
      %10599 = vmatmul.f32.gmra.mxu0 %v10200
      %v10600 = vpop.f32.mrf.mxu0
      %v10601 = vadd.f32 %v1652, %v10600
      %10602 = vmatmul.f32.gmra.mxu0 %v10203
      %v10603 = vpop.f32.mrf.mxu0
      %v10604 = vadd.f32 %v1655, %v10603
      %10605 = vmatmul.f32.gmra.mxu0 %v10206
      %v10606 = vpop.f32.mrf.mxu0
      %v10607 = vadd.f32 %v1658, %v10606
      %10608 = vmatmul.f32.gmra.mxu0 %v10209
      %v10609 = vpop.f32.mrf.mxu0
      %v10610 = vadd.f32 %v1661, %v10609
      %10611 = vmatmul.f32.gmra.mxu0 %v10212
      %v10612 = vpop.f32.mrf.mxu0
      %v10613 = vadd.f32 %v1664, %v10612
      %10614 = vmatmul.f32.gmra.mxu0 %v10215
      %v10615 = vpop.f32.mrf.mxu0
      %v10616 = vadd.f32 %v1667, %v10615
      %10617 = vmatmul.f32.gmra.mxu0 %v10218
      %v10618 = vpop.f32.mrf.mxu0
      %v10619 = vadd.f32 %v1670, %v10618
      %10620 = vmatmul.f32.gmra.mxu0 %v10221
      %v10621 = vpop.f32.mrf.mxu0
      %v10622 = vadd.f32 %v1673, %v10621
      %10623 = vmatmul.f32.gmra.mxu0 %v10224
      %v10624 = vpop.f32.mrf.mxu0
      %v10625 = vadd.f32 %v1676, %v10624
      %10626 = vmatmul.f32.gmra.mxu0 %v10227
      %v10627 = vpop.f32.mrf.mxu0
      %v10628 = vadd.f32 %v1679, %v10627
      %10629 = vmatmul.f32.gmra.mxu0 %v10230
      %v10630 = vpop.f32.mrf.mxu0
      %v10631 = vadd.f32 %v1682, %v10630
      %10632 = vmatmul.f32.gmra.mxu0 %v10233
      %v10633 = vpop.f32.mrf.mxu0
      %v10634 = vadd.f32 %v1685, %v10633
      %10635 = vdwg.mxu0
      %v10636 = vld [vmem:[%s8] sm:$0x1]
      %v10638 = vperm.slane %v10636, 0
      %v10640 = vadd.f32 %v10253, %v10638
      %v10641 = vadd.f32 %v10256, %v10638
      %v10642 = vadd.f32 %v10259, %v10638
      %v10643 = vadd.f32 %v10262, %v10638
      %v10644 = vadd.f32 %v10265, %v10638
      %v10645 = vadd.f32 %v10268, %v10638
      %v10646 = vadd.f32 %v10271, %v10638
      %v10647 = vadd.f32 %v10274, %v10638
      %v10648 = vadd.f32 %v10277, %v10638
      %v10649 = vadd.f32 %v10280, %v10638
      %v10650 = vadd.f32 %v10283, %v10638
      %v10651 = vadd.f32 %v10286, %v10638
      %v10652 = vadd.f32 %v10289, %v10638
      %v10653 = vadd.f32 %v10292, %v10638
      %v10654 = vadd.f32 %v10295, %v10638
      %v10655 = vadd.f32 %v10298, %v10638
      %v10656 = vadd.f32 %v10301, %v10638
      %v10657 = vadd.f32 %v10304, %v10638
      %v10658 = vadd.f32 %v10307, %v10638
      %v10659 = vadd.f32 %v10310, %v10638
      %v10660 = vadd.f32 %v10313, %v10638
      %v10661 = vadd.f32 %v10316, %v10638
      %v10662 = vadd.f32 %v10319, %v10638
      %v10663 = vadd.f32 %v10322, %v10638
      %v10664 = vadd.f32 %v10325, %v10638
      %v10665 = vadd.f32 %v10328, %v10638
      %v10666 = vadd.f32 %v10331, %v10638
      %v10667 = vadd.f32 %v10334, %v10638
      %v10668 = vadd.f32 %v10337, %v10638
      %v10669 = vadd.f32 %v10340, %v10638
      %v10670 = vadd.f32 %v10343, %v10638
      %v10671 = vadd.f32 %v10346, %v10638
      %v10672 = vadd.f32 %v10349, %v10638
      %v10673 = vadd.f32 %v10352, %v10638
      %v10674 = vadd.f32 %v10355, %v10638
      %v10675 = vadd.f32 %v10358, %v10638
      %v10676 = vadd.f32 %v10361, %v10638
      %v10677 = vadd.f32 %v10364, %v10638
      %v10678 = vadd.f32 %v10367, %v10638
      %v10679 = vadd.f32 %v10370, %v10638
      %v10680 = vadd.f32 %v10373, %v10638
      %v10681 = vadd.f32 %v10376, %v10638
      %v10682 = vadd.f32 %v10379, %v10638
      %v10683 = vadd.f32 %v10382, %v10638
      %v10684 = vadd.f32 %v10385, %v10638
      %v10685 = vadd.f32 %v10388, %v10638
      %v10686 = vadd.f32 %v10391, %v10638
      %v10687 = vadd.f32 %v10394, %v10638
      %v10688 = vadd.f32 %v10397, %v10638
      %v10689 = vadd.f32 %v10400, %v10638
      %v10690 = vadd.f32 %v10403, %v10638
      %v10691 = vadd.f32 %v10406, %v10638
      %v10692 = vadd.f32 %v10409, %v10638
      %v10693 = vadd.f32 %v10412, %v10638
      %v10694 = vadd.f32 %v10415, %v10638
      %v10695 = vadd.f32 %v10418, %v10638
      %v10696 = vadd.f32 %v10421, %v10638
      %v10697 = vadd.f32 %v10424, %v10638
      %v10698 = vadd.f32 %v10427, %v10638
      %v10699 = vadd.f32 %v10430, %v10638
      %v10700 = vadd.f32 %v10433, %v10638
      %v10701 = vadd.f32 %v10436, %v10638
      %v10702 = vadd.f32 %v10439, %v10638
      %v10703 = vadd.f32 %v10442, %v10638
      %v10704 = vadd.f32 %v10445, %v10638
      %v10705 = vadd.f32 %v10448, %v10638
      %v10706 = vadd.f32 %v10451, %v10638
      %v10707 = vadd.f32 %v10454, %v10638
      %v10708 = vadd.f32 %v10457, %v10638
      %v10709 = vadd.f32 %v10460, %v10638
      %v10710 = vadd.f32 %v10463, %v10638
      %v10711 = vadd.f32 %v10466, %v10638
      %v10712 = vadd.f32 %v10469, %v10638
      %v10713 = vadd.f32 %v10472, %v10638
      %v10714 = vadd.f32 %v10475, %v10638
      %v10715 = vadd.f32 %v10478, %v10638
      %v10716 = vadd.f32 %v10481, %v10638
      %v10717 = vadd.f32 %v10484, %v10638
      %v10718 = vadd.f32 %v10487, %v10638
      %v10719 = vadd.f32 %v10490, %v10638
      %v10720 = vadd.f32 %v10493, %v10638
      %v10721 = vadd.f32 %v10496, %v10638
      %v10722 = vadd.f32 %v10499, %v10638
      %v10723 = vadd.f32 %v10502, %v10638
      %v10724 = vadd.f32 %v10505, %v10638
      %v10725 = vadd.f32 %v10508, %v10638
      %v10726 = vadd.f32 %v10511, %v10638
      %v10727 = vadd.f32 %v10514, %v10638
      %v10728 = vadd.f32 %v10517, %v10638
      %v10729 = vadd.f32 %v10520, %v10638
      %v10730 = vadd.f32 %v10523, %v10638
      %v10731 = vadd.f32 %v10526, %v10638
      %v10732 = vadd.f32 %v10529, %v10638
      %v10733 = vadd.f32 %v10532, %v10638
      %v10734 = vadd.f32 %v10535, %v10638
      %v10735 = vadd.f32 %v10538, %v10638
      %v10736 = vadd.f32 %v10541, %v10638
      %v10737 = vadd.f32 %v10544, %v10638
      %v10738 = vadd.f32 %v10547, %v10638
      %v10739 = vadd.f32 %v10550, %v10638
      %v10740 = vadd.f32 %v10553, %v10638
      %v10741 = vadd.f32 %v10556, %v10638
      %v10742 = vadd.f32 %v10559, %v10638
      %v10743 = vadd.f32 %v10562, %v10638
      %v10744 = vadd.f32 %v10565, %v10638
      %v10745 = vadd.f32 %v10568, %v10638
      %v10746 = vadd.f32 %v10571, %v10638
      %v10747 = vadd.f32 %v10574, %v10638
      %v10748 = vadd.f32 %v10577, %v10638
      %v10749 = vadd.f32 %v10580, %v10638
      %v10750 = vadd.f32 %v10583, %v10638
      %v10751 = vadd.f32 %v10586, %v10638
      %v10752 = vadd.f32 %v10589, %v10638
      %v10753 = vadd.f32 %v10592, %v10638
      %v10754 = vadd.f32 %v10595, %v10638
      %v10755 = vadd.f32 %v10598, %v10638
      %v10756 = vadd.f32 %v10601, %v10638
      %v10757 = vadd.f32 %v10604, %v10638
      %v10758 = vadd.f32 %v10607, %v10638
      %v10759 = vadd.f32 %v10610, %v10638
      %v10760 = vadd.f32 %v10613, %v10638
      %v10761 = vadd.f32 %v10616, %v10638
      %v10762 = vadd.f32 %v10619, %v10638
      %v10763 = vadd.f32 %v10622, %v10638
      %v10764 = vadd.f32 %v10625, %v10638
      %v10765 = vadd.f32 %v10628, %v10638
      %v10766 = vadd.f32 %v10631, %v10638
      %v10767 = vadd.f32 %v10634, %v10638
      %v10768 = vmax.f32 %v10640, 0.0
      %v10769 = vmax.f32 %v10641, 0.0
      %v10770 = vmax.f32 %v10642, 0.0
      %v10771 = vmax.f32 %v10643, 0.0
      %v10772 = vmax.f32 %v10644, 0.0
      %v10773 = vmax.f32 %v10645, 0.0
      %v10774 = vmax.f32 %v10646, 0.0
      %v10775 = vmax.f32 %v10647, 0.0
      %v10776 = vmax.f32 %v10648, 0.0
      %v10777 = vmax.f32 %v10649, 0.0
      %v10778 = vmax.f32 %v10650, 0.0
      %v10779 = vmax.f32 %v10651, 0.0
      %v10780 = vmax.f32 %v10652, 0.0
      %v10781 = vmax.f32 %v10653, 0.0
      %v10782 = vmax.f32 %v10654, 0.0
      %v10783 = vmax.f32 %v10655, 0.0
      %v10784 = vmax.f32 %v10656, 0.0
      %v10785 = vmax.f32 %v10657, 0.0
      %v10786 = vmax.f32 %v10658, 0.0
      %v10787 = vmax.f32 %v10659, 0.0
      %v10788 = vmax.f32 %v10660, 0.0
      %v10789 = vmax.f32 %v10661, 0.0
      %v10790 = vmax.f32 %v10662, 0.0
      %v10791 = vmax.f32 %v10663, 0.0
      %v10792 = vmax.f32 %v10664, 0.0
      %v10793 = vmax.f32 %v10665, 0.0
      %v10794 = vmax.f32 %v10666, 0.0
      %v10795 = vmax.f32 %v10667, 0.0
      %v10796 = vmax.f32 %v10668, 0.0
      %v10797 = vmax.f32 %v10669, 0.0
      %v10798 = vmax.f32 %v10670, 0.0
      %v10799 = vmax.f32 %v10671, 0.0
      %v10800 = vmax.f32 %v10672, 0.0
      %v10801 = vmax.f32 %v10673, 0.0
      %v10802 = vmax.f32 %v10674, 0.0
      %v10803 = vmax.f32 %v10675, 0.0
      %v10804 = vmax.f32 %v10676, 0.0
      %v10805 = vmax.f32 %v10677, 0.0
      %v10806 = vmax.f32 %v10678, 0.0
      %v10807 = vmax.f32 %v10679, 0.0
      %v10808 = vmax.f32 %v10680, 0.0
      %v10809 = vmax.f32 %v10681, 0.0
      %v10810 = vmax.f32 %v10682, 0.0
      %v10811 = vmax.f32 %v10683, 0.0
      %v10812 = vmax.f32 %v10684, 0.0
      %v10813 = vmax.f32 %v10685, 0.0
      %v10814 = vmax.f32 %v10686, 0.0
      %v10815 = vmax.f32 %v10687, 0.0
      %v10816 = vmax.f32 %v10688, 0.0
      %v10817 = vmax.f32 %v10689, 0.0
      %v10818 = vmax.f32 %v10690, 0.0
      %v10819 = vmax.f32 %v10691, 0.0
      %v10820 = vmax.f32 %v10692, 0.0
      %v10821 = vmax.f32 %v10693, 0.0
      %v10822 = vmax.f32 %v10694, 0.0
      %v10823 = vmax.f32 %v10695, 0.0
      %v10824 = vmax.f32 %v10696, 0.0
      %v10825 = vmax.f32 %v10697, 0.0
      %v10826 = vmax.f32 %v10698, 0.0
      %v10827 = vmax.f32 %v10699, 0.0
      %v10828 = vmax.f32 %v10700, 0.0
      %v10829 = vmax.f32 %v10701, 0.0
      %v10830 = vmax.f32 %v10702, 0.0
      %v10831 = vmax.f32 %v10703, 0.0
      %v10832 = vmax.f32 %v10704, 0.0
      %v10833 = vmax.f32 %v10705, 0.0
      %v10834 = vmax.f32 %v10706, 0.0
      %v10835 = vmax.f32 %v10707, 0.0
      %v10836 = vmax.f32 %v10708, 0.0
      %v10837 = vmax.f32 %v10709, 0.0
      %v10838 = vmax.f32 %v10710, 0.0
      %v10839 = vmax.f32 %v10711, 0.0
      %v10840 = vmax.f32 %v10712, 0.0
      %v10841 = vmax.f32 %v10713, 0.0
      %v10842 = vmax.f32 %v10714, 0.0
      %v10843 = vmax.f32 %v10715, 0.0
      %v10844 = vmax.f32 %v10716, 0.0
      %v10845 = vmax.f32 %v10717, 0.0
      %v10846 = vmax.f32 %v10718, 0.0
      %v10847 = vmax.f32 %v10719, 0.0
      %v10848 = vmax.f32 %v10720, 0.0
      %v10849 = vmax.f32 %v10721, 0.0
      %v10850 = vmax.f32 %v10722, 0.0
      %v10851 = vmax.f32 %v10723, 0.0
      %v10852 = vmax.f32 %v10724, 0.0
      %v10853 = vmax.f32 %v10725, 0.0
      %v10854 = vmax.f32 %v10726, 0.0
      %v10855 = vmax.f32 %v10727, 0.0
      %v10856 = vmax.f32 %v10728, 0.0
      %v10857 = vmax.f32 %v10729, 0.0
      %v10858 = vmax.f32 %v10730, 0.0
      %v10859 = vmax.f32 %v10731, 0.0
      %v10860 = vmax.f32 %v10732, 0.0
      %v10861 = vmax.f32 %v10733, 0.0
      %v10862 = vmax.f32 %v10734, 0.0
      %v10863 = vmax.f32 %v10735, 0.0
      %v10864 = vmax.f32 %v10736, 0.0
      %v10865 = vmax.f32 %v10737, 0.0
      %v10866 = vmax.f32 %v10738, 0.0
      %v10867 = vmax.f32 %v10739, 0.0
      %v10868 = vmax.f32 %v10740, 0.0
      %v10869 = vmax.f32 %v10741, 0.0
      %v10870 = vmax.f32 %v10742, 0.0
      %v10871 = vmax.f32 %v10743, 0.0
      %v10872 = vmax.f32 %v10744, 0.0
      %v10873 = vmax.f32 %v10745, 0.0
      %v10874 = vmax.f32 %v10746, 0.0
      %v10875 = vmax.f32 %v10747, 0.0
      %v10876 = vmax.f32 %v10748, 0.0
      %v10877 = vmax.f32 %v10749, 0.0
      %v10878 = vmax.f32 %v10750, 0.0
      %v10879 = vmax.f32 %v10751, 0.0
      %v10880 = vmax.f32 %v10752, 0.0
      %v10881 = vmax.f32 %v10753, 0.0
      %v10882 = vmax.f32 %v10754, 0.0
      %v10883 = vmax.f32 %v10755, 0.0
      %v10884 = vmax.f32 %v10756, 0.0
      %v10885 = vmax.f32 %v10757, 0.0
      %v10886 = vmax.f32 %v10758, 0.0
      %v10887 = vmax.f32 %v10759, 0.0
      %v10888 = vmax.f32 %v10760, 0.0
      %v10889 = vmax.f32 %v10761, 0.0
      %v10890 = vmax.f32 %v10762, 0.0
      %v10891 = vmax.f32 %v10763, 0.0
      %v10892 = vmax.f32 %v10764, 0.0
      %v10893 = vmax.f32 %v10765, 0.0
      %v10894 = vmax.f32 %v10766, 0.0
      %v10895 = vmax.f32 %v10767, 0.0
      %v10896 = vld [vmem:[%s5] sm:$0xff]
      %v10897 = vld [vmem:[%s5 + $0x8] sm:$0xff]
      %v10898 = vld [vmem:[%s5 + $0x10] sm:$0xff]
      %v10899 = vld [vmem:[%s5 + $0x18] sm:$0xff]
      %v10900 = vld [vmem:[%s9] sm:$0x1]
      %v10902 = vperm.slane %v10900, 0
      %vm10904 = vcmask 261120
      %v10906 = vsel %vm10904, %v10768, 0
      %v10909 = vsel %vm10904, %v10769, 0
      %v10912 = vsel %vm10904, %v10770, 0
      %v10915 = vsel %vm10904, %v10771, 0
      %v10918 = vsel %vm10904, %v10772, 0
      %v10921 = vsel %vm10904, %v10773, 0
      %v10924 = vsel %vm10904, %v10774, 0
      %v10927 = vsel %vm10904, %v10775, 0
      %v10930 = vsel %vm10904, %v10776, 0
      %v10933 = vsel %vm10904, %v10777, 0
      %v10936 = vsel %vm10904, %v10778, 0
      %v10939 = vsel %vm10904, %v10779, 0
      %v10942 = vsel %vm10904, %v10780, 0
      %v10945 = vsel %vm10904, %v10781, 0
      %v10948 = vsel %vm10904, %v10782, 0
      %v10951 = vsel %vm10904, %v10783, 0
      %v10954 = vsel %vm10904, %v10784, 0
      %v10957 = vsel %vm10904, %v10785, 0
      %v10960 = vsel %vm10904, %v10786, 0
      %v10963 = vsel %vm10904, %v10787, 0
      %v10966 = vsel %vm10904, %v10788, 0
      %v10969 = vsel %vm10904, %v10789, 0
      %v10972 = vsel %vm10904, %v10790, 0
      %v10975 = vsel %vm10904, %v10791, 0
      %v10978 = vsel %vm10904, %v10792, 0
      %v10981 = vsel %vm10904, %v10793, 0
      %v10984 = vsel %vm10904, %v10794, 0
      %v10987 = vsel %vm10904, %v10795, 0
      %v10990 = vsel %vm10904, %v10796, 0
      %v10993 = vsel %vm10904, %v10797, 0
      %v10996 = vsel %vm10904, %v10798, 0
      %v10999 = vsel %vm10904, %v10799, 0
      %v11002 = vsel %vm10904, %v10800, 0
      %v11005 = vsel %vm10904, %v10801, 0
      %v11008 = vsel %vm10904, %v10802, 0
      %v11011 = vsel %vm10904, %v10803, 0
      %v11014 = vsel %vm10904, %v10804, 0
      %v11017 = vsel %vm10904, %v10805, 0
      %v11020 = vsel %vm10904, %v10806, 0
      %v11023 = vsel %vm10904, %v10807, 0
      %v11026 = vsel %vm10904, %v10808, 0
      %v11029 = vsel %vm10904, %v10809, 0
      %v11032 = vsel %vm10904, %v10810, 0
      %v11035 = vsel %vm10904, %v10811, 0
      %v11038 = vsel %vm10904, %v10812, 0
      %v11041 = vsel %vm10904, %v10813, 0
      %v11044 = vsel %vm10904, %v10814, 0
      %v11047 = vsel %vm10904, %v10815, 0
      %v11050 = vsel %vm10904, %v10816, 0
      %v11053 = vsel %vm10904, %v10817, 0
      %v11056 = vsel %vm10904, %v10818, 0
      %v11059 = vsel %vm10904, %v10819, 0
      %v11062 = vsel %vm10904, %v10820, 0
      %v11065 = vsel %vm10904, %v10821, 0
      %v11068 = vsel %vm10904, %v10822, 0
      %v11071 = vsel %vm10904, %v10823, 0
      %v11074 = vsel %vm10904, %v10824, 0
      %v11077 = vsel %vm10904, %v10825, 0
      %v11080 = vsel %vm10904, %v10826, 0
      %v11083 = vsel %vm10904, %v10827, 0
      %v11086 = vsel %vm10904, %v10828, 0
      %v11089 = vsel %vm10904, %v10829, 0
      %v11092 = vsel %vm10904, %v10830, 0
      %v11095 = vsel %vm10904, %v10831, 0
      %v11098 = vsel %vm10904, %v10832, 0
      %v11101 = vsel %vm10904, %v10833, 0
      %v11104 = vsel %vm10904, %v10834, 0
      %v11107 = vsel %vm10904, %v10835, 0
      %v11110 = vsel %vm10904, %v10836, 0
      %v11113 = vsel %vm10904, %v10837, 0
      %v11116 = vsel %vm10904, %v10838, 0
      %v11119 = vsel %vm10904, %v10839, 0
      %v11122 = vsel %vm10904, %v10840, 0
      %v11125 = vsel %vm10904, %v10841, 0
      %v11128 = vsel %vm10904, %v10842, 0
      %v11131 = vsel %vm10904, %v10843, 0
      %v11134 = vsel %vm10904, %v10844, 0
      %v11137 = vsel %vm10904, %v10845, 0
      %v11140 = vsel %vm10904, %v10846, 0
      %v11143 = vsel %vm10904, %v10847, 0
      %v11146 = vsel %vm10904, %v10848, 0
      %v11149 = vsel %vm10904, %v10849, 0
      %v11152 = vsel %vm10904, %v10850, 0
      %v11155 = vsel %vm10904, %v10851, 0
      %v11158 = vsel %vm10904, %v10852, 0
      %v11161 = vsel %vm10904, %v10853, 0
      %v11164 = vsel %vm10904, %v10854, 0
      %v11167 = vsel %vm10904, %v10855, 0
      %v11170 = vsel %vm10904, %v10856, 0
      %v11173 = vsel %vm10904, %v10857, 0
      %v11176 = vsel %vm10904, %v10858, 0
      %v11179 = vsel %vm10904, %v10859, 0
      %v11182 = vsel %vm10904, %v10860, 0
      %v11185 = vsel %vm10904, %v10861, 0
      %v11188 = vsel %vm10904, %v10862, 0
      %v11191 = vsel %vm10904, %v10863, 0
      %v11194 = vsel %vm10904, %v10864, 0
      %v11197 = vsel %vm10904, %v10865, 0
      %v11200 = vsel %vm10904, %v10866, 0
      %v11203 = vsel %vm10904, %v10867, 0
      %v11206 = vsel %vm10904, %v10868, 0
      %v11209 = vsel %vm10904, %v10869, 0
      %v11212 = vsel %vm10904, %v10870, 0
      %v11215 = vsel %vm10904, %v10871, 0
      %v11218 = vsel %vm10904, %v10872, 0
      %v11221 = vsel %vm10904, %v10873, 0
      %v11224 = vsel %vm10904, %v10874, 0
      %v11227 = vsel %vm10904, %v10875, 0
      %v11230 = vsel %vm10904, %v10876, 0
      %v11233 = vsel %vm10904, %v10877, 0
      %v11236 = vsel %vm10904, %v10878, 0
      %v11239 = vsel %vm10904, %v10879, 0
      %v11242 = vsel %vm10904, %v10880, 0
      %v11245 = vsel %vm10904, %v10881, 0
      %v11248 = vsel %vm10904, %v10882, 0
      %v11251 = vsel %vm10904, %v10883, 0
      %v11254 = vsel %vm10904, %v10884, 0
      %v11257 = vsel %vm10904, %v10885, 0
      %v11260 = vsel %vm10904, %v10886, 0
      %v11263 = vsel %vm10904, %v10887, 0
      %v11266 = vsel %vm10904, %v10888, 0
      %v11269 = vsel %vm10904, %v10889, 0
      %v11272 = vsel %vm10904, %v10890, 0
      %v11275 = vsel %vm10904, %v10891, 0
      %v11278 = vsel %vm10904, %v10892, 0
      %v11281 = vsel %vm10904, %v10893, 0
      %v11284 = vsel %vm10904, %v10894, 0
      %v11287 = vsel %vm10904, %v10895, 0
      %11289 = vmatpush.msra.mxu0 0.0
      %11290 = vmatpush.msra.mxu0 0.0
      %11291 = vmatpush.msra.mxu0 0.0
      %11292 = vmatpush.msra.mxu0 0.0
      %11293 = vmatpush.msra.mxu0 0.0
      %11294 = vmatpush.msra.mxu0 0.0
      %11295 = vmatpush.msra.mxu0 0.0
      %11296 = vmatpush.msra.mxu0 0.0
      %11297 = vmatpush.msra.mxu0 0.0
      %11298 = vmatpush.msra.mxu0 0.0
      %11299 = vmatpush.msra.mxu0 0.0
      %11300 = vmatpush.msra.mxu0 0.0
      %11301 = vmatpush.msra.mxu0 %v10899
      %11302 = vmatpush.msra.mxu0 %v10898
      %11303 = vmatpush.msra.mxu0 %v10897
      %11304 = vmatpush.msra.mxu0 %v10896
      %11305 = vmatmul.f32.gmra.mxu0 %v10906
      %v11306 = vpop.f32.mrf.mxu0
      %v11307 = vadd.f32 %v10902, %v11306
      %11308 = vmatmul.f32.gmra.mxu0 %v10909
      %v11309 = vpop.f32.mrf.mxu0
      %v11310 = vadd.f32 %v10902, %v11309
      %11311 = vmatmul.f32.gmra.mxu0 %v10912
      %v11312 = vpop.f32.mrf.mxu0
      %v11313 = vadd.f32 %v10902, %v11312
      %11314 = vmatmul.f32.gmra.mxu0 %v10915
      %v11315 = vpop.f32.mrf.mxu0
      %v11316 = vadd.f32 %v10902, %v11315
      %11317 = vmatmul.f32.gmra.mxu0 %v10918
      %v11318 = vpop.f32.mrf.mxu0
      %v11319 = vadd.f32 %v10902, %v11318
      %11320 = vmatmul.f32.gmra.mxu0 %v10921
      %v11321 = vpop.f32.mrf.mxu0
      %v11322 = vadd.f32 %v10902, %v11321
      %11323 = vmatmul.f32.gmra.mxu0 %v10924
      %v11324 = vpop.f32.mrf.mxu0
      %v11325 = vadd.f32 %v10902, %v11324
      %11326 = vmatmul.f32.gmra.mxu0 %v10927
      %v11327 = vpop.f32.mrf.mxu0
      %v11328 = vadd.f32 %v10902, %v11327
      %11329 = vmatmul.f32.gmra.mxu0 %v10930
      %v11330 = vpop.f32.mrf.mxu0
      %v11331 = vadd.f32 %v10902, %v11330
      %11332 = vmatmul.f32.gmra.mxu0 %v10933
      %v11333 = vpop.f32.mrf.mxu0
      %v11334 = vadd.f32 %v10902, %v11333
      %11335 = vmatmul.f32.gmra.mxu0 %v10936
      %v11336 = vpop.f32.mrf.mxu0
      %v11337 = vadd.f32 %v10902, %v11336
      %11338 = vmatmul.f32.gmra.mxu0 %v10939
      %v11339 = vpop.f32.mrf.mxu0
      %v11340 = vadd.f32 %v10902, %v11339
      %11341 = vmatmul.f32.gmra.mxu0 %v10942
      %v11342 = vpop.f32.mrf.mxu0
      %v11343 = vadd.f32 %v10902, %v11342
      %11344 = vmatmul.f32.gmra.mxu0 %v10945
      %v11345 = vpop.f32.mrf.mxu0
      %v11346 = vadd.f32 %v10902, %v11345
      %11347 = vmatmul.f32.gmra.mxu0 %v10948
      %v11348 = vpop.f32.mrf.mxu0
      %v11349 = vadd.f32 %v10902, %v11348
      %11350 = vmatmul.f32.gmra.mxu0 %v10951
      %v11351 = vpop.f32.mrf.mxu0
      %v11352 = vadd.f32 %v10902, %v11351
      %11353 = vmatmul.f32.gmra.mxu0 %v10954
      %v11354 = vpop.f32.mrf.mxu0
      %v11355 = vadd.f32 %v10902, %v11354
      %11356 = vmatmul.f32.gmra.mxu0 %v10957
      %v11357 = vpop.f32.mrf.mxu0
      %v11358 = vadd.f32 %v10902, %v11357
      %11359 = vmatmul.f32.gmra.mxu0 %v10960
      %v11360 = vpop.f32.mrf.mxu0
      %v11361 = vadd.f32 %v10902, %v11360
      %11362 = vmatmul.f32.gmra.mxu0 %v10963
      %v11363 = vpop.f32.mrf.mxu0
      %v11364 = vadd.f32 %v10902, %v11363
      %11365 = vmatmul.f32.gmra.mxu0 %v10966
      %v11366 = vpop.f32.mrf.mxu0
      %v11367 = vadd.f32 %v10902, %v11366
      %11368 = vmatmul.f32.gmra.mxu0 %v10969
      %v11369 = vpop.f32.mrf.mxu0
      %v11370 = vadd.f32 %v10902, %v11369
      %11371 = vmatmul.f32.gmra.mxu0 %v10972
      %v11372 = vpop.f32.mrf.mxu0
      %v11373 = vadd.f32 %v10902, %v11372
      %11374 = vmatmul.f32.gmra.mxu0 %v10975
      %v11375 = vpop.f32.mrf.mxu0
      %v11376 = vadd.f32 %v10902, %v11375
      %11377 = vmatmul.f32.gmra.mxu0 %v10978
      %v11378 = vpop.f32.mrf.mxu0
      %v11379 = vadd.f32 %v10902, %v11378
      %11380 = vmatmul.f32.gmra.mxu0 %v10981
      %v11381 = vpop.f32.mrf.mxu0
      %v11382 = vadd.f32 %v10902, %v11381
      %11383 = vmatmul.f32.gmra.mxu0 %v10984
      %v11384 = vpop.f32.mrf.mxu0
      %v11385 = vadd.f32 %v10902, %v11384
      %11386 = vmatmul.f32.gmra.mxu0 %v10987
      %v11387 = vpop.f32.mrf.mxu0
      %v11388 = vadd.f32 %v10902, %v11387
      %11389 = vmatmul.f32.gmra.mxu0 %v10990
      %v11390 = vpop.f32.mrf.mxu0
      %v11391 = vadd.f32 %v10902, %v11390
      %11392 = vmatmul.f32.gmra.mxu0 %v10993
      %v11393 = vpop.f32.mrf.mxu0
      %v11394 = vadd.f32 %v10902, %v11393
      %11395 = vmatmul.f32.gmra.mxu0 %v10996
      %v11396 = vpop.f32.mrf.mxu0
      %v11397 = vadd.f32 %v10902, %v11396
      %11398 = vmatmul.f32.gmra.mxu0 %v10999
      %v11399 = vpop.f32.mrf.mxu0
      %v11400 = vadd.f32 %v10902, %v11399
      %11401 = vmatmul.f32.gmra.mxu0 %v11002
      %v11402 = vpop.f32.mrf.mxu0
      %v11403 = vadd.f32 %v10902, %v11402
      %11404 = vmatmul.f32.gmra.mxu0 %v11005
      %v11405 = vpop.f32.mrf.mxu0
      %v11406 = vadd.f32 %v10902, %v11405
      %11407 = vmatmul.f32.gmra.mxu0 %v11008
      %v11408 = vpop.f32.mrf.mxu0
      %v11409 = vadd.f32 %v10902, %v11408
      %11410 = vmatmul.f32.gmra.mxu0 %v11011
      %v11411 = vpop.f32.mrf.mxu0
      %v11412 = vadd.f32 %v10902, %v11411
      %11413 = vmatmul.f32.gmra.mxu0 %v11014
      %v11414 = vpop.f32.mrf.mxu0
      %v11415 = vadd.f32 %v10902, %v11414
      %11416 = vmatmul.f32.gmra.mxu0 %v11017
      %v11417 = vpop.f32.mrf.mxu0
      %v11418 = vadd.f32 %v10902, %v11417
      %11419 = vmatmul.f32.gmra.mxu0 %v11020
      %v11420 = vpop.f32.mrf.mxu0
      %v11421 = vadd.f32 %v10902, %v11420
      %11422 = vmatmul.f32.gmra.mxu0 %v11023
      %v11423 = vpop.f32.mrf.mxu0
      %v11424 = vadd.f32 %v10902, %v11423
      %11425 = vmatmul.f32.gmra.mxu0 %v11026
      %v11426 = vpop.f32.mrf.mxu0
      %v11427 = vadd.f32 %v10902, %v11426
      %11428 = vmatmul.f32.gmra.mxu0 %v11029
      %v11429 = vpop.f32.mrf.mxu0
      %v11430 = vadd.f32 %v10902, %v11429
      %11431 = vmatmul.f32.gmra.mxu0 %v11032
      %v11432 = vpop.f32.mrf.mxu0
      %v11433 = vadd.f32 %v10902, %v11432
      %11434 = vmatmul.f32.gmra.mxu0 %v11035
      %v11435 = vpop.f32.mrf.mxu0
      %v11436 = vadd.f32 %v10902, %v11435
      %11437 = vmatmul.f32.gmra.mxu0 %v11038
      %v11438 = vpop.f32.mrf.mxu0
      %v11439 = vadd.f32 %v10902, %v11438
      %11440 = vmatmul.f32.gmra.mxu0 %v11041
      %v11441 = vpop.f32.mrf.mxu0
      %v11442 = vadd.f32 %v10902, %v11441
      %11443 = vmatmul.f32.gmra.mxu0 %v11044
      %v11444 = vpop.f32.mrf.mxu0
      %v11445 = vadd.f32 %v10902, %v11444
      %11446 = vmatmul.f32.gmra.mxu0 %v11047
      %v11447 = vpop.f32.mrf.mxu0
      %v11448 = vadd.f32 %v10902, %v11447
      %11449 = vmatmul.f32.gmra.mxu0 %v11050
      %v11450 = vpop.f32.mrf.mxu0
      %v11451 = vadd.f32 %v10902, %v11450
      %11452 = vmatmul.f32.gmra.mxu0 %v11053
      %v11453 = vpop.f32.mrf.mxu0
      %v11454 = vadd.f32 %v10902, %v11453
      %11455 = vmatmul.f32.gmra.mxu0 %v11056
      %v11456 = vpop.f32.mrf.mxu0
      %v11457 = vadd.f32 %v10902, %v11456
      %11458 = vmatmul.f32.gmra.mxu0 %v11059
      %v11459 = vpop.f32.mrf.mxu0
      %v11460 = vadd.f32 %v10902, %v11459
      %11461 = vmatmul.f32.gmra.mxu0 %v11062
      %v11462 = vpop.f32.mrf.mxu0
      %v11463 = vadd.f32 %v10902, %v11462
      %11464 = vmatmul.f32.gmra.mxu0 %v11065
      %v11465 = vpop.f32.mrf.mxu0
      %v11466 = vadd.f32 %v10902, %v11465
      %11467 = vmatmul.f32.gmra.mxu0 %v11068
      %v11468 = vpop.f32.mrf.mxu0
      %v11469 = vadd.f32 %v10902, %v11468
      %11470 = vmatmul.f32.gmra.mxu0 %v11071
      %v11471 = vpop.f32.mrf.mxu0
      %v11472 = vadd.f32 %v10902, %v11471
      %11473 = vmatmul.f32.gmra.mxu0 %v11074
      %v11474 = vpop.f32.mrf.mxu0
      %v11475 = vadd.f32 %v10902, %v11474
      %11476 = vmatmul.f32.gmra.mxu0 %v11077
      %v11477 = vpop.f32.mrf.mxu0
      %v11478 = vadd.f32 %v10902, %v11477
      %11479 = vmatmul.f32.gmra.mxu0 %v11080
      %v11480 = vpop.f32.mrf.mxu0
      %v11481 = vadd.f32 %v10902, %v11480
      %11482 = vmatmul.f32.gmra.mxu0 %v11083
      %v11483 = vpop.f32.mrf.mxu0
      %v11484 = vadd.f32 %v10902, %v11483
      %11485 = vmatmul.f32.gmra.mxu0 %v11086
      %v11486 = vpop.f32.mrf.mxu0
      %v11487 = vadd.f32 %v10902, %v11486
      %11488 = vmatmul.f32.gmra.mxu0 %v11089
      %v11489 = vpop.f32.mrf.mxu0
      %v11490 = vadd.f32 %v10902, %v11489
      %11491 = vmatmul.f32.gmra.mxu0 %v11092
      %v11492 = vpop.f32.mrf.mxu0
      %v11493 = vadd.f32 %v10902, %v11492
      %11494 = vmatmul.f32.gmra.mxu0 %v11095
      %v11495 = vpop.f32.mrf.mxu0
      %v11496 = vadd.f32 %v10902, %v11495
      %11497 = vmatmul.f32.gmra.mxu0 %v11098
      %v11498 = vpop.f32.mrf.mxu0
      %v11499 = vadd.f32 %v10902, %v11498
      %11500 = vmatmul.f32.gmra.mxu0 %v11101
      %v11501 = vpop.f32.mrf.mxu0
      %v11502 = vadd.f32 %v10902, %v11501
      %11503 = vmatmul.f32.gmra.mxu0 %v11104
      %v11504 = vpop.f32.mrf.mxu0
      %v11505 = vadd.f32 %v10902, %v11504
      %11506 = vmatmul.f32.gmra.mxu0 %v11107
      %v11507 = vpop.f32.mrf.mxu0
      %v11508 = vadd.f32 %v10902, %v11507
      %11509 = vmatmul.f32.gmra.mxu0 %v11110
      %v11510 = vpop.f32.mrf.mxu0
      %v11511 = vadd.f32 %v10902, %v11510
      %11512 = vmatmul.f32.gmra.mxu0 %v11113
      %v11513 = vpop.f32.mrf.mxu0
      %v11514 = vadd.f32 %v10902, %v11513
      %11515 = vmatmul.f32.gmra.mxu0 %v11116
      %v11516 = vpop.f32.mrf.mxu0
      %v11517 = vadd.f32 %v10902, %v11516
      %11518 = vmatmul.f32.gmra.mxu0 %v11119
      %v11519 = vpop.f32.mrf.mxu0
      %v11520 = vadd.f32 %v10902, %v11519
      %11521 = vmatmul.f32.gmra.mxu0 %v11122
      %v11522 = vpop.f32.mrf.mxu0
      %v11523 = vadd.f32 %v10902, %v11522
      %11524 = vmatmul.f32.gmra.mxu0 %v11125
      %v11525 = vpop.f32.mrf.mxu0
      %v11526 = vadd.f32 %v10902, %v11525
      %11527 = vmatmul.f32.gmra.mxu0 %v11128
      %v11528 = vpop.f32.mrf.mxu0
      %v11529 = vadd.f32 %v10902, %v11528
      %11530 = vmatmul.f32.gmra.mxu0 %v11131
      %v11531 = vpop.f32.mrf.mxu0
      %v11532 = vadd.f32 %v10902, %v11531
      %11533 = vmatmul.f32.gmra.mxu0 %v11134
      %v11534 = vpop.f32.mrf.mxu0
      %v11535 = vadd.f32 %v10902, %v11534
      %11536 = vmatmul.f32.gmra.mxu0 %v11137
      %v11537 = vpop.f32.mrf.mxu0
      %v11538 = vadd.f32 %v10902, %v11537
      %11539 = vmatmul.f32.gmra.mxu0 %v11140
      %v11540 = vpop.f32.mrf.mxu0
      %v11541 = vadd.f32 %v10902, %v11540
      %11542 = vmatmul.f32.gmra.mxu0 %v11143
      %v11543 = vpop.f32.mrf.mxu0
      %v11544 = vadd.f32 %v10902, %v11543
      %11545 = vmatmul.f32.gmra.mxu0 %v11146
      %v11546 = vpop.f32.mrf.mxu0
      %v11547 = vadd.f32 %v10902, %v11546
      %11548 = vmatmul.f32.gmra.mxu0 %v11149
      %v11549 = vpop.f32.mrf.mxu0
      %v11550 = vadd.f32 %v10902, %v11549
      %11551 = vmatmul.f32.gmra.mxu0 %v11152
      %v11552 = vpop.f32.mrf.mxu0
      %v11553 = vadd.f32 %v10902, %v11552
      %11554 = vmatmul.f32.gmra.mxu0 %v11155
      %v11555 = vpop.f32.mrf.mxu0
      %v11556 = vadd.f32 %v10902, %v11555
      %11557 = vmatmul.f32.gmra.mxu0 %v11158
      %v11558 = vpop.f32.mrf.mxu0
      %v11559 = vadd.f32 %v10902, %v11558
      %11560 = vmatmul.f32.gmra.mxu0 %v11161
      %v11561 = vpop.f32.mrf.mxu0
      %v11562 = vadd.f32 %v10902, %v11561
      %11563 = vmatmul.f32.gmra.mxu0 %v11164
      %v11564 = vpop.f32.mrf.mxu0
      %v11565 = vadd.f32 %v10902, %v11564
      %11566 = vmatmul.f32.gmra.mxu0 %v11167
      %v11567 = vpop.f32.mrf.mxu0
      %v11568 = vadd.f32 %v10902, %v11567
      %11569 = vmatmul.f32.gmra.mxu0 %v11170
      %v11570 = vpop.f32.mrf.mxu0
      %v11571 = vadd.f32 %v10902, %v11570
      %11572 = vmatmul.f32.gmra.mxu0 %v11173
      %v11573 = vpop.f32.mrf.mxu0
      %v11574 = vadd.f32 %v10902, %v11573
      %11575 = vmatmul.f32.gmra.mxu0 %v11176
      %v11576 = vpop.f32.mrf.mxu0
      %v11577 = vadd.f32 %v10902, %v11576
      %11578 = vmatmul.f32.gmra.mxu0 %v11179
      %v11579 = vpop.f32.mrf.mxu0
      %v11580 = vadd.f32 %v10902, %v11579
      %11581 = vmatmul.f32.gmra.mxu0 %v11182
      %v11582 = vpop.f32.mrf.mxu0
      %v11583 = vadd.f32 %v10902, %v11582
      %11584 = vmatmul.f32.gmra.mxu0 %v11185
      %v11585 = vpop.f32.mrf.mxu0
      %v11586 = vadd.f32 %v10902, %v11585
      %11587 = vmatmul.f32.gmra.mxu0 %v11188
      %v11588 = vpop.f32.mrf.mxu0
      %v11589 = vadd.f32 %v10902, %v11588
      %11590 = vmatmul.f32.gmra.mxu0 %v11191
      %v11591 = vpop.f32.mrf.mxu0
      %v11592 = vadd.f32 %v10902, %v11591
      %11593 = vmatmul.f32.gmra.mxu0 %v11194
      %v11594 = vpop.f32.mrf.mxu0
      %v11595 = vadd.f32 %v10902, %v11594
      %11596 = vmatmul.f32.gmra.mxu0 %v11197
      %v11597 = vpop.f32.mrf.mxu0
      %v11598 = vadd.f32 %v10902, %v11597
      %11599 = vmatmul.f32.gmra.mxu0 %v11200
      %v11600 = vpop.f32.mrf.mxu0
      %v11601 = vadd.f32 %v10902, %v11600
      %11602 = vmatmul.f32.gmra.mxu0 %v11203
      %v11603 = vpop.f32.mrf.mxu0
      %v11604 = vadd.f32 %v10902, %v11603
      %11605 = vmatmul.f32.gmra.mxu0 %v11206
      %v11606 = vpop.f32.mrf.mxu0
      %v11607 = vadd.f32 %v10902, %v11606
      %11608 = vmatmul.f32.gmra.mxu0 %v11209
      %v11609 = vpop.f32.mrf.mxu0
      %v11610 = vadd.f32 %v10902, %v11609
      %11611 = vmatmul.f32.gmra.mxu0 %v11212
      %v11612 = vpop.f32.mrf.mxu0
      %v11613 = vadd.f32 %v10902, %v11612
      %11614 = vmatmul.f32.gmra.mxu0 %v11215
      %v11615 = vpop.f32.mrf.mxu0
      %v11616 = vadd.f32 %v10902, %v11615
      %11617 = vmatmul.f32.gmra.mxu0 %v11218
      %v11618 = vpop.f32.mrf.mxu0
      %v11619 = vadd.f32 %v10902, %v11618
      %11620 = vmatmul.f32.gmra.mxu0 %v11221
      %v11621 = vpop.f32.mrf.mxu0
      %v11622 = vadd.f32 %v10902, %v11621
      %11623 = vmatmul.f32.gmra.mxu0 %v11224
      %v11624 = vpop.f32.mrf.mxu0
      %v11625 = vadd.f32 %v10902, %v11624
      %11626 = vmatmul.f32.gmra.mxu0 %v11227
      %v11627 = vpop.f32.mrf.mxu0
      %v11628 = vadd.f32 %v10902, %v11627
      %11629 = vmatmul.f32.gmra.mxu0 %v11230
      %v11630 = vpop.f32.mrf.mxu0
      %v11631 = vadd.f32 %v10902, %v11630
      %11632 = vmatmul.f32.gmra.mxu0 %v11233
      %v11633 = vpop.f32.mrf.mxu0
      %v11634 = vadd.f32 %v10902, %v11633
      %11635 = vmatmul.f32.gmra.mxu0 %v11236
      %v11636 = vpop.f32.mrf.mxu0
      %v11637 = vadd.f32 %v10902, %v11636
      %11638 = vmatmul.f32.gmra.mxu0 %v11239
      %v11639 = vpop.f32.mrf.mxu0
      %v11640 = vadd.f32 %v10902, %v11639
      %11641 = vmatmul.f32.gmra.mxu0 %v11242
      %v11642 = vpop.f32.mrf.mxu0
      %v11643 = vadd.f32 %v10902, %v11642
      %11644 = vmatmul.f32.gmra.mxu0 %v11245
      %v11645 = vpop.f32.mrf.mxu0
      %v11646 = vadd.f32 %v10902, %v11645
      %11647 = vmatmul.f32.gmra.mxu0 %v11248
      %v11648 = vpop.f32.mrf.mxu0
      %v11649 = vadd.f32 %v10902, %v11648
      %11650 = vmatmul.f32.gmra.mxu0 %v11251
      %v11651 = vpop.f32.mrf.mxu0
      %v11652 = vadd.f32 %v10902, %v11651
      %11653 = vmatmul.f32.gmra.mxu0 %v11254
      %v11654 = vpop.f32.mrf.mxu0
      %v11655 = vadd.f32 %v10902, %v11654
      %11656 = vmatmul.f32.gmra.mxu0 %v11257
      %v11657 = vpop.f32.mrf.mxu0
      %v11658 = vadd.f32 %v10902, %v11657
      %11659 = vmatmul.f32.gmra.mxu0 %v11260
      %v11660 = vpop.f32.mrf.mxu0
      %v11661 = vadd.f32 %v10902, %v11660
      %11662 = vmatmul.f32.gmra.mxu0 %v11263
      %v11663 = vpop.f32.mrf.mxu0
      %v11664 = vadd.f32 %v10902, %v11663
      %11665 = vmatmul.f32.gmra.mxu0 %v11266
      %v11666 = vpop.f32.mrf.mxu0
      %v11667 = vadd.f32 %v10902, %v11666
      %11668 = vmatmul.f32.gmra.mxu0 %v11269
      %v11669 = vpop.f32.mrf.mxu0
      %v11670 = vadd.f32 %v10902, %v11669
      %11671 = vmatmul.f32.gmra.mxu0 %v11272
      %v11672 = vpop.f32.mrf.mxu0
      %v11673 = vadd.f32 %v10902, %v11672
      %11674 = vmatmul.f32.gmra.mxu0 %v11275
      %v11675 = vpop.f32.mrf.mxu0
      %v11676 = vadd.f32 %v10902, %v11675
      %11677 = vmatmul.f32.gmra.mxu0 %v11278
      %v11678 = vpop.f32.mrf.mxu0
      %v11679 = vadd.f32 %v10902, %v11678
      %11680 = vmatmul.f32.gmra.mxu0 %v11281
      %v11681 = vpop.f32.mrf.mxu0
      %v11682 = vadd.f32 %v10902, %v11681
      %11683 = vmatmul.f32.gmra.mxu0 %v11284
      %v11684 = vpop.f32.mrf.mxu0
      %v11685 = vadd.f32 %v10902, %v11684
      %11686 = vmatmul.f32.gmra.mxu0 %v11287
      %v11687 = vpop.f32.mrf.mxu0
      %v11688 = vadd.f32 %v10902, %v11687
      %11689 = vdwg.mxu0
      %11690 = vrot.lane.b32.xlu0 %v9460, 64
      %v11691 = vpop.permute.xlu0 %11690
      %11692 = vrot.lane.b32.xlu0 %v9463, 64
      %v11693 = vpop.permute.xlu0 %11692
      %11694 = vrot.lane.b32.xlu0 %v9466, 64
      %v11695 = vpop.permute.xlu0 %11694
      %11696 = vrot.lane.b32.xlu0 %v9469, 64
      %v11697 = vpop.permute.xlu0 %11696
      %11698 = vrot.lane.b32.xlu0 %v9472, 64
      %v11699 = vpop.permute.xlu0 %11698
      %11700 = vrot.lane.b32.xlu0 %v9475, 64
      %v11701 = vpop.permute.xlu0 %11700
      %11702 = vrot.lane.b32.xlu0 %v9478, 64
      %v11703 = vpop.permute.xlu0 %11702
      %11704 = vrot.lane.b32.xlu0 %v9481, 64
      %v11705 = vpop.permute.xlu0 %11704
      %11706 = vrot.lane.b32.xlu0 %v9484, 64
      %v11707 = vpop.permute.xlu0 %11706
      %11708 = vrot.lane.b32.xlu0 %v9487, 64
      %v11709 = vpop.permute.xlu0 %11708
      %11710 = vrot.lane.b32.xlu0 %v9490, 64
      %v11711 = vpop.permute.xlu0 %11710
      %11712 = vrot.lane.b32.xlu0 %v9493, 64
      %v11713 = vpop.permute.xlu0 %11712
      %11714 = vrot.lane.b32.xlu0 %v9496, 64
      %v11715 = vpop.permute.xlu0 %11714
      %11716 = vrot.lane.b32.xlu0 %v9499, 64
      %v11717 = vpop.permute.xlu0 %11716
      %11718 = vrot.lane.b32.xlu0 %v9502, 64
      %v11719 = vpop.permute.xlu0 %11718
      %11720 = vrot.lane.b32.xlu0 %v9505, 64
      %v11721 = vpop.permute.xlu0 %11720
      %11722 = vrot.lane.b32.xlu0 %v9508, 64
      %v11723 = vpop.permute.xlu0 %11722
      %11724 = vrot.lane.b32.xlu0 %v9511, 64
      %v11725 = vpop.permute.xlu0 %11724
      %11726 = vrot.lane.b32.xlu0 %v9514, 64
      %v11727 = vpop.permute.xlu0 %11726
      %11728 = vrot.lane.b32.xlu0 %v9517, 64
      %v11729 = vpop.permute.xlu0 %11728
      %11730 = vrot.lane.b32.xlu0 %v9520, 64
      %v11731 = vpop.permute.xlu0 %11730
      %11732 = vrot.lane.b32.xlu0 %v9523, 64
      %v11733 = vpop.permute.xlu0 %11732
      %11734 = vrot.lane.b32.xlu0 %v9526, 64
      %v11735 = vpop.permute.xlu0 %11734
      %11736 = vrot.lane.b32.xlu0 %v9529, 64
      %v11737 = vpop.permute.xlu0 %11736
      %11738 = vrot.lane.b32.xlu0 %v9532, 64
      %v11739 = vpop.permute.xlu0 %11738
      %11740 = vrot.lane.b32.xlu0 %v9535, 64
      %v11741 = vpop.permute.xlu0 %11740
      %11742 = vrot.lane.b32.xlu0 %v9538, 64
      %v11743 = vpop.permute.xlu0 %11742
      %11744 = vrot.lane.b32.xlu0 %v9541, 64
      %v11745 = vpop.permute.xlu0 %11744
      %11746 = vrot.lane.b32.xlu0 %v9544, 64
      %v11747 = vpop.permute.xlu0 %11746
      %11748 = vrot.lane.b32.xlu0 %v9547, 64
      %v11749 = vpop.permute.xlu0 %11748
      %11750 = vrot.lane.b32.xlu0 %v9550, 64
      %v11751 = vpop.permute.xlu0 %11750
      %11752 = vrot.lane.b32.xlu0 %v9553, 64
      %v11753 = vpop.permute.xlu0 %11752
      %11754 = vrot.lane.b32.xlu0 %v9556, 64
      %v11755 = vpop.permute.xlu0 %11754
      %11756 = vrot.lane.b32.xlu0 %v9559, 64
      %v11757 = vpop.permute.xlu0 %11756
      %11758 = vrot.lane.b32.xlu0 %v9562, 64
      %v11759 = vpop.permute.xlu0 %11758
      %11760 = vrot.lane.b32.xlu0 %v9565, 64
      %v11761 = vpop.permute.xlu0 %11760
      %11762 = vrot.lane.b32.xlu0 %v9568, 64
      %v11763 = vpop.permute.xlu0 %11762
      %11764 = vrot.lane.b32.xlu0 %v9571, 64
      %v11765 = vpop.permute.xlu0 %11764
      %11766 = vrot.lane.b32.xlu0 %v9574, 64
      %v11767 = vpop.permute.xlu0 %11766
      %11768 = vrot.lane.b32.xlu0 %v9577, 64
      %v11769 = vpop.permute.xlu0 %11768
      %11770 = vrot.lane.b32.xlu0 %v9580, 64
      %v11771 = vpop.permute.xlu0 %11770
      %11772 = vrot.lane.b32.xlu0 %v9583, 64
      %v11773 = vpop.permute.xlu0 %11772
      %11774 = vrot.lane.b32.xlu0 %v9586, 64
      %v11775 = vpop.permute.xlu0 %11774
      %11776 = vrot.lane.b32.xlu0 %v9589, 64
      %v11777 = vpop.permute.xlu0 %11776
      %11778 = vrot.lane.b32.xlu0 %v9592, 64
      %v11779 = vpop.permute.xlu0 %11778
      %11780 = vrot.lane.b32.xlu0 %v9595, 64
      %v11781 = vpop.permute.xlu0 %11780
      %11782 = vrot.lane.b32.xlu0 %v9598, 64
      %v11783 = vpop.permute.xlu0 %11782
      %11784 = vrot.lane.b32.xlu0 %v9601, 64
      %v11785 = vpop.permute.xlu0 %11784
      %11786 = vrot.lane.b32.xlu0 %v9604, 64
      %v11787 = vpop.permute.xlu0 %11786
      %11788 = vrot.lane.b32.xlu0 %v9607, 64
      %v11789 = vpop.permute.xlu0 %11788
      %11790 = vrot.lane.b32.xlu0 %v9610, 64
      %v11791 = vpop.permute.xlu0 %11790
      %11792 = vrot.lane.b32.xlu0 %v9613, 64
      %v11793 = vpop.permute.xlu0 %11792
      %11794 = vrot.lane.b32.xlu0 %v9616, 64
      %v11795 = vpop.permute.xlu0 %11794
      %11796 = vrot.lane.b32.xlu0 %v9619, 64
      %v11797 = vpop.permute.xlu0 %11796
      %11798 = vrot.lane.b32.xlu0 %v9622, 64
      %v11799 = vpop.permute.xlu0 %11798
      %11800 = vrot.lane.b32.xlu0 %v9625, 64
      %v11801 = vpop.permute.xlu0 %11800
      %11802 = vrot.lane.b32.xlu0 %v9628, 64
      %v11803 = vpop.permute.xlu0 %11802
      %11804 = vrot.lane.b32.xlu0 %v9631, 64
      %v11805 = vpop.permute.xlu0 %11804
      %11806 = vrot.lane.b32.xlu0 %v9634, 64
      %v11807 = vpop.permute.xlu0 %11806
      %11808 = vrot.lane.b32.xlu0 %v9637, 64
      %v11809 = vpop.permute.xlu0 %11808
      %11810 = vrot.lane.b32.xlu0 %v9640, 64
      %v11811 = vpop.permute.xlu0 %11810
      %11812 = vrot.lane.b32.xlu0 %v9643, 64
      %v11813 = vpop.permute.xlu0 %11812
      %11814 = vrot.lane.b32.xlu0 %v9646, 64
      %v11815 = vpop.permute.xlu0 %11814
      %11816 = vrot.lane.b32.xlu0 %v9649, 64
      %v11817 = vpop.permute.xlu0 %11816
      %11818 = vrot.lane.b32.xlu0 %v9652, 64
      %v11819 = vpop.permute.xlu0 %11818
      %11820 = vrot.lane.b32.xlu0 %v9655, 64
      %v11821 = vpop.permute.xlu0 %11820
      %11822 = vrot.lane.b32.xlu0 %v9658, 64
      %v11823 = vpop.permute.xlu0 %11822
      %11824 = vrot.lane.b32.xlu0 %v9661, 64
      %v11825 = vpop.permute.xlu0 %11824
      %11826 = vrot.lane.b32.xlu0 %v9664, 64
      %v11827 = vpop.permute.xlu0 %11826
      %11828 = vrot.lane.b32.xlu0 %v9667, 64
      %v11829 = vpop.permute.xlu0 %11828
      %11830 = vrot.lane.b32.xlu0 %v9670, 64
      %v11831 = vpop.permute.xlu0 %11830
      %11832 = vrot.lane.b32.xlu0 %v9673, 64
      %v11833 = vpop.permute.xlu0 %11832
      %11834 = vrot.lane.b32.xlu0 %v9676, 64
      %v11835 = vpop.permute.xlu0 %11834
      %11836 = vrot.lane.b32.xlu0 %v9679, 64
      %v11837 = vpop.permute.xlu0 %11836
      %11838 = vrot.lane.b32.xlu0 %v9682, 64
      %v11839 = vpop.permute.xlu0 %11838
      %11840 = vrot.lane.b32.xlu0 %v9685, 64
      %v11841 = vpop.permute.xlu0 %11840
      %11842 = vrot.lane.b32.xlu0 %v9688, 64
      %v11843 = vpop.permute.xlu0 %11842
      %11844 = vrot.lane.b32.xlu0 %v9691, 64
      %v11845 = vpop.permute.xlu0 %11844
      %11846 = vrot.lane.b32.xlu0 %v9694, 64
      %v11847 = vpop.permute.xlu0 %11846
      %11848 = vrot.lane.b32.xlu0 %v9697, 64
      %v11849 = vpop.permute.xlu0 %11848
      %11850 = vrot.lane.b32.xlu0 %v9700, 64
      %v11851 = vpop.permute.xlu0 %11850
      %11852 = vrot.lane.b32.xlu0 %v9703, 64
      %v11853 = vpop.permute.xlu0 %11852
      %11854 = vrot.lane.b32.xlu0 %v9706, 64
      %v11855 = vpop.permute.xlu0 %11854
      %11856 = vrot.lane.b32.xlu0 %v9709, 64
      %v11857 = vpop.permute.xlu0 %11856
      %11858 = vrot.lane.b32.xlu0 %v9712, 64
      %v11859 = vpop.permute.xlu0 %11858
      %11860 = vrot.lane.b32.xlu0 %v9715, 64
      %v11861 = vpop.permute.xlu0 %11860
      %11862 = vrot.lane.b32.xlu0 %v9718, 64
      %v11863 = vpop.permute.xlu0 %11862
      %11864 = vrot.lane.b32.xlu0 %v9721, 64
      %v11865 = vpop.permute.xlu0 %11864
      %11866 = vrot.lane.b32.xlu0 %v9724, 64
      %v11867 = vpop.permute.xlu0 %11866
      %11868 = vrot.lane.b32.xlu0 %v9727, 64
      %v11869 = vpop.permute.xlu0 %11868
      %11870 = vrot.lane.b32.xlu0 %v9730, 64
      %v11871 = vpop.permute.xlu0 %11870
      %11872 = vrot.lane.b32.xlu0 %v9733, 64
      %v11873 = vpop.permute.xlu0 %11872
      %11874 = vrot.lane.b32.xlu0 %v9736, 64
      %v11875 = vpop.permute.xlu0 %11874
      %11876 = vrot.lane.b32.xlu0 %v9739, 64
      %v11877 = vpop.permute.xlu0 %11876
      %11878 = vrot.lane.b32.xlu0 %v9742, 64
      %v11879 = vpop.permute.xlu0 %11878
      %11880 = vrot.lane.b32.xlu0 %v9745, 64
      %v11881 = vpop.permute.xlu0 %11880
      %11882 = vrot.lane.b32.xlu0 %v9748, 64
      %v11883 = vpop.permute.xlu0 %11882
      %11884 = vrot.lane.b32.xlu0 %v9751, 64
      %v11885 = vpop.permute.xlu0 %11884
      %11886 = vrot.lane.b32.xlu0 %v9754, 64
      %v11887 = vpop.permute.xlu0 %11886
      %11888 = vrot.lane.b32.xlu0 %v9757, 64
      %v11889 = vpop.permute.xlu0 %11888
      %11890 = vrot.lane.b32.xlu0 %v9760, 64
      %v11891 = vpop.permute.xlu0 %11890
      %11892 = vrot.lane.b32.xlu0 %v9763, 64
      %v11893 = vpop.permute.xlu0 %11892
      %11894 = vrot.lane.b32.xlu0 %v9766, 64
      %v11895 = vpop.permute.xlu0 %11894
      %11896 = vrot.lane.b32.xlu0 %v9769, 64
      %v11897 = vpop.permute.xlu0 %11896
      %11898 = vrot.lane.b32.xlu0 %v9772, 64
      %v11899 = vpop.permute.xlu0 %11898
      %11900 = vrot.lane.b32.xlu0 %v9775, 64
      %v11901 = vpop.permute.xlu0 %11900
      %11902 = vrot.lane.b32.xlu0 %v9778, 64
      %v11903 = vpop.permute.xlu0 %11902
      %11904 = vrot.lane.b32.xlu0 %v9781, 64
      %v11905 = vpop.permute.xlu0 %11904
      %11906 = vrot.lane.b32.xlu0 %v9784, 64
      %v11907 = vpop.permute.xlu0 %11906
      %11908 = vrot.lane.b32.xlu0 %v9787, 64
      %v11909 = vpop.permute.xlu0 %11908
      %11910 = vrot.lane.b32.xlu0 %v9790, 64
      %v11911 = vpop.permute.xlu0 %11910
      %11912 = vrot.lane.b32.xlu0 %v9793, 64
      %v11913 = vpop.permute.xlu0 %11912
      %11914 = vrot.lane.b32.xlu0 %v9796, 64
      %v11915 = vpop.permute.xlu0 %11914
      %11916 = vrot.lane.b32.xlu0 %v9799, 64
      %v11917 = vpop.permute.xlu0 %11916
      %11918 = vrot.lane.b32.xlu0 %v9802, 64
      %v11919 = vpop.permute.xlu0 %11918
      %11920 = vrot.lane.b32.xlu0 %v9805, 64
      %v11921 = vpop.permute.xlu0 %11920
      %11922 = vrot.lane.b32.xlu0 %v9808, 64
      %v11923 = vpop.permute.xlu0 %11922
      %11924 = vrot.lane.b32.xlu0 %v9811, 64
      %v11925 = vpop.permute.xlu0 %11924
      %11926 = vrot.lane.b32.xlu0 %v9814, 64
      %v11927 = vpop.permute.xlu0 %11926
      %11928 = vrot.lane.b32.xlu0 %v9817, 64
      %v11929 = vpop.permute.xlu0 %11928
      %11930 = vrot.lane.b32.xlu0 %v9820, 64
      %v11931 = vpop.permute.xlu0 %11930
      %11932 = vrot.lane.b32.xlu0 %v9823, 64
      %v11933 = vpop.permute.xlu0 %11932
      %11934 = vrot.lane.b32.xlu0 %v9826, 64
      %v11935 = vpop.permute.xlu0 %11934
      %11936 = vrot.lane.b32.xlu0 %v9829, 64
      %v11937 = vpop.permute.xlu0 %11936
      %11938 = vrot.lane.b32.xlu0 %v9832, 64
      %v11939 = vpop.permute.xlu0 %11938
      %11940 = vrot.lane.b32.xlu0 %v9835, 64
      %v11941 = vpop.permute.xlu0 %11940
      %11942 = vrot.lane.b32.xlu0 %v9838, 64
      %v11943 = vpop.permute.xlu0 %11942
      %11944 = vrot.lane.b32.xlu0 %v9841, 64
      %v11945 = vpop.permute.xlu0 %11944
      %vm12074 = vcmask 7168
      %12075 = vst.msk [vmem:[%s361] sm:$0xff] %vm12074, %v11691
      %12076 = vst.msk [vmem:[%s361 + $0x8] sm:$0xff] %vm12074, %v11693
      %12077 = vst.msk [vmem:[%s361 + $0x10] sm:$0xff] %vm12074, %v11695
      %12078 = vst.msk [vmem:[%s361 + $0x18] sm:$0xff] %vm12074, %v11697
      %12079 = vst.msk [vmem:[%s361 + $0x20] sm:$0xff] %vm12074, %v11699
      %12080 = vst.msk [vmem:[%s361 + $0x28] sm:$0xff] %vm12074, %v11701
      %12081 = vst.msk [vmem:[%s361 + $0x30] sm:$0xff] %vm12074, %v11703
      %12082 = vst.msk [vmem:[%s361 + $0x38] sm:$0xff] %vm12074, %v11705
      %12083 = vst.msk [vmem:[%s361 + $0x40] sm:$0xff] %vm12074, %v11707
      %12084 = vst.msk [vmem:[%s361 + $0x48] sm:$0xff] %vm12074, %v11709
      %12085 = vst.msk [vmem:[%s361 + $0x50] sm:$0xff] %vm12074, %v11711
      %12086 = vst.msk [vmem:[%s361 + $0x58] sm:$0xff] %vm12074, %v11713
      %12087 = vst.msk [vmem:[%s361 + $0x60] sm:$0xff] %vm12074, %v11715
      %12088 = vst.msk [vmem:[%s361 + $0x68] sm:$0xff] %vm12074, %v11717
      %12089 = vst.msk [vmem:[%s361 + $0x70] sm:$0xff] %vm12074, %v11719
      %12090 = vst.msk [vmem:[%s361 + $0x78] sm:$0xff] %vm12074, %v11721
      %12091 = vst.msk [vmem:[%s361 + $0x80] sm:$0xff] %vm12074, %v11723
      %12092 = vst.msk [vmem:[%s361 + $0x88] sm:$0xff] %vm12074, %v11725
      %12093 = vst.msk [vmem:[%s361 + $0x90] sm:$0xff] %vm12074, %v11727
      %12094 = vst.msk [vmem:[%s361 + $0x98] sm:$0xff] %vm12074, %v11729
      %12095 = vst.msk [vmem:[%s361 + $0xa0] sm:$0xff] %vm12074, %v11731
      %12096 = vst.msk [vmem:[%s361 + $0xa8] sm:$0xff] %vm12074, %v11733
      %12097 = vst.msk [vmem:[%s361 + $0xb0] sm:$0xff] %vm12074, %v11735
      %12098 = vst.msk [vmem:[%s361 + $0xb8] sm:$0xff] %vm12074, %v11737
      %12099 = vst.msk [vmem:[%s361 + $0xc0] sm:$0xff] %vm12074, %v11739
      %12100 = vst.msk [vmem:[%s361 + $0xc8] sm:$0xff] %vm12074, %v11741
      %12101 = vst.msk [vmem:[%s361 + $0xd0] sm:$0xff] %vm12074, %v11743
      %12102 = vst.msk [vmem:[%s361 + $0xd8] sm:$0xff] %vm12074, %v11745
      %12103 = vst.msk [vmem:[%s361 + $0xe0] sm:$0xff] %vm12074, %v11747
      %12104 = vst.msk [vmem:[%s361 + $0xe8] sm:$0xff] %vm12074, %v11749
      %12105 = vst.msk [vmem:[%s361 + $0xf0] sm:$0xff] %vm12074, %v11751
      %12106 = vst.msk [vmem:[%s361 + $0xf8] sm:$0xff] %vm12074, %v11753
      %12107 = vst.msk [vmem:[%s361 + $0x100] sm:$0xff] %vm12074, %v11755
      %12108 = vst.msk [vmem:[%s361 + $0x108] sm:$0xff] %vm12074, %v11757
      %12109 = vst.msk [vmem:[%s361 + $0x110] sm:$0xff] %vm12074, %v11759
      %12110 = vst.msk [vmem:[%s361 + $0x118] sm:$0xff] %vm12074, %v11761
      %12111 = vst.msk [vmem:[%s361 + $0x120] sm:$0xff] %vm12074, %v11763
      %12112 = vst.msk [vmem:[%s361 + $0x128] sm:$0xff] %vm12074, %v11765
      %12113 = vst.msk [vmem:[%s361 + $0x130] sm:$0xff] %vm12074, %v11767
      %12114 = vst.msk [vmem:[%s361 + $0x138] sm:$0xff] %vm12074, %v11769
      %12115 = vst.msk [vmem:[%s361 + $0x140] sm:$0xff] %vm12074, %v11771
      %12116 = vst.msk [vmem:[%s361 + $0x148] sm:$0xff] %vm12074, %v11773
      %12117 = vst.msk [vmem:[%s361 + $0x150] sm:$0xff] %vm12074, %v11775
      %12118 = vst.msk [vmem:[%s361 + $0x158] sm:$0xff] %vm12074, %v11777
      %12119 = vst.msk [vmem:[%s361 + $0x160] sm:$0xff] %vm12074, %v11779
      %12120 = vst.msk [vmem:[%s361 + $0x168] sm:$0xff] %vm12074, %v11781
      %12121 = vst.msk [vmem:[%s361 + $0x170] sm:$0xff] %vm12074, %v11783
      %12122 = vst.msk [vmem:[%s361 + $0x178] sm:$0xff] %vm12074, %v11785
      %12123 = vst.msk [vmem:[%s361 + $0x180] sm:$0xff] %vm12074, %v11787
      %12124 = vst.msk [vmem:[%s361 + $0x188] sm:$0xff] %vm12074, %v11789
      %12125 = vst.msk [vmem:[%s361 + $0x190] sm:$0xff] %vm12074, %v11791
      %12126 = vst.msk [vmem:[%s361 + $0x198] sm:$0xff] %vm12074, %v11793
      %12127 = vst.msk [vmem:[%s361 + $0x1a0] sm:$0xff] %vm12074, %v11795
      %12128 = vst.msk [vmem:[%s361 + $0x1a8] sm:$0xff] %vm12074, %v11797
      %12129 = vst.msk [vmem:[%s361 + $0x1b0] sm:$0xff] %vm12074, %v11799
      %12130 = vst.msk [vmem:[%s361 + $0x1b8] sm:$0xff] %vm12074, %v11801
      %12131 = vst.msk [vmem:[%s361 + $0x1c0] sm:$0xff] %vm12074, %v11803
      %12132 = vst.msk [vmem:[%s361 + $0x1c8] sm:$0xff] %vm12074, %v11805
      %12133 = vst.msk [vmem:[%s361 + $0x1d0] sm:$0xff] %vm12074, %v11807
      %12134 = vst.msk [vmem:[%s361 + $0x1d8] sm:$0xff] %vm12074, %v11809
      %12135 = vst.msk [vmem:[%s361 + $0x1e0] sm:$0xff] %vm12074, %v11811
      %12136 = vst.msk [vmem:[%s361 + $0x1e8] sm:$0xff] %vm12074, %v11813
      %12137 = vst.msk [vmem:[%s361 + $0x1f0] sm:$0xff] %vm12074, %v11815
      %12138 = vst.msk [vmem:[%s361 + $0x1f8] sm:$0xff] %vm12074, %v11817
      %12139 = vst.msk [vmem:[%s361 + $0x200] sm:$0xff] %vm12074, %v11819
      %12140 = vst.msk [vmem:[%s361 + $0x208] sm:$0xff] %vm12074, %v11821
      %12141 = vst.msk [vmem:[%s361 + $0x210] sm:$0xff] %vm12074, %v11823
      %12142 = vst.msk [vmem:[%s361 + $0x218] sm:$0xff] %vm12074, %v11825
      %12143 = vst.msk [vmem:[%s361 + $0x220] sm:$0xff] %vm12074, %v11827
      %12144 = vst.msk [vmem:[%s361 + $0x228] sm:$0xff] %vm12074, %v11829
      %12145 = vst.msk [vmem:[%s361 + $0x230] sm:$0xff] %vm12074, %v11831
      %12146 = vst.msk [vmem:[%s361 + $0x238] sm:$0xff] %vm12074, %v11833
      %12147 = vst.msk [vmem:[%s361 + $0x240] sm:$0xff] %vm12074, %v11835
      %12148 = vst.msk [vmem:[%s361 + $0x248] sm:$0xff] %vm12074, %v11837
      %12149 = vst.msk [vmem:[%s361 + $0x250] sm:$0xff] %vm12074, %v11839
      %12150 = vst.msk [vmem:[%s361 + $0x258] sm:$0xff] %vm12074, %v11841
      %12151 = vst.msk [vmem:[%s361 + $0x260] sm:$0xff] %vm12074, %v11843
      %12152 = vst.msk [vmem:[%s361 + $0x268] sm:$0xff] %vm12074, %v11845
      %12153 = vst.msk [vmem:[%s361 + $0x270] sm:$0xff] %vm12074, %v11847
      %12154 = vst.msk [vmem:[%s361 + $0x278] sm:$0xff] %vm12074, %v11849
      %12155 = vst.msk [vmem:[%s361 + $0x280] sm:$0xff] %vm12074, %v11851
      %12156 = vst.msk [vmem:[%s361 + $0x288] sm:$0xff] %vm12074, %v11853
      %12157 = vst.msk [vmem:[%s361 + $0x290] sm:$0xff] %vm12074, %v11855
      %12158 = vst.msk [vmem:[%s361 + $0x298] sm:$0xff] %vm12074, %v11857
      %12159 = vst.msk [vmem:[%s361 + $0x2a0] sm:$0xff] %vm12074, %v11859
      %12160 = vst.msk [vmem:[%s361 + $0x2a8] sm:$0xff] %vm12074, %v11861
      %12161 = vst.msk [vmem:[%s361 + $0x2b0] sm:$0xff] %vm12074, %v11863
      %12162 = vst.msk [vmem:[%s361 + $0x2b8] sm:$0xff] %vm12074, %v11865
      %12163 = vst.msk [vmem:[%s361 + $0x2c0] sm:$0xff] %vm12074, %v11867
      %12164 = vst.msk [vmem:[%s361 + $0x2c8] sm:$0xff] %vm12074, %v11869
      %12165 = vst.msk [vmem:[%s361 + $0x2d0] sm:$0xff] %vm12074, %v11871
      %12166 = vst.msk [vmem:[%s361 + $0x2d8] sm:$0xff] %vm12074, %v11873
      %12167 = vst.msk [vmem:[%s361 + $0x2e0] sm:$0xff] %vm12074, %v11875
      %12168 = vst.msk [vmem:[%s361 + $0x2e8] sm:$0xff] %vm12074, %v11877
      %12169 = vst.msk [vmem:[%s361 + $0x2f0] sm:$0xff] %vm12074, %v11879
      %12170 = vst.msk [vmem:[%s361 + $0x2f8] sm:$0xff] %vm12074, %v11881
      %12171 = vst.msk [vmem:[%s361 + $0x300] sm:$0xff] %vm12074, %v11883
      %12172 = vst.msk [vmem:[%s361 + $0x308] sm:$0xff] %vm12074, %v11885
      %12173 = vst.msk [vmem:[%s361 + $0x310] sm:$0xff] %vm12074, %v11887
      %12174 = vst.msk [vmem:[%s361 + $0x318] sm:$0xff] %vm12074, %v11889
      %12175 = vst.msk [vmem:[%s361 + $0x320] sm:$0xff] %vm12074, %v11891
      %12176 = vst.msk [vmem:[%s361 + $0x328] sm:$0xff] %vm12074, %v11893
      %12177 = vst.msk [vmem:[%s361 + $0x330] sm:$0xff] %vm12074, %v11895
      %12178 = vst.msk [vmem:[%s361 + $0x338] sm:$0xff] %vm12074, %v11897
      %12179 = vst.msk [vmem:[%s361 + $0x340] sm:$0xff] %vm12074, %v11899
      %12180 = vst.msk [vmem:[%s361 + $0x348] sm:$0xff] %vm12074, %v11901
      %12181 = vst.msk [vmem:[%s361 + $0x350] sm:$0xff] %vm12074, %v11903
      %12182 = vst.msk [vmem:[%s361 + $0x358] sm:$0xff] %vm12074, %v11905
      %12183 = vst.msk [vmem:[%s361 + $0x360] sm:$0xff] %vm12074, %v11907
      %12184 = vst.msk [vmem:[%s361 + $0x368] sm:$0xff] %vm12074, %v11909
      %12185 = vst.msk [vmem:[%s361 + $0x370] sm:$0xff] %vm12074, %v11911
      %12186 = vst.msk [vmem:[%s361 + $0x378] sm:$0xff] %vm12074, %v11913
      %12187 = vst.msk [vmem:[%s361 + $0x380] sm:$0xff] %vm12074, %v11915
      %12188 = vst.msk [vmem:[%s361 + $0x388] sm:$0xff] %vm12074, %v11917
      %12189 = vst.msk [vmem:[%s361 + $0x390] sm:$0xff] %vm12074, %v11919
      %12190 = vst.msk [vmem:[%s361 + $0x398] sm:$0xff] %vm12074, %v11921
      %12191 = vst.msk [vmem:[%s361 + $0x3a0] sm:$0xff] %vm12074, %v11923
      %12192 = vst.msk [vmem:[%s361 + $0x3a8] sm:$0xff] %vm12074, %v11925
      %12193 = vst.msk [vmem:[%s361 + $0x3b0] sm:$0xff] %vm12074, %v11927
      %12194 = vst.msk [vmem:[%s361 + $0x3b8] sm:$0xff] %vm12074, %v11929
      %12195 = vst.msk [vmem:[%s361 + $0x3c0] sm:$0xff] %vm12074, %v11931
      %12196 = vst.msk [vmem:[%s361 + $0x3c8] sm:$0xff] %vm12074, %v11933
      %12197 = vst.msk [vmem:[%s361 + $0x3d0] sm:$0xff] %vm12074, %v11935
      %12198 = vst.msk [vmem:[%s361 + $0x3d8] sm:$0xff] %vm12074, %v11937
      %12199 = vst.msk [vmem:[%s361 + $0x3e0] sm:$0xff] %vm12074, %v11939
      %12200 = vst.msk [vmem:[%s361 + $0x3e8] sm:$0xff] %vm12074, %v11941
      %12201 = vst.msk [vmem:[%s361 + $0x3f0] sm:$0xff] %vm12074, %v11943
      %12202 = vst.msk [vmem:[%s361 + $0x3f8] sm:$0xff] %vm12074, %v11945
      %12331 = vrot.lane.b32.xlu0 %v11307, 1
      %v12332 = vpop.permute.xlu0 %12331
      %12333 = vrot.lane.b32.xlu0 %v11310, 1
      %v12334 = vpop.permute.xlu0 %12333
      %12335 = vrot.lane.b32.xlu0 %v11313, 1
      %v12336 = vpop.permute.xlu0 %12335
      %12337 = vrot.lane.b32.xlu0 %v11316, 1
      %v12338 = vpop.permute.xlu0 %12337
      %12339 = vrot.lane.b32.xlu0 %v11319, 1
      %v12340 = vpop.permute.xlu0 %12339
      %12341 = vrot.lane.b32.xlu0 %v11322, 1
      %v12342 = vpop.permute.xlu0 %12341
      %12343 = vrot.lane.b32.xlu0 %v11325, 1
      %v12344 = vpop.permute.xlu0 %12343
      %12345 = vrot.lane.b32.xlu0 %v11328, 1
      %v12346 = vpop.permute.xlu0 %12345
      %12347 = vrot.lane.b32.xlu0 %v11331, 1
      %v12348 = vpop.permute.xlu0 %12347
      %12349 = vrot.lane.b32.xlu0 %v11334, 1
      %v12350 = vpop.permute.xlu0 %12349
      %12351 = vrot.lane.b32.xlu0 %v11337, 1
      %v12352 = vpop.permute.xlu0 %12351
      %12353 = vrot.lane.b32.xlu0 %v11340, 1
      %v12354 = vpop.permute.xlu0 %12353
      %12355 = vrot.lane.b32.xlu0 %v11343, 1
      %v12356 = vpop.permute.xlu0 %12355
      %12357 = vrot.lane.b32.xlu0 %v11346, 1
      %v12358 = vpop.permute.xlu0 %12357
      %12359 = vrot.lane.b32.xlu0 %v11349, 1
      %v12360 = vpop.permute.xlu0 %12359
      %12361 = vrot.lane.b32.xlu0 %v11352, 1
      %v12362 = vpop.permute.xlu0 %12361
      %12363 = vrot.lane.b32.xlu0 %v11355, 1
      %v12364 = vpop.permute.xlu0 %12363
      %12365 = vrot.lane.b32.xlu0 %v11358, 1
      %v12366 = vpop.permute.xlu0 %12365
      %12367 = vrot.lane.b32.xlu0 %v11361, 1
      %v12368 = vpop.permute.xlu0 %12367
      %12369 = vrot.lane.b32.xlu0 %v11364, 1
      %v12370 = vpop.permute.xlu0 %12369
      %12371 = vrot.lane.b32.xlu0 %v11367, 1
      %v12372 = vpop.permute.xlu0 %12371
      %12373 = vrot.lane.b32.xlu0 %v11370, 1
      %v12374 = vpop.permute.xlu0 %12373
      %12375 = vrot.lane.b32.xlu0 %v11373, 1
      %v12376 = vpop.permute.xlu0 %12375
      %12377 = vrot.lane.b32.xlu0 %v11376, 1
      %v12378 = vpop.permute.xlu0 %12377
      %12379 = vrot.lane.b32.xlu0 %v11379, 1
      %v12380 = vpop.permute.xlu0 %12379
      %12381 = vrot.lane.b32.xlu0 %v11382, 1
      %v12382 = vpop.permute.xlu0 %12381
      %12383 = vrot.lane.b32.xlu0 %v11385, 1
      %v12384 = vpop.permute.xlu0 %12383
      %12385 = vrot.lane.b32.xlu0 %v11388, 1
      %v12386 = vpop.permute.xlu0 %12385
      %12387 = vrot.lane.b32.xlu0 %v11391, 1
      %v12388 = vpop.permute.xlu0 %12387
      %12389 = vrot.lane.b32.xlu0 %v11394, 1
      %v12390 = vpop.permute.xlu0 %12389
      %12391 = vrot.lane.b32.xlu0 %v11397, 1
      %v12392 = vpop.permute.xlu0 %12391
      %12393 = vrot.lane.b32.xlu0 %v11400, 1
      %v12394 = vpop.permute.xlu0 %12393
      %12395 = vrot.lane.b32.xlu0 %v11403, 1
      %v12396 = vpop.permute.xlu0 %12395
      %12397 = vrot.lane.b32.xlu0 %v11406, 1
      %v12398 = vpop.permute.xlu0 %12397
      %12399 = vrot.lane.b32.xlu0 %v11409, 1
      %v12400 = vpop.permute.xlu0 %12399
      %12401 = vrot.lane.b32.xlu0 %v11412, 1
      %v12402 = vpop.permute.xlu0 %12401
      %12403 = vrot.lane.b32.xlu0 %v11415, 1
      %v12404 = vpop.permute.xlu0 %12403
      %12405 = vrot.lane.b32.xlu0 %v11418, 1
      %v12406 = vpop.permute.xlu0 %12405
      %12407 = vrot.lane.b32.xlu0 %v11421, 1
      %v12408 = vpop.permute.xlu0 %12407
      %12409 = vrot.lane.b32.xlu0 %v11424, 1
      %v12410 = vpop.permute.xlu0 %12409
      %12411 = vrot.lane.b32.xlu0 %v11427, 1
      %v12412 = vpop.permute.xlu0 %12411
      %12413 = vrot.lane.b32.xlu0 %v11430, 1
      %v12414 = vpop.permute.xlu0 %12413
      %12415 = vrot.lane.b32.xlu0 %v11433, 1
      %v12416 = vpop.permute.xlu0 %12415
      %12417 = vrot.lane.b32.xlu0 %v11436, 1
      %v12418 = vpop.permute.xlu0 %12417
      %12419 = vrot.lane.b32.xlu0 %v11439, 1
      %v12420 = vpop.permute.xlu0 %12419
      %12421 = vrot.lane.b32.xlu0 %v11442, 1
      %v12422 = vpop.permute.xlu0 %12421
      %12423 = vrot.lane.b32.xlu0 %v11445, 1
      %v12424 = vpop.permute.xlu0 %12423
      %12425 = vrot.lane.b32.xlu0 %v11448, 1
      %v12426 = vpop.permute.xlu0 %12425
      %12427 = vrot.lane.b32.xlu0 %v11451, 1
      %v12428 = vpop.permute.xlu0 %12427
      %12429 = vrot.lane.b32.xlu0 %v11454, 1
      %v12430 = vpop.permute.xlu0 %12429
      %12431 = vrot.lane.b32.xlu0 %v11457, 1
      %v12432 = vpop.permute.xlu0 %12431
      %12433 = vrot.lane.b32.xlu0 %v11460, 1
      %v12434 = vpop.permute.xlu0 %12433
      %12435 = vrot.lane.b32.xlu0 %v11463, 1
      %v12436 = vpop.permute.xlu0 %12435
      %12437 = vrot.lane.b32.xlu0 %v11466, 1
      %v12438 = vpop.permute.xlu0 %12437
      %12439 = vrot.lane.b32.xlu0 %v11469, 1
      %v12440 = vpop.permute.xlu0 %12439
      %12441 = vrot.lane.b32.xlu0 %v11472, 1
      %v12442 = vpop.permute.xlu0 %12441
      %12443 = vrot.lane.b32.xlu0 %v11475, 1
      %v12444 = vpop.permute.xlu0 %12443
      %12445 = vrot.lane.b32.xlu0 %v11478, 1
      %v12446 = vpop.permute.xlu0 %12445
      %12447 = vrot.lane.b32.xlu0 %v11481, 1
      %v12448 = vpop.permute.xlu0 %12447
      %12449 = vrot.lane.b32.xlu0 %v11484, 1
      %v12450 = vpop.permute.xlu0 %12449
      %12451 = vrot.lane.b32.xlu0 %v11487, 1
      %v12452 = vpop.permute.xlu0 %12451
      %12453 = vrot.lane.b32.xlu0 %v11490, 1
      %v12454 = vpop.permute.xlu0 %12453
      %12455 = vrot.lane.b32.xlu0 %v11493, 1
      %v12456 = vpop.permute.xlu0 %12455
      %12457 = vrot.lane.b32.xlu0 %v11496, 1
      %v12458 = vpop.permute.xlu0 %12457
      %12459 = vrot.lane.b32.xlu0 %v11499, 1
      %v12460 = vpop.permute.xlu0 %12459
      %12461 = vrot.lane.b32.xlu0 %v11502, 1
      %v12462 = vpop.permute.xlu0 %12461
      %12463 = vrot.lane.b32.xlu0 %v11505, 1
      %v12464 = vpop.permute.xlu0 %12463
      %12465 = vrot.lane.b32.xlu0 %v11508, 1
      %v12466 = vpop.permute.xlu0 %12465
      %12467 = vrot.lane.b32.xlu0 %v11511, 1
      %v12468 = vpop.permute.xlu0 %12467
      %12469 = vrot.lane.b32.xlu0 %v11514, 1
      %v12470 = vpop.permute.xlu0 %12469
      %12471 = vrot.lane.b32.xlu0 %v11517, 1
      %v12472 = vpop.permute.xlu0 %12471
      %12473 = vrot.lane.b32.xlu0 %v11520, 1
      %v12474 = vpop.permute.xlu0 %12473
      %12475 = vrot.lane.b32.xlu0 %v11523, 1
      %v12476 = vpop.permute.xlu0 %12475
      %12477 = vrot.lane.b32.xlu0 %v11526, 1
      %v12478 = vpop.permute.xlu0 %12477
      %12479 = vrot.lane.b32.xlu0 %v11529, 1
      %v12480 = vpop.permute.xlu0 %12479
      %12481 = vrot.lane.b32.xlu0 %v11532, 1
      %v12482 = vpop.permute.xlu0 %12481
      %12483 = vrot.lane.b32.xlu0 %v11535, 1
      %v12484 = vpop.permute.xlu0 %12483
      %12485 = vrot.lane.b32.xlu0 %v11538, 1
      %v12486 = vpop.permute.xlu0 %12485
      %12487 = vrot.lane.b32.xlu0 %v11541, 1
      %v12488 = vpop.permute.xlu0 %12487
      %12489 = vrot.lane.b32.xlu0 %v11544, 1
      %v12490 = vpop.permute.xlu0 %12489
      %12491 = vrot.lane.b32.xlu0 %v11547, 1
      %v12492 = vpop.permute.xlu0 %12491
      %12493 = vrot.lane.b32.xlu0 %v11550, 1
      %v12494 = vpop.permute.xlu0 %12493
      %12495 = vrot.lane.b32.xlu0 %v11553, 1
      %v12496 = vpop.permute.xlu0 %12495
      %12497 = vrot.lane.b32.xlu0 %v11556, 1
      %v12498 = vpop.permute.xlu0 %12497
      %12499 = vrot.lane.b32.xlu0 %v11559, 1
      %v12500 = vpop.permute.xlu0 %12499
      %12501 = vrot.lane.b32.xlu0 %v11562, 1
      %v12502 = vpop.permute.xlu0 %12501
      %12503 = vrot.lane.b32.xlu0 %v11565, 1
      %v12504 = vpop.permute.xlu0 %12503
      %12505 = vrot.lane.b32.xlu0 %v11568, 1
      %v12506 = vpop.permute.xlu0 %12505
      %12507 = vrot.lane.b32.xlu0 %v11571, 1
      %v12508 = vpop.permute.xlu0 %12507
      %12509 = vrot.lane.b32.xlu0 %v11574, 1
      %v12510 = vpop.permute.xlu0 %12509
      %12511 = vrot.lane.b32.xlu0 %v11577, 1
      %v12512 = vpop.permute.xlu0 %12511
      %12513 = vrot.lane.b32.xlu0 %v11580, 1
      %v12514 = vpop.permute.xlu0 %12513
      %12515 = vrot.lane.b32.xlu0 %v11583, 1
      %v12516 = vpop.permute.xlu0 %12515
      %12517 = vrot.lane.b32.xlu0 %v11586, 1
      %v12518 = vpop.permute.xlu0 %12517
      %12519 = vrot.lane.b32.xlu0 %v11589, 1
      %v12520 = vpop.permute.xlu0 %12519
      %12521 = vrot.lane.b32.xlu0 %v11592, 1
      %v12522 = vpop.permute.xlu0 %12521
      %12523 = vrot.lane.b32.xlu0 %v11595, 1
      %v12524 = vpop.permute.xlu0 %12523
      %12525 = vrot.lane.b32.xlu0 %v11598, 1
      %v12526 = vpop.permute.xlu0 %12525
      %12527 = vrot.lane.b32.xlu0 %v11601, 1
      %v12528 = vpop.permute.xlu0 %12527
      %12529 = vrot.lane.b32.xlu0 %v11604, 1
      %v12530 = vpop.permute.xlu0 %12529
      %12531 = vrot.lane.b32.xlu0 %v11607, 1
      %v12532 = vpop.permute.xlu0 %12531
      %12533 = vrot.lane.b32.xlu0 %v11610, 1
      %v12534 = vpop.permute.xlu0 %12533
      %12535 = vrot.lane.b32.xlu0 %v11613, 1
      %v12536 = vpop.permute.xlu0 %12535
      %12537 = vrot.lane.b32.xlu0 %v11616, 1
      %v12538 = vpop.permute.xlu0 %12537
      %12539 = vrot.lane.b32.xlu0 %v11619, 1
      %v12540 = vpop.permute.xlu0 %12539
      %12541 = vrot.lane.b32.xlu0 %v11622, 1
      %v12542 = vpop.permute.xlu0 %12541
      %12543 = vrot.lane.b32.xlu0 %v11625, 1
      %v12544 = vpop.permute.xlu0 %12543
      %12545 = vrot.lane.b32.xlu0 %v11628, 1
      %v12546 = vpop.permute.xlu0 %12545
      %12547 = vrot.lane.b32.xlu0 %v11631, 1
      %v12548 = vpop.permute.xlu0 %12547
      %12549 = vrot.lane.b32.xlu0 %v11634, 1
      %v12550 = vpop.permute.xlu0 %12549
      %12551 = vrot.lane.b32.xlu0 %v11637, 1
      %v12552 = vpop.permute.xlu0 %12551
      %12553 = vrot.lane.b32.xlu0 %v11640, 1
      %v12554 = vpop.permute.xlu0 %12553
      %12555 = vrot.lane.b32.xlu0 %v11643, 1
      %v12556 = vpop.permute.xlu0 %12555
      %12557 = vrot.lane.b32.xlu0 %v11646, 1
      %v12558 = vpop.permute.xlu0 %12557
      %12559 = vrot.lane.b32.xlu0 %v11649, 1
      %v12560 = vpop.permute.xlu0 %12559
      %12561 = vrot.lane.b32.xlu0 %v11652, 1
      %v12562 = vpop.permute.xlu0 %12561
      %12563 = vrot.lane.b32.xlu0 %v11655, 1
      %v12564 = vpop.permute.xlu0 %12563
      %12565 = vrot.lane.b32.xlu0 %v11658, 1
      %v12566 = vpop.permute.xlu0 %12565
      %12567 = vrot.lane.b32.xlu0 %v11661, 1
      %v12568 = vpop.permute.xlu0 %12567
      %12569 = vrot.lane.b32.xlu0 %v11664, 1
      %v12570 = vpop.permute.xlu0 %12569
      %12571 = vrot.lane.b32.xlu0 %v11667, 1
      %v12572 = vpop.permute.xlu0 %12571
      %12573 = vrot.lane.b32.xlu0 %v11670, 1
      %v12574 = vpop.permute.xlu0 %12573
      %12575 = vrot.lane.b32.xlu0 %v11673, 1
      %v12576 = vpop.permute.xlu0 %12575
      %12577 = vrot.lane.b32.xlu0 %v11676, 1
      %v12578 = vpop.permute.xlu0 %12577
      %12579 = vrot.lane.b32.xlu0 %v11679, 1
      %v12580 = vpop.permute.xlu0 %12579
      %12581 = vrot.lane.b32.xlu0 %v11682, 1
      %v12582 = vpop.permute.xlu0 %12581
      %12583 = vrot.lane.b32.xlu0 %v11685, 1
      %v12584 = vpop.permute.xlu0 %12583
      %12585 = vrot.lane.b32.xlu0 %v11688, 1
      %v12586 = vpop.permute.xlu0 %12585
      %vm12715 = vcmask 31752
      %12716 = vst.msk [vmem:[%s361] sm:$0xff] %vm12715, %v12332
      %12717 = vst.msk [vmem:[%s361 + $0x8] sm:$0xff] %vm12715, %v12334
      %12718 = vst.msk [vmem:[%s361 + $0x10] sm:$0xff] %vm12715, %v12336
      %12719 = vst.msk [vmem:[%s361 + $0x18] sm:$0xff] %vm12715, %v12338
      %12720 = vst.msk [vmem:[%s361 + $0x20] sm:$0xff] %vm12715, %v12340
      %12721 = vst.msk [vmem:[%s361 + $0x28] sm:$0xff] %vm12715, %v12342
      %12722 = vst.msk [vmem:[%s361 + $0x30] sm:$0xff] %vm12715, %v12344
      %12723 = vst.msk [vmem:[%s361 + $0x38] sm:$0xff] %vm12715, %v12346
      %12724 = vst.msk [vmem:[%s361 + $0x40] sm:$0xff] %vm12715, %v12348
      %12725 = vst.msk [vmem:[%s361 + $0x48] sm:$0xff] %vm12715, %v12350
      %12726 = vst.msk [vmem:[%s361 + $0x50] sm:$0xff] %vm12715, %v12352
      %12727 = vst.msk [vmem:[%s361 + $0x58] sm:$0xff] %vm12715, %v12354
      %12728 = vst.msk [vmem:[%s361 + $0x60] sm:$0xff] %vm12715, %v12356
      %12729 = vst.msk [vmem:[%s361 + $0x68] sm:$0xff] %vm12715, %v12358
      %12730 = vst.msk [vmem:[%s361 + $0x70] sm:$0xff] %vm12715, %v12360
      %12731 = vst.msk [vmem:[%s361 + $0x78] sm:$0xff] %vm12715, %v12362
      %12732 = vst.msk [vmem:[%s361 + $0x80] sm:$0xff] %vm12715, %v12364
      %12733 = vst.msk [vmem:[%s361 + $0x88] sm:$0xff] %vm12715, %v12366
      %12734 = vst.msk [vmem:[%s361 + $0x90] sm:$0xff] %vm12715, %v12368
      %12735 = vst.msk [vmem:[%s361 + $0x98] sm:$0xff] %vm12715, %v12370
      %12736 = vst.msk [vmem:[%s361 + $0xa0] sm:$0xff] %vm12715, %v12372
      %12737 = vst.msk [vmem:[%s361 + $0xa8] sm:$0xff] %vm12715, %v12374
      %12738 = vst.msk [vmem:[%s361 + $0xb0] sm:$0xff] %vm12715, %v12376
      %12739 = vst.msk [vmem:[%s361 + $0xb8] sm:$0xff] %vm12715, %v12378
      %12740 = vst.msk [vmem:[%s361 + $0xc0] sm:$0xff] %vm12715, %v12380
      %12741 = vst.msk [vmem:[%s361 + $0xc8] sm:$0xff] %vm12715, %v12382
      %12742 = vst.msk [vmem:[%s361 + $0xd0] sm:$0xff] %vm12715, %v12384
      %12743 = vst.msk [vmem:[%s361 + $0xd8] sm:$0xff] %vm12715, %v12386
      %12744 = vst.msk [vmem:[%s361 + $0xe0] sm:$0xff] %vm12715, %v12388
      %12745 = vst.msk [vmem:[%s361 + $0xe8] sm:$0xff] %vm12715, %v12390
      %12746 = vst.msk [vmem:[%s361 + $0xf0] sm:$0xff] %vm12715, %v12392
      %12747 = vst.msk [vmem:[%s361 + $0xf8] sm:$0xff] %vm12715, %v12394
      %12748 = vst.msk [vmem:[%s361 + $0x100] sm:$0xff] %vm12715, %v12396
      %12749 = vst.msk [vmem:[%s361 + $0x108] sm:$0xff] %vm12715, %v12398
      %12750 = vst.msk [vmem:[%s361 + $0x110] sm:$0xff] %vm12715, %v12400
      %12751 = vst.msk [vmem:[%s361 + $0x118] sm:$0xff] %vm12715, %v12402
      %12752 = vst.msk [vmem:[%s361 + $0x120] sm:$0xff] %vm12715, %v12404
      %12753 = vst.msk [vmem:[%s361 + $0x128] sm:$0xff] %vm12715, %v12406
      %12754 = vst.msk [vmem:[%s361 + $0x130] sm:$0xff] %vm12715, %v12408
      %12755 = vst.msk [vmem:[%s361 + $0x138] sm:$0xff] %vm12715, %v12410
      %12756 = vst.msk [vmem:[%s361 + $0x140] sm:$0xff] %vm12715, %v12412
      %12757 = vst.msk [vmem:[%s361 + $0x148] sm:$0xff] %vm12715, %v12414
      %12758 = vst.msk [vmem:[%s361 + $0x150] sm:$0xff] %vm12715, %v12416
      %12759 = vst.msk [vmem:[%s361 + $0x158] sm:$0xff] %vm12715, %v12418
      %12760 = vst.msk [vmem:[%s361 + $0x160] sm:$0xff] %vm12715, %v12420
      %12761 = vst.msk [vmem:[%s361 + $0x168] sm:$0xff] %vm12715, %v12422
      %12762 = vst.msk [vmem:[%s361 + $0x170] sm:$0xff] %vm12715, %v12424
      %12763 = vst.msk [vmem:[%s361 + $0x178] sm:$0xff] %vm12715, %v12426
      %12764 = vst.msk [vmem:[%s361 + $0x180] sm:$0xff] %vm12715, %v12428
      %12765 = vst.msk [vmem:[%s361 + $0x188] sm:$0xff] %vm12715, %v12430
      %12766 = vst.msk [vmem:[%s361 + $0x190] sm:$0xff] %vm12715, %v12432
      %12767 = vst.msk [vmem:[%s361 + $0x198] sm:$0xff] %vm12715, %v12434
      %12768 = vst.msk [vmem:[%s361 + $0x1a0] sm:$0xff] %vm12715, %v12436
      %12769 = vst.msk [vmem:[%s361 + $0x1a8] sm:$0xff] %vm12715, %v12438
      %12770 = vst.msk [vmem:[%s361 + $0x1b0] sm:$0xff] %vm12715, %v12440
      %12771 = vst.msk [vmem:[%s361 + $0x1b8] sm:$0xff] %vm12715, %v12442
      %12772 = vst.msk [vmem:[%s361 + $0x1c0] sm:$0xff] %vm12715, %v12444
      %12773 = vst.msk [vmem:[%s361 + $0x1c8] sm:$0xff] %vm12715, %v12446
      %12774 = vst.msk [vmem:[%s361 + $0x1d0] sm:$0xff] %vm12715, %v12448
      %12775 = vst.msk [vmem:[%s361 + $0x1d8] sm:$0xff] %vm12715, %v12450
      %12776 = vst.msk [vmem:[%s361 + $0x1e0] sm:$0xff] %vm12715, %v12452
      %12777 = vst.msk [vmem:[%s361 + $0x1e8] sm:$0xff] %vm12715, %v12454
      %12778 = vst.msk [vmem:[%s361 + $0x1f0] sm:$0xff] %vm12715, %v12456
      %12779 = vst.msk [vmem:[%s361 + $0x1f8] sm:$0xff] %vm12715, %v12458
      %12780 = vst.msk [vmem:[%s361 + $0x200] sm:$0xff] %vm12715, %v12460
      %12781 = vst.msk [vmem:[%s361 + $0x208] sm:$0xff] %vm12715, %v12462
      %12782 = vst.msk [vmem:[%s361 + $0x210] sm:$0xff] %vm12715, %v12464
      %12783 = vst.msk [vmem:[%s361 + $0x218] sm:$0xff] %vm12715, %v12466
      %12784 = vst.msk [vmem:[%s361 + $0x220] sm:$0xff] %vm12715, %v12468
      %12785 = vst.msk [vmem:[%s361 + $0x228] sm:$0xff] %vm12715, %v12470
      %12786 = vst.msk [vmem:[%s361 + $0x230] sm:$0xff] %vm12715, %v12472
      %12787 = vst.msk [vmem:[%s361 + $0x238] sm:$0xff] %vm12715, %v12474
      %12788 = vst.msk [vmem:[%s361 + $0x240] sm:$0xff] %vm12715, %v12476
      %12789 = vst.msk [vmem:[%s361 + $0x248] sm:$0xff] %vm12715, %v12478
      %12790 = vst.msk [vmem:[%s361 + $0x250] sm:$0xff] %vm12715, %v12480
      %12791 = vst.msk [vmem:[%s361 + $0x258] sm:$0xff] %vm12715, %v12482
      %12792 = vst.msk [vmem:[%s361 + $0x260] sm:$0xff] %vm12715, %v12484
      %12793 = vst.msk [vmem:[%s361 + $0x268] sm:$0xff] %vm12715, %v12486
      %12794 = vst.msk [vmem:[%s361 + $0x270] sm:$0xff] %vm12715, %v12488
      %12795 = vst.msk [vmem:[%s361 + $0x278] sm:$0xff] %vm12715, %v12490
      %12796 = vst.msk [vmem:[%s361 + $0x280] sm:$0xff] %vm12715, %v12492
      %12797 = vst.msk [vmem:[%s361 + $0x288] sm:$0xff] %vm12715, %v12494
      %12798 = vst.msk [vmem:[%s361 + $0x290] sm:$0xff] %vm12715, %v12496
      %12799 = vst.msk [vmem:[%s361 + $0x298] sm:$0xff] %vm12715, %v12498
      %12800 = vst.msk [vmem:[%s361 + $0x2a0] sm:$0xff] %vm12715, %v12500
      %12801 = vst.msk [vmem:[%s361 + $0x2a8] sm:$0xff] %vm12715, %v12502
      %12802 = vst.msk [vmem:[%s361 + $0x2b0] sm:$0xff] %vm12715, %v12504
      %12803 = vst.msk [vmem:[%s361 + $0x2b8] sm:$0xff] %vm12715, %v12506
      %12804 = vst.msk [vmem:[%s361 + $0x2c0] sm:$0xff] %vm12715, %v12508
      %12805 = vst.msk [vmem:[%s361 + $0x2c8] sm:$0xff] %vm12715, %v12510
      %12806 = vst.msk [vmem:[%s361 + $0x2d0] sm:$0xff] %vm12715, %v12512
      %12807 = vst.msk [vmem:[%s361 + $0x2d8] sm:$0xff] %vm12715, %v12514
      %12808 = vst.msk [vmem:[%s361 + $0x2e0] sm:$0xff] %vm12715, %v12516
      %12809 = vst.msk [vmem:[%s361 + $0x2e8] sm:$0xff] %vm12715, %v12518
      %12810 = vst.msk [vmem:[%s361 + $0x2f0] sm:$0xff] %vm12715, %v12520
      %12811 = vst.msk [vmem:[%s361 + $0x2f8] sm:$0xff] %vm12715, %v12522
      %12812 = vst.msk [vmem:[%s361 + $0x300] sm:$0xff] %vm12715, %v12524
      %12813 = vst.msk [vmem:[%s361 + $0x308] sm:$0xff] %vm12715, %v12526
      %12814 = vst.msk [vmem:[%s361 + $0x310] sm:$0xff] %vm12715, %v12528
      %12815 = vst.msk [vmem:[%s361 + $0x318] sm:$0xff] %vm12715, %v12530
      %12816 = vst.msk [vmem:[%s361 + $0x320] sm:$0xff] %vm12715, %v12532
      %12817 = vst.msk [vmem:[%s361 + $0x328] sm:$0xff] %vm12715, %v12534
      %12818 = vst.msk [vmem:[%s361 + $0x330] sm:$0xff] %vm12715, %v12536
      %12819 = vst.msk [vmem:[%s361 + $0x338] sm:$0xff] %vm12715, %v12538
      %12820 = vst.msk [vmem:[%s361 + $0x340] sm:$0xff] %vm12715, %v12540
      %12821 = vst.msk [vmem:[%s361 + $0x348] sm:$0xff] %vm12715, %v12542
      %12822 = vst.msk [vmem:[%s361 + $0x350] sm:$0xff] %vm12715, %v12544
      %12823 = vst.msk [vmem:[%s361 + $0x358] sm:$0xff] %vm12715, %v12546
      %12824 = vst.msk [vmem:[%s361 + $0x360] sm:$0xff] %vm12715, %v12548
      %12825 = vst.msk [vmem:[%s361 + $0x368] sm:$0xff] %vm12715, %v12550
      %12826 = vst.msk [vmem:[%s361 + $0x370] sm:$0xff] %vm12715, %v12552
      %12827 = vst.msk [vmem:[%s361 + $0x378] sm:$0xff] %vm12715, %v12554
      %12828 = vst.msk [vmem:[%s361 + $0x380] sm:$0xff] %vm12715, %v12556
      %12829 = vst.msk [vmem:[%s361 + $0x388] sm:$0xff] %vm12715, %v12558
      %12830 = vst.msk [vmem:[%s361 + $0x390] sm:$0xff] %vm12715, %v12560
      %12831 = vst.msk [vmem:[%s361 + $0x398] sm:$0xff] %vm12715, %v12562
      %12832 = vst.msk [vmem:[%s361 + $0x3a0] sm:$0xff] %vm12715, %v12564
      %12833 = vst.msk [vmem:[%s361 + $0x3a8] sm:$0xff] %vm12715, %v12566
      %12834 = vst.msk [vmem:[%s361 + $0x3b0] sm:$0xff] %vm12715, %v12568
      %12835 = vst.msk [vmem:[%s361 + $0x3b8] sm:$0xff] %vm12715, %v12570
      %12836 = vst.msk [vmem:[%s361 + $0x3c0] sm:$0xff] %vm12715, %v12572
      %12837 = vst.msk [vmem:[%s361 + $0x3c8] sm:$0xff] %vm12715, %v12574
      %12838 = vst.msk [vmem:[%s361 + $0x3d0] sm:$0xff] %vm12715, %v12576
      %12839 = vst.msk [vmem:[%s361 + $0x3d8] sm:$0xff] %vm12715, %v12578
      %12840 = vst.msk [vmem:[%s361 + $0x3e0] sm:$0xff] %vm12715, %v12580
      %12841 = vst.msk [vmem:[%s361 + $0x3e8] sm:$0xff] %vm12715, %v12582
      %12842 = vst.msk [vmem:[%s361 + $0x3f0] sm:$0xff] %vm12715, %v12584
      %12843 = vst.msk [vmem:[%s361 + $0x3f8] sm:$0xff] %vm12715, %v12586
      %s12844 = smul.u32 128, %s21
      %p12845 = scmp.lt.s32.totalorder %s12844, 255
      %s12846 = scalar_select %p12845, %s12844, 255
      %s12847 = smul.addr %s12846, 8
      %s12848 = scalar_lea.vmem %s10, %s12847
      // Predicated region
      $region61: #{nerf_forward.1} parent=59 // pred_check
        %p12849 = pneg %p254
      $region62: #{nerf_forward.1} parent=59 // pred_check_branch
        %12851 = sbr.rel (%p12849) target = $region64
      $region63: #{nerf_forward.1} parent=59 // pred_region
        %s12852 = smul.u32 128, %s21
      $region64: #{nerf_forward.1} parent=59 // pred_fallthru
        _
    $region60: #{nerf_forward.1} parent=5 // pred_fallthru
      _
    %p12853 = scmp.le.s32.totalorder 2, %s16
    // Predicated region
    $region65: #{nerf_forward.1} parent=5 // pred_check
      %p12854 = pneg %p12853
    $region66: #{nerf_forward.1} parent=5 // pred_check_branch
      %12856 = sbr.rel (%p12854) target = $region68
    $region67: #{nerf_forward.1} parent=5 // pred_region
      %s12857 = ssub.s32 %s16, 2
      // Predicated region
      $region69: #{nerf_forward.1} parent=67 // pred_check
        %p12858 = pneg %p260
      $region70: #{nerf_forward.1} parent=67 // pred_check_branch
        %12860 = sbr.rel (%p12858) target = $region72
      $region71: #{nerf_forward.1} parent=67 // pred_region
        %s12861 = smul.u32 128, %s22
        %p12862 = scmp.lt.s32.totalorder %s12861, 255
        %s12863 = scalar_select %p12862, %s12861, 255
        %s12864 = smul.addr %s12863, 8
        %s12865 = scalar_lea.vmem %s10, %s12864
      $region72: #{nerf_forward.1} parent=67 // pred_fallthru
        _
    $region68: #{nerf_forward.1} parent=5 // pred_fallthru
      _
  $region6: #{nerf_forward.1} parent=0 // loop_footer
    %s20 = sadd.s32 1, %s16
  $region7: #{nerf_forward.1} parent=0 // loop_footer_branch
    %15 = sbr.rel target = $region3
  $region8: #{nerf_forward.1} parent=0 // loop_exit
    _

</llo_original>
